<compile_context>
chip_gen: v5e
topology: v5e:2x2
jax: 0.10.0
libtpu: 0.0.40
codegen_flags: <defaults>
</compile_context>

<pallas_src>
import numpy as np

import jax
import jax.numpy as jnp
from jax.experimental import pallas as pl
from jax.experimental.pallas import tpu as pltpu


# ----------------------------------------------------------------------------
# Synthetic (small) GLDiscs configuration.
GLOBAL_IN_CH, GLOBAL_HW = 3, 16          # global image: (N, 3, 16, 16)
GLOBAL_CONV_CH = (16, 32, 64)            # 16x16 -> 8x8 -> 4x4 -> 2x2
LOCAL_IN_CH, LOCAL_HW = 3, 8             # local patch:  (N, 3, 8, 8)
LOCAL_CONV_CH = (16, 32)                 # 8x8 -> 4x4 -> 2x2
FC_OUT = 1024                            # per-branch FC width
KSIZE, STRIDE, PAD = 5, 2, 2
LANE = 128                               # TPU lane width


def _round_up(x, m):
    return ((x + m - 1) // m) * m


G_FLAT = GLOBAL_IN_CH * GLOBAL_HW * GLOBAL_HW        # 768
L_FLAT = LOCAL_IN_CH * LOCAL_HW * LOCAL_HW           # 192
G_FLAT_PAD = _round_up(G_FLAT, LANE)                 # 768
L_FLAT_PAD = _round_up(L_FLAT, LANE)                 # 256
X_WIDTH = G_FLAT_PAD + L_FLAT_PAD                    # 1024 (fused input width)
# Width of the global conv3 output inside the fused stage-3 activation.
G3_W = GLOBAL_CONV_CH[-1] * (GLOBAL_HW // 2 ** len(GLOBAL_CONV_CH)) ** 2   # 256


# ----------------------------------------------------------------------------
# Host-side weight preprocessing.
def conv_as_dense(w_oihw, bias, h, w, stride=STRIDE, pad=PAD):
    """Fold one stride-2 KxK conv into a dense matrix.

    Flattened-activation order is PyTorch's `x.view(N, -1)` of NCHW, i.e.
    (c, h, w) for the input vector and (c_out, h_out, w_out) for the output:
        conv(x)[n].flatten() == x[n].flatten() @ M + b_flat
    """
    w_oihw = np.asarray(w_oihw, np.float32)
    bias = np.asarray(bias, np.float32)
    cout, cin, k, _ = w_oihw.shape
    ho = (h + 2 * pad - k) // stride + 1
    wo = (w + 2 * pad - k) // stride + 1
    mat = np.zeros((cin * h * w, cout * ho * wo), np.float32)
    co, oy, ox, ci, ky, kx = np.meshgrid(
        np.arange(cout), np.arange(ho), np.arange(wo),
        np.arange(cin), np.arange(k), np.arange(k), indexing="ij")
    iy = stride * oy + ky - pad
    ix = stride * ox + kx - pad
    valid = (iy >= 0) & (iy < h) & (ix >= 0) & (ix < w)
    in_idx = (ci * h + iy) * w + ix
    out_idx = (co * ho + oy) * wo + ox
    vals = w_oihw[co, ci, ky, kx]
    mat[in_idx[valid], out_idx[valid]] = vals[valid]
    b_flat = np.repeat(bias, ho * wo)
    return mat, b_flat, ho, wo


def pack_weights(params):
    """Build the block-diagonal-fused, VMEM-resident weight arrays.

    Stage alignment (global has 4 stages, local has 3):
      S1 = gConv1 (+) lConv1      S2 = gConv2 (+) lConv2
      S3 = gConv3 (+) lFC         S4 = gFC   (global part only)
    where (+) is a block-diagonal direct sum; the head Linear(2048,1) becomes
    two (1024,128) column-padded matrices (no concat needed in-kernel).
    """
    def fold_chain(convs, fc_w, fc_b, hw):
        mats, h = [], hw
        for w, b in convs:
            m, bvec, h, _ = conv_as_dense(w, b, h, h)
            mats.append((m, bvec))
        mats.append((np.asarray(fc_w, np.float32).T.copy(),
                     np.asarray(fc_b, np.float32)))
        return mats

    g = fold_chain(params["g_convs"], params["g_fc_w"], params["g_fc_b"], GLOBAL_HW)
    l = fold_chain(params["l_convs"], params["l_fc_w"], params["l_fc_b"], LOCAL_HW)
    assert len(g) == 4 and len(l) == 3

    def pad_rows(m, rows):
        if rows > m.shape[0]:
            m = np.concatenate(
                [m, np.zeros((rows - m.shape[0], m.shape[1]), np.float32)], 0)
        return m

    def block_diag(a, b):
        ka, na = a.shape
        kb, nb = b.shape
        out = np.zeros((ka + kb, na + nb), np.float32)
        out[:ka, :na] = a
        out[ka:, na:] = b
        return out

    # Pad first-stage reduction dims to lane multiples (the wrapper zero-pads
    # the flattened images identically).
    gm0 = pad_rows(g[0][0], G_FLAT_PAD)
    lm0 = pad_rows(l[0][0], L_FLAT_PAD)

    s1 = block_diag(gm0, lm0)
    b1 = np.concatenate([g[0][1], l[0][1]])               # (1280,)
    s2 = block_diag(g[1][0], l[1][0])                      # (1280, 640)
    b2 = np.concatenate([g[1][1], l[1][1]])
    s3 = block_diag(g[2][0], l[2][0])                      # (640, 1280)
    b3 = np.concatenate([g[2][1], l[2][1]])
    s4, b4 = g[3]                                          # (256, 1024)

    # Final Linear(2048, 1): split per branch, pad the single output column to
    # a full 128-lane vreg so the final store is lane-dense.
    fc_w = np.asarray(params["fc_w"], np.float32)          # (1, 2048)
    fc_b = np.asarray(params["fc_b"], np.float32)          # (1,)
    wg = np.zeros((FC_OUT, LANE), np.float32)
    wg[:, 0] = fc_w[0, :FC_OUT]
    wl = np.zeros((FC_OUT, LANE), np.float32)
    wl[:, 0] = fc_w[0, FC_OUT:]
    bh = np.zeros((1, LANE), np.float32)
    bh[0, 0] = fc_b[0]

    def mat(x):                        # bf16 weight storage (f32 accumulate in-kernel)
        return jnp.asarray(x, jnp.bfloat16)

    def vec(x):                        # biases stay f32 (elementwise math is f32)
        return jnp.asarray(x, jnp.float32).reshape(1, -1)

    # Order matches the kernel ref order.
    return (mat(s1), vec(b1), mat(s2), vec(b2), mat(s3), vec(b3),
            mat(s4), vec(b4), mat(wg), mat(wl), vec(bh))


# ----------------------------------------------------------------------------
# The fused Pallas kernel (6 serial MXU matmuls, everything VMEM-resident).
def gldiscs_kernel(x_ref, s1_ref, b1_ref, s2_ref, b2_ref, s3_ref, b3_ref,
                   s4_ref, b4_ref, wg_ref, wl_ref, bh_ref, out_ref):
    bf16 = jnp.bfloat16

    def stage(x_bf16, m_ref, b_ref):
        # Full-K bf16 MXU matmul with f32 accumulation; bias + ReLU in f32.
        y = jnp.dot(x_bf16, m_ref[...], preferred_element_type=jnp.float32)
        return jnp.maximum(y + b_ref[...], 0.0)

    a1 = stage(x_ref[...], s1_ref, b1_ref)                 # (tm, 1280)
    a2 = stage(a1.astype(bf16), s2_ref, b2_ref)            # (tm, 640)
    a3 = stage(a2.astype(bf16), s3_ref, b3_ref)            # (tm, 1280) = [g3 | l_feat]

    l_feat = a3[:, G3_W:].astype(bf16)                     # (tm, 1024), lane-aligned
    g_feat = stage(a3[:, :G3_W].astype(bf16), s4_ref, b4_ref).astype(bf16)

    # Linear(2048, 1) as a split sum (no concat); single column padded to 128
    # lanes so the final store is lane-dense.
    pred = (jnp.dot(g_feat, wg_ref[...], preferred_element_type=jnp.float32)
            + jnp.dot(l_feat, wl_ref[...], preferred_element_type=jnp.float32)
            + bh_ref[...])
    out_ref[...] = pred.astype(out_ref.dtype)


def build_gldiscs(params):
    weights = pack_weights(params)
    mat_idx = (0, 2, 4, 6, 8, 9)
    flops_per_row = int(sum(2 * weights[i].shape[0] * weights[i].shape[1]
                            for i in mat_idx))
    weight_bytes = int(sum(int(np.prod(w.shape)) * w.dtype.itemsize
                           for w in weights))

    @jax.jit
    def forward(ws, g_img, l_img):
        n = g_img.shape[0]
        gx = g_img.reshape(n, -1).astype(jnp.float32)
        lx = l_img.reshape(n, -1).astype(jnp.float32)
        gx = jnp.pad(gx, ((0, 0), (0, G_FLAT_PAD - gx.shape[1])))
        lx = jnp.pad(lx, ((0, 0), (0, L_FLAT_PAD - lx.shape[1])))
        x = jnp.concatenate([gx, lx], axis=1).astype(jnp.bfloat16)   # (n, 1024)

        # Batch tile: multiple of 16 (bf16 sublane packing), capped at 256 so
        # big batches get >=2 grid steps (DMA/compute overlap, v7x megacore)
        # and padding waste is bounded.
        tm = min(256, _round_up(max(n, 1), 16))
        npad = _round_up(n, tm)
        x = jnp.pad(x, ((0, npad - n), (0, 0)))

        # Grid-invariant weights/biases: constant index_map, single-buffered.
        w_specs = [pl.BlockSpec(w.shape, lambda i: (0, 0),
                                pipeline_mode=pl.Buffered(1)) for w in ws]

        cost = pl.CostEstimate(
            flops=npad * flops_per_row,
            transcendentals=0,
            bytes_accessed=weight_bytes + npad * X_WIDTH * 2 + npad * LANE * 4)

        out = pl.pallas_call(
            gldiscs_kernel,
            out_shape=jax.ShapeDtypeStruct((npad, LANE), jnp.float32),
            grid=(npad // tm,),
            in_specs=[pl.BlockSpec((tm, X_WIDTH), lambda i: (i, 0))] + w_specs,
            out_specs=pl.BlockSpec((tm, LANE), lambda i: (i, 0)),
            compiler_params=pltpu.CompilerParams(
                dimension_semantics=("parallel",),
                vmem_limit_bytes=24 * 1024 * 1024),
            cost_estimate=cost,
        )(x, *ws)
        return out[:n, :1]

    return lambda g_img, l_img: forward(weights, g_img, l_img)


# ----------------------------------------------------------------------------
# Pure-JAX reference (PyTorch-equivalent semantics) for validation.
def reference_forward(params, g_img, l_img):
    hp = jax.lax.Precision.HIGHEST

    def branch(convs, fc_w, fc_b, x):
        for w, b in convs:
            x = jax.lax.conv_general_dilated(
                x, w, window_strides=(STRIDE, STRIDE),
                padding=[(PAD, PAD), (PAD, PAD)],
                dimension_numbers=("NCHW", "OIHW", "NCHW"), precision=hp)
            x = jnp.maximum(x + b[None, :, None, None], 0.0)
        x = x.reshape(x.shape[0], -1)
        return jnp.maximum(jnp.dot(x, fc_w.T, precision=hp) + fc_b, 0.0)

    g = branch(params["g_convs"], params["g_fc_w"], params["g_fc_b"], g_img)
    l = branch(params["l_convs"], params["l_fc_w"], params["l_fc_b"], l_img)
    feat = jnp.concatenate([g, l], axis=1)
    return jnp.dot(feat, params["fc_w"].T, precision=hp) + params["fc_b"]


def init_params(key):
    keys = iter(jax.random.split(key, 16))

    def conv_init(cin, cout):
        w = 0.1 * jax.random.normal(next(keys), (cout, cin, KSIZE, KSIZE), jnp.float32)
        b = 0.1 * jax.random.normal(next(keys), (cout,), jnp.float32)
        return (w, b)

    g_convs, cin = [], GLOBAL_IN_CH
    for cout in GLOBAL_CONV_CH:
        g_convs.append(conv_init(cin, cout))
        cin = cout
    g_fc_in = GLOBAL_CONV_CH[-1] * (GLOBAL_HW // 2 ** len(GLOBAL_CONV_CH)) ** 2

    l_convs, cin = [], LOCAL_IN_CH
    for cout in LOCAL_CONV_CH:
        l_convs.append(conv_init(cin, cout))
        cin = cout
    l_fc_in = LOCAL_CONV_CH[-1] * (LOCAL_HW // 2 ** len(LOCAL_CONV_CH)) ** 2

    # Linear layers follow GLDiscs.init_weights: weight ~ N(0, 0.02), bias = 0.
    return dict(
        g_convs=g_convs,
        g_fc_w=0.02 * jax.random.normal(next(keys), (FC_OUT, g_fc_in), jnp.float32),
        g_fc_b=jnp.zeros((FC_OUT,), jnp.float32),
        l_convs=l_convs,
        l_fc_w=0.02 * jax.random.normal(next(keys), (FC_OUT, l_fc_in), jnp.float32),
        l_fc_b=jnp.zeros((FC_OUT,), jnp.float32),
        fc_w=0.02 * jax.random.normal(next(keys), (1, 2 * FC_OUT), jnp.float32),
        fc_b=jnp.zeros((1,), jnp.float32),
    )


if __name__ == "__main__":
    root = jax.random.PRNGKey(0)
    k_params, k_gimg, k_limg = jax.random.split(root, 3)
    params = init_params(k_params)

    batch = 2
    g_img = jax.random.normal(k_gimg, (batch, GLOBAL_IN_CH, GLOBAL_HW, GLOBAL_HW),
                              jnp.float32)
    l_img = jax.random.normal(k_limg, (batch, LOCAL_IN_CH, LOCAL_HW, LOCAL_HW),
                              jnp.float32)

    gldiscs = build_gldiscs(params)
    pred = jax.block_until_ready(gldiscs(g_img, l_img))
    assert pred.shape == (batch, 1), pred.shape

    ref = jax.block_until_ready(reference_forward(params, g_img, l_img))
    # Tolerance covers bf16 weight storage / bf16 activation casts (f32 accum).
    np.testing.assert_allclose(np.asarray(pred), np.asarray(ref),
                               rtol=2e-2, atol=2e-2)

    print("KERNEL_OK")
</pallas_src>

<mosaic_0001>
module attributes {stable_mosaic.version = 11 : i64} {
  func.func @gldiscs_kernel(%arg0: i32, %arg1: memref<16x1024xbf16, #tpu.memory_space<vmem>>, %arg2: memref<1024x1280xbf16, #tpu.memory_space<vmem>>, %arg3: memref<1x1280xf32, #tpu.memory_space<vmem>>, %arg4: memref<1280x640xbf16, #tpu.memory_space<vmem>>, %arg5: memref<1x640xf32, #tpu.memory_space<vmem>>, %arg6: memref<640x1280xbf16, #tpu.memory_space<vmem>>, %arg7: memref<1x1280xf32, #tpu.memory_space<vmem>>, %arg8: memref<256x1024xbf16, #tpu.memory_space<vmem>>, %arg9: memref<1x1024xf32, #tpu.memory_space<vmem>>, %arg10: memref<1024x128xbf16, #tpu.memory_space<vmem>>, %arg11: memref<1024x128xbf16, #tpu.memory_space<vmem>>, %arg12: memref<1x128xf32, #tpu.memory_space<vmem>>, %arg13: memref<16x128xf32, #tpu.memory_space<vmem>>) attributes {dimension_semantics = [#tpu.dimension_semantics<parallel>], iteration_bounds = array<i64: 1>, scalar_prefetch = 0 : i64, scratch_operands = 0 : i64, tpu.core_type = #tpu.core_type<tc>, window_params = [{transform_indices = @transform_0, window_bounds = array<i64: 16, 1024>}, {pipeline_mode = #tpu.pipeline_mode<synchronous>, transform_indices = @transform_1, window_bounds = array<i64: 1024, 1280>}, {pipeline_mode = #tpu.pipeline_mode<synchronous>, transform_indices = @transform_2, window_bounds = array<i64: 1, 1280>}, {pipeline_mode = #tpu.pipeline_mode<synchronous>, transform_indices = @transform_3, window_bounds = array<i64: 1280, 640>}, {pipeline_mode = #tpu.pipeline_mode<synchronous>, transform_indices = @transform_4, window_bounds = array<i64: 1, 640>}, {pipeline_mode = #tpu.pipeline_mode<synchronous>, transform_indices = @transform_5, window_bounds = array<i64: 640, 1280>}, {pipeline_mode = #tpu.pipeline_mode<synchronous>, transform_indices = @transform_6, window_bounds = array<i64: 1, 1280>}, {pipeline_mode = #tpu.pipeline_mode<synchronous>, transform_indices = @transform_7, window_bounds = array<i64: 256, 1024>}, {pipeline_mode = #tpu.pipeline_mode<synchronous>, transform_indices = @transform_8, window_bounds = array<i64: 1, 1024>}, {pipeline_mode = #tpu.pipeline_mode<synchronous>, transform_indices = @transform_9, window_bounds = array<i64: 1024, 128>}, {pipeline_mode = #tpu.pipeline_mode<synchronous>, transform_indices = @transform_10, window_bounds = array<i64: 1024, 128>}, {pipeline_mode = #tpu.pipeline_mode<synchronous>, transform_indices = @transform_11, window_bounds = array<i64: 1, 128>}, {transform_indices = @transform_12, window_bounds = array<i64: 16, 128>}]} {
    %c0 = arith.constant 0 : index
    %c0_0 = arith.constant 0 : index
    %0 = vector.load %arg1[%c0, %c0_0] : memref<16x1024xbf16, #tpu.memory_space<vmem>>, vector<16x1024xbf16>
    %c0_1 = arith.constant 0 : index
    %c0_2 = arith.constant 0 : index
    %1 = vector.load %arg2[%c0_1, %c0_2] : memref<1024x1280xbf16, #tpu.memory_space<vmem>>, vector<1024x1280xbf16>
    %cst = arith.constant dense<0.000000e+00> : vector<16x1280xf32>
    %2 = tpu.matmul %0, %1, %cst {dimension_numbers = #tpu.dot_dimension_numbers<[1], [0], [0], [1], [0, 0, 1, 1], [], []>} : vector<16x1024xbf16>, vector<1024x1280xbf16>, vector<16x1280xf32> -> vector<16x1280xf32>
    %c0_3 = arith.constant 0 : index
    %c0_4 = arith.constant 0 : index
    %3 = vector.load %arg3[%c0_3, %c0_4] : memref<1x1280xf32, #tpu.memory_space<vmem>>, vector<1x1280xf32>
    %4 = vector.broadcast %3 : vector<1x1280xf32> to vector<16x1280xf32>
    %5 = arith.addf %2, %4 : vector<16x1280xf32>
    %cst_5 = arith.constant 0.000000e+00 : f32
    %6 = vector.broadcast %cst_5 : f32 to vector<16x1280xf32>
    %7 = arith.maximumf %5, %6 : vector<16x1280xf32>
    %8 = arith.truncf %7 : vector<16x1280xf32> to vector<16x1280xbf16>
    %c0_6 = arith.constant 0 : index
    %c0_7 = arith.constant 0 : index
    %9 = vector.load %arg4[%c0_6, %c0_7] : memref<1280x640xbf16, #tpu.memory_space<vmem>>, vector<1280x640xbf16>
    %cst_8 = arith.constant dense<0.000000e+00> : vector<16x640xf32>
    %10 = tpu.matmul %8, %9, %cst_8 {dimension_numbers = #tpu.dot_dimension_numbers<[1], [0], [0], [1], [0, 0, 1, 1], [], []>} : vector<16x1280xbf16>, vector<1280x640xbf16>, vector<16x640xf32> -> vector<16x640xf32>
    %c0_9 = arith.constant 0 : index
    %c0_10 = arith.constant 0 : index
    %11 = vector.load %arg5[%c0_9, %c0_10] : memref<1x640xf32, #tpu.memory_space<vmem>>, vector<1x640xf32>
    %12 = vector.broadcast %11 : vector<1x640xf32> to vector<16x640xf32>
    %13 = arith.addf %10, %12 : vector<16x640xf32>
    %cst_11 = arith.constant 0.000000e+00 : f32
    %14 = vector.broadcast %cst_11 : f32 to vector<16x640xf32>
    %15 = arith.maximumf %13, %14 : vector<16x640xf32>
    %16 = arith.truncf %15 : vector<16x640xf32> to vector<16x640xbf16>
    %c0_12 = arith.constant 0 : index
    %c0_13 = arith.constant 0 : index
    %17 = vector.load %arg6[%c0_12, %c0_13] : memref<640x1280xbf16, #tpu.memory_space<vmem>>, vector<640x1280xbf16>
    %cst_14 = arith.constant dense<0.000000e+00> : vector<16x1280xf32>
    %18 = tpu.matmul %16, %17, %cst_14 {dimension_numbers = #tpu.dot_dimension_numbers<[1], [0], [0], [1], [0, 0, 1, 1], [], []>} : vector<16x640xbf16>, vector<640x1280xbf16>, vector<16x1280xf32> -> vector<16x1280xf32>
    %c0_15 = arith.constant 0 : index
    %c0_16 = arith.constant 0 : index
    %19 = vector.load %arg7[%c0_15, %c0_16] : memref<1x1280xf32, #tpu.memory_space<vmem>>, vector<1x1280xf32>
    %20 = vector.broadcast %19 : vector<1x1280xf32> to vector<16x1280xf32>
    %21 = arith.addf %18, %20 : vector<16x1280xf32>
    %cst_17 = arith.constant 0.000000e+00 : f32
    %22 = vector.broadcast %cst_17 : f32 to vector<16x1280xf32>
    %23 = arith.maximumf %21, %22 : vector<16x1280xf32>
    %24 = vector.extract_strided_slice %23 {offsets = [0, 256], sizes = [16, 1024], strides = [1, 1]} : vector<16x1280xf32> to vector<16x1024xf32>
    %25 = arith.truncf %24 : vector<16x1024xf32> to vector<16x1024xbf16>
    %26 = vector.extract_strided_slice %23 {offsets = [0, 0], sizes = [16, 256], strides = [1, 1]} : vector<16x1280xf32> to vector<16x256xf32>
    %27 = arith.truncf %26 : vector<16x256xf32> to vector<16x256xbf16>
    %c0_18 = arith.constant 0 : index
    %c0_19 = arith.constant 0 : index
    %28 = vector.load %arg8[%c0_18, %c0_19] : memref<256x1024xbf16, #tpu.memory_space<vmem>>, vector<256x1024xbf16>
    %cst_20 = arith.constant dense<0.000000e+00> : vector<16x1024xf32>
    %29 = tpu.matmul %27, %28, %cst_20 {dimension_numbers = #tpu.dot_dimension_numbers<[1], [0], [0], [1], [0, 0, 1, 1], [], []>} : vector<16x256xbf16>, vector<256x1024xbf16>, vector<16x1024xf32> -> vector<16x1024xf32>
    %c0_21 = arith.constant 0 : index
    %c0_22 = arith.constant 0 : index
    %30 = vector.load %arg9[%c0_21, %c0_22] : memref<1x1024xf32, #tpu.memory_space<vmem>>, vector<1x1024xf32>
    %31 = vector.broadcast %30 : vector<1x1024xf32> to vector<16x1024xf32>
    %32 = arith.addf %29, %31 : vector<16x1024xf32>
    %cst_23 = arith.constant 0.000000e+00 : f32
    %33 = vector.broadcast %cst_23 : f32 to vector<16x1024xf32>
    %34 = arith.maximumf %32, %33 : vector<16x1024xf32>
    %35 = arith.truncf %34 : vector<16x1024xf32> to vector<16x1024xbf16>
    %c0_24 = arith.constant 0 : index
    %c0_25 = arith.constant 0 : index
    %36 = vector.load %arg10[%c0_24, %c0_25] : memref<1024x128xbf16, #tpu.memory_space<vmem>>, vector<1024x128xbf16>
    %cst_26 = arith.constant dense<0.000000e+00> : vector<16x128xf32>
    %37 = tpu.matmul %35, %36, %cst_26 {dimension_numbers = #tpu.dot_dimension_numbers<[1], [0], [0], [1], [0, 0, 1, 1], [], []>} : vector<16x1024xbf16>, vector<1024x128xbf16>, vector<16x128xf32> -> vector<16x128xf32>
    %c0_27 = arith.constant 0 : index
    %c0_28 = arith.constant 0 : index
    %38 = vector.load %arg11[%c0_27, %c0_28] : memref<1024x128xbf16, #tpu.memory_space<vmem>>, vector<1024x128xbf16>
    %cst_29 = arith.constant dense<0.000000e+00> : vector<16x128xf32>
    %39 = tpu.matmul %25, %38, %cst_29 {dimension_numbers = #tpu.dot_dimension_numbers<[1], [0], [0], [1], [0, 0, 1, 1], [], []>} : vector<16x1024xbf16>, vector<1024x128xbf16>, vector<16x128xf32> -> vector<16x128xf32>
    %40 = arith.addf %37, %39 : vector<16x128xf32>
    %c0_30 = arith.constant 0 : index
    %c0_31 = arith.constant 0 : index
    %41 = vector.load %arg12[%c0_30, %c0_31] : memref<1x128xf32, #tpu.memory_space<vmem>>, vector<1x128xf32>
    %42 = vector.broadcast %41 : vector<1x128xf32> to vector<16x128xf32>
    %43 = arith.addf %40, %42 : vector<16x128xf32>
    %c0_32 = arith.constant 0 : index
    %c0_33 = arith.constant 0 : index
    %44 = vector.load %arg13[%c0_32, %c0_33] : memref<16x128xf32, #tpu.memory_space<vmem>>, vector<16x128xf32>
    tpu.vector_store %arg13[%c0_32, %c0_33], %43 {strides = array<i32>} : memref<16x128xf32, #tpu.memory_space<vmem>>, vector<16x128xf32>,
    return
  }
  func.func @transform_0(%arg0: i32) -> (i32, i32) {
    %c0_i32 = arith.constant 0 : i32
    %c0_i32_0 = arith.constant 0 : i32
    return %arg0, %c0_i32 : i32, i32
  }
  func.func @transform_1(%arg0: i32) -> (i32, i32) {
    %c0_i32 = arith.constant 0 : i32
    %c0_i32_0 = arith.constant 0 : i32
    %c0_i32_1 = arith.constant 0 : i32
    return %c0_i32, %c0_i32_0 : i32, i32
  }
  func.func @transform_2(%arg0: i32) -> (i32, i32) {
    %c0_i32 = arith.constant 0 : i32
    %c0_i32_0 = arith.constant 0 : i32
    %c0_i32_1 = arith.constant 0 : i32
    return %c0_i32, %c0_i32_0 : i32, i32
  }
  func.func @transform_3(%arg0: i32) -> (i32, i32) {
    %c0_i32 = arith.constant 0 : i32
    %c0_i32_0 = arith.constant 0 : i32
    %c0_i32_1 = arith.constant 0 : i32
    return %c0_i32, %c0_i32_0 : i32, i32
  }
  func.func @transform_4(%arg0: i32) -> (i32, i32) {
    %c0_i32 = arith.constant 0 : i32
    %c0_i32_0 = arith.constant 0 : i32
    %c0_i32_1 = arith.constant 0 : i32
    return %c0_i32, %c0_i32_0 : i32, i32
  }
  func.func @transform_5(%arg0: i32) -> (i32, i32) {
    %c0_i32 = arith.constant 0 : i32
    %c0_i32_0 = arith.constant 0 : i32
    %c0_i32_1 = arith.constant 0 : i32
    return %c0_i32, %c0_i32_0 : i32, i32
  }
  func.func @transform_6(%arg0: i32) -> (i32, i32) {
    %c0_i32 = arith.constant 0 : i32
    %c0_i32_0 = arith.constant 0 : i32
    %c0_i32_1 = arith.constant 0 : i32
    return %c0_i32, %c0_i32_0 : i32, i32
  }
  func.func @transform_7(%arg0: i32) -> (i32, i32) {
    %c0_i32 = arith.constant 0 : i32
    %c0_i32_0 = arith.constant 0 : i32
    %c0_i32_1 = arith.constant 0 : i32
    return %c0_i32, %c0_i32_0 : i32, i32
  }
  func.func @transform_8(%arg0: i32) -> (i32, i32) {
    %c0_i32 = arith.constant 0 : i32
    %c0_i32_0 = arith.constant 0 : i32
    %c0_i32_1 = arith.constant 0 : i32
    return %c0_i32, %c0_i32_0 : i32, i32
  }
  func.func @transform_9(%arg0: i32) -> (i32, i32) {
    %c0_i32 = arith.constant 0 : i32
    %c0_i32_0 = arith.constant 0 : i32
    %c0_i32_1 = arith.constant 0 : i32
    return %c0_i32, %c0_i32_0 : i32, i32
  }
  func.func @transform_10(%arg0: i32) -> (i32, i32) {
    %c0_i32 = arith.constant 0 : i32
    %c0_i32_0 = arith.constant 0 : i32
    %c0_i32_1 = arith.constant 0 : i32
    return %c0_i32, %c0_i32_0 : i32, i32
  }
  func.func @transform_11(%arg0: i32) -> (i32, i32) {
    %c0_i32 = arith.constant 0 : i32
    %c0_i32_0 = arith.constant 0 : i32
    %c0_i32_1 = arith.constant 0 : i32
    return %c0_i32, %c0_i32_0 : i32, i32
  }
  func.func @transform_12(%arg0: i32) -> (i32, i32) {
    %c0_i32 = arith.constant 0 : i32
    %c0_i32_0 = arith.constant 0 : i32
    return %arg0, %c0_i32 : i32, i32
  }
}

</mosaic_0001>

<llo_original>
// kernel: forward.1
$region0: #{forward.1}
  #allocation0 [shape = 'u32[]', space=smem, size = 0x4, offset = 0x4, fixed_abs, tag = 'smem constant byte address 0x4 - core index']
  #allocation1 [shape = 'u32[72,128]{1,0:T(1,128)}', space=vmem, size = 0x9000, scoped, tag = 'internal scratch']
  %s0 = inlined_call_operand.vmem [shape: bf16[16,1024], index: 0, kind: input, shape index: {}]
  %s1 = inlined_call_operand.hbm [shape: bf16[1024,1280], index: 1, kind: input, shape index: {}]
  %s2 = inlined_call_operand.hbm [shape: f32[1,1280], index: 2, kind: input, shape index: {}]
  %s3 = inlined_call_operand.hbm [shape: bf16[1280,640], index: 3, kind: input, shape index: {}]
  %s4 = inlined_call_operand.hbm [shape: f32[1,640], index: 4, kind: input, shape index: {}]
  %s5 = inlined_call_operand.hbm [shape: bf16[640,1280], index: 5, kind: input, shape index: {}]
  %s6 = inlined_call_operand.hbm [shape: f32[1,1280], index: 6, kind: input, shape index: {}]
  %s7 = inlined_call_operand.hbm [shape: bf16[256,1024], index: 7, kind: input, shape index: {}]
  %s8 = inlined_call_operand.hbm [shape: f32[1,1024], index: 8, kind: input, shape index: {}]
  %s9 = inlined_call_operand.hbm [shape: bf16[1024,128], index: 9, kind: input, shape index: {}]
  %s10 = inlined_call_operand.hbm [shape: bf16[1024,128], index: 10, kind: input, shape index: {}]
  %s11 = inlined_call_operand.hbm [shape: f32[1,128], index: 11, kind: input, shape index: {}]
  %s12 = inlined_call_operand.vmem [shape: f32[16,128], index: 12, kind: output, shape index: {}]
  %s13 = sld [smem:[#allocation0]]
  $region102: #{forward.1} parent=0
    _
  %s15 = ssub.s32 1, %s13
  %s16 = scalar_select 0, %s15, %s13
  $region1: #{forward.1} parent=0
    #allocation2 [shape = 'u8[2621440]{0}', space=vmem, size = 0x280000, scoped, tag = 'input window, operand 1, single buffered']
    #allocation3 [shape = 's32[1]{0}', space=sflag, size = 0x4, scoped, tag = 'scoped memory for forward.1']
    #allocation4 [shape = 'u8[5120]{0}', space=vmem, size = 0x1400, scoped, tag = 'input window, operand 2, single buffered']
    #allocation5 [shape = 's32[1]{0}', space=sflag, size = 0x4, scoped, tag = 'scoped memory for forward.1']
    #allocation6 [shape = 'u8[1638400]{0}', space=vmem, size = 0x190000, scoped, tag = 'input window, operand 3, single buffered']
    #allocation7 [shape = 'u8[2560]{0}', space=vmem, size = 0xc00, scoped, tag = 'input window, operand 4, single buffered']
    #allocation8 [shape = 's32[1]{0}', space=sflag, size = 0x4, scoped, tag = 'scoped memory for forward.1']
    #allocation9 [shape = 'u8[1638400]{0}', space=vmem, size = 0x190000, scoped, tag = 'input window, operand 5, single buffered']
    #allocation10 [shape = 'u8[5120]{0}', space=vmem, size = 0x1400, scoped, tag = 'input window, operand 6, single buffered']
    #allocation11 [shape = 's32[1]{0}', space=sflag, size = 0x4, scoped, tag = 'scoped memory for forward.1']
    #allocation12 [shape = 'u8[524288]{0}', space=vmem, size = 0x80000, scoped, tag = 'input window, operand 7, single buffered']
    #allocation13 [shape = 'u8[4096]{0}', space=vmem, size = 0x1000, scoped, tag = 'input window, operand 8, single buffered']
    #allocation14 [shape = 's32[1]{0}', space=sflag, size = 0x4, scoped, tag = 'scoped memory for forward.1']
    #allocation15 [shape = 'u8[262144]{0}', space=vmem, size = 0x40000, scoped, tag = 'input window, operand 9, single buffered']
    #allocation16 [shape = 'u8[262144]{0}', space=vmem, size = 0x40000, scoped, tag = 'input window, operand 10, single buffered']
    #allocation17 [shape = 's32[1]{0}', space=sflag, size = 0x4, scoped, tag = 'scoped memory for forward.1']
    #allocation18 [shape = 'u8[512]{0}', space=vmem, size = 0x400, scoped, tag = 'input window, operand 11, single buffered']
    %17 = vsyncpa [#allocation3], 0
    %18 = vsyncpa [#allocation5], 0
    %19 = vsyncpa [#allocation8], 0
    %20 = vsyncpa [#allocation11], 0
    %21 = vsyncpa [#allocation14], 0
    %22 = vsyncpa [#allocation17], 0
    // Predicated region
    $region2: #{forward.1} parent=1 // pred_check
      _
    $region3: #{forward.1} parent=1 // pred_check_branch
      %24 = sbr.rel (0) target = $region5
    $region4: #{forward.1} parent=1 // pred_region
      _
    $region5: #{forward.1} parent=1 // pred_fallthru
      _
    // Predicated region
    $region6: #{forward.1} parent=1 // pred_check
      _
    $region7: #{forward.1} parent=1 // pred_check_branch
      %26 = sbr.rel (0) target = $region9
    $region8: #{forward.1} parent=1 // pred_region
      %28 = vsyncadd [#allocation3], 0
      %s29 = sshll.u32 %s1, 4
      %s30 = int_to_ptr.hbm [resolvable:$true] %s29
      %s31 = sshll.u32 [#allocation2], 4
      %s32 = int_to_ptr.vmem [resolvable:$true] %s31
      %37 = dma.hbm_to_vmem [thread:$0]  %s30, 81920, %s32, [#allocation3], 640, 640, 40
    $region9: #{forward.1} parent=1 // pred_fallthru
      _
    // Predicated region
    $region10: #{forward.1} parent=1 // pred_check
      _
    $region11: #{forward.1} parent=1 // pred_check_branch
      %39 = sbr.rel (0) target = $region13
    $region12: #{forward.1} parent=1 // pred_region
      %41 = vsyncadd [#allocation5], 0
      %s43 = sshll.u32 %s2, 4
      %s44 = int_to_ptr.hbm [resolvable:$true] %s43
      %s45 = sshll.u32 [#allocation4], 4
      %s46 = int_to_ptr.vmem [resolvable:$true] %s45
      %48 = dma.hbm_to_vmem [thread:$0]  %s44, 160, %s46, [#allocation5]
    $region13: #{forward.1} parent=1 // pred_fallthru
      _
    // Predicated region
    $region14: #{forward.1} parent=1 // pred_check
      _
    $region15: #{forward.1} parent=1 // pred_check_branch
      %50 = sbr.rel (0) target = $region17
    $region16: #{forward.1} parent=1 // pred_region
      %52 = vsyncadd [#allocation5], 0
      %s53 = sshll.u32 %s3, 4
      %s54 = int_to_ptr.hbm [resolvable:$true] %s53
      %s55 = sshll.u32 [#allocation6], 4
      %s56 = int_to_ptr.vmem [resolvable:$true] %s55
      %61 = dma.hbm_to_vmem [thread:$0]  %s54, 51200, %s56, [#allocation5], 320, 320, 20
    $region17: #{forward.1} parent=1 // pred_fallthru
      _
    // Predicated region
    $region18: #{forward.1} parent=1 // pred_check
      _
    $region19: #{forward.1} parent=1 // pred_check_branch
      %63 = sbr.rel (0) target = $region21
    $region20: #{forward.1} parent=1 // pred_region
      %65 = vsyncadd [#allocation8], 0
      %s67 = sshll.u32 %s4, 4
      %s68 = int_to_ptr.hbm [resolvable:$true] %s67
      %s69 = sshll.u32 [#allocation7], 4
      %s70 = int_to_ptr.vmem [resolvable:$true] %s69
      %72 = dma.hbm_to_vmem [thread:$0]  %s68, 80, %s70, [#allocation8]
    $region21: #{forward.1} parent=1 // pred_fallthru
      _
    // Predicated region
    $region22: #{forward.1} parent=1 // pred_check
      _
    $region23: #{forward.1} parent=1 // pred_check_branch
      %74 = sbr.rel (0) target = $region25
    $region24: #{forward.1} parent=1 // pred_region
      %76 = vsyncadd [#allocation8], 0
      %s77 = sshll.u32 %s5, 4
      %s78 = int_to_ptr.hbm [resolvable:$true] %s77
      %s79 = sshll.u32 [#allocation9], 4
      %s80 = int_to_ptr.vmem [resolvable:$true] %s79
      %85 = dma.hbm_to_vmem [thread:$0]  %s78, 51200, %s80, [#allocation8], 640, 640, 40
    $region25: #{forward.1} parent=1 // pred_fallthru
      _
    // Predicated region
    $region26: #{forward.1} parent=1 // pred_check
      _
    $region27: #{forward.1} parent=1 // pred_check_branch
      %87 = sbr.rel (0) target = $region29
    $region28: #{forward.1} parent=1 // pred_region
      %89 = vsyncadd [#allocation11], 0
      %s91 = sshll.u32 %s6, 4
      %s92 = int_to_ptr.hbm [resolvable:$true] %s91
      %s93 = sshll.u32 [#allocation10], 4
      %s94 = int_to_ptr.vmem [resolvable:$true] %s93
      %96 = dma.hbm_to_vmem [thread:$0]  %s92, 160, %s94, [#allocation11]
    $region29: #{forward.1} parent=1 // pred_fallthru
      _
    // Predicated region
    $region30: #{forward.1} parent=1 // pred_check
      _
    $region31: #{forward.1} parent=1 // pred_check_branch
      %98 = sbr.rel (0) target = $region33
    $region32: #{forward.1} parent=1 // pred_region
      %100 = vsyncadd [#allocation11], 0
      %s101 = sshll.u32 %s7, 4
      %s102 = int_to_ptr.hbm [resolvable:$true] %s101
      %s103 = sshll.u32 [#allocation12], 4
      %s104 = int_to_ptr.vmem [resolvable:$true] %s103
      %109 = dma.hbm_to_vmem [thread:$0]  %s102, 16384, %s104, [#allocation11], 512, 512, 32
    $region33: #{forward.1} parent=1 // pred_fallthru
      _
    // Predicated region
    $region34: #{forward.1} parent=1 // pred_check
      _
    $region35: #{forward.1} parent=1 // pred_check_branch
      %111 = sbr.rel (0) target = $region37
    $region36: #{forward.1} parent=1 // pred_region
      %113 = vsyncadd [#allocation14], 0
      %s115 = sshll.u32 %s8, 4
      %s116 = int_to_ptr.hbm [resolvable:$true] %s115
      %s117 = sshll.u32 [#allocation13], 4
      %s118 = int_to_ptr.vmem [resolvable:$true] %s117
      %120 = dma.hbm_to_vmem [thread:$0]  %s116, 128, %s118, [#allocation14]
    $region37: #{forward.1} parent=1 // pred_fallthru
      _
    // Predicated region
    $region38: #{forward.1} parent=1 // pred_check
      _
    $region39: #{forward.1} parent=1 // pred_check_branch
      %122 = sbr.rel (0) target = $region41
    $region40: #{forward.1} parent=1 // pred_region
      %124 = vsyncadd [#allocation14], 0
      %s125 = sshll.u32 %s9, 4
      %s126 = int_to_ptr.hbm [resolvable:$true] %s125
      %s127 = sshll.u32 [#allocation15], 4
      %s128 = int_to_ptr.vmem [resolvable:$true] %s127
      %133 = dma.hbm_to_vmem [thread:$0]  %s126, 8192, %s128, [#allocation14], 64, 64, 4
    $region41: #{forward.1} parent=1 // pred_fallthru
      _
    // Predicated region
    $region42: #{forward.1} parent=1 // pred_check
      _
    $region43: #{forward.1} parent=1 // pred_check_branch
      %135 = sbr.rel (0) target = $region45
    $region44: #{forward.1} parent=1 // pred_region
      %137 = vsyncadd [#allocation17], 0
      %s138 = sshll.u32 %s10, 4
      %s139 = int_to_ptr.hbm [resolvable:$true] %s138
      %s140 = sshll.u32 [#allocation16], 4
      %s141 = int_to_ptr.vmem [resolvable:$true] %s140
      %146 = dma.hbm_to_vmem [thread:$0]  %s139, 8192, %s141, [#allocation17], 64, 64, 4
    $region45: #{forward.1} parent=1 // pred_fallthru
      _
    // Predicated region
    $region46: #{forward.1} parent=1 // pred_check
      _
    $region47: #{forward.1} parent=1 // pred_check_branch
      %148 = sbr.rel (0) target = $region49
    $region48: #{forward.1} parent=1 // pred_region
      %150 = vsyncadd [#allocation17], 0
      %s152 = sshll.u32 %s11, 4
      %s153 = int_to_ptr.hbm [resolvable:$true] %s152
      %s154 = sshll.u32 [#allocation18], 4
      %s155 = int_to_ptr.vmem [resolvable:$true] %s154
      %157 = dma.hbm_to_vmem [thread:$0]  %s153, 16, %s155, [#allocation17]
    $region49: #{forward.1} parent=1 // pred_fallthru
      _
    // Predicated region
    $region50: #{forward.1} parent=1 // pred_check
      _
    $region51: #{forward.1} parent=1 // pred_check_branch
      %159 = sbr.rel (0) target = $region53
    $region52: #{forward.1} parent=1 // pred_region
      %161 = dma.done [#allocation3], 81920
    $region53: #{forward.1} parent=1 // pred_fallthru
      _
    // Predicated region
    $region54: #{forward.1} parent=1 // pred_check
      _
    $region55: #{forward.1} parent=1 // pred_check_branch
      %163 = sbr.rel (0) target = $region57
    $region56: #{forward.1} parent=1 // pred_region
      %165 = dma.done [#allocation5], 160
    $region57: #{forward.1} parent=1 // pred_fallthru
      _
    // Predicated region
    $region58: #{forward.1} parent=1 // pred_check
      _
    $region59: #{forward.1} parent=1 // pred_check_branch
      %167 = sbr.rel (0) target = $region61
    $region60: #{forward.1} parent=1 // pred_region
      %169 = dma.done [#allocation5], 51200
    $region61: #{forward.1} parent=1 // pred_fallthru
      _
    // Predicated region
    $region62: #{forward.1} parent=1 // pred_check
      _
    $region63: #{forward.1} parent=1 // pred_check_branch
      %171 = sbr.rel (0) target = $region65
    $region64: #{forward.1} parent=1 // pred_region
      %173 = dma.done [#allocation8], 80
    $region65: #{forward.1} parent=1 // pred_fallthru
      _
    // Predicated region
    $region66: #{forward.1} parent=1 // pred_check
      _
    $region67: #{forward.1} parent=1 // pred_check_branch
      %175 = sbr.rel (0) target = $region69
    $region68: #{forward.1} parent=1 // pred_region
      %177 = dma.done [#allocation8], 51200
    $region69: #{forward.1} parent=1 // pred_fallthru
      _
    // Predicated region
    $region70: #{forward.1} parent=1 // pred_check
      _
    $region71: #{forward.1} parent=1 // pred_check_branch
      %179 = sbr.rel (0) target = $region73
    $region72: #{forward.1} parent=1 // pred_region
      %181 = dma.done [#allocation11], 160
    $region73: #{forward.1} parent=1 // pred_fallthru
      _
    // Predicated region
    $region74: #{forward.1} parent=1 // pred_check
      _
    $region75: #{forward.1} parent=1 // pred_check_branch
      %183 = sbr.rel (0) target = $region77
    $region76: #{forward.1} parent=1 // pred_region
      %185 = dma.done [#allocation11], 16384
    $region77: #{forward.1} parent=1 // pred_fallthru
      _
    // Predicated region
    $region78: #{forward.1} parent=1 // pred_check
      _
    $region79: #{forward.1} parent=1 // pred_check_branch
      %187 = sbr.rel (0) target = $region81
    $region80: #{forward.1} parent=1 // pred_region
      %189 = dma.done [#allocation14], 128
    $region81: #{forward.1} parent=1 // pred_fallthru
      _
    // Predicated region
    $region82: #{forward.1} parent=1 // pred_check
      _
    $region83: #{forward.1} parent=1 // pred_check_branch
      %191 = sbr.rel (0) target = $region85
    $region84: #{forward.1} parent=1 // pred_region
      %193 = dma.done [#allocation14], 8192
    $region85: #{forward.1} parent=1 // pred_fallthru
      _
    // Predicated region
    $region86: #{forward.1} parent=1 // pred_check
      _
    $region87: #{forward.1} parent=1 // pred_check_branch
      %195 = sbr.rel (0) target = $region89
    $region88: #{forward.1} parent=1 // pred_region
      %197 = dma.done [#allocation17], 8192
    $region89: #{forward.1} parent=1 // pred_fallthru
      _
    // Predicated region
    $region90: #{forward.1} parent=1 // pred_check
      _
    $region91: #{forward.1} parent=1 // pred_check_branch
      %199 = sbr.rel (0) target = $region93
    $region92: #{forward.1} parent=1 // pred_region
      %201 = dma.done [#allocation17], 16
    $region93: #{forward.1} parent=1 // pred_fallthru
      _
    %v202 = vld [vmem:[%s0] sm:$0xff]
    %v203 = vld [vmem:[%s0 + $0x8] sm:$0xff]
    %v204 = vld [vmem:[%s0 + $0x10] sm:$0xff]
    %v205 = vld [vmem:[%s0 + $0x18] sm:$0xff]
    %v206 = vld [vmem:[%s0 + $0x20] sm:$0xff]
    %v207 = vld [vmem:[%s0 + $0x28] sm:$0xff]
    %v208 = vld [vmem:[%s0 + $0x30] sm:$0xff]
    %v209 = vld [vmem:[%s0 + $0x38] sm:$0xff]
    %v210 = vld [vmem:[#allocation2] sm:$0xff]
    %v211 = vld [vmem:[#allocation2 + $0x8] sm:$0xff]
    %v212 = vld [vmem:[#allocation2 + $0x10] sm:$0xff]
    %v213 = vld [vmem:[#allocation2 + $0x18] sm:$0xff]
    %v214 = vld [vmem:[#allocation2 + $0x20] sm:$0xff]
    %v215 = vld [vmem:[#allocation2 + $0x28] sm:$0xff]
    %v216 = vld [vmem:[#allocation2 + $0x30] sm:$0xff]
    %v217 = vld [vmem:[#allocation2 + $0x38] sm:$0xff]
    %v218 = vld [vmem:[#allocation2 + $0x40] sm:$0xff]
    %v219 = vld [vmem:[#allocation2 + $0x48] sm:$0xff]
    %v220 = vld [vmem:[#allocation2 + $0x50] sm:$0xff]
    %v221 = vld [vmem:[#allocation2 + $0x58] sm:$0xff]
    %v222 = vld [vmem:[#allocation2 + $0x60] sm:$0xff]
    %v223 = vld [vmem:[#allocation2 + $0x68] sm:$0xff]
    %v224 = vld [vmem:[#allocation2 + $0x70] sm:$0xff]
    %v225 = vld [vmem:[#allocation2 + $0x78] sm:$0xff]
    %v226 = vld [vmem:[#allocation2 + $0x80] sm:$0xff]
    %v227 = vld [vmem:[#allocation2 + $0x88] sm:$0xff]
    %v228 = vld [vmem:[#allocation2 + $0x90] sm:$0xff]
    %v229 = vld [vmem:[#allocation2 + $0x98] sm:$0xff]
    %v230 = vld [vmem:[#allocation2 + $0xa0] sm:$0xff]
    %v231 = vld [vmem:[#allocation2 + $0xa8] sm:$0xff]
    %v232 = vld [vmem:[#allocation2 + $0xb0] sm:$0xff]
    %v233 = vld [vmem:[#allocation2 + $0xb8] sm:$0xff]
    %v234 = vld [vmem:[#allocation2 + $0xc0] sm:$0xff]
    %v235 = vld [vmem:[#allocation2 + $0xc8] sm:$0xff]
    %v236 = vld [vmem:[#allocation2 + $0xd0] sm:$0xff]
    %v237 = vld [vmem:[#allocation2 + $0xd8] sm:$0xff]
    %v238 = vld [vmem:[#allocation2 + $0xe0] sm:$0xff]
    %v239 = vld [vmem:[#allocation2 + $0xe8] sm:$0xff]
    %v240 = vld [vmem:[#allocation2 + $0xf0] sm:$0xff]
    %v241 = vld [vmem:[#allocation2 + $0xf8] sm:$0xff]
    %v242 = vld [vmem:[#allocation2 + $0x100] sm:$0xff]
    %v243 = vld [vmem:[#allocation2 + $0x108] sm:$0xff]
    %v244 = vld [vmem:[#allocation2 + $0x110] sm:$0xff]
    %v245 = vld [vmem:[#allocation2 + $0x118] sm:$0xff]
    %v246 = vld [vmem:[#allocation2 + $0x120] sm:$0xff]
    %v247 = vld [vmem:[#allocation2 + $0x128] sm:$0xff]
    %v248 = vld [vmem:[#allocation2 + $0x130] sm:$0xff]
    %v249 = vld [vmem:[#allocation2 + $0x138] sm:$0xff]
    %v250 = vld [vmem:[#allocation2 + $0x140] sm:$0xff]
    %v251 = vld [vmem:[#allocation2 + $0x148] sm:$0xff]
    %v252 = vld [vmem:[#allocation2 + $0x150] sm:$0xff]
    %v253 = vld [vmem:[#allocation2 + $0x158] sm:$0xff]
    %v254 = vld [vmem:[#allocation2 + $0x160] sm:$0xff]
    %v255 = vld [vmem:[#allocation2 + $0x168] sm:$0xff]
    %v256 = vld [vmem:[#allocation2 + $0x170] sm:$0xff]
    %v257 = vld [vmem:[#allocation2 + $0x178] sm:$0xff]
    %v258 = vld [vmem:[#allocation2 + $0x180] sm:$0xff]
    %v259 = vld [vmem:[#allocation2 + $0x188] sm:$0xff]
    %v260 = vld [vmem:[#allocation2 + $0x190] sm:$0xff]
    %v261 = vld [vmem:[#allocation2 + $0x198] sm:$0xff]
    %v262 = vld [vmem:[#allocation2 + $0x1a0] sm:$0xff]
    %v263 = vld [vmem:[#allocation2 + $0x1a8] sm:$0xff]
    %v264 = vld [vmem:[#allocation2 + $0x1b0] sm:$0xff]
    %v265 = vld [vmem:[#allocation2 + $0x1b8] sm:$0xff]
    %v266 = vld [vmem:[#allocation2 + $0x1c0] sm:$0xff]
    %v267 = vld [vmem:[#allocation2 + $0x1c8] sm:$0xff]
    %v268 = vld [vmem:[#allocation2 + $0x1d0] sm:$0xff]
    %v269 = vld [vmem:[#allocation2 + $0x1d8] sm:$0xff]
    %v270 = vld [vmem:[#allocation2 + $0x1e0] sm:$0xff]
    %v271 = vld [vmem:[#allocation2 + $0x1e8] sm:$0xff]
    %v272 = vld [vmem:[#allocation2 + $0x1f0] sm:$0xff]
    %v273 = vld [vmem:[#allocation2 + $0x1f8] sm:$0xff]
    %v274 = vld [vmem:[#allocation2 + $0x200] sm:$0xff]
    %v275 = vld [vmem:[#allocation2 + $0x208] sm:$0xff]
    %v276 = vld [vmem:[#allocation2 + $0x210] sm:$0xff]
    %v277 = vld [vmem:[#allocation2 + $0x218] sm:$0xff]
    %v278 = vld [vmem:[#allocation2 + $0x220] sm:$0xff]
    %v279 = vld [vmem:[#allocation2 + $0x228] sm:$0xff]
    %v280 = vld [vmem:[#allocation2 + $0x230] sm:$0xff]
    %v281 = vld [vmem:[#allocation2 + $0x238] sm:$0xff]
    %v282 = vld [vmem:[#allocation2 + $0x240] sm:$0xff]
    %v283 = vld [vmem:[#allocation2 + $0x248] sm:$0xff]
    %v284 = vld [vmem:[#allocation2 + $0x250] sm:$0xff]
    %v285 = vld [vmem:[#allocation2 + $0x258] sm:$0xff]
    %v286 = vld [vmem:[#allocation2 + $0x260] sm:$0xff]
    %v287 = vld [vmem:[#allocation2 + $0x268] sm:$0xff]
    %v288 = vld [vmem:[#allocation2 + $0x270] sm:$0xff]
    %v289 = vld [vmem:[#allocation2 + $0x278] sm:$0xff]
    %v290 = vld [vmem:[#allocation2 + $0x280] sm:$0xff]
    %v291 = vld [vmem:[#allocation2 + $0x288] sm:$0xff]
    %v292 = vld [vmem:[#allocation2 + $0x290] sm:$0xff]
    %v293 = vld [vmem:[#allocation2 + $0x298] sm:$0xff]
    %v294 = vld [vmem:[#allocation2 + $0x2a0] sm:$0xff]
    %v295 = vld [vmem:[#allocation2 + $0x2a8] sm:$0xff]
    %v296 = vld [vmem:[#allocation2 + $0x2b0] sm:$0xff]
    %v297 = vld [vmem:[#allocation2 + $0x2b8] sm:$0xff]
    %v298 = vld [vmem:[#allocation2 + $0x2c0] sm:$0xff]
    %v299 = vld [vmem:[#allocation2 + $0x2c8] sm:$0xff]
    %v300 = vld [vmem:[#allocation2 + $0x2d0] sm:$0xff]
    %v301 = vld [vmem:[#allocation2 + $0x2d8] sm:$0xff]
    %v302 = vld [vmem:[#allocation2 + $0x2e0] sm:$0xff]
    %v303 = vld [vmem:[#allocation2 + $0x2e8] sm:$0xff]
    %v304 = vld [vmem:[#allocation2 + $0x2f0] sm:$0xff]
    %v305 = vld [vmem:[#allocation2 + $0x2f8] sm:$0xff]
    %v306 = vld [vmem:[#allocation2 + $0x300] sm:$0xff]
    %v307 = vld [vmem:[#allocation2 + $0x308] sm:$0xff]
    %v308 = vld [vmem:[#allocation2 + $0x310] sm:$0xff]
    %v309 = vld [vmem:[#allocation2 + $0x318] sm:$0xff]
    %v310 = vld [vmem:[#allocation2 + $0x320] sm:$0xff]
    %v311 = vld [vmem:[#allocation2 + $0x328] sm:$0xff]
    %v312 = vld [vmem:[#allocation2 + $0x330] sm:$0xff]
    %v313 = vld [vmem:[#allocation2 + $0x338] sm:$0xff]
    %v314 = vld [vmem:[#allocation2 + $0x340] sm:$0xff]
    %v315 = vld [vmem:[#allocation2 + $0x348] sm:$0xff]
    %v316 = vld [vmem:[#allocation2 + $0x350] sm:$0xff]
    %v317 = vld [vmem:[#allocation2 + $0x358] sm:$0xff]
    %v318 = vld [vmem:[#allocation2 + $0x360] sm:$0xff]
    %v319 = vld [vmem:[#allocation2 + $0x368] sm:$0xff]
    %v320 = vld [vmem:[#allocation2 + $0x370] sm:$0xff]
    %v321 = vld [vmem:[#allocation2 + $0x378] sm:$0xff]
    %v322 = vld [vmem:[#allocation2 + $0x380] sm:$0xff]
    %v323 = vld [vmem:[#allocation2 + $0x388] sm:$0xff]
    %v324 = vld [vmem:[#allocation2 + $0x390] sm:$0xff]
    %v325 = vld [vmem:[#allocation2 + $0x398] sm:$0xff]
    %v326 = vld [vmem:[#allocation2 + $0x3a0] sm:$0xff]
    %v327 = vld [vmem:[#allocation2 + $0x3a8] sm:$0xff]
    %v328 = vld [vmem:[#allocation2 + $0x3b0] sm:$0xff]
    %v329 = vld [vmem:[#allocation2 + $0x3b8] sm:$0xff]
    %v330 = vld [vmem:[#allocation2 + $0x3c0] sm:$0xff]
    %v331 = vld [vmem:[#allocation2 + $0x3c8] sm:$0xff]
    %v332 = vld [vmem:[#allocation2 + $0x3d0] sm:$0xff]
    %v333 = vld [vmem:[#allocation2 + $0x3d8] sm:$0xff]
    %v334 = vld [vmem:[#allocation2 + $0x3e0] sm:$0xff]
    %v335 = vld [vmem:[#allocation2 + $0x3e8] sm:$0xff]
    %v336 = vld [vmem:[#allocation2 + $0x3f0] sm:$0xff]
    %v337 = vld [vmem:[#allocation2 + $0x3f8] sm:$0xff]
    %v338 = vld [vmem:[#allocation2 + $0x400] sm:$0xff]
    %v339 = vld [vmem:[#allocation2 + $0x408] sm:$0xff]
    %v340 = vld [vmem:[#allocation2 + $0x410] sm:$0xff]
    %v341 = vld [vmem:[#allocation2 + $0x418] sm:$0xff]
    %v342 = vld [vmem:[#allocation2 + $0x420] sm:$0xff]
    %v343 = vld [vmem:[#allocation2 + $0x428] sm:$0xff]
    %v344 = vld [vmem:[#allocation2 + $0x430] sm:$0xff]
    %v345 = vld [vmem:[#allocation2 + $0x438] sm:$0xff]
    %v346 = vld [vmem:[#allocation2 + $0x440] sm:$0xff]
    %v347 = vld [vmem:[#allocation2 + $0x448] sm:$0xff]
    %v348 = vld [vmem:[#allocation2 + $0x450] sm:$0xff]
    %v349 = vld [vmem:[#allocation2 + $0x458] sm:$0xff]
    %v350 = vld [vmem:[#allocation2 + $0x460] sm:$0xff]
    %v351 = vld [vmem:[#allocation2 + $0x468] sm:$0xff]
    %v352 = vld [vmem:[#allocation2 + $0x470] sm:$0xff]
    %v353 = vld [vmem:[#allocation2 + $0x478] sm:$0xff]
    %v354 = vld [vmem:[#allocation2 + $0x480] sm:$0xff]
    %v355 = vld [vmem:[#allocation2 + $0x488] sm:$0xff]
    %v356 = vld [vmem:[#allocation2 + $0x490] sm:$0xff]
    %v357 = vld [vmem:[#allocation2 + $0x498] sm:$0xff]
    %v358 = vld [vmem:[#allocation2 + $0x4a0] sm:$0xff]
    %v359 = vld [vmem:[#allocation2 + $0x4a8] sm:$0xff]
    %v360 = vld [vmem:[#allocation2 + $0x4b0] sm:$0xff]
    %v361 = vld [vmem:[#allocation2 + $0x4b8] sm:$0xff]
    %v362 = vld [vmem:[#allocation2 + $0x4c0] sm:$0xff]
    %v363 = vld [vmem:[#allocation2 + $0x4c8] sm:$0xff]
    %v364 = vld [vmem:[#allocation2 + $0x4d0] sm:$0xff]
    %v365 = vld [vmem:[#allocation2 + $0x4d8] sm:$0xff]
    %v366 = vld [vmem:[#allocation2 + $0x4e0] sm:$0xff]
    %v367 = vld [vmem:[#allocation2 + $0x4e8] sm:$0xff]
    %v368 = vld [vmem:[#allocation2 + $0x4f0] sm:$0xff]
    %v369 = vld [vmem:[#allocation2 + $0x4f8] sm:$0xff]
    %v370 = vld [vmem:[#allocation2 + $0x500] sm:$0xff]
    %v371 = vld [vmem:[#allocation2 + $0x508] sm:$0xff]
    %v372 = vld [vmem:[#allocation2 + $0x510] sm:$0xff]
    %v373 = vld [vmem:[#allocation2 + $0x518] sm:$0xff]
    %v374 = vld [vmem:[#allocation2 + $0x520] sm:$0xff]
    %v375 = vld [vmem:[#allocation2 + $0x528] sm:$0xff]
    %v376 = vld [vmem:[#allocation2 + $0x530] sm:$0xff]
    %v377 = vld [vmem:[#allocation2 + $0x538] sm:$0xff]
    %v378 = vld [vmem:[#allocation2 + $0x540] sm:$0xff]
    %v379 = vld [vmem:[#allocation2 + $0x548] sm:$0xff]
    %v380 = vld [vmem:[#allocation2 + $0x550] sm:$0xff]
    %v381 = vld [vmem:[#allocation2 + $0x558] sm:$0xff]
    %v382 = vld [vmem:[#allocation2 + $0x560] sm:$0xff]
    %v383 = vld [vmem:[#allocation2 + $0x568] sm:$0xff]
    %v384 = vld [vmem:[#allocation2 + $0x570] sm:$0xff]
    %v385 = vld [vmem:[#allocation2 + $0x578] sm:$0xff]
    %v386 = vld [vmem:[#allocation2 + $0x580] sm:$0xff]
    %v387 = vld [vmem:[#allocation2 + $0x588] sm:$0xff]
    %v388 = vld [vmem:[#allocation2 + $0x590] sm:$0xff]
    %v389 = vld [vmem:[#allocation2 + $0x598] sm:$0xff]
    %v390 = vld [vmem:[#allocation2 + $0x5a0] sm:$0xff]
    %v391 = vld [vmem:[#allocation2 + $0x5a8] sm:$0xff]
    %v392 = vld [vmem:[#allocation2 + $0x5b0] sm:$0xff]
    %v393 = vld [vmem:[#allocation2 + $0x5b8] sm:$0xff]
    %v394 = vld [vmem:[#allocation2 + $0x5c0] sm:$0xff]
    %v395 = vld [vmem:[#allocation2 + $0x5c8] sm:$0xff]
    %v396 = vld [vmem:[#allocation2 + $0x5d0] sm:$0xff]
    %v397 = vld [vmem:[#allocation2 + $0x5d8] sm:$0xff]
    %v398 = vld [vmem:[#allocation2 + $0x5e0] sm:$0xff]
    %v399 = vld [vmem:[#allocation2 + $0x5e8] sm:$0xff]
    %v400 = vld [vmem:[#allocation2 + $0x5f0] sm:$0xff]
    %v401 = vld [vmem:[#allocation2 + $0x5f8] sm:$0xff]
    %v402 = vld [vmem:[#allocation2 + $0x600] sm:$0xff]
    %v403 = vld [vmem:[#allocation2 + $0x608] sm:$0xff]
    %v404 = vld [vmem:[#allocation2 + $0x610] sm:$0xff]
    %v405 = vld [vmem:[#allocation2 + $0x618] sm:$0xff]
    %v406 = vld [vmem:[#allocation2 + $0x620] sm:$0xff]
    %v407 = vld [vmem:[#allocation2 + $0x628] sm:$0xff]
    %v408 = vld [vmem:[#allocation2 + $0x630] sm:$0xff]
    %v409 = vld [vmem:[#allocation2 + $0x638] sm:$0xff]
    %v410 = vld [vmem:[#allocation2 + $0x640] sm:$0xff]
    %v411 = vld [vmem:[#allocation2 + $0x648] sm:$0xff]
    %v412 = vld [vmem:[#allocation2 + $0x650] sm:$0xff]
    %v413 = vld [vmem:[#allocation2 + $0x658] sm:$0xff]
    %v414 = vld [vmem:[#allocation2 + $0x660] sm:$0xff]
    %v415 = vld [vmem:[#allocation2 + $0x668] sm:$0xff]
    %v416 = vld [vmem:[#allocation2 + $0x670] sm:$0xff]
    %v417 = vld [vmem:[#allocation2 + $0x678] sm:$0xff]
    %v418 = vld [vmem:[#allocation2 + $0x680] sm:$0xff]
    %v419 = vld [vmem:[#allocation2 + $0x688] sm:$0xff]
    %v420 = vld [vmem:[#allocation2 + $0x690] sm:$0xff]
    %v421 = vld [vmem:[#allocation2 + $0x698] sm:$0xff]
    %v422 = vld [vmem:[#allocation2 + $0x6a0] sm:$0xff]
    %v423 = vld [vmem:[#allocation2 + $0x6a8] sm:$0xff]
    %v424 = vld [vmem:[#allocation2 + $0x6b0] sm:$0xff]
    %v425 = vld [vmem:[#allocation2 + $0x6b8] sm:$0xff]
    %v426 = vld [vmem:[#allocation2 + $0x6c0] sm:$0xff]
    %v427 = vld [vmem:[#allocation2 + $0x6c8] sm:$0xff]
    %v428 = vld [vmem:[#allocation2 + $0x6d0] sm:$0xff]
    %v429 = vld [vmem:[#allocation2 + $0x6d8] sm:$0xff]
    %v430 = vld [vmem:[#allocation2 + $0x6e0] sm:$0xff]
    %v431 = vld [vmem:[#allocation2 + $0x6e8] sm:$0xff]
    %v432 = vld [vmem:[#allocation2 + $0x6f0] sm:$0xff]
    %v433 = vld [vmem:[#allocation2 + $0x6f8] sm:$0xff]
    %v434 = vld [vmem:[#allocation2 + $0x700] sm:$0xff]
    %v435 = vld [vmem:[#allocation2 + $0x708] sm:$0xff]
    %v436 = vld [vmem:[#allocation2 + $0x710] sm:$0xff]
    %v437 = vld [vmem:[#allocation2 + $0x718] sm:$0xff]
    %v438 = vld [vmem:[#allocation2 + $0x720] sm:$0xff]
    %v439 = vld [vmem:[#allocation2 + $0x728] sm:$0xff]
    %v440 = vld [vmem:[#allocation2 + $0x730] sm:$0xff]
    %v441 = vld [vmem:[#allocation2 + $0x738] sm:$0xff]
    %v442 = vld [vmem:[#allocation2 + $0x740] sm:$0xff]
    %v443 = vld [vmem:[#allocation2 + $0x748] sm:$0xff]
    %v444 = vld [vmem:[#allocation2 + $0x750] sm:$0xff]
    %v445 = vld [vmem:[#allocation2 + $0x758] sm:$0xff]
    %v446 = vld [vmem:[#allocation2 + $0x760] sm:$0xff]
    %v447 = vld [vmem:[#allocation2 + $0x768] sm:$0xff]
    %v448 = vld [vmem:[#allocation2 + $0x770] sm:$0xff]
    %v449 = vld [vmem:[#allocation2 + $0x778] sm:$0xff]
    %v450 = vld [vmem:[#allocation2 + $0x780] sm:$0xff]
    %v451 = vld [vmem:[#allocation2 + $0x788] sm:$0xff]
    %v452 = vld [vmem:[#allocation2 + $0x790] sm:$0xff]
    %v453 = vld [vmem:[#allocation2 + $0x798] sm:$0xff]
    %v454 = vld [vmem:[#allocation2 + $0x7a0] sm:$0xff]
    %v455 = vld [vmem:[#allocation2 + $0x7a8] sm:$0xff]
    %v456 = vld [vmem:[#allocation2 + $0x7b0] sm:$0xff]
    %v457 = vld [vmem:[#allocation2 + $0x7b8] sm:$0xff]
    %v458 = vld [vmem:[#allocation2 + $0x7c0] sm:$0xff]
    %v459 = vld [vmem:[#allocation2 + $0x7c8] sm:$0xff]
    %v460 = vld [vmem:[#allocation2 + $0x7d0] sm:$0xff]
    %v461 = vld [vmem:[#allocation2 + $0x7d8] sm:$0xff]
    %v462 = vld [vmem:[#allocation2 + $0x7e0] sm:$0xff]
    %v463 = vld [vmem:[#allocation2 + $0x7e8] sm:$0xff]
    %v464 = vld [vmem:[#allocation2 + $0x7f0] sm:$0xff]
    %v465 = vld [vmem:[#allocation2 + $0x7f8] sm:$0xff]
    %v466 = vld [vmem:[#allocation2 + $0x800] sm:$0xff]
    %v467 = vld [vmem:[#allocation2 + $0x808] sm:$0xff]
    %v468 = vld [vmem:[#allocation2 + $0x810] sm:$0xff]
    %v469 = vld [vmem:[#allocation2 + $0x818] sm:$0xff]
    %v470 = vld [vmem:[#allocation2 + $0x820] sm:$0xff]
    %v471 = vld [vmem:[#allocation2 + $0x828] sm:$0xff]
    %v472 = vld [vmem:[#allocation2 + $0x830] sm:$0xff]
    %v473 = vld [vmem:[#allocation2 + $0x838] sm:$0xff]
    %v474 = vld [vmem:[#allocation2 + $0x840] sm:$0xff]
    %v475 = vld [vmem:[#allocation2 + $0x848] sm:$0xff]
    %v476 = vld [vmem:[#allocation2 + $0x850] sm:$0xff]
    %v477 = vld [vmem:[#allocation2 + $0x858] sm:$0xff]
    %v478 = vld [vmem:[#allocation2 + $0x860] sm:$0xff]
    %v479 = vld [vmem:[#allocation2 + $0x868] sm:$0xff]
    %v480 = vld [vmem:[#allocation2 + $0x870] sm:$0xff]
    %v481 = vld [vmem:[#allocation2 + $0x878] sm:$0xff]
    %v482 = vld [vmem:[#allocation2 + $0x880] sm:$0xff]
    %v483 = vld [vmem:[#allocation2 + $0x888] sm:$0xff]
    %v484 = vld [vmem:[#allocation2 + $0x890] sm:$0xff]
    %v485 = vld [vmem:[#allocation2 + $0x898] sm:$0xff]
    %v486 = vld [vmem:[#allocation2 + $0x8a0] sm:$0xff]
    %v487 = vld [vmem:[#allocation2 + $0x8a8] sm:$0xff]
    %v488 = vld [vmem:[#allocation2 + $0x8b0] sm:$0xff]
    %v489 = vld [vmem:[#allocation2 + $0x8b8] sm:$0xff]
    %v490 = vld [vmem:[#allocation2 + $0x8c0] sm:$0xff]
    %v491 = vld [vmem:[#allocation2 + $0x8c8] sm:$0xff]
    %v492 = vld [vmem:[#allocation2 + $0x8d0] sm:$0xff]
    %v493 = vld [vmem:[#allocation2 + $0x8d8] sm:$0xff]
    %v494 = vld [vmem:[#allocation2 + $0x8e0] sm:$0xff]
    %v495 = vld [vmem:[#allocation2 + $0x8e8] sm:$0xff]
    %v496 = vld [vmem:[#allocation2 + $0x8f0] sm:$0xff]
    %v497 = vld [vmem:[#allocation2 + $0x8f8] sm:$0xff]
    %v498 = vld [vmem:[#allocation2 + $0x900] sm:$0xff]
    %v499 = vld [vmem:[#allocation2 + $0x908] sm:$0xff]
    %v500 = vld [vmem:[#allocation2 + $0x910] sm:$0xff]
    %v501 = vld [vmem:[#allocation2 + $0x918] sm:$0xff]
    %v502 = vld [vmem:[#allocation2 + $0x920] sm:$0xff]
    %v503 = vld [vmem:[#allocation2 + $0x928] sm:$0xff]
    %v504 = vld [vmem:[#allocation2 + $0x930] sm:$0xff]
    %v505 = vld [vmem:[#allocation2 + $0x938] sm:$0xff]
    %v506 = vld [vmem:[#allocation2 + $0x940] sm:$0xff]
    %v507 = vld [vmem:[#allocation2 + $0x948] sm:$0xff]
    %v508 = vld [vmem:[#allocation2 + $0x950] sm:$0xff]
    %v509 = vld [vmem:[#allocation2 + $0x958] sm:$0xff]
    %v510 = vld [vmem:[#allocation2 + $0x960] sm:$0xff]
    %v511 = vld [vmem:[#allocation2 + $0x968] sm:$0xff]
    %v512 = vld [vmem:[#allocation2 + $0x970] sm:$0xff]
    %v513 = vld [vmem:[#allocation2 + $0x978] sm:$0xff]
    %v514 = vld [vmem:[#allocation2 + $0x980] sm:$0xff]
    %v515 = vld [vmem:[#allocation2 + $0x988] sm:$0xff]
    %v516 = vld [vmem:[#allocation2 + $0x990] sm:$0xff]
    %v517 = vld [vmem:[#allocation2 + $0x998] sm:$0xff]
    %v518 = vld [vmem:[#allocation2 + $0x9a0] sm:$0xff]
    %v519 = vld [vmem:[#allocation2 + $0x9a8] sm:$0xff]
    %v520 = vld [vmem:[#allocation2 + $0x9b0] sm:$0xff]
    %v521 = vld [vmem:[#allocation2 + $0x9b8] sm:$0xff]
    %v522 = vld [vmem:[#allocation2 + $0x9c0] sm:$0xff]
    %v523 = vld [vmem:[#allocation2 + $0x9c8] sm:$0xff]
    %v524 = vld [vmem:[#allocation2 + $0x9d0] sm:$0xff]
    %v525 = vld [vmem:[#allocation2 + $0x9d8] sm:$0xff]
    %v526 = vld [vmem:[#allocation2 + $0x9e0] sm:$0xff]
    %v527 = vld [vmem:[#allocation2 + $0x9e8] sm:$0xff]
    %v528 = vld [vmem:[#allocation2 + $0x9f0] sm:$0xff]
    %v529 = vld [vmem:[#allocation2 + $0x9f8] sm:$0xff]
    %v530 = vld [vmem:[#allocation2 + $0xa00] sm:$0xff]
    %v531 = vld [vmem:[#allocation2 + $0xa08] sm:$0xff]
    %v532 = vld [vmem:[#allocation2 + $0xa10] sm:$0xff]
    %v533 = vld [vmem:[#allocation2 + $0xa18] sm:$0xff]
    %v534 = vld [vmem:[#allocation2 + $0xa20] sm:$0xff]
    %v535 = vld [vmem:[#allocation2 + $0xa28] sm:$0xff]
    %v536 = vld [vmem:[#allocation2 + $0xa30] sm:$0xff]
    %v537 = vld [vmem:[#allocation2 + $0xa38] sm:$0xff]
    %v538 = vld [vmem:[#allocation2 + $0xa40] sm:$0xff]
    %v539 = vld [vmem:[#allocation2 + $0xa48] sm:$0xff]
    %v540 = vld [vmem:[#allocation2 + $0xa50] sm:$0xff]
    %v541 = vld [vmem:[#allocation2 + $0xa58] sm:$0xff]
    %v542 = vld [vmem:[#allocation2 + $0xa60] sm:$0xff]
    %v543 = vld [vmem:[#allocation2 + $0xa68] sm:$0xff]
    %v544 = vld [vmem:[#allocation2 + $0xa70] sm:$0xff]
    %v545 = vld [vmem:[#allocation2 + $0xa78] sm:$0xff]
    %v546 = vld [vmem:[#allocation2 + $0xa80] sm:$0xff]
    %v547 = vld [vmem:[#allocation2 + $0xa88] sm:$0xff]
    %v548 = vld [vmem:[#allocation2 + $0xa90] sm:$0xff]
    %v549 = vld [vmem:[#allocation2 + $0xa98] sm:$0xff]
    %v550 = vld [vmem:[#allocation2 + $0xaa0] sm:$0xff]
    %v551 = vld [vmem:[#allocation2 + $0xaa8] sm:$0xff]
    %v552 = vld [vmem:[#allocation2 + $0xab0] sm:$0xff]
    %v553 = vld [vmem:[#allocation2 + $0xab8] sm:$0xff]
    %v554 = vld [vmem:[#allocation2 + $0xac0] sm:$0xff]
    %v555 = vld [vmem:[#allocation2 + $0xac8] sm:$0xff]
    %v556 = vld [vmem:[#allocation2 + $0xad0] sm:$0xff]
    %v557 = vld [vmem:[#allocation2 + $0xad8] sm:$0xff]
    %v558 = vld [vmem:[#allocation2 + $0xae0] sm:$0xff]
    %v559 = vld [vmem:[#allocation2 + $0xae8] sm:$0xff]
    %v560 = vld [vmem:[#allocation2 + $0xaf0] sm:$0xff]
    %v561 = vld [vmem:[#allocation2 + $0xaf8] sm:$0xff]
    %v562 = vld [vmem:[#allocation2 + $0xb00] sm:$0xff]
    %v563 = vld [vmem:[#allocation2 + $0xb08] sm:$0xff]
    %v564 = vld [vmem:[#allocation2 + $0xb10] sm:$0xff]
    %v565 = vld [vmem:[#allocation2 + $0xb18] sm:$0xff]
    %v566 = vld [vmem:[#allocation2 + $0xb20] sm:$0xff]
    %v567 = vld [vmem:[#allocation2 + $0xb28] sm:$0xff]
    %v568 = vld [vmem:[#allocation2 + $0xb30] sm:$0xff]
    %v569 = vld [vmem:[#allocation2 + $0xb38] sm:$0xff]
    %v570 = vld [vmem:[#allocation2 + $0xb40] sm:$0xff]
    %v571 = vld [vmem:[#allocation2 + $0xb48] sm:$0xff]
    %v572 = vld [vmem:[#allocation2 + $0xb50] sm:$0xff]
    %v573 = vld [vmem:[#allocation2 + $0xb58] sm:$0xff]
    %v574 = vld [vmem:[#allocation2 + $0xb60] sm:$0xff]
    %v575 = vld [vmem:[#allocation2 + $0xb68] sm:$0xff]
    %v576 = vld [vmem:[#allocation2 + $0xb70] sm:$0xff]
    %v577 = vld [vmem:[#allocation2 + $0xb78] sm:$0xff]
    %v578 = vld [vmem:[#allocation2 + $0xb80] sm:$0xff]
    %v579 = vld [vmem:[#allocation2 + $0xb88] sm:$0xff]
    %v580 = vld [vmem:[#allocation2 + $0xb90] sm:$0xff]
    %v581 = vld [vmem:[#allocation2 + $0xb98] sm:$0xff]
    %v582 = vld [vmem:[#allocation2 + $0xba0] sm:$0xff]
    %v583 = vld [vmem:[#allocation2 + $0xba8] sm:$0xff]
    %v584 = vld [vmem:[#allocation2 + $0xbb0] sm:$0xff]
    %v585 = vld [vmem:[#allocation2 + $0xbb8] sm:$0xff]
    %v586 = vld [vmem:[#allocation2 + $0xbc0] sm:$0xff]
    %v587 = vld [vmem:[#allocation2 + $0xbc8] sm:$0xff]
    %v588 = vld [vmem:[#allocation2 + $0xbd0] sm:$0xff]
    %v589 = vld [vmem:[#allocation2 + $0xbd8] sm:$0xff]
    %v590 = vld [vmem:[#allocation2 + $0xbe0] sm:$0xff]
    %v591 = vld [vmem:[#allocation2 + $0xbe8] sm:$0xff]
    %v592 = vld [vmem:[#allocation2 + $0xbf0] sm:$0xff]
    %v593 = vld [vmem:[#allocation2 + $0xbf8] sm:$0xff]
    %v594 = vld [vmem:[#allocation2 + $0xc00] sm:$0xff]
    %v595 = vld [vmem:[#allocation2 + $0xc08] sm:$0xff]
    %v596 = vld [vmem:[#allocation2 + $0xc10] sm:$0xff]
    %v597 = vld [vmem:[#allocation2 + $0xc18] sm:$0xff]
    %v598 = vld [vmem:[#allocation2 + $0xc20] sm:$0xff]
    %v599 = vld [vmem:[#allocation2 + $0xc28] sm:$0xff]
    %v600 = vld [vmem:[#allocation2 + $0xc30] sm:$0xff]
    %v601 = vld [vmem:[#allocation2 + $0xc38] sm:$0xff]
    %v602 = vld [vmem:[#allocation2 + $0xc40] sm:$0xff]
    %v603 = vld [vmem:[#allocation2 + $0xc48] sm:$0xff]
    %v604 = vld [vmem:[#allocation2 + $0xc50] sm:$0xff]
    %v605 = vld [vmem:[#allocation2 + $0xc58] sm:$0xff]
    %v606 = vld [vmem:[#allocation2 + $0xc60] sm:$0xff]
    %v607 = vld [vmem:[#allocation2 + $0xc68] sm:$0xff]
    %v608 = vld [vmem:[#allocation2 + $0xc70] sm:$0xff]
    %v609 = vld [vmem:[#allocation2 + $0xc78] sm:$0xff]
    %v610 = vld [vmem:[#allocation2 + $0xc80] sm:$0xff]
    %v611 = vld [vmem:[#allocation2 + $0xc88] sm:$0xff]
    %v612 = vld [vmem:[#allocation2 + $0xc90] sm:$0xff]
    %v613 = vld [vmem:[#allocation2 + $0xc98] sm:$0xff]
    %v614 = vld [vmem:[#allocation2 + $0xca0] sm:$0xff]
    %v615 = vld [vmem:[#allocation2 + $0xca8] sm:$0xff]
    %v616 = vld [vmem:[#allocation2 + $0xcb0] sm:$0xff]
    %v617 = vld [vmem:[#allocation2 + $0xcb8] sm:$0xff]
    %v618 = vld [vmem:[#allocation2 + $0xcc0] sm:$0xff]
    %v619 = vld [vmem:[#allocation2 + $0xcc8] sm:$0xff]
    %v620 = vld [vmem:[#allocation2 + $0xcd0] sm:$0xff]
    %v621 = vld [vmem:[#allocation2 + $0xcd8] sm:$0xff]
    %v622 = vld [vmem:[#allocation2 + $0xce0] sm:$0xff]
    %v623 = vld [vmem:[#allocation2 + $0xce8] sm:$0xff]
    %v624 = vld [vmem:[#allocation2 + $0xcf0] sm:$0xff]
    %v625 = vld [vmem:[#allocation2 + $0xcf8] sm:$0xff]
    %v626 = vld [vmem:[#allocation2 + $0xd00] sm:$0xff]
    %v627 = vld [vmem:[#allocation2 + $0xd08] sm:$0xff]
    %v628 = vld [vmem:[#allocation2 + $0xd10] sm:$0xff]
    %v629 = vld [vmem:[#allocation2 + $0xd18] sm:$0xff]
    %v630 = vld [vmem:[#allocation2 + $0xd20] sm:$0xff]
    %v631 = vld [vmem:[#allocation2 + $0xd28] sm:$0xff]
    %v632 = vld [vmem:[#allocation2 + $0xd30] sm:$0xff]
    %v633 = vld [vmem:[#allocation2 + $0xd38] sm:$0xff]
    %v634 = vld [vmem:[#allocation2 + $0xd40] sm:$0xff]
    %v635 = vld [vmem:[#allocation2 + $0xd48] sm:$0xff]
    %v636 = vld [vmem:[#allocation2 + $0xd50] sm:$0xff]
    %v637 = vld [vmem:[#allocation2 + $0xd58] sm:$0xff]
    %v638 = vld [vmem:[#allocation2 + $0xd60] sm:$0xff]
    %v639 = vld [vmem:[#allocation2 + $0xd68] sm:$0xff]
    %v640 = vld [vmem:[#allocation2 + $0xd70] sm:$0xff]
    %v641 = vld [vmem:[#allocation2 + $0xd78] sm:$0xff]
    %v642 = vld [vmem:[#allocation2 + $0xd80] sm:$0xff]
    %v643 = vld [vmem:[#allocation2 + $0xd88] sm:$0xff]
    %v644 = vld [vmem:[#allocation2 + $0xd90] sm:$0xff]
    %v645 = vld [vmem:[#allocation2 + $0xd98] sm:$0xff]
    %v646 = vld [vmem:[#allocation2 + $0xda0] sm:$0xff]
    %v647 = vld [vmem:[#allocation2 + $0xda8] sm:$0xff]
    %v648 = vld [vmem:[#allocation2 + $0xdb0] sm:$0xff]
    %v649 = vld [vmem:[#allocation2 + $0xdb8] sm:$0xff]
    %v650 = vld [vmem:[#allocation2 + $0xdc0] sm:$0xff]
    %v651 = vld [vmem:[#allocation2 + $0xdc8] sm:$0xff]
    %v652 = vld [vmem:[#allocation2 + $0xdd0] sm:$0xff]
    %v653 = vld [vmem:[#allocation2 + $0xdd8] sm:$0xff]
    %v654 = vld [vmem:[#allocation2 + $0xde0] sm:$0xff]
    %v655 = vld [vmem:[#allocation2 + $0xde8] sm:$0xff]
    %v656 = vld [vmem:[#allocation2 + $0xdf0] sm:$0xff]
    %v657 = vld [vmem:[#allocation2 + $0xdf8] sm:$0xff]
    %v658 = vld [vmem:[#allocation2 + $0xe00] sm:$0xff]
    %v659 = vld [vmem:[#allocation2 + $0xe08] sm:$0xff]
    %v660 = vld [vmem:[#allocation2 + $0xe10] sm:$0xff]
    %v661 = vld [vmem:[#allocation2 + $0xe18] sm:$0xff]
    %v662 = vld [vmem:[#allocation2 + $0xe20] sm:$0xff]
    %v663 = vld [vmem:[#allocation2 + $0xe28] sm:$0xff]
    %v664 = vld [vmem:[#allocation2 + $0xe30] sm:$0xff]
    %v665 = vld [vmem:[#allocation2 + $0xe38] sm:$0xff]
    %v666 = vld [vmem:[#allocation2 + $0xe40] sm:$0xff]
    %v667 = vld [vmem:[#allocation2 + $0xe48] sm:$0xff]
    %v668 = vld [vmem:[#allocation2 + $0xe50] sm:$0xff]
    %v669 = vld [vmem:[#allocation2 + $0xe58] sm:$0xff]
    %v670 = vld [vmem:[#allocation2 + $0xe60] sm:$0xff]
    %v671 = vld [vmem:[#allocation2 + $0xe68] sm:$0xff]
    %v672 = vld [vmem:[#allocation2 + $0xe70] sm:$0xff]
    %v673 = vld [vmem:[#allocation2 + $0xe78] sm:$0xff]
    %v674 = vld [vmem:[#allocation2 + $0xe80] sm:$0xff]
    %v675 = vld [vmem:[#allocation2 + $0xe88] sm:$0xff]
    %v676 = vld [vmem:[#allocation2 + $0xe90] sm:$0xff]
    %v677 = vld [vmem:[#allocation2 + $0xe98] sm:$0xff]
    %v678 = vld [vmem:[#allocation2 + $0xea0] sm:$0xff]
    %v679 = vld [vmem:[#allocation2 + $0xea8] sm:$0xff]
    %v680 = vld [vmem:[#allocation2 + $0xeb0] sm:$0xff]
    %v681 = vld [vmem:[#allocation2 + $0xeb8] sm:$0xff]
    %v682 = vld [vmem:[#allocation2 + $0xec0] sm:$0xff]
    %v683 = vld [vmem:[#allocation2 + $0xec8] sm:$0xff]
    %v684 = vld [vmem:[#allocation2 + $0xed0] sm:$0xff]
    %v685 = vld [vmem:[#allocation2 + $0xed8] sm:$0xff]
    %v686 = vld [vmem:[#allocation2 + $0xee0] sm:$0xff]
    %v687 = vld [vmem:[#allocation2 + $0xee8] sm:$0xff]
    %v688 = vld [vmem:[#allocation2 + $0xef0] sm:$0xff]
    %v689 = vld [vmem:[#allocation2 + $0xef8] sm:$0xff]
    %v690 = vld [vmem:[#allocation2 + $0xf00] sm:$0xff]
    %v691 = vld [vmem:[#allocation2 + $0xf08] sm:$0xff]
    %v692 = vld [vmem:[#allocation2 + $0xf10] sm:$0xff]
    %v693 = vld [vmem:[#allocation2 + $0xf18] sm:$0xff]
    %v694 = vld [vmem:[#allocation2 + $0xf20] sm:$0xff]
    %v695 = vld [vmem:[#allocation2 + $0xf28] sm:$0xff]
    %v696 = vld [vmem:[#allocation2 + $0xf30] sm:$0xff]
    %v697 = vld [vmem:[#allocation2 + $0xf38] sm:$0xff]
    %v698 = vld [vmem:[#allocation2 + $0xf40] sm:$0xff]
    %v699 = vld [vmem:[#allocation2 + $0xf48] sm:$0xff]
    %v700 = vld [vmem:[#allocation2 + $0xf50] sm:$0xff]
    %v701 = vld [vmem:[#allocation2 + $0xf58] sm:$0xff]
    %v702 = vld [vmem:[#allocation2 + $0xf60] sm:$0xff]
    %v703 = vld [vmem:[#allocation2 + $0xf68] sm:$0xff]
    %v704 = vld [vmem:[#allocation2 + $0xf70] sm:$0xff]
    %v705 = vld [vmem:[#allocation2 + $0xf78] sm:$0xff]
    %v706 = vld [vmem:[#allocation2 + $0xf80] sm:$0xff]
    %v707 = vld [vmem:[#allocation2 + $0xf88] sm:$0xff]
    %v708 = vld [vmem:[#allocation2 + $0xf90] sm:$0xff]
    %v709 = vld [vmem:[#allocation2 + $0xf98] sm:$0xff]
    %v710 = vld [vmem:[#allocation2 + $0xfa0] sm:$0xff]
    %v711 = vld [vmem:[#allocation2 + $0xfa8] sm:$0xff]
    %v712 = vld [vmem:[#allocation2 + $0xfb0] sm:$0xff]
    %v713 = vld [vmem:[#allocation2 + $0xfb8] sm:$0xff]
    %v714 = vld [vmem:[#allocation2 + $0xfc0] sm:$0xff]
    %v715 = vld [vmem:[#allocation2 + $0xfc8] sm:$0xff]
    %v716 = vld [vmem:[#allocation2 + $0xfd0] sm:$0xff]
    %v717 = vld [vmem:[#allocation2 + $0xfd8] sm:$0xff]
    %v718 = vld [vmem:[#allocation2 + $0xfe0] sm:$0xff]
    %v719 = vld [vmem:[#allocation2 + $0xfe8] sm:$0xff]
    %v720 = vld [vmem:[#allocation2 + $0xff0] sm:$0xff]
    %v721 = vld [vmem:[#allocation2 + $0xff8] sm:$0xff]
    %v722 = vld [vmem:[#allocation2 + $0x1000] sm:$0xff]
    %v723 = vld [vmem:[#allocation2 + $0x1008] sm:$0xff]
    %v724 = vld [vmem:[#allocation2 + $0x1010] sm:$0xff]
    %v725 = vld [vmem:[#allocation2 + $0x1018] sm:$0xff]
    %v726 = vld [vmem:[#allocation2 + $0x1020] sm:$0xff]
    %v727 = vld [vmem:[#allocation2 + $0x1028] sm:$0xff]
    %v728 = vld [vmem:[#allocation2 + $0x1030] sm:$0xff]
    %v729 = vld [vmem:[#allocation2 + $0x1038] sm:$0xff]
    %v730 = vld [vmem:[#allocation2 + $0x1040] sm:$0xff]
    %v731 = vld [vmem:[#allocation2 + $0x1048] sm:$0xff]
    %v732 = vld [vmem:[#allocation2 + $0x1050] sm:$0xff]
    %v733 = vld [vmem:[#allocation2 + $0x1058] sm:$0xff]
    %v734 = vld [vmem:[#allocation2 + $0x1060] sm:$0xff]
    %v735 = vld [vmem:[#allocation2 + $0x1068] sm:$0xff]
    %v736 = vld [vmem:[#allocation2 + $0x1070] sm:$0xff]
    %v737 = vld [vmem:[#allocation2 + $0x1078] sm:$0xff]
    %v738 = vld [vmem:[#allocation2 + $0x1080] sm:$0xff]
    %v739 = vld [vmem:[#allocation2 + $0x1088] sm:$0xff]
    %v740 = vld [vmem:[#allocation2 + $0x1090] sm:$0xff]
    %v741 = vld [vmem:[#allocation2 + $0x1098] sm:$0xff]
    %v742 = vld [vmem:[#allocation2 + $0x10a0] sm:$0xff]
    %v743 = vld [vmem:[#allocation2 + $0x10a8] sm:$0xff]
    %v744 = vld [vmem:[#allocation2 + $0x10b0] sm:$0xff]
    %v745 = vld [vmem:[#allocation2 + $0x10b8] sm:$0xff]
    %v746 = vld [vmem:[#allocation2 + $0x10c0] sm:$0xff]
    %v747 = vld [vmem:[#allocation2 + $0x10c8] sm:$0xff]
    %v748 = vld [vmem:[#allocation2 + $0x10d0] sm:$0xff]
    %v749 = vld [vmem:[#allocation2 + $0x10d8] sm:$0xff]
    %v750 = vld [vmem:[#allocation2 + $0x10e0] sm:$0xff]
    %v751 = vld [vmem:[#allocation2 + $0x10e8] sm:$0xff]
    %v752 = vld [vmem:[#allocation2 + $0x10f0] sm:$0xff]
    %v753 = vld [vmem:[#allocation2 + $0x10f8] sm:$0xff]
    %v754 = vld [vmem:[#allocation2 + $0x1100] sm:$0xff]
    %v755 = vld [vmem:[#allocation2 + $0x1108] sm:$0xff]
    %v756 = vld [vmem:[#allocation2 + $0x1110] sm:$0xff]
    %v757 = vld [vmem:[#allocation2 + $0x1118] sm:$0xff]
    %v758 = vld [vmem:[#allocation2 + $0x1120] sm:$0xff]
    %v759 = vld [vmem:[#allocation2 + $0x1128] sm:$0xff]
    %v760 = vld [vmem:[#allocation2 + $0x1130] sm:$0xff]
    %v761 = vld [vmem:[#allocation2 + $0x1138] sm:$0xff]
    %v762 = vld [vmem:[#allocation2 + $0x1140] sm:$0xff]
    %v763 = vld [vmem:[#allocation2 + $0x1148] sm:$0xff]
    %v764 = vld [vmem:[#allocation2 + $0x1150] sm:$0xff]
    %v765 = vld [vmem:[#allocation2 + $0x1158] sm:$0xff]
    %v766 = vld [vmem:[#allocation2 + $0x1160] sm:$0xff]
    %v767 = vld [vmem:[#allocation2 + $0x1168] sm:$0xff]
    %v768 = vld [vmem:[#allocation2 + $0x1170] sm:$0xff]
    %v769 = vld [vmem:[#allocation2 + $0x1178] sm:$0xff]
    %v770 = vld [vmem:[#allocation2 + $0x1180] sm:$0xff]
    %v771 = vld [vmem:[#allocation2 + $0x1188] sm:$0xff]
    %v772 = vld [vmem:[#allocation2 + $0x1190] sm:$0xff]
    %v773 = vld [vmem:[#allocation2 + $0x1198] sm:$0xff]
    %v774 = vld [vmem:[#allocation2 + $0x11a0] sm:$0xff]
    %v775 = vld [vmem:[#allocation2 + $0x11a8] sm:$0xff]
    %v776 = vld [vmem:[#allocation2 + $0x11b0] sm:$0xff]
    %v777 = vld [vmem:[#allocation2 + $0x11b8] sm:$0xff]
    %v778 = vld [vmem:[#allocation2 + $0x11c0] sm:$0xff]
    %v779 = vld [vmem:[#allocation2 + $0x11c8] sm:$0xff]
    %v780 = vld [vmem:[#allocation2 + $0x11d0] sm:$0xff]
    %v781 = vld [vmem:[#allocation2 + $0x11d8] sm:$0xff]
    %v782 = vld [vmem:[#allocation2 + $0x11e0] sm:$0xff]
    %v783 = vld [vmem:[#allocation2 + $0x11e8] sm:$0xff]
    %v784 = vld [vmem:[#allocation2 + $0x11f0] sm:$0xff]
    %v785 = vld [vmem:[#allocation2 + $0x11f8] sm:$0xff]
    %v786 = vld [vmem:[#allocation2 + $0x1200] sm:$0xff]
    %v787 = vld [vmem:[#allocation2 + $0x1208] sm:$0xff]
    %v788 = vld [vmem:[#allocation2 + $0x1210] sm:$0xff]
    %v789 = vld [vmem:[#allocation2 + $0x1218] sm:$0xff]
    %v790 = vld [vmem:[#allocation2 + $0x1220] sm:$0xff]
    %v791 = vld [vmem:[#allocation2 + $0x1228] sm:$0xff]
    %v792 = vld [vmem:[#allocation2 + $0x1230] sm:$0xff]
    %v793 = vld [vmem:[#allocation2 + $0x1238] sm:$0xff]
    %v794 = vld [vmem:[#allocation2 + $0x1240] sm:$0xff]
    %v795 = vld [vmem:[#allocation2 + $0x1248] sm:$0xff]
    %v796 = vld [vmem:[#allocation2 + $0x1250] sm:$0xff]
    %v797 = vld [vmem:[#allocation2 + $0x1258] sm:$0xff]
    %v798 = vld [vmem:[#allocation2 + $0x1260] sm:$0xff]
    %v799 = vld [vmem:[#allocation2 + $0x1268] sm:$0xff]
    %v800 = vld [vmem:[#allocation2 + $0x1270] sm:$0xff]
    %v801 = vld [vmem:[#allocation2 + $0x1278] sm:$0xff]
    %v802 = vld [vmem:[#allocation2 + $0x1280] sm:$0xff]
    %v803 = vld [vmem:[#allocation2 + $0x1288] sm:$0xff]
    %v804 = vld [vmem:[#allocation2 + $0x1290] sm:$0xff]
    %v805 = vld [vmem:[#allocation2 + $0x1298] sm:$0xff]
    %v806 = vld [vmem:[#allocation2 + $0x12a0] sm:$0xff]
    %v807 = vld [vmem:[#allocation2 + $0x12a8] sm:$0xff]
    %v808 = vld [vmem:[#allocation2 + $0x12b0] sm:$0xff]
    %v809 = vld [vmem:[#allocation2 + $0x12b8] sm:$0xff]
    %v810 = vld [vmem:[#allocation2 + $0x12c0] sm:$0xff]
    %v811 = vld [vmem:[#allocation2 + $0x12c8] sm:$0xff]
    %v812 = vld [vmem:[#allocation2 + $0x12d0] sm:$0xff]
    %v813 = vld [vmem:[#allocation2 + $0x12d8] sm:$0xff]
    %v814 = vld [vmem:[#allocation2 + $0x12e0] sm:$0xff]
    %v815 = vld [vmem:[#allocation2 + $0x12e8] sm:$0xff]
    %v816 = vld [vmem:[#allocation2 + $0x12f0] sm:$0xff]
    %v817 = vld [vmem:[#allocation2 + $0x12f8] sm:$0xff]
    %v818 = vld [vmem:[#allocation2 + $0x1300] sm:$0xff]
    %v819 = vld [vmem:[#allocation2 + $0x1308] sm:$0xff]
    %v820 = vld [vmem:[#allocation2 + $0x1310] sm:$0xff]
    %v821 = vld [vmem:[#allocation2 + $0x1318] sm:$0xff]
    %v822 = vld [vmem:[#allocation2 + $0x1320] sm:$0xff]
    %v823 = vld [vmem:[#allocation2 + $0x1328] sm:$0xff]
    %v824 = vld [vmem:[#allocation2 + $0x1330] sm:$0xff]
    %v825 = vld [vmem:[#allocation2 + $0x1338] sm:$0xff]
    %v826 = vld [vmem:[#allocation2 + $0x1340] sm:$0xff]
    %v827 = vld [vmem:[#allocation2 + $0x1348] sm:$0xff]
    %v828 = vld [vmem:[#allocation2 + $0x1350] sm:$0xff]
    %v829 = vld [vmem:[#allocation2 + $0x1358] sm:$0xff]
    %v830 = vld [vmem:[#allocation2 + $0x1360] sm:$0xff]
    %v831 = vld [vmem:[#allocation2 + $0x1368] sm:$0xff]
    %v832 = vld [vmem:[#allocation2 + $0x1370] sm:$0xff]
    %v833 = vld [vmem:[#allocation2 + $0x1378] sm:$0xff]
    %v834 = vld [vmem:[#allocation2 + $0x1380] sm:$0xff]
    %v835 = vld [vmem:[#allocation2 + $0x1388] sm:$0xff]
    %v836 = vld [vmem:[#allocation2 + $0x1390] sm:$0xff]
    %v837 = vld [vmem:[#allocation2 + $0x1398] sm:$0xff]
    %v838 = vld [vmem:[#allocation2 + $0x13a0] sm:$0xff]
    %v839 = vld [vmem:[#allocation2 + $0x13a8] sm:$0xff]
    %v840 = vld [vmem:[#allocation2 + $0x13b0] sm:$0xff]
    %v841 = vld [vmem:[#allocation2 + $0x13b8] sm:$0xff]
    %v842 = vld [vmem:[#allocation2 + $0x13c0] sm:$0xff]
    %v843 = vld [vmem:[#allocation2 + $0x13c8] sm:$0xff]
    %v844 = vld [vmem:[#allocation2 + $0x13d0] sm:$0xff]
    %v845 = vld [vmem:[#allocation2 + $0x13d8] sm:$0xff]
    %v846 = vld [vmem:[#allocation2 + $0x13e0] sm:$0xff]
    %v847 = vld [vmem:[#allocation2 + $0x13e8] sm:$0xff]
    %v848 = vld [vmem:[#allocation2 + $0x13f0] sm:$0xff]
    %v849 = vld [vmem:[#allocation2 + $0x13f8] sm:$0xff]
    %v850 = vld [vmem:[#allocation4] sm:$0xff]
    %v851 = vld [vmem:[#allocation4 + $0x8] sm:$0x3]
    %v854 = vperm.slane %v850, 0
    %v855 = vperm.slane %v850, 1
    %v856 = vperm.slane %v850, 2
    %v857 = vperm.slane %v850, 3
    %v858 = vperm.slane %v850, 4
    %v859 = vperm.slane %v850, 5
    %v860 = vperm.slane %v850, 6
    %v861 = vperm.slane %v850, 7
    %v862 = vperm.slane %v851, 0
    %v863 = vperm.slane %v851, 1
    %v882 = vunpack.c.l.b16 %v202
    %v883 = vunpack.c.h.b16 %v202
    %v884 = vunpack.c.l.b16 %v203
    %v885 = vunpack.c.h.b16 %v203
    %v886 = vunpack.c.l.b16 %v204
    %v887 = vunpack.c.h.b16 %v204
    %v888 = vunpack.c.l.b16 %v205
    %v889 = vunpack.c.h.b16 %v205
    %v890 = vunpack.c.l.b16 %v206
    %v891 = vunpack.c.h.b16 %v206
    %v892 = vunpack.c.l.b16 %v207
    %v893 = vunpack.c.h.b16 %v207
    %v894 = vunpack.c.l.b16 %v208
    %v895 = vunpack.c.h.b16 %v208
    %v896 = vunpack.c.l.b16 %v209
    %v897 = vunpack.c.h.b16 %v209
    %v898 = vpack.c.b16 %v890, %v882
    %v899 = vpack.c.b16 %v891, %v883
    %v900 = vpack.c.b16 %v892, %v884
    %v901 = vpack.c.b16 %v893, %v885
    %v902 = vpack.c.b16 %v894, %v886
    %v903 = vpack.c.b16 %v895, %v887
    %v904 = vpack.c.b16 %v896, %v888
    %v905 = vpack.c.b16 %v897, %v889
    %v1554 = vunpack.c.l.b16 %v210
    %v1555 = vunpack.c.h.b16 %v210
    %v1556 = vunpack.c.l.b16 %v211
    %v1557 = vunpack.c.h.b16 %v211
    %v1558 = vunpack.c.l.b16 %v212
    %v1559 = vunpack.c.h.b16 %v212
    %v1560 = vunpack.c.l.b16 %v213
    %v1561 = vunpack.c.h.b16 %v213
    %v1562 = vunpack.c.l.b16 %v214
    %v1563 = vunpack.c.h.b16 %v214
    %v1564 = vunpack.c.l.b16 %v215
    %v1565 = vunpack.c.h.b16 %v215
    %v1566 = vunpack.c.l.b16 %v216
    %v1567 = vunpack.c.h.b16 %v216
    %v1568 = vunpack.c.l.b16 %v217
    %v1569 = vunpack.c.h.b16 %v217
    %v1570 = vunpack.c.l.b16 %v218
    %v1571 = vunpack.c.h.b16 %v218
    %v1572 = vunpack.c.l.b16 %v219
    %v1573 = vunpack.c.h.b16 %v219
    %v1574 = vunpack.c.l.b16 %v220
    %v1575 = vunpack.c.h.b16 %v220
    %v1576 = vunpack.c.l.b16 %v221
    %v1577 = vunpack.c.h.b16 %v221
    %v1578 = vunpack.c.l.b16 %v222
    %v1579 = vunpack.c.h.b16 %v222
    %v1580 = vunpack.c.l.b16 %v223
    %v1581 = vunpack.c.h.b16 %v223
    %v1582 = vunpack.c.l.b16 %v224
    %v1583 = vunpack.c.h.b16 %v224
    %v1584 = vunpack.c.l.b16 %v225
    %v1585 = vunpack.c.h.b16 %v225
    %v1586 = vunpack.c.l.b16 %v226
    %v1587 = vunpack.c.h.b16 %v226
    %v1588 = vunpack.c.l.b16 %v227
    %v1589 = vunpack.c.h.b16 %v227
    %v1590 = vunpack.c.l.b16 %v228
    %v1591 = vunpack.c.h.b16 %v228
    %v1592 = vunpack.c.l.b16 %v229
    %v1593 = vunpack.c.h.b16 %v229
    %v1594 = vunpack.c.l.b16 %v230
    %v1595 = vunpack.c.h.b16 %v230
    %v1596 = vunpack.c.l.b16 %v231
    %v1597 = vunpack.c.h.b16 %v231
    %v1598 = vunpack.c.l.b16 %v232
    %v1599 = vunpack.c.h.b16 %v232
    %v1600 = vunpack.c.l.b16 %v233
    %v1601 = vunpack.c.h.b16 %v233
    %v1602 = vunpack.c.l.b16 %v234
    %v1603 = vunpack.c.h.b16 %v234
    %v1604 = vunpack.c.l.b16 %v235
    %v1605 = vunpack.c.h.b16 %v235
    %v1606 = vunpack.c.l.b16 %v236
    %v1607 = vunpack.c.h.b16 %v236
    %v1608 = vunpack.c.l.b16 %v237
    %v1609 = vunpack.c.h.b16 %v237
    %v1610 = vunpack.c.l.b16 %v238
    %v1611 = vunpack.c.h.b16 %v238
    %v1612 = vunpack.c.l.b16 %v239
    %v1613 = vunpack.c.h.b16 %v239
    %v1614 = vunpack.c.l.b16 %v240
    %v1615 = vunpack.c.h.b16 %v240
    %v1616 = vunpack.c.l.b16 %v241
    %v1617 = vunpack.c.h.b16 %v241
    %v1618 = vunpack.c.l.b16 %v242
    %v1619 = vunpack.c.h.b16 %v242
    %v1620 = vunpack.c.l.b16 %v243
    %v1621 = vunpack.c.h.b16 %v243
    %v1622 = vunpack.c.l.b16 %v244
    %v1623 = vunpack.c.h.b16 %v244
    %v1624 = vunpack.c.l.b16 %v245
    %v1625 = vunpack.c.h.b16 %v245
    %v1626 = vunpack.c.l.b16 %v246
    %v1627 = vunpack.c.h.b16 %v246
    %v1628 = vunpack.c.l.b16 %v247
    %v1629 = vunpack.c.h.b16 %v247
    %v1630 = vunpack.c.l.b16 %v248
    %v1631 = vunpack.c.h.b16 %v248
    %v1632 = vunpack.c.l.b16 %v249
    %v1633 = vunpack.c.h.b16 %v249
    %v1634 = vunpack.c.l.b16 %v250
    %v1635 = vunpack.c.h.b16 %v250
    %v1636 = vunpack.c.l.b16 %v251
    %v1637 = vunpack.c.h.b16 %v251
    %v1638 = vunpack.c.l.b16 %v252
    %v1639 = vunpack.c.h.b16 %v252
    %v1640 = vunpack.c.l.b16 %v253
    %v1641 = vunpack.c.h.b16 %v253
    %v1642 = vunpack.c.l.b16 %v254
    %v1643 = vunpack.c.h.b16 %v254
    %v1644 = vunpack.c.l.b16 %v255
    %v1645 = vunpack.c.h.b16 %v255
    %v1646 = vunpack.c.l.b16 %v256
    %v1647 = vunpack.c.h.b16 %v256
    %v1648 = vunpack.c.l.b16 %v257
    %v1649 = vunpack.c.h.b16 %v257
    %v1650 = vunpack.c.l.b16 %v258
    %v1651 = vunpack.c.h.b16 %v258
    %v1652 = vunpack.c.l.b16 %v259
    %v1653 = vunpack.c.h.b16 %v259
    %v1654 = vunpack.c.l.b16 %v260
    %v1655 = vunpack.c.h.b16 %v260
    %v1656 = vunpack.c.l.b16 %v261
    %v1657 = vunpack.c.h.b16 %v261
    %v1658 = vunpack.c.l.b16 %v262
    %v1659 = vunpack.c.h.b16 %v262
    %v1660 = vunpack.c.l.b16 %v263
    %v1661 = vunpack.c.h.b16 %v263
    %v1662 = vunpack.c.l.b16 %v264
    %v1663 = vunpack.c.h.b16 %v264
    %v1664 = vunpack.c.l.b16 %v265
    %v1665 = vunpack.c.h.b16 %v265
    %v1666 = vunpack.c.l.b16 %v266
    %v1667 = vunpack.c.h.b16 %v266
    %v1668 = vunpack.c.l.b16 %v267
    %v1669 = vunpack.c.h.b16 %v267
    %v1670 = vunpack.c.l.b16 %v268
    %v1671 = vunpack.c.h.b16 %v268
    %v1672 = vunpack.c.l.b16 %v269
    %v1673 = vunpack.c.h.b16 %v269
    %v1674 = vunpack.c.l.b16 %v270
    %v1675 = vunpack.c.h.b16 %v270
    %v1676 = vunpack.c.l.b16 %v271
    %v1677 = vunpack.c.h.b16 %v271
    %v1678 = vunpack.c.l.b16 %v272
    %v1679 = vunpack.c.h.b16 %v272
    %v1680 = vunpack.c.l.b16 %v273
    %v1681 = vunpack.c.h.b16 %v273
    %v1682 = vunpack.c.l.b16 %v274
    %v1683 = vunpack.c.h.b16 %v274
    %v1684 = vunpack.c.l.b16 %v275
    %v1685 = vunpack.c.h.b16 %v275
    %v1686 = vunpack.c.l.b16 %v276
    %v1687 = vunpack.c.h.b16 %v276
    %v1688 = vunpack.c.l.b16 %v277
    %v1689 = vunpack.c.h.b16 %v277
    %v1690 = vunpack.c.l.b16 %v278
    %v1691 = vunpack.c.h.b16 %v278
    %v1692 = vunpack.c.l.b16 %v279
    %v1693 = vunpack.c.h.b16 %v279
    %v1694 = vunpack.c.l.b16 %v280
    %v1695 = vunpack.c.h.b16 %v280
    %v1696 = vunpack.c.l.b16 %v281
    %v1697 = vunpack.c.h.b16 %v281
    %v1698 = vunpack.c.l.b16 %v282
    %v1699 = vunpack.c.h.b16 %v282
    %v1700 = vunpack.c.l.b16 %v283
    %v1701 = vunpack.c.h.b16 %v283
    %v1702 = vunpack.c.l.b16 %v284
    %v1703 = vunpack.c.h.b16 %v284
    %v1704 = vunpack.c.l.b16 %v285
    %v1705 = vunpack.c.h.b16 %v285
    %v1706 = vunpack.c.l.b16 %v286
    %v1707 = vunpack.c.h.b16 %v286
    %v1708 = vunpack.c.l.b16 %v287
    %v1709 = vunpack.c.h.b16 %v287
    %v1710 = vunpack.c.l.b16 %v288
    %v1711 = vunpack.c.h.b16 %v288
    %v1712 = vunpack.c.l.b16 %v289
    %v1713 = vunpack.c.h.b16 %v289
    %v1714 = vunpack.c.l.b16 %v290
    %v1715 = vunpack.c.h.b16 %v290
    %v1716 = vunpack.c.l.b16 %v291
    %v1717 = vunpack.c.h.b16 %v291
    %v1718 = vunpack.c.l.b16 %v292
    %v1719 = vunpack.c.h.b16 %v292
    %v1720 = vunpack.c.l.b16 %v293
    %v1721 = vunpack.c.h.b16 %v293
    %v1722 = vunpack.c.l.b16 %v294
    %v1723 = vunpack.c.h.b16 %v294
    %v1724 = vunpack.c.l.b16 %v295
    %v1725 = vunpack.c.h.b16 %v295
    %v1726 = vunpack.c.l.b16 %v296
    %v1727 = vunpack.c.h.b16 %v296
    %v1728 = vunpack.c.l.b16 %v297
    %v1729 = vunpack.c.h.b16 %v297
    %v1730 = vunpack.c.l.b16 %v298
    %v1731 = vunpack.c.h.b16 %v298
    %v1732 = vunpack.c.l.b16 %v299
    %v1733 = vunpack.c.h.b16 %v299
    %v1734 = vunpack.c.l.b16 %v300
    %v1735 = vunpack.c.h.b16 %v300
    %v1736 = vunpack.c.l.b16 %v301
    %v1737 = vunpack.c.h.b16 %v301
    %v1738 = vunpack.c.l.b16 %v302
    %v1739 = vunpack.c.h.b16 %v302
    %v1740 = vunpack.c.l.b16 %v303
    %v1741 = vunpack.c.h.b16 %v303
    %v1742 = vunpack.c.l.b16 %v304
    %v1743 = vunpack.c.h.b16 %v304
    %v1744 = vunpack.c.l.b16 %v305
    %v1745 = vunpack.c.h.b16 %v305
    %v1746 = vunpack.c.l.b16 %v306
    %v1747 = vunpack.c.h.b16 %v306
    %v1748 = vunpack.c.l.b16 %v307
    %v1749 = vunpack.c.h.b16 %v307
    %v1750 = vunpack.c.l.b16 %v308
    %v1751 = vunpack.c.h.b16 %v308
    %v1752 = vunpack.c.l.b16 %v309
    %v1753 = vunpack.c.h.b16 %v309
    %v1754 = vunpack.c.l.b16 %v310
    %v1755 = vunpack.c.h.b16 %v310
    %v1756 = vunpack.c.l.b16 %v311
    %v1757 = vunpack.c.h.b16 %v311
    %v1758 = vunpack.c.l.b16 %v312
    %v1759 = vunpack.c.h.b16 %v312
    %v1760 = vunpack.c.l.b16 %v313
    %v1761 = vunpack.c.h.b16 %v313
    %v1762 = vunpack.c.l.b16 %v314
    %v1763 = vunpack.c.h.b16 %v314
    %v1764 = vunpack.c.l.b16 %v315
    %v1765 = vunpack.c.h.b16 %v315
    %v1766 = vunpack.c.l.b16 %v316
    %v1767 = vunpack.c.h.b16 %v316
    %v1768 = vunpack.c.l.b16 %v317
    %v1769 = vunpack.c.h.b16 %v317
    %v1770 = vunpack.c.l.b16 %v318
    %v1771 = vunpack.c.h.b16 %v318
    %v1772 = vunpack.c.l.b16 %v319
    %v1773 = vunpack.c.h.b16 %v319
    %v1774 = vunpack.c.l.b16 %v320
    %v1775 = vunpack.c.h.b16 %v320
    %v1776 = vunpack.c.l.b16 %v321
    %v1777 = vunpack.c.h.b16 %v321
    %v1778 = vunpack.c.l.b16 %v322
    %v1779 = vunpack.c.h.b16 %v322
    %v1780 = vunpack.c.l.b16 %v323
    %v1781 = vunpack.c.h.b16 %v323
    %v1782 = vunpack.c.l.b16 %v324
    %v1783 = vunpack.c.h.b16 %v324
    %v1784 = vunpack.c.l.b16 %v325
    %v1785 = vunpack.c.h.b16 %v325
    %v1786 = vunpack.c.l.b16 %v326
    %v1787 = vunpack.c.h.b16 %v326
    %v1788 = vunpack.c.l.b16 %v327
    %v1789 = vunpack.c.h.b16 %v327
    %v1790 = vunpack.c.l.b16 %v328
    %v1791 = vunpack.c.h.b16 %v328
    %v1792 = vunpack.c.l.b16 %v329
    %v1793 = vunpack.c.h.b16 %v329
    %v1794 = vunpack.c.l.b16 %v330
    %v1795 = vunpack.c.h.b16 %v330
    %v1796 = vunpack.c.l.b16 %v331
    %v1797 = vunpack.c.h.b16 %v331
    %v1798 = vunpack.c.l.b16 %v332
    %v1799 = vunpack.c.h.b16 %v332
    %v1800 = vunpack.c.l.b16 %v333
    %v1801 = vunpack.c.h.b16 %v333
    %v1802 = vunpack.c.l.b16 %v334
    %v1803 = vunpack.c.h.b16 %v334
    %v1804 = vunpack.c.l.b16 %v335
    %v1805 = vunpack.c.h.b16 %v335
    %v1806 = vunpack.c.l.b16 %v336
    %v1807 = vunpack.c.h.b16 %v336
    %v1808 = vunpack.c.l.b16 %v337
    %v1809 = vunpack.c.h.b16 %v337
    %v1810 = vunpack.c.l.b16 %v338
    %v1811 = vunpack.c.h.b16 %v338
    %v1812 = vunpack.c.l.b16 %v339
    %v1813 = vunpack.c.h.b16 %v339
    %v1814 = vunpack.c.l.b16 %v340
    %v1815 = vunpack.c.h.b16 %v340
    %v1816 = vunpack.c.l.b16 %v341
    %v1817 = vunpack.c.h.b16 %v341
    %v1818 = vunpack.c.l.b16 %v342
    %v1819 = vunpack.c.h.b16 %v342
    %v1820 = vunpack.c.l.b16 %v343
    %v1821 = vunpack.c.h.b16 %v343
    %v1822 = vunpack.c.l.b16 %v344
    %v1823 = vunpack.c.h.b16 %v344
    %v1824 = vunpack.c.l.b16 %v345
    %v1825 = vunpack.c.h.b16 %v345
    %v1826 = vunpack.c.l.b16 %v346
    %v1827 = vunpack.c.h.b16 %v346
    %v1828 = vunpack.c.l.b16 %v347
    %v1829 = vunpack.c.h.b16 %v347
    %v1830 = vunpack.c.l.b16 %v348
    %v1831 = vunpack.c.h.b16 %v348
    %v1832 = vunpack.c.l.b16 %v349
    %v1833 = vunpack.c.h.b16 %v349
    %v1834 = vunpack.c.l.b16 %v350
    %v1835 = vunpack.c.h.b16 %v350
    %v1836 = vunpack.c.l.b16 %v351
    %v1837 = vunpack.c.h.b16 %v351
    %v1838 = vunpack.c.l.b16 %v352
    %v1839 = vunpack.c.h.b16 %v352
    %v1840 = vunpack.c.l.b16 %v353
    %v1841 = vunpack.c.h.b16 %v353
    %v1842 = vunpack.c.l.b16 %v354
    %v1843 = vunpack.c.h.b16 %v354
    %v1844 = vunpack.c.l.b16 %v355
    %v1845 = vunpack.c.h.b16 %v355
    %v1846 = vunpack.c.l.b16 %v356
    %v1847 = vunpack.c.h.b16 %v356
    %v1848 = vunpack.c.l.b16 %v357
    %v1849 = vunpack.c.h.b16 %v357
    %v1850 = vunpack.c.l.b16 %v358
    %v1851 = vunpack.c.h.b16 %v358
    %v1852 = vunpack.c.l.b16 %v359
    %v1853 = vunpack.c.h.b16 %v359
    %v1854 = vunpack.c.l.b16 %v360
    %v1855 = vunpack.c.h.b16 %v360
    %v1856 = vunpack.c.l.b16 %v361
    %v1857 = vunpack.c.h.b16 %v361
    %v1858 = vunpack.c.l.b16 %v362
    %v1859 = vunpack.c.h.b16 %v362
    %v1860 = vunpack.c.l.b16 %v363
    %v1861 = vunpack.c.h.b16 %v363
    %v1862 = vunpack.c.l.b16 %v364
    %v1863 = vunpack.c.h.b16 %v364
    %v1864 = vunpack.c.l.b16 %v365
    %v1865 = vunpack.c.h.b16 %v365
    %v1866 = vunpack.c.l.b16 %v366
    %v1867 = vunpack.c.h.b16 %v366
    %v1868 = vunpack.c.l.b16 %v367
    %v1869 = vunpack.c.h.b16 %v367
    %v1870 = vunpack.c.l.b16 %v368
    %v1871 = vunpack.c.h.b16 %v368
    %v1872 = vunpack.c.l.b16 %v369
    %v1873 = vunpack.c.h.b16 %v369
    %v1874 = vunpack.c.l.b16 %v370
    %v1875 = vunpack.c.h.b16 %v370
    %v1876 = vunpack.c.l.b16 %v371
    %v1877 = vunpack.c.h.b16 %v371
    %v1878 = vunpack.c.l.b16 %v372
    %v1879 = vunpack.c.h.b16 %v372
    %v1880 = vunpack.c.l.b16 %v373
    %v1881 = vunpack.c.h.b16 %v373
    %v1882 = vunpack.c.l.b16 %v374
    %v1883 = vunpack.c.h.b16 %v374
    %v1884 = vunpack.c.l.b16 %v375
    %v1885 = vunpack.c.h.b16 %v375
    %v1886 = vunpack.c.l.b16 %v376
    %v1887 = vunpack.c.h.b16 %v376
    %v1888 = vunpack.c.l.b16 %v377
    %v1889 = vunpack.c.h.b16 %v377
    %v1890 = vunpack.c.l.b16 %v378
    %v1891 = vunpack.c.h.b16 %v378
    %v1892 = vunpack.c.l.b16 %v379
    %v1893 = vunpack.c.h.b16 %v379
    %v1894 = vunpack.c.l.b16 %v380
    %v1895 = vunpack.c.h.b16 %v380
    %v1896 = vunpack.c.l.b16 %v381
    %v1897 = vunpack.c.h.b16 %v381
    %v1898 = vunpack.c.l.b16 %v382
    %v1899 = vunpack.c.h.b16 %v382
    %v1900 = vunpack.c.l.b16 %v383
    %v1901 = vunpack.c.h.b16 %v383
    %v1902 = vunpack.c.l.b16 %v384
    %v1903 = vunpack.c.h.b16 %v384
    %v1904 = vunpack.c.l.b16 %v385
    %v1905 = vunpack.c.h.b16 %v385
    %v1906 = vunpack.c.l.b16 %v386
    %v1907 = vunpack.c.h.b16 %v386
    %v1908 = vunpack.c.l.b16 %v387
    %v1909 = vunpack.c.h.b16 %v387
    %v1910 = vunpack.c.l.b16 %v388
    %v1911 = vunpack.c.h.b16 %v388
    %v1912 = vunpack.c.l.b16 %v389
    %v1913 = vunpack.c.h.b16 %v389
    %v1914 = vunpack.c.l.b16 %v390
    %v1915 = vunpack.c.h.b16 %v390
    %v1916 = vunpack.c.l.b16 %v391
    %v1917 = vunpack.c.h.b16 %v391
    %v1918 = vunpack.c.l.b16 %v392
    %v1919 = vunpack.c.h.b16 %v392
    %v1920 = vunpack.c.l.b16 %v393
    %v1921 = vunpack.c.h.b16 %v393
    %v1922 = vunpack.c.l.b16 %v394
    %v1923 = vunpack.c.h.b16 %v394
    %v1924 = vunpack.c.l.b16 %v395
    %v1925 = vunpack.c.h.b16 %v395
    %v1926 = vunpack.c.l.b16 %v396
    %v1927 = vunpack.c.h.b16 %v396
    %v1928 = vunpack.c.l.b16 %v397
    %v1929 = vunpack.c.h.b16 %v397
    %v1930 = vunpack.c.l.b16 %v398
    %v1931 = vunpack.c.h.b16 %v398
    %v1932 = vunpack.c.l.b16 %v399
    %v1933 = vunpack.c.h.b16 %v399
    %v1934 = vunpack.c.l.b16 %v400
    %v1935 = vunpack.c.h.b16 %v400
    %v1936 = vunpack.c.l.b16 %v401
    %v1937 = vunpack.c.h.b16 %v401
    %v1938 = vunpack.c.l.b16 %v402
    %v1939 = vunpack.c.h.b16 %v402
    %v1940 = vunpack.c.l.b16 %v403
    %v1941 = vunpack.c.h.b16 %v403
    %v1942 = vunpack.c.l.b16 %v404
    %v1943 = vunpack.c.h.b16 %v404
    %v1944 = vunpack.c.l.b16 %v405
    %v1945 = vunpack.c.h.b16 %v405
    %v1946 = vunpack.c.l.b16 %v406
    %v1947 = vunpack.c.h.b16 %v406
    %v1948 = vunpack.c.l.b16 %v407
    %v1949 = vunpack.c.h.b16 %v407
    %v1950 = vunpack.c.l.b16 %v408
    %v1951 = vunpack.c.h.b16 %v408
    %v1952 = vunpack.c.l.b16 %v409
    %v1953 = vunpack.c.h.b16 %v409
    %v1954 = vunpack.c.l.b16 %v410
    %v1955 = vunpack.c.h.b16 %v410
    %v1956 = vunpack.c.l.b16 %v411
    %v1957 = vunpack.c.h.b16 %v411
    %v1958 = vunpack.c.l.b16 %v412
    %v1959 = vunpack.c.h.b16 %v412
    %v1960 = vunpack.c.l.b16 %v413
    %v1961 = vunpack.c.h.b16 %v413
    %v1962 = vunpack.c.l.b16 %v414
    %v1963 = vunpack.c.h.b16 %v414
    %v1964 = vunpack.c.l.b16 %v415
    %v1965 = vunpack.c.h.b16 %v415
    %v1966 = vunpack.c.l.b16 %v416
    %v1967 = vunpack.c.h.b16 %v416
    %v1968 = vunpack.c.l.b16 %v417
    %v1969 = vunpack.c.h.b16 %v417
    %v1970 = vunpack.c.l.b16 %v418
    %v1971 = vunpack.c.h.b16 %v418
    %v1972 = vunpack.c.l.b16 %v419
    %v1973 = vunpack.c.h.b16 %v419
    %v1974 = vunpack.c.l.b16 %v420
    %v1975 = vunpack.c.h.b16 %v420
    %v1976 = vunpack.c.l.b16 %v421
    %v1977 = vunpack.c.h.b16 %v421
    %v1978 = vunpack.c.l.b16 %v422
    %v1979 = vunpack.c.h.b16 %v422
    %v1980 = vunpack.c.l.b16 %v423
    %v1981 = vunpack.c.h.b16 %v423
    %v1982 = vunpack.c.l.b16 %v424
    %v1983 = vunpack.c.h.b16 %v424
    %v1984 = vunpack.c.l.b16 %v425
    %v1985 = vunpack.c.h.b16 %v425
    %v1986 = vunpack.c.l.b16 %v426
    %v1987 = vunpack.c.h.b16 %v426
    %v1988 = vunpack.c.l.b16 %v427
    %v1989 = vunpack.c.h.b16 %v427
    %v1990 = vunpack.c.l.b16 %v428
    %v1991 = vunpack.c.h.b16 %v428
    %v1992 = vunpack.c.l.b16 %v429
    %v1993 = vunpack.c.h.b16 %v429
    %v1994 = vunpack.c.l.b16 %v430
    %v1995 = vunpack.c.h.b16 %v430
    %v1996 = vunpack.c.l.b16 %v431
    %v1997 = vunpack.c.h.b16 %v431
    %v1998 = vunpack.c.l.b16 %v432
    %v1999 = vunpack.c.h.b16 %v432
    %v2000 = vunpack.c.l.b16 %v433
    %v2001 = vunpack.c.h.b16 %v433
    %v2002 = vunpack.c.l.b16 %v434
    %v2003 = vunpack.c.h.b16 %v434
    %v2004 = vunpack.c.l.b16 %v435
    %v2005 = vunpack.c.h.b16 %v435
    %v2006 = vunpack.c.l.b16 %v436
    %v2007 = vunpack.c.h.b16 %v436
    %v2008 = vunpack.c.l.b16 %v437
    %v2009 = vunpack.c.h.b16 %v437
    %v2010 = vunpack.c.l.b16 %v438
    %v2011 = vunpack.c.h.b16 %v438
    %v2012 = vunpack.c.l.b16 %v439
    %v2013 = vunpack.c.h.b16 %v439
    %v2014 = vunpack.c.l.b16 %v440
    %v2015 = vunpack.c.h.b16 %v440
    %v2016 = vunpack.c.l.b16 %v441
    %v2017 = vunpack.c.h.b16 %v441
    %v2018 = vunpack.c.l.b16 %v442
    %v2019 = vunpack.c.h.b16 %v442
    %v2020 = vunpack.c.l.b16 %v443
    %v2021 = vunpack.c.h.b16 %v443
    %v2022 = vunpack.c.l.b16 %v444
    %v2023 = vunpack.c.h.b16 %v444
    %v2024 = vunpack.c.l.b16 %v445
    %v2025 = vunpack.c.h.b16 %v445
    %v2026 = vunpack.c.l.b16 %v446
    %v2027 = vunpack.c.h.b16 %v446
    %v2028 = vunpack.c.l.b16 %v447
    %v2029 = vunpack.c.h.b16 %v447
    %v2030 = vunpack.c.l.b16 %v448
    %v2031 = vunpack.c.h.b16 %v448
    %v2032 = vunpack.c.l.b16 %v449
    %v2033 = vunpack.c.h.b16 %v449
    %v2034 = vunpack.c.l.b16 %v450
    %v2035 = vunpack.c.h.b16 %v450
    %v2036 = vunpack.c.l.b16 %v451
    %v2037 = vunpack.c.h.b16 %v451
    %v2038 = vunpack.c.l.b16 %v452
    %v2039 = vunpack.c.h.b16 %v452
    %v2040 = vunpack.c.l.b16 %v453
    %v2041 = vunpack.c.h.b16 %v453
    %v2042 = vunpack.c.l.b16 %v454
    %v2043 = vunpack.c.h.b16 %v454
    %v2044 = vunpack.c.l.b16 %v455
    %v2045 = vunpack.c.h.b16 %v455
    %v2046 = vunpack.c.l.b16 %v456
    %v2047 = vunpack.c.h.b16 %v456
    %v2048 = vunpack.c.l.b16 %v457
    %v2049 = vunpack.c.h.b16 %v457
    %v2050 = vunpack.c.l.b16 %v458
    %v2051 = vunpack.c.h.b16 %v458
    %v2052 = vunpack.c.l.b16 %v459
    %v2053 = vunpack.c.h.b16 %v459
    %v2054 = vunpack.c.l.b16 %v460
    %v2055 = vunpack.c.h.b16 %v460
    %v2056 = vunpack.c.l.b16 %v461
    %v2057 = vunpack.c.h.b16 %v461
    %v2058 = vunpack.c.l.b16 %v462
    %v2059 = vunpack.c.h.b16 %v462
    %v2060 = vunpack.c.l.b16 %v463
    %v2061 = vunpack.c.h.b16 %v463
    %v2062 = vunpack.c.l.b16 %v464
    %v2063 = vunpack.c.h.b16 %v464
    %v2064 = vunpack.c.l.b16 %v465
    %v2065 = vunpack.c.h.b16 %v465
    %v2066 = vunpack.c.l.b16 %v466
    %v2067 = vunpack.c.h.b16 %v466
    %v2068 = vunpack.c.l.b16 %v467
    %v2069 = vunpack.c.h.b16 %v467
    %v2070 = vunpack.c.l.b16 %v468
    %v2071 = vunpack.c.h.b16 %v468
    %v2072 = vunpack.c.l.b16 %v469
    %v2073 = vunpack.c.h.b16 %v469
    %v2074 = vunpack.c.l.b16 %v470
    %v2075 = vunpack.c.h.b16 %v470
    %v2076 = vunpack.c.l.b16 %v471
    %v2077 = vunpack.c.h.b16 %v471
    %v2078 = vunpack.c.l.b16 %v472
    %v2079 = vunpack.c.h.b16 %v472
    %v2080 = vunpack.c.l.b16 %v473
    %v2081 = vunpack.c.h.b16 %v473
    %v2082 = vunpack.c.l.b16 %v474
    %v2083 = vunpack.c.h.b16 %v474
    %v2084 = vunpack.c.l.b16 %v475
    %v2085 = vunpack.c.h.b16 %v475
    %v2086 = vunpack.c.l.b16 %v476
    %v2087 = vunpack.c.h.b16 %v476
    %v2088 = vunpack.c.l.b16 %v477
    %v2089 = vunpack.c.h.b16 %v477
    %v2090 = vunpack.c.l.b16 %v478
    %v2091 = vunpack.c.h.b16 %v478
    %v2092 = vunpack.c.l.b16 %v479
    %v2093 = vunpack.c.h.b16 %v479
    %v2094 = vunpack.c.l.b16 %v480
    %v2095 = vunpack.c.h.b16 %v480
    %v2096 = vunpack.c.l.b16 %v481
    %v2097 = vunpack.c.h.b16 %v481
    %v2098 = vunpack.c.l.b16 %v482
    %v2099 = vunpack.c.h.b16 %v482
    %v2100 = vunpack.c.l.b16 %v483
    %v2101 = vunpack.c.h.b16 %v483
    %v2102 = vunpack.c.l.b16 %v484
    %v2103 = vunpack.c.h.b16 %v484
    %v2104 = vunpack.c.l.b16 %v485
    %v2105 = vunpack.c.h.b16 %v485
    %v2106 = vunpack.c.l.b16 %v486
    %v2107 = vunpack.c.h.b16 %v486
    %v2108 = vunpack.c.l.b16 %v487
    %v2109 = vunpack.c.h.b16 %v487
    %v2110 = vunpack.c.l.b16 %v488
    %v2111 = vunpack.c.h.b16 %v488
    %v2112 = vunpack.c.l.b16 %v489
    %v2113 = vunpack.c.h.b16 %v489
    %v2114 = vunpack.c.l.b16 %v490
    %v2115 = vunpack.c.h.b16 %v490
    %v2116 = vunpack.c.l.b16 %v491
    %v2117 = vunpack.c.h.b16 %v491
    %v2118 = vunpack.c.l.b16 %v492
    %v2119 = vunpack.c.h.b16 %v492
    %v2120 = vunpack.c.l.b16 %v493
    %v2121 = vunpack.c.h.b16 %v493
    %v2122 = vunpack.c.l.b16 %v494
    %v2123 = vunpack.c.h.b16 %v494
    %v2124 = vunpack.c.l.b16 %v495
    %v2125 = vunpack.c.h.b16 %v495
    %v2126 = vunpack.c.l.b16 %v496
    %v2127 = vunpack.c.h.b16 %v496
    %v2128 = vunpack.c.l.b16 %v497
    %v2129 = vunpack.c.h.b16 %v497
    %v2130 = vunpack.c.l.b16 %v498
    %v2131 = vunpack.c.h.b16 %v498
    %v2132 = vunpack.c.l.b16 %v499
    %v2133 = vunpack.c.h.b16 %v499
    %v2134 = vunpack.c.l.b16 %v500
    %v2135 = vunpack.c.h.b16 %v500
    %v2136 = vunpack.c.l.b16 %v501
    %v2137 = vunpack.c.h.b16 %v501
    %v2138 = vunpack.c.l.b16 %v502
    %v2139 = vunpack.c.h.b16 %v502
    %v2140 = vunpack.c.l.b16 %v503
    %v2141 = vunpack.c.h.b16 %v503
    %v2142 = vunpack.c.l.b16 %v504
    %v2143 = vunpack.c.h.b16 %v504
    %v2144 = vunpack.c.l.b16 %v505
    %v2145 = vunpack.c.h.b16 %v505
    %v2146 = vunpack.c.l.b16 %v506
    %v2147 = vunpack.c.h.b16 %v506
    %v2148 = vunpack.c.l.b16 %v507
    %v2149 = vunpack.c.h.b16 %v507
    %v2150 = vunpack.c.l.b16 %v508
    %v2151 = vunpack.c.h.b16 %v508
    %v2152 = vunpack.c.l.b16 %v509
    %v2153 = vunpack.c.h.b16 %v509
    %v2154 = vunpack.c.l.b16 %v510
    %v2155 = vunpack.c.h.b16 %v510
    %v2156 = vunpack.c.l.b16 %v511
    %v2157 = vunpack.c.h.b16 %v511
    %v2158 = vunpack.c.l.b16 %v512
    %v2159 = vunpack.c.h.b16 %v512
    %v2160 = vunpack.c.l.b16 %v513
    %v2161 = vunpack.c.h.b16 %v513
    %v2162 = vunpack.c.l.b16 %v514
    %v2163 = vunpack.c.h.b16 %v514
    %v2164 = vunpack.c.l.b16 %v515
    %v2165 = vunpack.c.h.b16 %v515
    %v2166 = vunpack.c.l.b16 %v516
    %v2167 = vunpack.c.h.b16 %v516
    %v2168 = vunpack.c.l.b16 %v517
    %v2169 = vunpack.c.h.b16 %v517
    %v2170 = vunpack.c.l.b16 %v518
    %v2171 = vunpack.c.h.b16 %v518
    %v2172 = vunpack.c.l.b16 %v519
    %v2173 = vunpack.c.h.b16 %v519
    %v2174 = vunpack.c.l.b16 %v520
    %v2175 = vunpack.c.h.b16 %v520
    %v2176 = vunpack.c.l.b16 %v521
    %v2177 = vunpack.c.h.b16 %v521
    %v2178 = vunpack.c.l.b16 %v522
    %v2179 = vunpack.c.h.b16 %v522
    %v2180 = vunpack.c.l.b16 %v523
    %v2181 = vunpack.c.h.b16 %v523
    %v2182 = vunpack.c.l.b16 %v524
    %v2183 = vunpack.c.h.b16 %v524
    %v2184 = vunpack.c.l.b16 %v525
    %v2185 = vunpack.c.h.b16 %v525
    %v2186 = vunpack.c.l.b16 %v526
    %v2187 = vunpack.c.h.b16 %v526
    %v2188 = vunpack.c.l.b16 %v527
    %v2189 = vunpack.c.h.b16 %v527
    %v2190 = vunpack.c.l.b16 %v528
    %v2191 = vunpack.c.h.b16 %v528
    %v2192 = vunpack.c.l.b16 %v529
    %v2193 = vunpack.c.h.b16 %v529
    %v2194 = vunpack.c.l.b16 %v530
    %v2195 = vunpack.c.h.b16 %v530
    %v2196 = vunpack.c.l.b16 %v531
    %v2197 = vunpack.c.h.b16 %v531
    %v2198 = vunpack.c.l.b16 %v532
    %v2199 = vunpack.c.h.b16 %v532
    %v2200 = vunpack.c.l.b16 %v533
    %v2201 = vunpack.c.h.b16 %v533
    %v2202 = vunpack.c.l.b16 %v534
    %v2203 = vunpack.c.h.b16 %v534
    %v2204 = vunpack.c.l.b16 %v535
    %v2205 = vunpack.c.h.b16 %v535
    %v2206 = vunpack.c.l.b16 %v536
    %v2207 = vunpack.c.h.b16 %v536
    %v2208 = vunpack.c.l.b16 %v537
    %v2209 = vunpack.c.h.b16 %v537
    %v2210 = vunpack.c.l.b16 %v538
    %v2211 = vunpack.c.h.b16 %v538
    %v2212 = vunpack.c.l.b16 %v539
    %v2213 = vunpack.c.h.b16 %v539
    %v2214 = vunpack.c.l.b16 %v540
    %v2215 = vunpack.c.h.b16 %v540
    %v2216 = vunpack.c.l.b16 %v541
    %v2217 = vunpack.c.h.b16 %v541
    %v2218 = vunpack.c.l.b16 %v542
    %v2219 = vunpack.c.h.b16 %v542
    %v2220 = vunpack.c.l.b16 %v543
    %v2221 = vunpack.c.h.b16 %v543
    %v2222 = vunpack.c.l.b16 %v544
    %v2223 = vunpack.c.h.b16 %v544
    %v2224 = vunpack.c.l.b16 %v545
    %v2225 = vunpack.c.h.b16 %v545
    %v2226 = vunpack.c.l.b16 %v546
    %v2227 = vunpack.c.h.b16 %v546
    %v2228 = vunpack.c.l.b16 %v547
    %v2229 = vunpack.c.h.b16 %v547
    %v2230 = vunpack.c.l.b16 %v548
    %v2231 = vunpack.c.h.b16 %v548
    %v2232 = vunpack.c.l.b16 %v549
    %v2233 = vunpack.c.h.b16 %v549
    %v2234 = vunpack.c.l.b16 %v550
    %v2235 = vunpack.c.h.b16 %v550
    %v2236 = vunpack.c.l.b16 %v551
    %v2237 = vunpack.c.h.b16 %v551
    %v2238 = vunpack.c.l.b16 %v552
    %v2239 = vunpack.c.h.b16 %v552
    %v2240 = vunpack.c.l.b16 %v553
    %v2241 = vunpack.c.h.b16 %v553
    %v2242 = vunpack.c.l.b16 %v554
    %v2243 = vunpack.c.h.b16 %v554
    %v2244 = vunpack.c.l.b16 %v555
    %v2245 = vunpack.c.h.b16 %v555
    %v2246 = vunpack.c.l.b16 %v556
    %v2247 = vunpack.c.h.b16 %v556
    %v2248 = vunpack.c.l.b16 %v557
    %v2249 = vunpack.c.h.b16 %v557
    %v2250 = vunpack.c.l.b16 %v558
    %v2251 = vunpack.c.h.b16 %v558
    %v2252 = vunpack.c.l.b16 %v559
    %v2253 = vunpack.c.h.b16 %v559
    %v2254 = vunpack.c.l.b16 %v560
    %v2255 = vunpack.c.h.b16 %v560
    %v2256 = vunpack.c.l.b16 %v561
    %v2257 = vunpack.c.h.b16 %v561
    %v2258 = vunpack.c.l.b16 %v562
    %v2259 = vunpack.c.h.b16 %v562
    %v2260 = vunpack.c.l.b16 %v563
    %v2261 = vunpack.c.h.b16 %v563
    %v2262 = vunpack.c.l.b16 %v564
    %v2263 = vunpack.c.h.b16 %v564
    %v2264 = vunpack.c.l.b16 %v565
    %v2265 = vunpack.c.h.b16 %v565
    %v2266 = vunpack.c.l.b16 %v566
    %v2267 = vunpack.c.h.b16 %v566
    %v2268 = vunpack.c.l.b16 %v567
    %v2269 = vunpack.c.h.b16 %v567
    %v2270 = vunpack.c.l.b16 %v568
    %v2271 = vunpack.c.h.b16 %v568
    %v2272 = vunpack.c.l.b16 %v569
    %v2273 = vunpack.c.h.b16 %v569
    %v2274 = vunpack.c.l.b16 %v570
    %v2275 = vunpack.c.h.b16 %v570
    %v2276 = vunpack.c.l.b16 %v571
    %v2277 = vunpack.c.h.b16 %v571
    %v2278 = vunpack.c.l.b16 %v572
    %v2279 = vunpack.c.h.b16 %v572
    %v2280 = vunpack.c.l.b16 %v573
    %v2281 = vunpack.c.h.b16 %v573
    %v2282 = vunpack.c.l.b16 %v574
    %v2283 = vunpack.c.h.b16 %v574
    %v2284 = vunpack.c.l.b16 %v575
    %v2285 = vunpack.c.h.b16 %v575
    %v2286 = vunpack.c.l.b16 %v576
    %v2287 = vunpack.c.h.b16 %v576
    %v2288 = vunpack.c.l.b16 %v577
    %v2289 = vunpack.c.h.b16 %v577
    %v2290 = vunpack.c.l.b16 %v578
    %v2291 = vunpack.c.h.b16 %v578
    %v2292 = vunpack.c.l.b16 %v579
    %v2293 = vunpack.c.h.b16 %v579
    %v2294 = vunpack.c.l.b16 %v580
    %v2295 = vunpack.c.h.b16 %v580
    %v2296 = vunpack.c.l.b16 %v581
    %v2297 = vunpack.c.h.b16 %v581
    %v2298 = vunpack.c.l.b16 %v582
    %v2299 = vunpack.c.h.b16 %v582
    %v2300 = vunpack.c.l.b16 %v583
    %v2301 = vunpack.c.h.b16 %v583
    %v2302 = vunpack.c.l.b16 %v584
    %v2303 = vunpack.c.h.b16 %v584
    %v2304 = vunpack.c.l.b16 %v585
    %v2305 = vunpack.c.h.b16 %v585
    %v2306 = vunpack.c.l.b16 %v586
    %v2307 = vunpack.c.h.b16 %v586
    %v2308 = vunpack.c.l.b16 %v587
    %v2309 = vunpack.c.h.b16 %v587
    %v2310 = vunpack.c.l.b16 %v588
    %v2311 = vunpack.c.h.b16 %v588
    %v2312 = vunpack.c.l.b16 %v589
    %v2313 = vunpack.c.h.b16 %v589
    %v2314 = vunpack.c.l.b16 %v590
    %v2315 = vunpack.c.h.b16 %v590
    %v2316 = vunpack.c.l.b16 %v591
    %v2317 = vunpack.c.h.b16 %v591
    %v2318 = vunpack.c.l.b16 %v592
    %v2319 = vunpack.c.h.b16 %v592
    %v2320 = vunpack.c.l.b16 %v593
    %v2321 = vunpack.c.h.b16 %v593
    %v2322 = vunpack.c.l.b16 %v594
    %v2323 = vunpack.c.h.b16 %v594
    %v2324 = vunpack.c.l.b16 %v595
    %v2325 = vunpack.c.h.b16 %v595
    %v2326 = vunpack.c.l.b16 %v596
    %v2327 = vunpack.c.h.b16 %v596
    %v2328 = vunpack.c.l.b16 %v597
    %v2329 = vunpack.c.h.b16 %v597
    %v2330 = vunpack.c.l.b16 %v598
    %v2331 = vunpack.c.h.b16 %v598
    %v2332 = vunpack.c.l.b16 %v599
    %v2333 = vunpack.c.h.b16 %v599
    %v2334 = vunpack.c.l.b16 %v600
    %v2335 = vunpack.c.h.b16 %v600
    %v2336 = vunpack.c.l.b16 %v601
    %v2337 = vunpack.c.h.b16 %v601
    %v2338 = vunpack.c.l.b16 %v602
    %v2339 = vunpack.c.h.b16 %v602
    %v2340 = vunpack.c.l.b16 %v603
    %v2341 = vunpack.c.h.b16 %v603
    %v2342 = vunpack.c.l.b16 %v604
    %v2343 = vunpack.c.h.b16 %v604
    %v2344 = vunpack.c.l.b16 %v605
    %v2345 = vunpack.c.h.b16 %v605
    %v2346 = vunpack.c.l.b16 %v606
    %v2347 = vunpack.c.h.b16 %v606
    %v2348 = vunpack.c.l.b16 %v607
    %v2349 = vunpack.c.h.b16 %v607
    %v2350 = vunpack.c.l.b16 %v608
    %v2351 = vunpack.c.h.b16 %v608
    %v2352 = vunpack.c.l.b16 %v609
    %v2353 = vunpack.c.h.b16 %v609
    %v2354 = vunpack.c.l.b16 %v610
    %v2355 = vunpack.c.h.b16 %v610
    %v2356 = vunpack.c.l.b16 %v611
    %v2357 = vunpack.c.h.b16 %v611
    %v2358 = vunpack.c.l.b16 %v612
    %v2359 = vunpack.c.h.b16 %v612
    %v2360 = vunpack.c.l.b16 %v613
    %v2361 = vunpack.c.h.b16 %v613
    %v2362 = vunpack.c.l.b16 %v614
    %v2363 = vunpack.c.h.b16 %v614
    %v2364 = vunpack.c.l.b16 %v615
    %v2365 = vunpack.c.h.b16 %v615
    %v2366 = vunpack.c.l.b16 %v616
    %v2367 = vunpack.c.h.b16 %v616
    %v2368 = vunpack.c.l.b16 %v617
    %v2369 = vunpack.c.h.b16 %v617
    %v2370 = vunpack.c.l.b16 %v618
    %v2371 = vunpack.c.h.b16 %v618
    %v2372 = vunpack.c.l.b16 %v619
    %v2373 = vunpack.c.h.b16 %v619
    %v2374 = vunpack.c.l.b16 %v620
    %v2375 = vunpack.c.h.b16 %v620
    %v2376 = vunpack.c.l.b16 %v621
    %v2377 = vunpack.c.h.b16 %v621
    %v2378 = vunpack.c.l.b16 %v622
    %v2379 = vunpack.c.h.b16 %v622
    %v2380 = vunpack.c.l.b16 %v623
    %v2381 = vunpack.c.h.b16 %v623
    %v2382 = vunpack.c.l.b16 %v624
    %v2383 = vunpack.c.h.b16 %v624
    %v2384 = vunpack.c.l.b16 %v625
    %v2385 = vunpack.c.h.b16 %v625
    %v2386 = vunpack.c.l.b16 %v626
    %v2387 = vunpack.c.h.b16 %v626
    %v2388 = vunpack.c.l.b16 %v627
    %v2389 = vunpack.c.h.b16 %v627
    %v2390 = vunpack.c.l.b16 %v628
    %v2391 = vunpack.c.h.b16 %v628
    %v2392 = vunpack.c.l.b16 %v629
    %v2393 = vunpack.c.h.b16 %v629
    %v2394 = vunpack.c.l.b16 %v630
    %v2395 = vunpack.c.h.b16 %v630
    %v2396 = vunpack.c.l.b16 %v631
    %v2397 = vunpack.c.h.b16 %v631
    %v2398 = vunpack.c.l.b16 %v632
    %v2399 = vunpack.c.h.b16 %v632
    %v2400 = vunpack.c.l.b16 %v633
    %v2401 = vunpack.c.h.b16 %v633
    %v2402 = vunpack.c.l.b16 %v634
    %v2403 = vunpack.c.h.b16 %v634
    %v2404 = vunpack.c.l.b16 %v635
    %v2405 = vunpack.c.h.b16 %v635
    %v2406 = vunpack.c.l.b16 %v636
    %v2407 = vunpack.c.h.b16 %v636
    %v2408 = vunpack.c.l.b16 %v637
    %v2409 = vunpack.c.h.b16 %v637
    %v2410 = vunpack.c.l.b16 %v638
    %v2411 = vunpack.c.h.b16 %v638
    %v2412 = vunpack.c.l.b16 %v639
    %v2413 = vunpack.c.h.b16 %v639
    %v2414 = vunpack.c.l.b16 %v640
    %v2415 = vunpack.c.h.b16 %v640
    %v2416 = vunpack.c.l.b16 %v641
    %v2417 = vunpack.c.h.b16 %v641
    %v2418 = vunpack.c.l.b16 %v642
    %v2419 = vunpack.c.h.b16 %v642
    %v2420 = vunpack.c.l.b16 %v643
    %v2421 = vunpack.c.h.b16 %v643
    %v2422 = vunpack.c.l.b16 %v644
    %v2423 = vunpack.c.h.b16 %v644
    %v2424 = vunpack.c.l.b16 %v645
    %v2425 = vunpack.c.h.b16 %v645
    %v2426 = vunpack.c.l.b16 %v646
    %v2427 = vunpack.c.h.b16 %v646
    %v2428 = vunpack.c.l.b16 %v647
    %v2429 = vunpack.c.h.b16 %v647
    %v2430 = vunpack.c.l.b16 %v648
    %v2431 = vunpack.c.h.b16 %v648
    %v2432 = vunpack.c.l.b16 %v649
    %v2433 = vunpack.c.h.b16 %v649
    %v2434 = vunpack.c.l.b16 %v650
    %v2435 = vunpack.c.h.b16 %v650
    %v2436 = vunpack.c.l.b16 %v651
    %v2437 = vunpack.c.h.b16 %v651
    %v2438 = vunpack.c.l.b16 %v652
    %v2439 = vunpack.c.h.b16 %v652
    %v2440 = vunpack.c.l.b16 %v653
    %v2441 = vunpack.c.h.b16 %v653
    %v2442 = vunpack.c.l.b16 %v654
    %v2443 = vunpack.c.h.b16 %v654
    %v2444 = vunpack.c.l.b16 %v655
    %v2445 = vunpack.c.h.b16 %v655
    %v2446 = vunpack.c.l.b16 %v656
    %v2447 = vunpack.c.h.b16 %v656
    %v2448 = vunpack.c.l.b16 %v657
    %v2449 = vunpack.c.h.b16 %v657
    %v2450 = vunpack.c.l.b16 %v658
    %v2451 = vunpack.c.h.b16 %v658
    %v2452 = vunpack.c.l.b16 %v659
    %v2453 = vunpack.c.h.b16 %v659
    %v2454 = vunpack.c.l.b16 %v660
    %v2455 = vunpack.c.h.b16 %v660
    %v2456 = vunpack.c.l.b16 %v661
    %v2457 = vunpack.c.h.b16 %v661
    %v2458 = vunpack.c.l.b16 %v662
    %v2459 = vunpack.c.h.b16 %v662
    %v2460 = vunpack.c.l.b16 %v663
    %v2461 = vunpack.c.h.b16 %v663
    %v2462 = vunpack.c.l.b16 %v664
    %v2463 = vunpack.c.h.b16 %v664
    %v2464 = vunpack.c.l.b16 %v665
    %v2465 = vunpack.c.h.b16 %v665
    %v2466 = vunpack.c.l.b16 %v666
    %v2467 = vunpack.c.h.b16 %v666
    %v2468 = vunpack.c.l.b16 %v667
    %v2469 = vunpack.c.h.b16 %v667
    %v2470 = vunpack.c.l.b16 %v668
    %v2471 = vunpack.c.h.b16 %v668
    %v2472 = vunpack.c.l.b16 %v669
    %v2473 = vunpack.c.h.b16 %v669
    %v2474 = vunpack.c.l.b16 %v670
    %v2475 = vunpack.c.h.b16 %v670
    %v2476 = vunpack.c.l.b16 %v671
    %v2477 = vunpack.c.h.b16 %v671
    %v2478 = vunpack.c.l.b16 %v672
    %v2479 = vunpack.c.h.b16 %v672
    %v2480 = vunpack.c.l.b16 %v673
    %v2481 = vunpack.c.h.b16 %v673
    %v2482 = vunpack.c.l.b16 %v674
    %v2483 = vunpack.c.h.b16 %v674
    %v2484 = vunpack.c.l.b16 %v675
    %v2485 = vunpack.c.h.b16 %v675
    %v2486 = vunpack.c.l.b16 %v676
    %v2487 = vunpack.c.h.b16 %v676
    %v2488 = vunpack.c.l.b16 %v677
    %v2489 = vunpack.c.h.b16 %v677
    %v2490 = vunpack.c.l.b16 %v678
    %v2491 = vunpack.c.h.b16 %v678
    %v2492 = vunpack.c.l.b16 %v679
    %v2493 = vunpack.c.h.b16 %v679
    %v2494 = vunpack.c.l.b16 %v680
    %v2495 = vunpack.c.h.b16 %v680
    %v2496 = vunpack.c.l.b16 %v681
    %v2497 = vunpack.c.h.b16 %v681
    %v2498 = vunpack.c.l.b16 %v682
    %v2499 = vunpack.c.h.b16 %v682
    %v2500 = vunpack.c.l.b16 %v683
    %v2501 = vunpack.c.h.b16 %v683
    %v2502 = vunpack.c.l.b16 %v684
    %v2503 = vunpack.c.h.b16 %v684
    %v2504 = vunpack.c.l.b16 %v685
    %v2505 = vunpack.c.h.b16 %v685
    %v2506 = vunpack.c.l.b16 %v686
    %v2507 = vunpack.c.h.b16 %v686
    %v2508 = vunpack.c.l.b16 %v687
    %v2509 = vunpack.c.h.b16 %v687
    %v2510 = vunpack.c.l.b16 %v688
    %v2511 = vunpack.c.h.b16 %v688
    %v2512 = vunpack.c.l.b16 %v689
    %v2513 = vunpack.c.h.b16 %v689
    %v2514 = vunpack.c.l.b16 %v690
    %v2515 = vunpack.c.h.b16 %v690
    %v2516 = vunpack.c.l.b16 %v691
    %v2517 = vunpack.c.h.b16 %v691
    %v2518 = vunpack.c.l.b16 %v692
    %v2519 = vunpack.c.h.b16 %v692
    %v2520 = vunpack.c.l.b16 %v693
    %v2521 = vunpack.c.h.b16 %v693
    %v2522 = vunpack.c.l.b16 %v694
    %v2523 = vunpack.c.h.b16 %v694
    %v2524 = vunpack.c.l.b16 %v695
    %v2525 = vunpack.c.h.b16 %v695
    %v2526 = vunpack.c.l.b16 %v696
    %v2527 = vunpack.c.h.b16 %v696
    %v2528 = vunpack.c.l.b16 %v697
    %v2529 = vunpack.c.h.b16 %v697
    %v2530 = vunpack.c.l.b16 %v698
    %v2531 = vunpack.c.h.b16 %v698
    %v2532 = vunpack.c.l.b16 %v699
    %v2533 = vunpack.c.h.b16 %v699
    %v2534 = vunpack.c.l.b16 %v700
    %v2535 = vunpack.c.h.b16 %v700
    %v2536 = vunpack.c.l.b16 %v701
    %v2537 = vunpack.c.h.b16 %v701
    %v2538 = vunpack.c.l.b16 %v702
    %v2539 = vunpack.c.h.b16 %v702
    %v2540 = vunpack.c.l.b16 %v703
    %v2541 = vunpack.c.h.b16 %v703
    %v2542 = vunpack.c.l.b16 %v704
    %v2543 = vunpack.c.h.b16 %v704
    %v2544 = vunpack.c.l.b16 %v705
    %v2545 = vunpack.c.h.b16 %v705
    %v2546 = vunpack.c.l.b16 %v706
    %v2547 = vunpack.c.h.b16 %v706
    %v2548 = vunpack.c.l.b16 %v707
    %v2549 = vunpack.c.h.b16 %v707
    %v2550 = vunpack.c.l.b16 %v708
    %v2551 = vunpack.c.h.b16 %v708
    %v2552 = vunpack.c.l.b16 %v709
    %v2553 = vunpack.c.h.b16 %v709
    %v2554 = vunpack.c.l.b16 %v710
    %v2555 = vunpack.c.h.b16 %v710
    %v2556 = vunpack.c.l.b16 %v711
    %v2557 = vunpack.c.h.b16 %v711
    %v2558 = vunpack.c.l.b16 %v712
    %v2559 = vunpack.c.h.b16 %v712
    %v2560 = vunpack.c.l.b16 %v713
    %v2561 = vunpack.c.h.b16 %v713
    %v2562 = vunpack.c.l.b16 %v714
    %v2563 = vunpack.c.h.b16 %v714
    %v2564 = vunpack.c.l.b16 %v715
    %v2565 = vunpack.c.h.b16 %v715
    %v2566 = vunpack.c.l.b16 %v716
    %v2567 = vunpack.c.h.b16 %v716
    %v2568 = vunpack.c.l.b16 %v717
    %v2569 = vunpack.c.h.b16 %v717
    %v2570 = vunpack.c.l.b16 %v718
    %v2571 = vunpack.c.h.b16 %v718
    %v2572 = vunpack.c.l.b16 %v719
    %v2573 = vunpack.c.h.b16 %v719
    %v2574 = vunpack.c.l.b16 %v720
    %v2575 = vunpack.c.h.b16 %v720
    %v2576 = vunpack.c.l.b16 %v721
    %v2577 = vunpack.c.h.b16 %v721
    %v2578 = vunpack.c.l.b16 %v722
    %v2579 = vunpack.c.h.b16 %v722
    %v2580 = vunpack.c.l.b16 %v723
    %v2581 = vunpack.c.h.b16 %v723
    %v2582 = vunpack.c.l.b16 %v724
    %v2583 = vunpack.c.h.b16 %v724
    %v2584 = vunpack.c.l.b16 %v725
    %v2585 = vunpack.c.h.b16 %v725
    %v2586 = vunpack.c.l.b16 %v726
    %v2587 = vunpack.c.h.b16 %v726
    %v2588 = vunpack.c.l.b16 %v727
    %v2589 = vunpack.c.h.b16 %v727
    %v2590 = vunpack.c.l.b16 %v728
    %v2591 = vunpack.c.h.b16 %v728
    %v2592 = vunpack.c.l.b16 %v729
    %v2593 = vunpack.c.h.b16 %v729
    %v2594 = vunpack.c.l.b16 %v730
    %v2595 = vunpack.c.h.b16 %v730
    %v2596 = vunpack.c.l.b16 %v731
    %v2597 = vunpack.c.h.b16 %v731
    %v2598 = vunpack.c.l.b16 %v732
    %v2599 = vunpack.c.h.b16 %v732
    %v2600 = vunpack.c.l.b16 %v733
    %v2601 = vunpack.c.h.b16 %v733
    %v2602 = vunpack.c.l.b16 %v734
    %v2603 = vunpack.c.h.b16 %v734
    %v2604 = vunpack.c.l.b16 %v735
    %v2605 = vunpack.c.h.b16 %v735
    %v2606 = vunpack.c.l.b16 %v736
    %v2607 = vunpack.c.h.b16 %v736
    %v2608 = vunpack.c.l.b16 %v737
    %v2609 = vunpack.c.h.b16 %v737
    %v2610 = vunpack.c.l.b16 %v738
    %v2611 = vunpack.c.h.b16 %v738
    %v2612 = vunpack.c.l.b16 %v739
    %v2613 = vunpack.c.h.b16 %v739
    %v2614 = vunpack.c.l.b16 %v740
    %v2615 = vunpack.c.h.b16 %v740
    %v2616 = vunpack.c.l.b16 %v741
    %v2617 = vunpack.c.h.b16 %v741
    %v2618 = vunpack.c.l.b16 %v742
    %v2619 = vunpack.c.h.b16 %v742
    %v2620 = vunpack.c.l.b16 %v743
    %v2621 = vunpack.c.h.b16 %v743
    %v2622 = vunpack.c.l.b16 %v744
    %v2623 = vunpack.c.h.b16 %v744
    %v2624 = vunpack.c.l.b16 %v745
    %v2625 = vunpack.c.h.b16 %v745
    %v2626 = vunpack.c.l.b16 %v746
    %v2627 = vunpack.c.h.b16 %v746
    %v2628 = vunpack.c.l.b16 %v747
    %v2629 = vunpack.c.h.b16 %v747
    %v2630 = vunpack.c.l.b16 %v748
    %v2631 = vunpack.c.h.b16 %v748
    %v2632 = vunpack.c.l.b16 %v749
    %v2633 = vunpack.c.h.b16 %v749
    %v2634 = vunpack.c.l.b16 %v750
    %v2635 = vunpack.c.h.b16 %v750
    %v2636 = vunpack.c.l.b16 %v751
    %v2637 = vunpack.c.h.b16 %v751
    %v2638 = vunpack.c.l.b16 %v752
    %v2639 = vunpack.c.h.b16 %v752
    %v2640 = vunpack.c.l.b16 %v753
    %v2641 = vunpack.c.h.b16 %v753
    %v2642 = vunpack.c.l.b16 %v754
    %v2643 = vunpack.c.h.b16 %v754
    %v2644 = vunpack.c.l.b16 %v755
    %v2645 = vunpack.c.h.b16 %v755
    %v2646 = vunpack.c.l.b16 %v756
    %v2647 = vunpack.c.h.b16 %v756
    %v2648 = vunpack.c.l.b16 %v757
    %v2649 = vunpack.c.h.b16 %v757
    %v2650 = vunpack.c.l.b16 %v758
    %v2651 = vunpack.c.h.b16 %v758
    %v2652 = vunpack.c.l.b16 %v759
    %v2653 = vunpack.c.h.b16 %v759
    %v2654 = vunpack.c.l.b16 %v760
    %v2655 = vunpack.c.h.b16 %v760
    %v2656 = vunpack.c.l.b16 %v761
    %v2657 = vunpack.c.h.b16 %v761
    %v2658 = vunpack.c.l.b16 %v762
    %v2659 = vunpack.c.h.b16 %v762
    %v2660 = vunpack.c.l.b16 %v763
    %v2661 = vunpack.c.h.b16 %v763
    %v2662 = vunpack.c.l.b16 %v764
    %v2663 = vunpack.c.h.b16 %v764
    %v2664 = vunpack.c.l.b16 %v765
    %v2665 = vunpack.c.h.b16 %v765
    %v2666 = vunpack.c.l.b16 %v766
    %v2667 = vunpack.c.h.b16 %v766
    %v2668 = vunpack.c.l.b16 %v767
    %v2669 = vunpack.c.h.b16 %v767
    %v2670 = vunpack.c.l.b16 %v768
    %v2671 = vunpack.c.h.b16 %v768
    %v2672 = vunpack.c.l.b16 %v769
    %v2673 = vunpack.c.h.b16 %v769
    %v2674 = vunpack.c.l.b16 %v770
    %v2675 = vunpack.c.h.b16 %v770
    %v2676 = vunpack.c.l.b16 %v771
    %v2677 = vunpack.c.h.b16 %v771
    %v2678 = vunpack.c.l.b16 %v772
    %v2679 = vunpack.c.h.b16 %v772
    %v2680 = vunpack.c.l.b16 %v773
    %v2681 = vunpack.c.h.b16 %v773
    %v2682 = vunpack.c.l.b16 %v774
    %v2683 = vunpack.c.h.b16 %v774
    %v2684 = vunpack.c.l.b16 %v775
    %v2685 = vunpack.c.h.b16 %v775
    %v2686 = vunpack.c.l.b16 %v776
    %v2687 = vunpack.c.h.b16 %v776
    %v2688 = vunpack.c.l.b16 %v777
    %v2689 = vunpack.c.h.b16 %v777
    %v2690 = vunpack.c.l.b16 %v778
    %v2691 = vunpack.c.h.b16 %v778
    %v2692 = vunpack.c.l.b16 %v779
    %v2693 = vunpack.c.h.b16 %v779
    %v2694 = vunpack.c.l.b16 %v780
    %v2695 = vunpack.c.h.b16 %v780
    %v2696 = vunpack.c.l.b16 %v781
    %v2697 = vunpack.c.h.b16 %v781
    %v2698 = vunpack.c.l.b16 %v782
    %v2699 = vunpack.c.h.b16 %v782
    %v2700 = vunpack.c.l.b16 %v783
    %v2701 = vunpack.c.h.b16 %v783
    %v2702 = vunpack.c.l.b16 %v784
    %v2703 = vunpack.c.h.b16 %v784
    %v2704 = vunpack.c.l.b16 %v785
    %v2705 = vunpack.c.h.b16 %v785
    %v2706 = vunpack.c.l.b16 %v786
    %v2707 = vunpack.c.h.b16 %v786
    %v2708 = vunpack.c.l.b16 %v787
    %v2709 = vunpack.c.h.b16 %v787
    %v2710 = vunpack.c.l.b16 %v788
    %v2711 = vunpack.c.h.b16 %v788
    %v2712 = vunpack.c.l.b16 %v789
    %v2713 = vunpack.c.h.b16 %v789
    %v2714 = vunpack.c.l.b16 %v790
    %v2715 = vunpack.c.h.b16 %v790
    %v2716 = vunpack.c.l.b16 %v791
    %v2717 = vunpack.c.h.b16 %v791
    %v2718 = vunpack.c.l.b16 %v792
    %v2719 = vunpack.c.h.b16 %v792
    %v2720 = vunpack.c.l.b16 %v793
    %v2721 = vunpack.c.h.b16 %v793
    %v2722 = vunpack.c.l.b16 %v794
    %v2723 = vunpack.c.h.b16 %v794
    %v2724 = vunpack.c.l.b16 %v795
    %v2725 = vunpack.c.h.b16 %v795
    %v2726 = vunpack.c.l.b16 %v796
    %v2727 = vunpack.c.h.b16 %v796
    %v2728 = vunpack.c.l.b16 %v797
    %v2729 = vunpack.c.h.b16 %v797
    %v2730 = vunpack.c.l.b16 %v798
    %v2731 = vunpack.c.h.b16 %v798
    %v2732 = vunpack.c.l.b16 %v799
    %v2733 = vunpack.c.h.b16 %v799
    %v2734 = vunpack.c.l.b16 %v800
    %v2735 = vunpack.c.h.b16 %v800
    %v2736 = vunpack.c.l.b16 %v801
    %v2737 = vunpack.c.h.b16 %v801
    %v2738 = vunpack.c.l.b16 %v802
    %v2739 = vunpack.c.h.b16 %v802
    %v2740 = vunpack.c.l.b16 %v803
    %v2741 = vunpack.c.h.b16 %v803
    %v2742 = vunpack.c.l.b16 %v804
    %v2743 = vunpack.c.h.b16 %v804
    %v2744 = vunpack.c.l.b16 %v805
    %v2745 = vunpack.c.h.b16 %v805
    %v2746 = vunpack.c.l.b16 %v806
    %v2747 = vunpack.c.h.b16 %v806
    %v2748 = vunpack.c.l.b16 %v807
    %v2749 = vunpack.c.h.b16 %v807
    %v2750 = vunpack.c.l.b16 %v808
    %v2751 = vunpack.c.h.b16 %v808
    %v2752 = vunpack.c.l.b16 %v809
    %v2753 = vunpack.c.h.b16 %v809
    %v2754 = vunpack.c.l.b16 %v810
    %v2755 = vunpack.c.h.b16 %v810
    %v2756 = vunpack.c.l.b16 %v811
    %v2757 = vunpack.c.h.b16 %v811
    %v2758 = vunpack.c.l.b16 %v812
    %v2759 = vunpack.c.h.b16 %v812
    %v2760 = vunpack.c.l.b16 %v813
    %v2761 = vunpack.c.h.b16 %v813
    %v2762 = vunpack.c.l.b16 %v814
    %v2763 = vunpack.c.h.b16 %v814
    %v2764 = vunpack.c.l.b16 %v815
    %v2765 = vunpack.c.h.b16 %v815
    %v2766 = vunpack.c.l.b16 %v816
    %v2767 = vunpack.c.h.b16 %v816
    %v2768 = vunpack.c.l.b16 %v817
    %v2769 = vunpack.c.h.b16 %v817
    %v2770 = vunpack.c.l.b16 %v818
    %v2771 = vunpack.c.h.b16 %v818
    %v2772 = vunpack.c.l.b16 %v819
    %v2773 = vunpack.c.h.b16 %v819
    %v2774 = vunpack.c.l.b16 %v820
    %v2775 = vunpack.c.h.b16 %v820
    %v2776 = vunpack.c.l.b16 %v821
    %v2777 = vunpack.c.h.b16 %v821
    %v2778 = vunpack.c.l.b16 %v822
    %v2779 = vunpack.c.h.b16 %v822
    %v2780 = vunpack.c.l.b16 %v823
    %v2781 = vunpack.c.h.b16 %v823
    %v2782 = vunpack.c.l.b16 %v824
    %v2783 = vunpack.c.h.b16 %v824
    %v2784 = vunpack.c.l.b16 %v825
    %v2785 = vunpack.c.h.b16 %v825
    %v2786 = vunpack.c.l.b16 %v826
    %v2787 = vunpack.c.h.b16 %v826
    %v2788 = vunpack.c.l.b16 %v827
    %v2789 = vunpack.c.h.b16 %v827
    %v2790 = vunpack.c.l.b16 %v828
    %v2791 = vunpack.c.h.b16 %v828
    %v2792 = vunpack.c.l.b16 %v829
    %v2793 = vunpack.c.h.b16 %v829
    %v2794 = vunpack.c.l.b16 %v830
    %v2795 = vunpack.c.h.b16 %v830
    %v2796 = vunpack.c.l.b16 %v831
    %v2797 = vunpack.c.h.b16 %v831
    %v2798 = vunpack.c.l.b16 %v832
    %v2799 = vunpack.c.h.b16 %v832
    %v2800 = vunpack.c.l.b16 %v833
    %v2801 = vunpack.c.h.b16 %v833
    %v2802 = vunpack.c.l.b16 %v834
    %v2803 = vunpack.c.h.b16 %v834
    %v2804 = vunpack.c.l.b16 %v835
    %v2805 = vunpack.c.h.b16 %v835
    %v2806 = vunpack.c.l.b16 %v836
    %v2807 = vunpack.c.h.b16 %v836
    %v2808 = vunpack.c.l.b16 %v837
    %v2809 = vunpack.c.h.b16 %v837
    %v2810 = vunpack.c.l.b16 %v838
    %v2811 = vunpack.c.h.b16 %v838
    %v2812 = vunpack.c.l.b16 %v839
    %v2813 = vunpack.c.h.b16 %v839
    %v2814 = vunpack.c.l.b16 %v840
    %v2815 = vunpack.c.h.b16 %v840
    %v2816 = vunpack.c.l.b16 %v841
    %v2817 = vunpack.c.h.b16 %v841
    %v2818 = vunpack.c.l.b16 %v842
    %v2819 = vunpack.c.h.b16 %v842
    %v2820 = vunpack.c.l.b16 %v843
    %v2821 = vunpack.c.h.b16 %v843
    %v2822 = vunpack.c.l.b16 %v844
    %v2823 = vunpack.c.h.b16 %v844
    %v2824 = vunpack.c.l.b16 %v845
    %v2825 = vunpack.c.h.b16 %v845
    %v2826 = vunpack.c.l.b16 %v846
    %v2827 = vunpack.c.h.b16 %v846
    %v2828 = vunpack.c.l.b16 %v847
    %v2829 = vunpack.c.h.b16 %v847
    %v2830 = vunpack.c.l.b16 %v848
    %v2831 = vunpack.c.h.b16 %v848
    %v2832 = vunpack.c.l.b16 %v849
    %v2833 = vunpack.c.h.b16 %v849
    %v2834 = vpack.c.b16 %v1564, %v1554
    %v2835 = vpack.c.b16 %v1565, %v1555
    %v2836 = vpack.c.b16 %v1566, %v1556
    %v2837 = vpack.c.b16 %v1567, %v1557
    %v2838 = vpack.c.b16 %v1568, %v1558
    %v2839 = vpack.c.b16 %v1569, %v1559
    %v2840 = vpack.c.b16 %v1570, %v1560
    %v2841 = vpack.c.b16 %v1571, %v1561
    %v2842 = vpack.c.b16 %v1572, %v1562
    %v2843 = vpack.c.b16 %v1573, %v1563
    %v2844 = vpack.c.b16 %v1584, %v1574
    %v2845 = vpack.c.b16 %v1585, %v1575
    %v2846 = vpack.c.b16 %v1586, %v1576
    %v2847 = vpack.c.b16 %v1587, %v1577
    %v2848 = vpack.c.b16 %v1588, %v1578
    %v2849 = vpack.c.b16 %v1589, %v1579
    %v2850 = vpack.c.b16 %v1590, %v1580
    %v2851 = vpack.c.b16 %v1591, %v1581
    %v2852 = vpack.c.b16 %v1592, %v1582
    %v2853 = vpack.c.b16 %v1593, %v1583
    %v2854 = vpack.c.b16 %v1604, %v1594
    %v2855 = vpack.c.b16 %v1605, %v1595
    %v2856 = vpack.c.b16 %v1606, %v1596
    %v2857 = vpack.c.b16 %v1607, %v1597
    %v2858 = vpack.c.b16 %v1608, %v1598
    %v2859 = vpack.c.b16 %v1609, %v1599
    %v2860 = vpack.c.b16 %v1610, %v1600
    %v2861 = vpack.c.b16 %v1611, %v1601
    %v2862 = vpack.c.b16 %v1612, %v1602
    %v2863 = vpack.c.b16 %v1613, %v1603
    %v2864 = vpack.c.b16 %v1624, %v1614
    %v2865 = vpack.c.b16 %v1625, %v1615
    %v2866 = vpack.c.b16 %v1626, %v1616
    %v2867 = vpack.c.b16 %v1627, %v1617
    %v2868 = vpack.c.b16 %v1628, %v1618
    %v2869 = vpack.c.b16 %v1629, %v1619
    %v2870 = vpack.c.b16 %v1630, %v1620
    %v2871 = vpack.c.b16 %v1631, %v1621
    %v2872 = vpack.c.b16 %v1632, %v1622
    %v2873 = vpack.c.b16 %v1633, %v1623
    %v2874 = vpack.c.b16 %v1644, %v1634
    %v2875 = vpack.c.b16 %v1645, %v1635
    %v2876 = vpack.c.b16 %v1646, %v1636
    %v2877 = vpack.c.b16 %v1647, %v1637
    %v2878 = vpack.c.b16 %v1648, %v1638
    %v2879 = vpack.c.b16 %v1649, %v1639
    %v2880 = vpack.c.b16 %v1650, %v1640
    %v2881 = vpack.c.b16 %v1651, %v1641
    %v2882 = vpack.c.b16 %v1652, %v1642
    %v2883 = vpack.c.b16 %v1653, %v1643
    %v2884 = vpack.c.b16 %v1664, %v1654
    %v2885 = vpack.c.b16 %v1665, %v1655
    %v2886 = vpack.c.b16 %v1666, %v1656
    %v2887 = vpack.c.b16 %v1667, %v1657
    %v2888 = vpack.c.b16 %v1668, %v1658
    %v2889 = vpack.c.b16 %v1669, %v1659
    %v2890 = vpack.c.b16 %v1670, %v1660
    %v2891 = vpack.c.b16 %v1671, %v1661
    %v2892 = vpack.c.b16 %v1672, %v1662
    %v2893 = vpack.c.b16 %v1673, %v1663
    %v2894 = vpack.c.b16 %v1684, %v1674
    %v2895 = vpack.c.b16 %v1685, %v1675
    %v2896 = vpack.c.b16 %v1686, %v1676
    %v2897 = vpack.c.b16 %v1687, %v1677
    %v2898 = vpack.c.b16 %v1688, %v1678
    %v2899 = vpack.c.b16 %v1689, %v1679
    %v2900 = vpack.c.b16 %v1690, %v1680
    %v2901 = vpack.c.b16 %v1691, %v1681
    %v2902 = vpack.c.b16 %v1692, %v1682
    %v2903 = vpack.c.b16 %v1693, %v1683
    %v2904 = vpack.c.b16 %v1704, %v1694
    %v2905 = vpack.c.b16 %v1705, %v1695
    %v2906 = vpack.c.b16 %v1706, %v1696
    %v2907 = vpack.c.b16 %v1707, %v1697
    %v2908 = vpack.c.b16 %v1708, %v1698
    %v2909 = vpack.c.b16 %v1709, %v1699
    %v2910 = vpack.c.b16 %v1710, %v1700
    %v2911 = vpack.c.b16 %v1711, %v1701
    %v2912 = vpack.c.b16 %v1712, %v1702
    %v2913 = vpack.c.b16 %v1713, %v1703
    %v2914 = vpack.c.b16 %v1724, %v1714
    %v2915 = vpack.c.b16 %v1725, %v1715
    %v2916 = vpack.c.b16 %v1726, %v1716
    %v2917 = vpack.c.b16 %v1727, %v1717
    %v2918 = vpack.c.b16 %v1728, %v1718
    %v2919 = vpack.c.b16 %v1729, %v1719
    %v2920 = vpack.c.b16 %v1730, %v1720
    %v2921 = vpack.c.b16 %v1731, %v1721
    %v2922 = vpack.c.b16 %v1732, %v1722
    %v2923 = vpack.c.b16 %v1733, %v1723
    %v2924 = vpack.c.b16 %v1744, %v1734
    %v2925 = vpack.c.b16 %v1745, %v1735
    %v2926 = vpack.c.b16 %v1746, %v1736
    %v2927 = vpack.c.b16 %v1747, %v1737
    %v2928 = vpack.c.b16 %v1748, %v1738
    %v2929 = vpack.c.b16 %v1749, %v1739
    %v2930 = vpack.c.b16 %v1750, %v1740
    %v2931 = vpack.c.b16 %v1751, %v1741
    %v2932 = vpack.c.b16 %v1752, %v1742
    %v2933 = vpack.c.b16 %v1753, %v1743
    %v2934 = vpack.c.b16 %v1764, %v1754
    %v2935 = vpack.c.b16 %v1765, %v1755
    %v2936 = vpack.c.b16 %v1766, %v1756
    %v2937 = vpack.c.b16 %v1767, %v1757
    %v2938 = vpack.c.b16 %v1768, %v1758
    %v2939 = vpack.c.b16 %v1769, %v1759
    %v2940 = vpack.c.b16 %v1770, %v1760
    %v2941 = vpack.c.b16 %v1771, %v1761
    %v2942 = vpack.c.b16 %v1772, %v1762
    %v2943 = vpack.c.b16 %v1773, %v1763
    %v2944 = vpack.c.b16 %v1784, %v1774
    %v2945 = vpack.c.b16 %v1785, %v1775
    %v2946 = vpack.c.b16 %v1786, %v1776
    %v2947 = vpack.c.b16 %v1787, %v1777
    %v2948 = vpack.c.b16 %v1788, %v1778
    %v2949 = vpack.c.b16 %v1789, %v1779
    %v2950 = vpack.c.b16 %v1790, %v1780
    %v2951 = vpack.c.b16 %v1791, %v1781
    %v2952 = vpack.c.b16 %v1792, %v1782
    %v2953 = vpack.c.b16 %v1793, %v1783
    %v2954 = vpack.c.b16 %v1804, %v1794
    %v2955 = vpack.c.b16 %v1805, %v1795
    %v2956 = vpack.c.b16 %v1806, %v1796
    %v2957 = vpack.c.b16 %v1807, %v1797
    %v2958 = vpack.c.b16 %v1808, %v1798
    %v2959 = vpack.c.b16 %v1809, %v1799
    %v2960 = vpack.c.b16 %v1810, %v1800
    %v2961 = vpack.c.b16 %v1811, %v1801
    %v2962 = vpack.c.b16 %v1812, %v1802
    %v2963 = vpack.c.b16 %v1813, %v1803
    %v2964 = vpack.c.b16 %v1824, %v1814
    %v2965 = vpack.c.b16 %v1825, %v1815
    %v2966 = vpack.c.b16 %v1826, %v1816
    %v2967 = vpack.c.b16 %v1827, %v1817
    %v2968 = vpack.c.b16 %v1828, %v1818
    %v2969 = vpack.c.b16 %v1829, %v1819
    %v2970 = vpack.c.b16 %v1830, %v1820
    %v2971 = vpack.c.b16 %v1831, %v1821
    %v2972 = vpack.c.b16 %v1832, %v1822
    %v2973 = vpack.c.b16 %v1833, %v1823
    %v2974 = vpack.c.b16 %v1844, %v1834
    %v2975 = vpack.c.b16 %v1845, %v1835
    %v2976 = vpack.c.b16 %v1846, %v1836
    %v2977 = vpack.c.b16 %v1847, %v1837
    %v2978 = vpack.c.b16 %v1848, %v1838
    %v2979 = vpack.c.b16 %v1849, %v1839
    %v2980 = vpack.c.b16 %v1850, %v1840
    %v2981 = vpack.c.b16 %v1851, %v1841
    %v2982 = vpack.c.b16 %v1852, %v1842
    %v2983 = vpack.c.b16 %v1853, %v1843
    %v2984 = vpack.c.b16 %v1864, %v1854
    %v2985 = vpack.c.b16 %v1865, %v1855
    %v2986 = vpack.c.b16 %v1866, %v1856
    %v2987 = vpack.c.b16 %v1867, %v1857
    %v2988 = vpack.c.b16 %v1868, %v1858
    %v2989 = vpack.c.b16 %v1869, %v1859
    %v2990 = vpack.c.b16 %v1870, %v1860
    %v2991 = vpack.c.b16 %v1871, %v1861
    %v2992 = vpack.c.b16 %v1872, %v1862
    %v2993 = vpack.c.b16 %v1873, %v1863
    %v2994 = vpack.c.b16 %v1884, %v1874
    %v2995 = vpack.c.b16 %v1885, %v1875
    %v2996 = vpack.c.b16 %v1886, %v1876
    %v2997 = vpack.c.b16 %v1887, %v1877
    %v2998 = vpack.c.b16 %v1888, %v1878
    %v2999 = vpack.c.b16 %v1889, %v1879
    %v3000 = vpack.c.b16 %v1890, %v1880
    %v3001 = vpack.c.b16 %v1891, %v1881
    %v3002 = vpack.c.b16 %v1892, %v1882
    %v3003 = vpack.c.b16 %v1893, %v1883
    %v3004 = vpack.c.b16 %v1904, %v1894
    %v3005 = vpack.c.b16 %v1905, %v1895
    %v3006 = vpack.c.b16 %v1906, %v1896
    %v3007 = vpack.c.b16 %v1907, %v1897
    %v3008 = vpack.c.b16 %v1908, %v1898
    %v3009 = vpack.c.b16 %v1909, %v1899
    %v3010 = vpack.c.b16 %v1910, %v1900
    %v3011 = vpack.c.b16 %v1911, %v1901
    %v3012 = vpack.c.b16 %v1912, %v1902
    %v3013 = vpack.c.b16 %v1913, %v1903
    %v3014 = vpack.c.b16 %v1924, %v1914
    %v3015 = vpack.c.b16 %v1925, %v1915
    %v3016 = vpack.c.b16 %v1926, %v1916
    %v3017 = vpack.c.b16 %v1927, %v1917
    %v3018 = vpack.c.b16 %v1928, %v1918
    %v3019 = vpack.c.b16 %v1929, %v1919
    %v3020 = vpack.c.b16 %v1930, %v1920
    %v3021 = vpack.c.b16 %v1931, %v1921
    %v3022 = vpack.c.b16 %v1932, %v1922
    %v3023 = vpack.c.b16 %v1933, %v1923
    %v3024 = vpack.c.b16 %v1944, %v1934
    %v3025 = vpack.c.b16 %v1945, %v1935
    %v3026 = vpack.c.b16 %v1946, %v1936
    %v3027 = vpack.c.b16 %v1947, %v1937
    %v3028 = vpack.c.b16 %v1948, %v1938
    %v3029 = vpack.c.b16 %v1949, %v1939
    %v3030 = vpack.c.b16 %v1950, %v1940
    %v3031 = vpack.c.b16 %v1951, %v1941
    %v3032 = vpack.c.b16 %v1952, %v1942
    %v3033 = vpack.c.b16 %v1953, %v1943
    %v3034 = vpack.c.b16 %v1964, %v1954
    %v3035 = vpack.c.b16 %v1965, %v1955
    %v3036 = vpack.c.b16 %v1966, %v1956
    %v3037 = vpack.c.b16 %v1967, %v1957
    %v3038 = vpack.c.b16 %v1968, %v1958
    %v3039 = vpack.c.b16 %v1969, %v1959
    %v3040 = vpack.c.b16 %v1970, %v1960
    %v3041 = vpack.c.b16 %v1971, %v1961
    %v3042 = vpack.c.b16 %v1972, %v1962
    %v3043 = vpack.c.b16 %v1973, %v1963
    %v3044 = vpack.c.b16 %v1984, %v1974
    %v3045 = vpack.c.b16 %v1985, %v1975
    %v3046 = vpack.c.b16 %v1986, %v1976
    %v3047 = vpack.c.b16 %v1987, %v1977
    %v3048 = vpack.c.b16 %v1988, %v1978
    %v3049 = vpack.c.b16 %v1989, %v1979
    %v3050 = vpack.c.b16 %v1990, %v1980
    %v3051 = vpack.c.b16 %v1991, %v1981
    %v3052 = vpack.c.b16 %v1992, %v1982
    %v3053 = vpack.c.b16 %v1993, %v1983
    %v3054 = vpack.c.b16 %v2004, %v1994
    %v3055 = vpack.c.b16 %v2005, %v1995
    %v3056 = vpack.c.b16 %v2006, %v1996
    %v3057 = vpack.c.b16 %v2007, %v1997
    %v3058 = vpack.c.b16 %v2008, %v1998
    %v3059 = vpack.c.b16 %v2009, %v1999
    %v3060 = vpack.c.b16 %v2010, %v2000
    %v3061 = vpack.c.b16 %v2011, %v2001
    %v3062 = vpack.c.b16 %v2012, %v2002
    %v3063 = vpack.c.b16 %v2013, %v2003
    %v3064 = vpack.c.b16 %v2024, %v2014
    %v3065 = vpack.c.b16 %v2025, %v2015
    %v3066 = vpack.c.b16 %v2026, %v2016
    %v3067 = vpack.c.b16 %v2027, %v2017
    %v3068 = vpack.c.b16 %v2028, %v2018
    %v3069 = vpack.c.b16 %v2029, %v2019
    %v3070 = vpack.c.b16 %v2030, %v2020
    %v3071 = vpack.c.b16 %v2031, %v2021
    %v3072 = vpack.c.b16 %v2032, %v2022
    %v3073 = vpack.c.b16 %v2033, %v2023
    %v3074 = vpack.c.b16 %v2044, %v2034
    %v3075 = vpack.c.b16 %v2045, %v2035
    %v3076 = vpack.c.b16 %v2046, %v2036
    %v3077 = vpack.c.b16 %v2047, %v2037
    %v3078 = vpack.c.b16 %v2048, %v2038
    %v3079 = vpack.c.b16 %v2049, %v2039
    %v3080 = vpack.c.b16 %v2050, %v2040
    %v3081 = vpack.c.b16 %v2051, %v2041
    %v3082 = vpack.c.b16 %v2052, %v2042
    %v3083 = vpack.c.b16 %v2053, %v2043
    %v3084 = vpack.c.b16 %v2064, %v2054
    %v3085 = vpack.c.b16 %v2065, %v2055
    %v3086 = vpack.c.b16 %v2066, %v2056
    %v3087 = vpack.c.b16 %v2067, %v2057
    %v3088 = vpack.c.b16 %v2068, %v2058
    %v3089 = vpack.c.b16 %v2069, %v2059
    %v3090 = vpack.c.b16 %v2070, %v2060
    %v3091 = vpack.c.b16 %v2071, %v2061
    %v3092 = vpack.c.b16 %v2072, %v2062
    %v3093 = vpack.c.b16 %v2073, %v2063
    %v3094 = vpack.c.b16 %v2084, %v2074
    %v3095 = vpack.c.b16 %v2085, %v2075
    %v3096 = vpack.c.b16 %v2086, %v2076
    %v3097 = vpack.c.b16 %v2087, %v2077
    %v3098 = vpack.c.b16 %v2088, %v2078
    %v3099 = vpack.c.b16 %v2089, %v2079
    %v3100 = vpack.c.b16 %v2090, %v2080
    %v3101 = vpack.c.b16 %v2091, %v2081
    %v3102 = vpack.c.b16 %v2092, %v2082
    %v3103 = vpack.c.b16 %v2093, %v2083
    %v3104 = vpack.c.b16 %v2104, %v2094
    %v3105 = vpack.c.b16 %v2105, %v2095
    %v3106 = vpack.c.b16 %v2106, %v2096
    %v3107 = vpack.c.b16 %v2107, %v2097
    %v3108 = vpack.c.b16 %v2108, %v2098
    %v3109 = vpack.c.b16 %v2109, %v2099
    %v3110 = vpack.c.b16 %v2110, %v2100
    %v3111 = vpack.c.b16 %v2111, %v2101
    %v3112 = vpack.c.b16 %v2112, %v2102
    %v3113 = vpack.c.b16 %v2113, %v2103
    %v3114 = vpack.c.b16 %v2124, %v2114
    %v3115 = vpack.c.b16 %v2125, %v2115
    %v3116 = vpack.c.b16 %v2126, %v2116
    %v3117 = vpack.c.b16 %v2127, %v2117
    %v3118 = vpack.c.b16 %v2128, %v2118
    %v3119 = vpack.c.b16 %v2129, %v2119
    %v3120 = vpack.c.b16 %v2130, %v2120
    %v3121 = vpack.c.b16 %v2131, %v2121
    %v3122 = vpack.c.b16 %v2132, %v2122
    %v3123 = vpack.c.b16 %v2133, %v2123
    %v3124 = vpack.c.b16 %v2144, %v2134
    %v3125 = vpack.c.b16 %v2145, %v2135
    %v3126 = vpack.c.b16 %v2146, %v2136
    %v3127 = vpack.c.b16 %v2147, %v2137
    %v3128 = vpack.c.b16 %v2148, %v2138
    %v3129 = vpack.c.b16 %v2149, %v2139
    %v3130 = vpack.c.b16 %v2150, %v2140
    %v3131 = vpack.c.b16 %v2151, %v2141
    %v3132 = vpack.c.b16 %v2152, %v2142
    %v3133 = vpack.c.b16 %v2153, %v2143
    %v3134 = vpack.c.b16 %v2164, %v2154
    %v3135 = vpack.c.b16 %v2165, %v2155
    %v3136 = vpack.c.b16 %v2166, %v2156
    %v3137 = vpack.c.b16 %v2167, %v2157
    %v3138 = vpack.c.b16 %v2168, %v2158
    %v3139 = vpack.c.b16 %v2169, %v2159
    %v3140 = vpack.c.b16 %v2170, %v2160
    %v3141 = vpack.c.b16 %v2171, %v2161
    %v3142 = vpack.c.b16 %v2172, %v2162
    %v3143 = vpack.c.b16 %v2173, %v2163
    %v3144 = vpack.c.b16 %v2184, %v2174
    %v3145 = vpack.c.b16 %v2185, %v2175
    %v3146 = vpack.c.b16 %v2186, %v2176
    %v3147 = vpack.c.b16 %v2187, %v2177
    %v3148 = vpack.c.b16 %v2188, %v2178
    %v3149 = vpack.c.b16 %v2189, %v2179
    %v3150 = vpack.c.b16 %v2190, %v2180
    %v3151 = vpack.c.b16 %v2191, %v2181
    %v3152 = vpack.c.b16 %v2192, %v2182
    %v3153 = vpack.c.b16 %v2193, %v2183
    %v3154 = vpack.c.b16 %v2204, %v2194
    %v3155 = vpack.c.b16 %v2205, %v2195
    %v3156 = vpack.c.b16 %v2206, %v2196
    %v3157 = vpack.c.b16 %v2207, %v2197
    %v3158 = vpack.c.b16 %v2208, %v2198
    %v3159 = vpack.c.b16 %v2209, %v2199
    %v3160 = vpack.c.b16 %v2210, %v2200
    %v3161 = vpack.c.b16 %v2211, %v2201
    %v3162 = vpack.c.b16 %v2212, %v2202
    %v3163 = vpack.c.b16 %v2213, %v2203
    %v3164 = vpack.c.b16 %v2224, %v2214
    %v3165 = vpack.c.b16 %v2225, %v2215
    %v3166 = vpack.c.b16 %v2226, %v2216
    %v3167 = vpack.c.b16 %v2227, %v2217
    %v3168 = vpack.c.b16 %v2228, %v2218
    %v3169 = vpack.c.b16 %v2229, %v2219
    %v3170 = vpack.c.b16 %v2230, %v2220
    %v3171 = vpack.c.b16 %v2231, %v2221
    %v3172 = vpack.c.b16 %v2232, %v2222
    %v3173 = vpack.c.b16 %v2233, %v2223
    %v3174 = vpack.c.b16 %v2244, %v2234
    %v3175 = vpack.c.b16 %v2245, %v2235
    %v3176 = vpack.c.b16 %v2246, %v2236
    %v3177 = vpack.c.b16 %v2247, %v2237
    %v3178 = vpack.c.b16 %v2248, %v2238
    %v3179 = vpack.c.b16 %v2249, %v2239
    %v3180 = vpack.c.b16 %v2250, %v2240
    %v3181 = vpack.c.b16 %v2251, %v2241
    %v3182 = vpack.c.b16 %v2252, %v2242
    %v3183 = vpack.c.b16 %v2253, %v2243
    %v3184 = vpack.c.b16 %v2264, %v2254
    %v3185 = vpack.c.b16 %v2265, %v2255
    %v3186 = vpack.c.b16 %v2266, %v2256
    %v3187 = vpack.c.b16 %v2267, %v2257
    %v3188 = vpack.c.b16 %v2268, %v2258
    %v3189 = vpack.c.b16 %v2269, %v2259
    %v3190 = vpack.c.b16 %v2270, %v2260
    %v3191 = vpack.c.b16 %v2271, %v2261
    %v3192 = vpack.c.b16 %v2272, %v2262
    %v3193 = vpack.c.b16 %v2273, %v2263
    %v3194 = vpack.c.b16 %v2284, %v2274
    %v3195 = vpack.c.b16 %v2285, %v2275
    %v3196 = vpack.c.b16 %v2286, %v2276
    %v3197 = vpack.c.b16 %v2287, %v2277
    %v3198 = vpack.c.b16 %v2288, %v2278
    %v3199 = vpack.c.b16 %v2289, %v2279
    %v3200 = vpack.c.b16 %v2290, %v2280
    %v3201 = vpack.c.b16 %v2291, %v2281
    %v3202 = vpack.c.b16 %v2292, %v2282
    %v3203 = vpack.c.b16 %v2293, %v2283
    %v3204 = vpack.c.b16 %v2304, %v2294
    %v3205 = vpack.c.b16 %v2305, %v2295
    %v3206 = vpack.c.b16 %v2306, %v2296
    %v3207 = vpack.c.b16 %v2307, %v2297
    %v3208 = vpack.c.b16 %v2308, %v2298
    %v3209 = vpack.c.b16 %v2309, %v2299
    %v3210 = vpack.c.b16 %v2310, %v2300
    %v3211 = vpack.c.b16 %v2311, %v2301
    %v3212 = vpack.c.b16 %v2312, %v2302
    %v3213 = vpack.c.b16 %v2313, %v2303
    %v3214 = vpack.c.b16 %v2324, %v2314
    %v3215 = vpack.c.b16 %v2325, %v2315
    %v3216 = vpack.c.b16 %v2326, %v2316
    %v3217 = vpack.c.b16 %v2327, %v2317
    %v3218 = vpack.c.b16 %v2328, %v2318
    %v3219 = vpack.c.b16 %v2329, %v2319
    %v3220 = vpack.c.b16 %v2330, %v2320
    %v3221 = vpack.c.b16 %v2331, %v2321
    %v3222 = vpack.c.b16 %v2332, %v2322
    %v3223 = vpack.c.b16 %v2333, %v2323
    %v3224 = vpack.c.b16 %v2344, %v2334
    %v3225 = vpack.c.b16 %v2345, %v2335
    %v3226 = vpack.c.b16 %v2346, %v2336
    %v3227 = vpack.c.b16 %v2347, %v2337
    %v3228 = vpack.c.b16 %v2348, %v2338
    %v3229 = vpack.c.b16 %v2349, %v2339
    %v3230 = vpack.c.b16 %v2350, %v2340
    %v3231 = vpack.c.b16 %v2351, %v2341
    %v3232 = vpack.c.b16 %v2352, %v2342
    %v3233 = vpack.c.b16 %v2353, %v2343
    %v3234 = vpack.c.b16 %v2364, %v2354
    %v3235 = vpack.c.b16 %v2365, %v2355
    %v3236 = vpack.c.b16 %v2366, %v2356
    %v3237 = vpack.c.b16 %v2367, %v2357
    %v3238 = vpack.c.b16 %v2368, %v2358
    %v3239 = vpack.c.b16 %v2369, %v2359
    %v3240 = vpack.c.b16 %v2370, %v2360
    %v3241 = vpack.c.b16 %v2371, %v2361
    %v3242 = vpack.c.b16 %v2372, %v2362
    %v3243 = vpack.c.b16 %v2373, %v2363
    %v3244 = vpack.c.b16 %v2384, %v2374
    %v3245 = vpack.c.b16 %v2385, %v2375
    %v3246 = vpack.c.b16 %v2386, %v2376
    %v3247 = vpack.c.b16 %v2387, %v2377
    %v3248 = vpack.c.b16 %v2388, %v2378
    %v3249 = vpack.c.b16 %v2389, %v2379
    %v3250 = vpack.c.b16 %v2390, %v2380
    %v3251 = vpack.c.b16 %v2391, %v2381
    %v3252 = vpack.c.b16 %v2392, %v2382
    %v3253 = vpack.c.b16 %v2393, %v2383
    %v3254 = vpack.c.b16 %v2404, %v2394
    %v3255 = vpack.c.b16 %v2405, %v2395
    %v3256 = vpack.c.b16 %v2406, %v2396
    %v3257 = vpack.c.b16 %v2407, %v2397
    %v3258 = vpack.c.b16 %v2408, %v2398
    %v3259 = vpack.c.b16 %v2409, %v2399
    %v3260 = vpack.c.b16 %v2410, %v2400
    %v3261 = vpack.c.b16 %v2411, %v2401
    %v3262 = vpack.c.b16 %v2412, %v2402
    %v3263 = vpack.c.b16 %v2413, %v2403
    %v3264 = vpack.c.b16 %v2424, %v2414
    %v3265 = vpack.c.b16 %v2425, %v2415
    %v3266 = vpack.c.b16 %v2426, %v2416
    %v3267 = vpack.c.b16 %v2427, %v2417
    %v3268 = vpack.c.b16 %v2428, %v2418
    %v3269 = vpack.c.b16 %v2429, %v2419
    %v3270 = vpack.c.b16 %v2430, %v2420
    %v3271 = vpack.c.b16 %v2431, %v2421
    %v3272 = vpack.c.b16 %v2432, %v2422
    %v3273 = vpack.c.b16 %v2433, %v2423
    %v3274 = vpack.c.b16 %v2444, %v2434
    %v3275 = vpack.c.b16 %v2445, %v2435
    %v3276 = vpack.c.b16 %v2446, %v2436
    %v3277 = vpack.c.b16 %v2447, %v2437
    %v3278 = vpack.c.b16 %v2448, %v2438
    %v3279 = vpack.c.b16 %v2449, %v2439
    %v3280 = vpack.c.b16 %v2450, %v2440
    %v3281 = vpack.c.b16 %v2451, %v2441
    %v3282 = vpack.c.b16 %v2452, %v2442
    %v3283 = vpack.c.b16 %v2453, %v2443
    %v3284 = vpack.c.b16 %v2464, %v2454
    %v3285 = vpack.c.b16 %v2465, %v2455
    %v3286 = vpack.c.b16 %v2466, %v2456
    %v3287 = vpack.c.b16 %v2467, %v2457
    %v3288 = vpack.c.b16 %v2468, %v2458
    %v3289 = vpack.c.b16 %v2469, %v2459
    %v3290 = vpack.c.b16 %v2470, %v2460
    %v3291 = vpack.c.b16 %v2471, %v2461
    %v3292 = vpack.c.b16 %v2472, %v2462
    %v3293 = vpack.c.b16 %v2473, %v2463
    %v3294 = vpack.c.b16 %v2484, %v2474
    %v3295 = vpack.c.b16 %v2485, %v2475
    %v3296 = vpack.c.b16 %v2486, %v2476
    %v3297 = vpack.c.b16 %v2487, %v2477
    %v3298 = vpack.c.b16 %v2488, %v2478
    %v3299 = vpack.c.b16 %v2489, %v2479
    %v3300 = vpack.c.b16 %v2490, %v2480
    %v3301 = vpack.c.b16 %v2491, %v2481
    %v3302 = vpack.c.b16 %v2492, %v2482
    %v3303 = vpack.c.b16 %v2493, %v2483
    %v3304 = vpack.c.b16 %v2504, %v2494
    %v3305 = vpack.c.b16 %v2505, %v2495
    %v3306 = vpack.c.b16 %v2506, %v2496
    %v3307 = vpack.c.b16 %v2507, %v2497
    %v3308 = vpack.c.b16 %v2508, %v2498
    %v3309 = vpack.c.b16 %v2509, %v2499
    %v3310 = vpack.c.b16 %v2510, %v2500
    %v3311 = vpack.c.b16 %v2511, %v2501
    %v3312 = vpack.c.b16 %v2512, %v2502
    %v3313 = vpack.c.b16 %v2513, %v2503
    %v3314 = vpack.c.b16 %v2524, %v2514
    %v3315 = vpack.c.b16 %v2525, %v2515
    %v3316 = vpack.c.b16 %v2526, %v2516
    %v3317 = vpack.c.b16 %v2527, %v2517
    %v3318 = vpack.c.b16 %v2528, %v2518
    %v3319 = vpack.c.b16 %v2529, %v2519
    %v3320 = vpack.c.b16 %v2530, %v2520
    %v3321 = vpack.c.b16 %v2531, %v2521
    %v3322 = vpack.c.b16 %v2532, %v2522
    %v3323 = vpack.c.b16 %v2533, %v2523
    %v3324 = vpack.c.b16 %v2544, %v2534
    %v3325 = vpack.c.b16 %v2545, %v2535
    %v3326 = vpack.c.b16 %v2546, %v2536
    %v3327 = vpack.c.b16 %v2547, %v2537
    %v3328 = vpack.c.b16 %v2548, %v2538
    %v3329 = vpack.c.b16 %v2549, %v2539
    %v3330 = vpack.c.b16 %v2550, %v2540
    %v3331 = vpack.c.b16 %v2551, %v2541
    %v3332 = vpack.c.b16 %v2552, %v2542
    %v3333 = vpack.c.b16 %v2553, %v2543
    %v3334 = vpack.c.b16 %v2564, %v2554
    %v3335 = vpack.c.b16 %v2565, %v2555
    %v3336 = vpack.c.b16 %v2566, %v2556
    %v3337 = vpack.c.b16 %v2567, %v2557
    %v3338 = vpack.c.b16 %v2568, %v2558
    %v3339 = vpack.c.b16 %v2569, %v2559
    %v3340 = vpack.c.b16 %v2570, %v2560
    %v3341 = vpack.c.b16 %v2571, %v2561
    %v3342 = vpack.c.b16 %v2572, %v2562
    %v3343 = vpack.c.b16 %v2573, %v2563
    %v3344 = vpack.c.b16 %v2584, %v2574
    %v3345 = vpack.c.b16 %v2585, %v2575
    %v3346 = vpack.c.b16 %v2586, %v2576
    %v3347 = vpack.c.b16 %v2587, %v2577
    %v3348 = vpack.c.b16 %v2588, %v2578
    %v3349 = vpack.c.b16 %v2589, %v2579
    %v3350 = vpack.c.b16 %v2590, %v2580
    %v3351 = vpack.c.b16 %v2591, %v2581
    %v3352 = vpack.c.b16 %v2592, %v2582
    %v3353 = vpack.c.b16 %v2593, %v2583
    %v3354 = vpack.c.b16 %v2604, %v2594
    %v3355 = vpack.c.b16 %v2605, %v2595
    %v3356 = vpack.c.b16 %v2606, %v2596
    %v3357 = vpack.c.b16 %v2607, %v2597
    %v3358 = vpack.c.b16 %v2608, %v2598
    %v3359 = vpack.c.b16 %v2609, %v2599
    %v3360 = vpack.c.b16 %v2610, %v2600
    %v3361 = vpack.c.b16 %v2611, %v2601
    %v3362 = vpack.c.b16 %v2612, %v2602
    %v3363 = vpack.c.b16 %v2613, %v2603
    %v3364 = vpack.c.b16 %v2624, %v2614
    %v3365 = vpack.c.b16 %v2625, %v2615
    %v3366 = vpack.c.b16 %v2626, %v2616
    %v3367 = vpack.c.b16 %v2627, %v2617
    %v3368 = vpack.c.b16 %v2628, %v2618
    %v3369 = vpack.c.b16 %v2629, %v2619
    %v3370 = vpack.c.b16 %v2630, %v2620
    %v3371 = vpack.c.b16 %v2631, %v2621
    %v3372 = vpack.c.b16 %v2632, %v2622
    %v3373 = vpack.c.b16 %v2633, %v2623
    %v3374 = vpack.c.b16 %v2644, %v2634
    %v3375 = vpack.c.b16 %v2645, %v2635
    %v3376 = vpack.c.b16 %v2646, %v2636
    %v3377 = vpack.c.b16 %v2647, %v2637
    %v3378 = vpack.c.b16 %v2648, %v2638
    %v3379 = vpack.c.b16 %v2649, %v2639
    %v3380 = vpack.c.b16 %v2650, %v2640
    %v3381 = vpack.c.b16 %v2651, %v2641
    %v3382 = vpack.c.b16 %v2652, %v2642
    %v3383 = vpack.c.b16 %v2653, %v2643
    %v3384 = vpack.c.b16 %v2664, %v2654
    %v3385 = vpack.c.b16 %v2665, %v2655
    %v3386 = vpack.c.b16 %v2666, %v2656
    %v3387 = vpack.c.b16 %v2667, %v2657
    %v3388 = vpack.c.b16 %v2668, %v2658
    %v3389 = vpack.c.b16 %v2669, %v2659
    %v3390 = vpack.c.b16 %v2670, %v2660
    %v3391 = vpack.c.b16 %v2671, %v2661
    %v3392 = vpack.c.b16 %v2672, %v2662
    %v3393 = vpack.c.b16 %v2673, %v2663
    %v3394 = vpack.c.b16 %v2684, %v2674
    %v3395 = vpack.c.b16 %v2685, %v2675
    %v3396 = vpack.c.b16 %v2686, %v2676
    %v3397 = vpack.c.b16 %v2687, %v2677
    %v3398 = vpack.c.b16 %v2688, %v2678
    %v3399 = vpack.c.b16 %v2689, %v2679
    %v3400 = vpack.c.b16 %v2690, %v2680
    %v3401 = vpack.c.b16 %v2691, %v2681
    %v3402 = vpack.c.b16 %v2692, %v2682
    %v3403 = vpack.c.b16 %v2693, %v2683
    %v3404 = vpack.c.b16 %v2704, %v2694
    %v3405 = vpack.c.b16 %v2705, %v2695
    %v3406 = vpack.c.b16 %v2706, %v2696
    %v3407 = vpack.c.b16 %v2707, %v2697
    %v3408 = vpack.c.b16 %v2708, %v2698
    %v3409 = vpack.c.b16 %v2709, %v2699
    %v3410 = vpack.c.b16 %v2710, %v2700
    %v3411 = vpack.c.b16 %v2711, %v2701
    %v3412 = vpack.c.b16 %v2712, %v2702
    %v3413 = vpack.c.b16 %v2713, %v2703
    %v3414 = vpack.c.b16 %v2724, %v2714
    %v3415 = vpack.c.b16 %v2725, %v2715
    %v3416 = vpack.c.b16 %v2726, %v2716
    %v3417 = vpack.c.b16 %v2727, %v2717
    %v3418 = vpack.c.b16 %v2728, %v2718
    %v3419 = vpack.c.b16 %v2729, %v2719
    %v3420 = vpack.c.b16 %v2730, %v2720
    %v3421 = vpack.c.b16 %v2731, %v2721
    %v3422 = vpack.c.b16 %v2732, %v2722
    %v3423 = vpack.c.b16 %v2733, %v2723
    %v3424 = vpack.c.b16 %v2744, %v2734
    %v3425 = vpack.c.b16 %v2745, %v2735
    %v3426 = vpack.c.b16 %v2746, %v2736
    %v3427 = vpack.c.b16 %v2747, %v2737
    %v3428 = vpack.c.b16 %v2748, %v2738
    %v3429 = vpack.c.b16 %v2749, %v2739
    %v3430 = vpack.c.b16 %v2750, %v2740
    %v3431 = vpack.c.b16 %v2751, %v2741
    %v3432 = vpack.c.b16 %v2752, %v2742
    %v3433 = vpack.c.b16 %v2753, %v2743
    %v3434 = vpack.c.b16 %v2764, %v2754
    %v3435 = vpack.c.b16 %v2765, %v2755
    %v3436 = vpack.c.b16 %v2766, %v2756
    %v3437 = vpack.c.b16 %v2767, %v2757
    %v3438 = vpack.c.b16 %v2768, %v2758
    %v3439 = vpack.c.b16 %v2769, %v2759
    %v3440 = vpack.c.b16 %v2770, %v2760
    %v3441 = vpack.c.b16 %v2771, %v2761
    %v3442 = vpack.c.b16 %v2772, %v2762
    %v3443 = vpack.c.b16 %v2773, %v2763
    %v3444 = vpack.c.b16 %v2784, %v2774
    %v3445 = vpack.c.b16 %v2785, %v2775
    %v3446 = vpack.c.b16 %v2786, %v2776
    %v3447 = vpack.c.b16 %v2787, %v2777
    %v3448 = vpack.c.b16 %v2788, %v2778
    %v3449 = vpack.c.b16 %v2789, %v2779
    %v3450 = vpack.c.b16 %v2790, %v2780
    %v3451 = vpack.c.b16 %v2791, %v2781
    %v3452 = vpack.c.b16 %v2792, %v2782
    %v3453 = vpack.c.b16 %v2793, %v2783
    %v3454 = vpack.c.b16 %v2804, %v2794
    %v3455 = vpack.c.b16 %v2805, %v2795
    %v3456 = vpack.c.b16 %v2806, %v2796
    %v3457 = vpack.c.b16 %v2807, %v2797
    %v3458 = vpack.c.b16 %v2808, %v2798
    %v3459 = vpack.c.b16 %v2809, %v2799
    %v3460 = vpack.c.b16 %v2810, %v2800
    %v3461 = vpack.c.b16 %v2811, %v2801
    %v3462 = vpack.c.b16 %v2812, %v2802
    %v3463 = vpack.c.b16 %v2813, %v2803
    %v3464 = vpack.c.b16 %v2824, %v2814
    %v3465 = vpack.c.b16 %v2825, %v2815
    %v3466 = vpack.c.b16 %v2826, %v2816
    %v3467 = vpack.c.b16 %v2827, %v2817
    %v3468 = vpack.c.b16 %v2828, %v2818
    %v3469 = vpack.c.b16 %v2829, %v2819
    %v3470 = vpack.c.b16 %v2830, %v2820
    %v3471 = vpack.c.b16 %v2831, %v2821
    %v3472 = vpack.c.b16 %v2832, %v2822
    %v3473 = vpack.c.b16 %v2833, %v2823
    %4114 = vmatpush.bf16.msra.mxu0 %v2904
    %4115 = vmatpush.bf16.msra.mxu0 %v2894
    %4116 = vmatpush.bf16.msra.mxu0 %v2884
    %4117 = vmatpush.bf16.msra.mxu0 %v2874
    %4118 = vmatpush.bf16.msra.mxu0 %v2864
    %4119 = vmatpush.bf16.msra.mxu0 %v2854
    %4120 = vmatpush.bf16.msra.mxu0 %v2844
    %4121 = vmatpush.bf16.msra.mxu0 %v2834
    %4122 = vmatmul.bf16.gmra.mxu0 %v898
    %v4123 = vpop.f32.mrf.mxu0
    %v4124 = vadd.f32 %v854, %v4123
    %v4125 = vpop.f32.mrf.mxu0
    %v4126 = vadd.f32 %v854, %v4125
    %4127 = vdwg.mxu0
    %4128 = vmatpush.bf16.msra.mxu0 %v2984
    %4129 = vmatpush.bf16.msra.mxu0 %v2974
    %4130 = vmatpush.bf16.msra.mxu0 %v2964
    %4131 = vmatpush.bf16.msra.mxu0 %v2954
    %4132 = vmatpush.bf16.msra.mxu0 %v2944
    %4133 = vmatpush.bf16.msra.mxu0 %v2934
    %4134 = vmatpush.bf16.msra.mxu0 %v2924
    %4135 = vmatpush.bf16.msra.mxu0 %v2914
    %4136 = vmatmul.bf16.gmra.mxu0 %v899
    %v4137 = vpop.f32.mrf.mxu0
    %v4138 = vadd.f32 %v4124, %v4137
    %v4139 = vpop.f32.mrf.mxu0
    %v4140 = vadd.f32 %v4126, %v4139
    %4141 = vdwg.mxu0
    %4142 = vmatpush.bf16.msra.mxu0 %v3064
    %4143 = vmatpush.bf16.msra.mxu0 %v3054
    %4144 = vmatpush.bf16.msra.mxu0 %v3044
    %4145 = vmatpush.bf16.msra.mxu0 %v3034
    %4146 = vmatpush.bf16.msra.mxu0 %v3024
    %4147 = vmatpush.bf16.msra.mxu0 %v3014
    %4148 = vmatpush.bf16.msra.mxu0 %v3004
    %4149 = vmatpush.bf16.msra.mxu0 %v2994
    %4150 = vmatmul.bf16.gmra.mxu0 %v900
    %v4151 = vpop.f32.mrf.mxu0
    %v4152 = vadd.f32 %v4138, %v4151
    %v4153 = vpop.f32.mrf.mxu0
    %v4154 = vadd.f32 %v4140, %v4153
    %4155 = vdwg.mxu0
    %4156 = vmatpush.bf16.msra.mxu0 %v3144
    %4157 = vmatpush.bf16.msra.mxu0 %v3134
    %4158 = vmatpush.bf16.msra.mxu0 %v3124
    %4159 = vmatpush.bf16.msra.mxu0 %v3114
    %4160 = vmatpush.bf16.msra.mxu0 %v3104
    %4161 = vmatpush.bf16.msra.mxu0 %v3094
    %4162 = vmatpush.bf16.msra.mxu0 %v3084
    %4163 = vmatpush.bf16.msra.mxu0 %v3074
    %4164 = vmatmul.bf16.gmra.mxu0 %v901
    %v4165 = vpop.f32.mrf.mxu0
    %v4166 = vadd.f32 %v4152, %v4165
    %v4167 = vpop.f32.mrf.mxu0
    %v4168 = vadd.f32 %v4154, %v4167
    %4169 = vdwg.mxu0
    %4170 = vmatpush.bf16.msra.mxu0 %v3224
    %4171 = vmatpush.bf16.msra.mxu0 %v3214
    %4172 = vmatpush.bf16.msra.mxu0 %v3204
    %4173 = vmatpush.bf16.msra.mxu0 %v3194
    %4174 = vmatpush.bf16.msra.mxu0 %v3184
    %4175 = vmatpush.bf16.msra.mxu0 %v3174
    %4176 = vmatpush.bf16.msra.mxu0 %v3164
    %4177 = vmatpush.bf16.msra.mxu0 %v3154
    %4178 = vmatmul.bf16.gmra.mxu0 %v902
    %v4179 = vpop.f32.mrf.mxu0
    %v4180 = vadd.f32 %v4166, %v4179
    %v4181 = vpop.f32.mrf.mxu0
    %v4182 = vadd.f32 %v4168, %v4181
    %4183 = vdwg.mxu0
    %4184 = vmatpush.bf16.msra.mxu0 %v3304
    %4185 = vmatpush.bf16.msra.mxu0 %v3294
    %4186 = vmatpush.bf16.msra.mxu0 %v3284
    %4187 = vmatpush.bf16.msra.mxu0 %v3274
    %4188 = vmatpush.bf16.msra.mxu0 %v3264
    %4189 = vmatpush.bf16.msra.mxu0 %v3254
    %4190 = vmatpush.bf16.msra.mxu0 %v3244
    %4191 = vmatpush.bf16.msra.mxu0 %v3234
    %4192 = vmatmul.bf16.gmra.mxu0 %v903
    %v4193 = vpop.f32.mrf.mxu0
    %v4194 = vadd.f32 %v4180, %v4193
    %v4195 = vpop.f32.mrf.mxu0
    %v4196 = vadd.f32 %v4182, %v4195
    %4197 = vdwg.mxu0
    %4198 = vmatpush.bf16.msra.mxu0 %v3384
    %4199 = vmatpush.bf16.msra.mxu0 %v3374
    %4200 = vmatpush.bf16.msra.mxu0 %v3364
    %4201 = vmatpush.bf16.msra.mxu0 %v3354
    %4202 = vmatpush.bf16.msra.mxu0 %v3344
    %4203 = vmatpush.bf16.msra.mxu0 %v3334
    %4204 = vmatpush.bf16.msra.mxu0 %v3324
    %4205 = vmatpush.bf16.msra.mxu0 %v3314
    %4206 = vmatmul.bf16.gmra.mxu0 %v904
    %v4207 = vpop.f32.mrf.mxu0
    %v4208 = vadd.f32 %v4194, %v4207
    %v4209 = vpop.f32.mrf.mxu0
    %v4210 = vadd.f32 %v4196, %v4209
    %4211 = vdwg.mxu0
    %4212 = vmatpush.bf16.msra.mxu0 %v3464
    %4213 = vmatpush.bf16.msra.mxu0 %v3454
    %4214 = vmatpush.bf16.msra.mxu0 %v3444
    %4215 = vmatpush.bf16.msra.mxu0 %v3434
    %4216 = vmatpush.bf16.msra.mxu0 %v3424
    %4217 = vmatpush.bf16.msra.mxu0 %v3414
    %4218 = vmatpush.bf16.msra.mxu0 %v3404
    %4219 = vmatpush.bf16.msra.mxu0 %v3394
    %4220 = vmatmul.bf16.gmra.mxu0 %v905
    %v4221 = vpop.f32.mrf.mxu0
    %v4222 = vadd.f32 %v4208, %v4221
    %v4223 = vpop.f32.mrf.mxu0
    %v4224 = vadd.f32 %v4210, %v4223
    %4225 = vdwg.mxu0
    %4226 = vmatpush.bf16.msra.mxu0 %v2905
    %4227 = vmatpush.bf16.msra.mxu0 %v2895
    %4228 = vmatpush.bf16.msra.mxu0 %v2885
    %4229 = vmatpush.bf16.msra.mxu0 %v2875
    %4230 = vmatpush.bf16.msra.mxu0 %v2865
    %4231 = vmatpush.bf16.msra.mxu0 %v2855
    %4232 = vmatpush.bf16.msra.mxu0 %v2845
    %4233 = vmatpush.bf16.msra.mxu0 %v2835
    %4234 = vmatmul.bf16.gmra.mxu0 %v898
    %v4235 = vpop.f32.mrf.mxu0
    %v4236 = vadd.f32 %v855, %v4235
    %v4237 = vpop.f32.mrf.mxu0
    %v4238 = vadd.f32 %v855, %v4237
    %4239 = vdwg.mxu0
    %4240 = vmatpush.bf16.msra.mxu0 %v2985
    %4241 = vmatpush.bf16.msra.mxu0 %v2975
    %4242 = vmatpush.bf16.msra.mxu0 %v2965
    %4243 = vmatpush.bf16.msra.mxu0 %v2955
    %4244 = vmatpush.bf16.msra.mxu0 %v2945
    %4245 = vmatpush.bf16.msra.mxu0 %v2935
    %4246 = vmatpush.bf16.msra.mxu0 %v2925
    %4247 = vmatpush.bf16.msra.mxu0 %v2915
    %4248 = vmatmul.bf16.gmra.mxu0 %v899
    %v4249 = vpop.f32.mrf.mxu0
    %v4250 = vadd.f32 %v4236, %v4249
    %v4251 = vpop.f32.mrf.mxu0
    %v4252 = vadd.f32 %v4238, %v4251
    %4253 = vdwg.mxu0
    %4254 = vmatpush.bf16.msra.mxu0 %v3065
    %4255 = vmatpush.bf16.msra.mxu0 %v3055
    %4256 = vmatpush.bf16.msra.mxu0 %v3045
    %4257 = vmatpush.bf16.msra.mxu0 %v3035
    %4258 = vmatpush.bf16.msra.mxu0 %v3025
    %4259 = vmatpush.bf16.msra.mxu0 %v3015
    %4260 = vmatpush.bf16.msra.mxu0 %v3005
    %4261 = vmatpush.bf16.msra.mxu0 %v2995
    %4262 = vmatmul.bf16.gmra.mxu0 %v900
    %v4263 = vpop.f32.mrf.mxu0
    %v4264 = vadd.f32 %v4250, %v4263
    %v4265 = vpop.f32.mrf.mxu0
    %v4266 = vadd.f32 %v4252, %v4265
    %4267 = vdwg.mxu0
    %4268 = vmatpush.bf16.msra.mxu0 %v3145
    %4269 = vmatpush.bf16.msra.mxu0 %v3135
    %4270 = vmatpush.bf16.msra.mxu0 %v3125
    %4271 = vmatpush.bf16.msra.mxu0 %v3115
    %4272 = vmatpush.bf16.msra.mxu0 %v3105
    %4273 = vmatpush.bf16.msra.mxu0 %v3095
    %4274 = vmatpush.bf16.msra.mxu0 %v3085
    %4275 = vmatpush.bf16.msra.mxu0 %v3075
    %4276 = vmatmul.bf16.gmra.mxu0 %v901
    %v4277 = vpop.f32.mrf.mxu0
    %v4278 = vadd.f32 %v4264, %v4277
    %v4279 = vpop.f32.mrf.mxu0
    %v4280 = vadd.f32 %v4266, %v4279
    %4281 = vdwg.mxu0
    %4282 = vmatpush.bf16.msra.mxu0 %v3225
    %4283 = vmatpush.bf16.msra.mxu0 %v3215
    %4284 = vmatpush.bf16.msra.mxu0 %v3205
    %4285 = vmatpush.bf16.msra.mxu0 %v3195
    %4286 = vmatpush.bf16.msra.mxu0 %v3185
    %4287 = vmatpush.bf16.msra.mxu0 %v3175
    %4288 = vmatpush.bf16.msra.mxu0 %v3165
    %4289 = vmatpush.bf16.msra.mxu0 %v3155
    %4290 = vmatmul.bf16.gmra.mxu0 %v902
    %v4291 = vpop.f32.mrf.mxu0
    %v4292 = vadd.f32 %v4278, %v4291
    %v4293 = vpop.f32.mrf.mxu0
    %v4294 = vadd.f32 %v4280, %v4293
    %4295 = vdwg.mxu0
    %4296 = vmatpush.bf16.msra.mxu0 %v3305
    %4297 = vmatpush.bf16.msra.mxu0 %v3295
    %4298 = vmatpush.bf16.msra.mxu0 %v3285
    %4299 = vmatpush.bf16.msra.mxu0 %v3275
    %4300 = vmatpush.bf16.msra.mxu0 %v3265
    %4301 = vmatpush.bf16.msra.mxu0 %v3255
    %4302 = vmatpush.bf16.msra.mxu0 %v3245
    %4303 = vmatpush.bf16.msra.mxu0 %v3235
    %4304 = vmatmul.bf16.gmra.mxu0 %v903
    %v4305 = vpop.f32.mrf.mxu0
    %v4306 = vadd.f32 %v4292, %v4305
    %v4307 = vpop.f32.mrf.mxu0
    %v4308 = vadd.f32 %v4294, %v4307
    %4309 = vdwg.mxu0
    %4310 = vmatpush.bf16.msra.mxu0 %v3385
    %4311 = vmatpush.bf16.msra.mxu0 %v3375
    %4312 = vmatpush.bf16.msra.mxu0 %v3365
    %4313 = vmatpush.bf16.msra.mxu0 %v3355
    %4314 = vmatpush.bf16.msra.mxu0 %v3345
    %4315 = vmatpush.bf16.msra.mxu0 %v3335
    %4316 = vmatpush.bf16.msra.mxu0 %v3325
    %4317 = vmatpush.bf16.msra.mxu0 %v3315
    %4318 = vmatmul.bf16.gmra.mxu0 %v904
    %v4319 = vpop.f32.mrf.mxu0
    %v4320 = vadd.f32 %v4306, %v4319
    %v4321 = vpop.f32.mrf.mxu0
    %v4322 = vadd.f32 %v4308, %v4321
    %4323 = vdwg.mxu0
    %4324 = vmatpush.bf16.msra.mxu0 %v3465
    %4325 = vmatpush.bf16.msra.mxu0 %v3455
    %4326 = vmatpush.bf16.msra.mxu0 %v3445
    %4327 = vmatpush.bf16.msra.mxu0 %v3435
    %4328 = vmatpush.bf16.msra.mxu0 %v3425
    %4329 = vmatpush.bf16.msra.mxu0 %v3415
    %4330 = vmatpush.bf16.msra.mxu0 %v3405
    %4331 = vmatpush.bf16.msra.mxu0 %v3395
    %4332 = vmatmul.bf16.gmra.mxu0 %v905
    %v4333 = vpop.f32.mrf.mxu0
    %v4334 = vadd.f32 %v4320, %v4333
    %v4335 = vpop.f32.mrf.mxu0
    %v4336 = vadd.f32 %v4322, %v4335
    %4337 = vdwg.mxu0
    %4338 = vmatpush.bf16.msra.mxu0 %v2906
    %4339 = vmatpush.bf16.msra.mxu0 %v2896
    %4340 = vmatpush.bf16.msra.mxu0 %v2886
    %4341 = vmatpush.bf16.msra.mxu0 %v2876
    %4342 = vmatpush.bf16.msra.mxu0 %v2866
    %4343 = vmatpush.bf16.msra.mxu0 %v2856
    %4344 = vmatpush.bf16.msra.mxu0 %v2846
    %4345 = vmatpush.bf16.msra.mxu0 %v2836
    %4346 = vmatmul.bf16.gmra.mxu0 %v898
    %v4347 = vpop.f32.mrf.mxu0
    %v4348 = vadd.f32 %v856, %v4347
    %v4349 = vpop.f32.mrf.mxu0
    %v4350 = vadd.f32 %v856, %v4349
    %4351 = vdwg.mxu0
    %4352 = vmatpush.bf16.msra.mxu0 %v2986
    %4353 = vmatpush.bf16.msra.mxu0 %v2976
    %4354 = vmatpush.bf16.msra.mxu0 %v2966
    %4355 = vmatpush.bf16.msra.mxu0 %v2956
    %4356 = vmatpush.bf16.msra.mxu0 %v2946
    %4357 = vmatpush.bf16.msra.mxu0 %v2936
    %4358 = vmatpush.bf16.msra.mxu0 %v2926
    %4359 = vmatpush.bf16.msra.mxu0 %v2916
    %4360 = vmatmul.bf16.gmra.mxu0 %v899
    %v4361 = vpop.f32.mrf.mxu0
    %v4362 = vadd.f32 %v4348, %v4361
    %v4363 = vpop.f32.mrf.mxu0
    %v4364 = vadd.f32 %v4350, %v4363
    %4365 = vdwg.mxu0
    %4366 = vmatpush.bf16.msra.mxu0 %v3066
    %4367 = vmatpush.bf16.msra.mxu0 %v3056
    %4368 = vmatpush.bf16.msra.mxu0 %v3046
    %4369 = vmatpush.bf16.msra.mxu0 %v3036
    %4370 = vmatpush.bf16.msra.mxu0 %v3026
    %4371 = vmatpush.bf16.msra.mxu0 %v3016
    %4372 = vmatpush.bf16.msra.mxu0 %v3006
    %4373 = vmatpush.bf16.msra.mxu0 %v2996
    %4374 = vmatmul.bf16.gmra.mxu0 %v900
    %v4375 = vpop.f32.mrf.mxu0
    %v4376 = vadd.f32 %v4362, %v4375
    %v4377 = vpop.f32.mrf.mxu0
    %v4378 = vadd.f32 %v4364, %v4377
    %4379 = vdwg.mxu0
    %4380 = vmatpush.bf16.msra.mxu0 %v3146
    %4381 = vmatpush.bf16.msra.mxu0 %v3136
    %4382 = vmatpush.bf16.msra.mxu0 %v3126
    %4383 = vmatpush.bf16.msra.mxu0 %v3116
    %4384 = vmatpush.bf16.msra.mxu0 %v3106
    %4385 = vmatpush.bf16.msra.mxu0 %v3096
    %4386 = vmatpush.bf16.msra.mxu0 %v3086
    %4387 = vmatpush.bf16.msra.mxu0 %v3076
    %4388 = vmatmul.bf16.gmra.mxu0 %v901
    %v4389 = vpop.f32.mrf.mxu0
    %v4390 = vadd.f32 %v4376, %v4389
    %v4391 = vpop.f32.mrf.mxu0
    %v4392 = vadd.f32 %v4378, %v4391
    %4393 = vdwg.mxu0
    %4394 = vmatpush.bf16.msra.mxu0 %v3226
    %4395 = vmatpush.bf16.msra.mxu0 %v3216
    %4396 = vmatpush.bf16.msra.mxu0 %v3206
    %4397 = vmatpush.bf16.msra.mxu0 %v3196
    %4398 = vmatpush.bf16.msra.mxu0 %v3186
    %4399 = vmatpush.bf16.msra.mxu0 %v3176
    %4400 = vmatpush.bf16.msra.mxu0 %v3166
    %4401 = vmatpush.bf16.msra.mxu0 %v3156
    %4402 = vmatmul.bf16.gmra.mxu0 %v902
    %v4403 = vpop.f32.mrf.mxu0
    %v4404 = vadd.f32 %v4390, %v4403
    %v4405 = vpop.f32.mrf.mxu0
    %v4406 = vadd.f32 %v4392, %v4405
    %4407 = vdwg.mxu0
    %4408 = vmatpush.bf16.msra.mxu0 %v3306
    %4409 = vmatpush.bf16.msra.mxu0 %v3296
    %4410 = vmatpush.bf16.msra.mxu0 %v3286
    %4411 = vmatpush.bf16.msra.mxu0 %v3276
    %4412 = vmatpush.bf16.msra.mxu0 %v3266
    %4413 = vmatpush.bf16.msra.mxu0 %v3256
    %4414 = vmatpush.bf16.msra.mxu0 %v3246
    %4415 = vmatpush.bf16.msra.mxu0 %v3236
    %4416 = vmatmul.bf16.gmra.mxu0 %v903
    %v4417 = vpop.f32.mrf.mxu0
    %v4418 = vadd.f32 %v4404, %v4417
    %v4419 = vpop.f32.mrf.mxu0
    %v4420 = vadd.f32 %v4406, %v4419
    %4421 = vdwg.mxu0
    %4422 = vmatpush.bf16.msra.mxu0 %v3386
    %4423 = vmatpush.bf16.msra.mxu0 %v3376
    %4424 = vmatpush.bf16.msra.mxu0 %v3366
    %4425 = vmatpush.bf16.msra.mxu0 %v3356
    %4426 = vmatpush.bf16.msra.mxu0 %v3346
    %4427 = vmatpush.bf16.msra.mxu0 %v3336
    %4428 = vmatpush.bf16.msra.mxu0 %v3326
    %4429 = vmatpush.bf16.msra.mxu0 %v3316
    %4430 = vmatmul.bf16.gmra.mxu0 %v904
    %v4431 = vpop.f32.mrf.mxu0
    %v4432 = vadd.f32 %v4418, %v4431
    %v4433 = vpop.f32.mrf.mxu0
    %v4434 = vadd.f32 %v4420, %v4433
    %4435 = vdwg.mxu0
    %4436 = vmatpush.bf16.msra.mxu0 %v3466
    %4437 = vmatpush.bf16.msra.mxu0 %v3456
    %4438 = vmatpush.bf16.msra.mxu0 %v3446
    %4439 = vmatpush.bf16.msra.mxu0 %v3436
    %4440 = vmatpush.bf16.msra.mxu0 %v3426
    %4441 = vmatpush.bf16.msra.mxu0 %v3416
    %4442 = vmatpush.bf16.msra.mxu0 %v3406
    %4443 = vmatpush.bf16.msra.mxu0 %v3396
    %4444 = vmatmul.bf16.gmra.mxu0 %v905
    %v4445 = vpop.f32.mrf.mxu0
    %v4446 = vadd.f32 %v4432, %v4445
    %v4447 = vpop.f32.mrf.mxu0
    %v4448 = vadd.f32 %v4434, %v4447
    %4449 = vdwg.mxu0
    %4450 = vmatpush.bf16.msra.mxu0 %v2907
    %4451 = vmatpush.bf16.msra.mxu0 %v2897
    %4452 = vmatpush.bf16.msra.mxu0 %v2887
    %4453 = vmatpush.bf16.msra.mxu0 %v2877
    %4454 = vmatpush.bf16.msra.mxu0 %v2867
    %4455 = vmatpush.bf16.msra.mxu0 %v2857
    %4456 = vmatpush.bf16.msra.mxu0 %v2847
    %4457 = vmatpush.bf16.msra.mxu0 %v2837
    %4458 = vmatmul.bf16.gmra.mxu0 %v898
    %v4459 = vpop.f32.mrf.mxu0
    %v4460 = vadd.f32 %v857, %v4459
    %v4461 = vpop.f32.mrf.mxu0
    %v4462 = vadd.f32 %v857, %v4461
    %4463 = vdwg.mxu0
    %4464 = vmatpush.bf16.msra.mxu0 %v2987
    %4465 = vmatpush.bf16.msra.mxu0 %v2977
    %4466 = vmatpush.bf16.msra.mxu0 %v2967
    %4467 = vmatpush.bf16.msra.mxu0 %v2957
    %4468 = vmatpush.bf16.msra.mxu0 %v2947
    %4469 = vmatpush.bf16.msra.mxu0 %v2937
    %4470 = vmatpush.bf16.msra.mxu0 %v2927
    %4471 = vmatpush.bf16.msra.mxu0 %v2917
    %4472 = vmatmul.bf16.gmra.mxu0 %v899
    %v4473 = vpop.f32.mrf.mxu0
    %v4474 = vadd.f32 %v4460, %v4473
    %v4475 = vpop.f32.mrf.mxu0
    %v4476 = vadd.f32 %v4462, %v4475
    %4477 = vdwg.mxu0
    %4478 = vmatpush.bf16.msra.mxu0 %v3067
    %4479 = vmatpush.bf16.msra.mxu0 %v3057
    %4480 = vmatpush.bf16.msra.mxu0 %v3047
    %4481 = vmatpush.bf16.msra.mxu0 %v3037
    %4482 = vmatpush.bf16.msra.mxu0 %v3027
    %4483 = vmatpush.bf16.msra.mxu0 %v3017
    %4484 = vmatpush.bf16.msra.mxu0 %v3007
    %4485 = vmatpush.bf16.msra.mxu0 %v2997
    %4486 = vmatmul.bf16.gmra.mxu0 %v900
    %v4487 = vpop.f32.mrf.mxu0
    %v4488 = vadd.f32 %v4474, %v4487
    %v4489 = vpop.f32.mrf.mxu0
    %v4490 = vadd.f32 %v4476, %v4489
    %4491 = vdwg.mxu0
    %4492 = vmatpush.bf16.msra.mxu0 %v3147
    %4493 = vmatpush.bf16.msra.mxu0 %v3137
    %4494 = vmatpush.bf16.msra.mxu0 %v3127
    %4495 = vmatpush.bf16.msra.mxu0 %v3117
    %4496 = vmatpush.bf16.msra.mxu0 %v3107
    %4497 = vmatpush.bf16.msra.mxu0 %v3097
    %4498 = vmatpush.bf16.msra.mxu0 %v3087
    %4499 = vmatpush.bf16.msra.mxu0 %v3077
    %4500 = vmatmul.bf16.gmra.mxu0 %v901
    %v4501 = vpop.f32.mrf.mxu0
    %v4502 = vadd.f32 %v4488, %v4501
    %v4503 = vpop.f32.mrf.mxu0
    %v4504 = vadd.f32 %v4490, %v4503
    %4505 = vdwg.mxu0
    %4506 = vmatpush.bf16.msra.mxu0 %v3227
    %4507 = vmatpush.bf16.msra.mxu0 %v3217
    %4508 = vmatpush.bf16.msra.mxu0 %v3207
    %4509 = vmatpush.bf16.msra.mxu0 %v3197
    %4510 = vmatpush.bf16.msra.mxu0 %v3187
    %4511 = vmatpush.bf16.msra.mxu0 %v3177
    %4512 = vmatpush.bf16.msra.mxu0 %v3167
    %4513 = vmatpush.bf16.msra.mxu0 %v3157
    %4514 = vmatmul.bf16.gmra.mxu0 %v902
    %v4515 = vpop.f32.mrf.mxu0
    %v4516 = vadd.f32 %v4502, %v4515
    %v4517 = vpop.f32.mrf.mxu0
    %v4518 = vadd.f32 %v4504, %v4517
    %4519 = vdwg.mxu0
    %4520 = vmatpush.bf16.msra.mxu0 %v3307
    %4521 = vmatpush.bf16.msra.mxu0 %v3297
    %4522 = vmatpush.bf16.msra.mxu0 %v3287
    %4523 = vmatpush.bf16.msra.mxu0 %v3277
    %4524 = vmatpush.bf16.msra.mxu0 %v3267
    %4525 = vmatpush.bf16.msra.mxu0 %v3257
    %4526 = vmatpush.bf16.msra.mxu0 %v3247
    %4527 = vmatpush.bf16.msra.mxu0 %v3237
    %4528 = vmatmul.bf16.gmra.mxu0 %v903
    %v4529 = vpop.f32.mrf.mxu0
    %v4530 = vadd.f32 %v4516, %v4529
    %v4531 = vpop.f32.mrf.mxu0
    %v4532 = vadd.f32 %v4518, %v4531
    %4533 = vdwg.mxu0
    %4534 = vmatpush.bf16.msra.mxu0 %v3387
    %4535 = vmatpush.bf16.msra.mxu0 %v3377
    %4536 = vmatpush.bf16.msra.mxu0 %v3367
    %4537 = vmatpush.bf16.msra.mxu0 %v3357
    %4538 = vmatpush.bf16.msra.mxu0 %v3347
    %4539 = vmatpush.bf16.msra.mxu0 %v3337
    %4540 = vmatpush.bf16.msra.mxu0 %v3327
    %4541 = vmatpush.bf16.msra.mxu0 %v3317
    %4542 = vmatmul.bf16.gmra.mxu0 %v904
    %v4543 = vpop.f32.mrf.mxu0
    %v4544 = vadd.f32 %v4530, %v4543
    %v4545 = vpop.f32.mrf.mxu0
    %v4546 = vadd.f32 %v4532, %v4545
    %4547 = vdwg.mxu0
    %4548 = vmatpush.bf16.msra.mxu0 %v3467
    %4549 = vmatpush.bf16.msra.mxu0 %v3457
    %4550 = vmatpush.bf16.msra.mxu0 %v3447
    %4551 = vmatpush.bf16.msra.mxu0 %v3437
    %4552 = vmatpush.bf16.msra.mxu0 %v3427
    %4553 = vmatpush.bf16.msra.mxu0 %v3417
    %4554 = vmatpush.bf16.msra.mxu0 %v3407
    %4555 = vmatpush.bf16.msra.mxu0 %v3397
    %4556 = vmatmul.bf16.gmra.mxu0 %v905
    %v4557 = vpop.f32.mrf.mxu0
    %v4558 = vadd.f32 %v4544, %v4557
    %v4559 = vpop.f32.mrf.mxu0
    %v4560 = vadd.f32 %v4546, %v4559
    %4561 = vdwg.mxu0
    %4562 = vmatpush.bf16.msra.mxu0 %v2908
    %4563 = vmatpush.bf16.msra.mxu0 %v2898
    %4564 = vmatpush.bf16.msra.mxu0 %v2888
    %4565 = vmatpush.bf16.msra.mxu0 %v2878
    %4566 = vmatpush.bf16.msra.mxu0 %v2868
    %4567 = vmatpush.bf16.msra.mxu0 %v2858
    %4568 = vmatpush.bf16.msra.mxu0 %v2848
    %4569 = vmatpush.bf16.msra.mxu0 %v2838
    %4570 = vmatmul.bf16.gmra.mxu0 %v898
    %v4571 = vpop.f32.mrf.mxu0
    %v4572 = vadd.f32 %v858, %v4571
    %v4573 = vpop.f32.mrf.mxu0
    %v4574 = vadd.f32 %v858, %v4573
    %4575 = vdwg.mxu0
    %4576 = vmatpush.bf16.msra.mxu0 %v2988
    %4577 = vmatpush.bf16.msra.mxu0 %v2978
    %4578 = vmatpush.bf16.msra.mxu0 %v2968
    %4579 = vmatpush.bf16.msra.mxu0 %v2958
    %4580 = vmatpush.bf16.msra.mxu0 %v2948
    %4581 = vmatpush.bf16.msra.mxu0 %v2938
    %4582 = vmatpush.bf16.msra.mxu0 %v2928
    %4583 = vmatpush.bf16.msra.mxu0 %v2918
    %4584 = vmatmul.bf16.gmra.mxu0 %v899
    %v4585 = vpop.f32.mrf.mxu0
    %v4586 = vadd.f32 %v4572, %v4585
    %v4587 = vpop.f32.mrf.mxu0
    %v4588 = vadd.f32 %v4574, %v4587
    %4589 = vdwg.mxu0
    %4590 = vmatpush.bf16.msra.mxu0 %v3068
    %4591 = vmatpush.bf16.msra.mxu0 %v3058
    %4592 = vmatpush.bf16.msra.mxu0 %v3048
    %4593 = vmatpush.bf16.msra.mxu0 %v3038
    %4594 = vmatpush.bf16.msra.mxu0 %v3028
    %4595 = vmatpush.bf16.msra.mxu0 %v3018
    %4596 = vmatpush.bf16.msra.mxu0 %v3008
    %4597 = vmatpush.bf16.msra.mxu0 %v2998
    %4598 = vmatmul.bf16.gmra.mxu0 %v900
    %v4599 = vpop.f32.mrf.mxu0
    %v4600 = vadd.f32 %v4586, %v4599
    %v4601 = vpop.f32.mrf.mxu0
    %v4602 = vadd.f32 %v4588, %v4601
    %4603 = vdwg.mxu0
    %4604 = vmatpush.bf16.msra.mxu0 %v3148
    %4605 = vmatpush.bf16.msra.mxu0 %v3138
    %4606 = vmatpush.bf16.msra.mxu0 %v3128
    %4607 = vmatpush.bf16.msra.mxu0 %v3118
    %4608 = vmatpush.bf16.msra.mxu0 %v3108
    %4609 = vmatpush.bf16.msra.mxu0 %v3098
    %4610 = vmatpush.bf16.msra.mxu0 %v3088
    %4611 = vmatpush.bf16.msra.mxu0 %v3078
    %4612 = vmatmul.bf16.gmra.mxu0 %v901
    %v4613 = vpop.f32.mrf.mxu0
    %v4614 = vadd.f32 %v4600, %v4613
    %v4615 = vpop.f32.mrf.mxu0
    %v4616 = vadd.f32 %v4602, %v4615
    %4617 = vdwg.mxu0
    %4618 = vmatpush.bf16.msra.mxu0 %v3228
    %4619 = vmatpush.bf16.msra.mxu0 %v3218
    %4620 = vmatpush.bf16.msra.mxu0 %v3208
    %4621 = vmatpush.bf16.msra.mxu0 %v3198
    %4622 = vmatpush.bf16.msra.mxu0 %v3188
    %4623 = vmatpush.bf16.msra.mxu0 %v3178
    %4624 = vmatpush.bf16.msra.mxu0 %v3168
    %4625 = vmatpush.bf16.msra.mxu0 %v3158
    %4626 = vmatmul.bf16.gmra.mxu0 %v902
    %v4627 = vpop.f32.mrf.mxu0
    %v4628 = vadd.f32 %v4614, %v4627
    %v4629 = vpop.f32.mrf.mxu0
    %v4630 = vadd.f32 %v4616, %v4629
    %4631 = vdwg.mxu0
    %4632 = vmatpush.bf16.msra.mxu0 %v3308
    %4633 = vmatpush.bf16.msra.mxu0 %v3298
    %4634 = vmatpush.bf16.msra.mxu0 %v3288
    %4635 = vmatpush.bf16.msra.mxu0 %v3278
    %4636 = vmatpush.bf16.msra.mxu0 %v3268
    %4637 = vmatpush.bf16.msra.mxu0 %v3258
    %4638 = vmatpush.bf16.msra.mxu0 %v3248
    %4639 = vmatpush.bf16.msra.mxu0 %v3238
    %4640 = vmatmul.bf16.gmra.mxu0 %v903
    %v4641 = vpop.f32.mrf.mxu0
    %v4642 = vadd.f32 %v4628, %v4641
    %v4643 = vpop.f32.mrf.mxu0
    %v4644 = vadd.f32 %v4630, %v4643
    %4645 = vdwg.mxu0
    %4646 = vmatpush.bf16.msra.mxu0 %v3388
    %4647 = vmatpush.bf16.msra.mxu0 %v3378
    %4648 = vmatpush.bf16.msra.mxu0 %v3368
    %4649 = vmatpush.bf16.msra.mxu0 %v3358
    %4650 = vmatpush.bf16.msra.mxu0 %v3348
    %4651 = vmatpush.bf16.msra.mxu0 %v3338
    %4652 = vmatpush.bf16.msra.mxu0 %v3328
    %4653 = vmatpush.bf16.msra.mxu0 %v3318
    %4654 = vmatmul.bf16.gmra.mxu0 %v904
    %v4655 = vpop.f32.mrf.mxu0
    %v4656 = vadd.f32 %v4642, %v4655
    %v4657 = vpop.f32.mrf.mxu0
    %v4658 = vadd.f32 %v4644, %v4657
    %4659 = vdwg.mxu0
    %4660 = vmatpush.bf16.msra.mxu0 %v3468
    %4661 = vmatpush.bf16.msra.mxu0 %v3458
    %4662 = vmatpush.bf16.msra.mxu0 %v3448
    %4663 = vmatpush.bf16.msra.mxu0 %v3438
    %4664 = vmatpush.bf16.msra.mxu0 %v3428
    %4665 = vmatpush.bf16.msra.mxu0 %v3418
    %4666 = vmatpush.bf16.msra.mxu0 %v3408
    %4667 = vmatpush.bf16.msra.mxu0 %v3398
    %4668 = vmatmul.bf16.gmra.mxu0 %v905
    %v4669 = vpop.f32.mrf.mxu0
    %v4670 = vadd.f32 %v4656, %v4669
    %v4671 = vpop.f32.mrf.mxu0
    %v4672 = vadd.f32 %v4658, %v4671
    %4673 = vdwg.mxu0
    %4674 = vmatpush.bf16.msra.mxu0 %v2909
    %4675 = vmatpush.bf16.msra.mxu0 %v2899
    %4676 = vmatpush.bf16.msra.mxu0 %v2889
    %4677 = vmatpush.bf16.msra.mxu0 %v2879
    %4678 = vmatpush.bf16.msra.mxu0 %v2869
    %4679 = vmatpush.bf16.msra.mxu0 %v2859
    %4680 = vmatpush.bf16.msra.mxu0 %v2849
    %4681 = vmatpush.bf16.msra.mxu0 %v2839
    %4682 = vmatmul.bf16.gmra.mxu0 %v898
    %v4683 = vpop.f32.mrf.mxu0
    %v4684 = vadd.f32 %v859, %v4683
    %v4685 = vpop.f32.mrf.mxu0
    %v4686 = vadd.f32 %v859, %v4685
    %4687 = vdwg.mxu0
    %4688 = vmatpush.bf16.msra.mxu0 %v2989
    %4689 = vmatpush.bf16.msra.mxu0 %v2979
    %4690 = vmatpush.bf16.msra.mxu0 %v2969
    %4691 = vmatpush.bf16.msra.mxu0 %v2959
    %4692 = vmatpush.bf16.msra.mxu0 %v2949
    %4693 = vmatpush.bf16.msra.mxu0 %v2939
    %4694 = vmatpush.bf16.msra.mxu0 %v2929
    %4695 = vmatpush.bf16.msra.mxu0 %v2919
    %4696 = vmatmul.bf16.gmra.mxu0 %v899
    %v4697 = vpop.f32.mrf.mxu0
    %v4698 = vadd.f32 %v4684, %v4697
    %v4699 = vpop.f32.mrf.mxu0
    %v4700 = vadd.f32 %v4686, %v4699
    %4701 = vdwg.mxu0
    %4702 = vmatpush.bf16.msra.mxu0 %v3069
    %4703 = vmatpush.bf16.msra.mxu0 %v3059
    %4704 = vmatpush.bf16.msra.mxu0 %v3049
    %4705 = vmatpush.bf16.msra.mxu0 %v3039
    %4706 = vmatpush.bf16.msra.mxu0 %v3029
    %4707 = vmatpush.bf16.msra.mxu0 %v3019
    %4708 = vmatpush.bf16.msra.mxu0 %v3009
    %4709 = vmatpush.bf16.msra.mxu0 %v2999
    %4710 = vmatmul.bf16.gmra.mxu0 %v900
    %v4711 = vpop.f32.mrf.mxu0
    %v4712 = vadd.f32 %v4698, %v4711
    %v4713 = vpop.f32.mrf.mxu0
    %v4714 = vadd.f32 %v4700, %v4713
    %4715 = vdwg.mxu0
    %4716 = vmatpush.bf16.msra.mxu0 %v3149
    %4717 = vmatpush.bf16.msra.mxu0 %v3139
    %4718 = vmatpush.bf16.msra.mxu0 %v3129
    %4719 = vmatpush.bf16.msra.mxu0 %v3119
    %4720 = vmatpush.bf16.msra.mxu0 %v3109
    %4721 = vmatpush.bf16.msra.mxu0 %v3099
    %4722 = vmatpush.bf16.msra.mxu0 %v3089
    %4723 = vmatpush.bf16.msra.mxu0 %v3079
    %4724 = vmatmul.bf16.gmra.mxu0 %v901
    %v4725 = vpop.f32.mrf.mxu0
    %v4726 = vadd.f32 %v4712, %v4725
    %v4727 = vpop.f32.mrf.mxu0
    %v4728 = vadd.f32 %v4714, %v4727
    %4729 = vdwg.mxu0
    %4730 = vmatpush.bf16.msra.mxu0 %v3229
    %4731 = vmatpush.bf16.msra.mxu0 %v3219
    %4732 = vmatpush.bf16.msra.mxu0 %v3209
    %4733 = vmatpush.bf16.msra.mxu0 %v3199
    %4734 = vmatpush.bf16.msra.mxu0 %v3189
    %4735 = vmatpush.bf16.msra.mxu0 %v3179
    %4736 = vmatpush.bf16.msra.mxu0 %v3169
    %4737 = vmatpush.bf16.msra.mxu0 %v3159
    %4738 = vmatmul.bf16.gmra.mxu0 %v902
    %v4739 = vpop.f32.mrf.mxu0
    %v4740 = vadd.f32 %v4726, %v4739
    %v4741 = vpop.f32.mrf.mxu0
    %v4742 = vadd.f32 %v4728, %v4741
    %4743 = vdwg.mxu0
    %4744 = vmatpush.bf16.msra.mxu0 %v3309
    %4745 = vmatpush.bf16.msra.mxu0 %v3299
    %4746 = vmatpush.bf16.msra.mxu0 %v3289
    %4747 = vmatpush.bf16.msra.mxu0 %v3279
    %4748 = vmatpush.bf16.msra.mxu0 %v3269
    %4749 = vmatpush.bf16.msra.mxu0 %v3259
    %4750 = vmatpush.bf16.msra.mxu0 %v3249
    %4751 = vmatpush.bf16.msra.mxu0 %v3239
    %4752 = vmatmul.bf16.gmra.mxu0 %v903
    %v4753 = vpop.f32.mrf.mxu0
    %v4754 = vadd.f32 %v4740, %v4753
    %v4755 = vpop.f32.mrf.mxu0
    %v4756 = vadd.f32 %v4742, %v4755
    %4757 = vdwg.mxu0
    %4758 = vmatpush.bf16.msra.mxu0 %v3389
    %4759 = vmatpush.bf16.msra.mxu0 %v3379
    %4760 = vmatpush.bf16.msra.mxu0 %v3369
    %4761 = vmatpush.bf16.msra.mxu0 %v3359
    %4762 = vmatpush.bf16.msra.mxu0 %v3349
    %4763 = vmatpush.bf16.msra.mxu0 %v3339
    %4764 = vmatpush.bf16.msra.mxu0 %v3329
    %4765 = vmatpush.bf16.msra.mxu0 %v3319
    %4766 = vmatmul.bf16.gmra.mxu0 %v904
    %v4767 = vpop.f32.mrf.mxu0
    %v4768 = vadd.f32 %v4754, %v4767
    %v4769 = vpop.f32.mrf.mxu0
    %v4770 = vadd.f32 %v4756, %v4769
    %4771 = vdwg.mxu0
    %4772 = vmatpush.bf16.msra.mxu0 %v3469
    %4773 = vmatpush.bf16.msra.mxu0 %v3459
    %4774 = vmatpush.bf16.msra.mxu0 %v3449
    %4775 = vmatpush.bf16.msra.mxu0 %v3439
    %4776 = vmatpush.bf16.msra.mxu0 %v3429
    %4777 = vmatpush.bf16.msra.mxu0 %v3419
    %4778 = vmatpush.bf16.msra.mxu0 %v3409
    %4779 = vmatpush.bf16.msra.mxu0 %v3399
    %4780 = vmatmul.bf16.gmra.mxu0 %v905
    %v4781 = vpop.f32.mrf.mxu0
    %v4782 = vadd.f32 %v4768, %v4781
    %v4783 = vpop.f32.mrf.mxu0
    %v4784 = vadd.f32 %v4770, %v4783
    %4785 = vdwg.mxu0
    %4786 = vmatpush.bf16.msra.mxu0 %v2910
    %4787 = vmatpush.bf16.msra.mxu0 %v2900
    %4788 = vmatpush.bf16.msra.mxu0 %v2890
    %4789 = vmatpush.bf16.msra.mxu0 %v2880
    %4790 = vmatpush.bf16.msra.mxu0 %v2870
    %4791 = vmatpush.bf16.msra.mxu0 %v2860
    %4792 = vmatpush.bf16.msra.mxu0 %v2850
    %4793 = vmatpush.bf16.msra.mxu0 %v2840
    %4794 = vmatmul.bf16.gmra.mxu0 %v898
    %v4795 = vpop.f32.mrf.mxu0
    %v4796 = vadd.f32 %v860, %v4795
    %v4797 = vpop.f32.mrf.mxu0
    %v4798 = vadd.f32 %v860, %v4797
    %4799 = vdwg.mxu0
    %4800 = vmatpush.bf16.msra.mxu0 %v2990
    %4801 = vmatpush.bf16.msra.mxu0 %v2980
    %4802 = vmatpush.bf16.msra.mxu0 %v2970
    %4803 = vmatpush.bf16.msra.mxu0 %v2960
    %4804 = vmatpush.bf16.msra.mxu0 %v2950
    %4805 = vmatpush.bf16.msra.mxu0 %v2940
    %4806 = vmatpush.bf16.msra.mxu0 %v2930
    %4807 = vmatpush.bf16.msra.mxu0 %v2920
    %4808 = vmatmul.bf16.gmra.mxu0 %v899
    %v4809 = vpop.f32.mrf.mxu0
    %v4810 = vadd.f32 %v4796, %v4809
    %v4811 = vpop.f32.mrf.mxu0
    %v4812 = vadd.f32 %v4798, %v4811
    %4813 = vdwg.mxu0
    %4814 = vmatpush.bf16.msra.mxu0 %v3070
    %4815 = vmatpush.bf16.msra.mxu0 %v3060
    %4816 = vmatpush.bf16.msra.mxu0 %v3050
    %4817 = vmatpush.bf16.msra.mxu0 %v3040
    %4818 = vmatpush.bf16.msra.mxu0 %v3030
    %4819 = vmatpush.bf16.msra.mxu0 %v3020
    %4820 = vmatpush.bf16.msra.mxu0 %v3010
    %4821 = vmatpush.bf16.msra.mxu0 %v3000
    %4822 = vmatmul.bf16.gmra.mxu0 %v900
    %v4823 = vpop.f32.mrf.mxu0
    %v4824 = vadd.f32 %v4810, %v4823
    %v4825 = vpop.f32.mrf.mxu0
    %v4826 = vadd.f32 %v4812, %v4825
    %4827 = vdwg.mxu0
    %4828 = vmatpush.bf16.msra.mxu0 %v3150
    %4829 = vmatpush.bf16.msra.mxu0 %v3140
    %4830 = vmatpush.bf16.msra.mxu0 %v3130
    %4831 = vmatpush.bf16.msra.mxu0 %v3120
    %4832 = vmatpush.bf16.msra.mxu0 %v3110
    %4833 = vmatpush.bf16.msra.mxu0 %v3100
    %4834 = vmatpush.bf16.msra.mxu0 %v3090
    %4835 = vmatpush.bf16.msra.mxu0 %v3080
    %4836 = vmatmul.bf16.gmra.mxu0 %v901
    %v4837 = vpop.f32.mrf.mxu0
    %v4838 = vadd.f32 %v4824, %v4837
    %v4839 = vpop.f32.mrf.mxu0
    %v4840 = vadd.f32 %v4826, %v4839
    %4841 = vdwg.mxu0
    %4842 = vmatpush.bf16.msra.mxu0 %v3230
    %4843 = vmatpush.bf16.msra.mxu0 %v3220
    %4844 = vmatpush.bf16.msra.mxu0 %v3210
    %4845 = vmatpush.bf16.msra.mxu0 %v3200
    %4846 = vmatpush.bf16.msra.mxu0 %v3190
    %4847 = vmatpush.bf16.msra.mxu0 %v3180
    %4848 = vmatpush.bf16.msra.mxu0 %v3170
    %4849 = vmatpush.bf16.msra.mxu0 %v3160
    %4850 = vmatmul.bf16.gmra.mxu0 %v902
    %v4851 = vpop.f32.mrf.mxu0
    %v4852 = vadd.f32 %v4838, %v4851
    %v4853 = vpop.f32.mrf.mxu0
    %v4854 = vadd.f32 %v4840, %v4853
    %4855 = vdwg.mxu0
    %4856 = vmatpush.bf16.msra.mxu0 %v3310
    %4857 = vmatpush.bf16.msra.mxu0 %v3300
    %4858 = vmatpush.bf16.msra.mxu0 %v3290
    %4859 = vmatpush.bf16.msra.mxu0 %v3280
    %4860 = vmatpush.bf16.msra.mxu0 %v3270
    %4861 = vmatpush.bf16.msra.mxu0 %v3260
    %4862 = vmatpush.bf16.msra.mxu0 %v3250
    %4863 = vmatpush.bf16.msra.mxu0 %v3240
    %4864 = vmatmul.bf16.gmra.mxu0 %v903
    %v4865 = vpop.f32.mrf.mxu0
    %v4866 = vadd.f32 %v4852, %v4865
    %v4867 = vpop.f32.mrf.mxu0
    %v4868 = vadd.f32 %v4854, %v4867
    %4869 = vdwg.mxu0
    %4870 = vmatpush.bf16.msra.mxu0 %v3390
    %4871 = vmatpush.bf16.msra.mxu0 %v3380
    %4872 = vmatpush.bf16.msra.mxu0 %v3370
    %4873 = vmatpush.bf16.msra.mxu0 %v3360
    %4874 = vmatpush.bf16.msra.mxu0 %v3350
    %4875 = vmatpush.bf16.msra.mxu0 %v3340
    %4876 = vmatpush.bf16.msra.mxu0 %v3330
    %4877 = vmatpush.bf16.msra.mxu0 %v3320
    %4878 = vmatmul.bf16.gmra.mxu0 %v904
    %v4879 = vpop.f32.mrf.mxu0
    %v4880 = vadd.f32 %v4866, %v4879
    %v4881 = vpop.f32.mrf.mxu0
    %v4882 = vadd.f32 %v4868, %v4881
    %4883 = vdwg.mxu0
    %4884 = vmatpush.bf16.msra.mxu0 %v3470
    %4885 = vmatpush.bf16.msra.mxu0 %v3460
    %4886 = vmatpush.bf16.msra.mxu0 %v3450
    %4887 = vmatpush.bf16.msra.mxu0 %v3440
    %4888 = vmatpush.bf16.msra.mxu0 %v3430
    %4889 = vmatpush.bf16.msra.mxu0 %v3420
    %4890 = vmatpush.bf16.msra.mxu0 %v3410
    %4891 = vmatpush.bf16.msra.mxu0 %v3400
    %4892 = vmatmul.bf16.gmra.mxu0 %v905
    %v4893 = vpop.f32.mrf.mxu0
    %v4894 = vadd.f32 %v4880, %v4893
    %v4895 = vpop.f32.mrf.mxu0
    %v4896 = vadd.f32 %v4882, %v4895
    %4897 = vdwg.mxu0
    %4898 = vmatpush.bf16.msra.mxu0 %v2911
    %4899 = vmatpush.bf16.msra.mxu0 %v2901
    %4900 = vmatpush.bf16.msra.mxu0 %v2891
    %4901 = vmatpush.bf16.msra.mxu0 %v2881
    %4902 = vmatpush.bf16.msra.mxu0 %v2871
    %4903 = vmatpush.bf16.msra.mxu0 %v2861
    %4904 = vmatpush.bf16.msra.mxu0 %v2851
    %4905 = vmatpush.bf16.msra.mxu0 %v2841
    %4906 = vmatmul.bf16.gmra.mxu0 %v898
    %v4907 = vpop.f32.mrf.mxu0
    %v4908 = vadd.f32 %v861, %v4907
    %v4909 = vpop.f32.mrf.mxu0
    %v4910 = vadd.f32 %v861, %v4909
    %4911 = vdwg.mxu0
    %4912 = vmatpush.bf16.msra.mxu0 %v2991
    %4913 = vmatpush.bf16.msra.mxu0 %v2981
    %4914 = vmatpush.bf16.msra.mxu0 %v2971
    %4915 = vmatpush.bf16.msra.mxu0 %v2961
    %4916 = vmatpush.bf16.msra.mxu0 %v2951
    %4917 = vmatpush.bf16.msra.mxu0 %v2941
    %4918 = vmatpush.bf16.msra.mxu0 %v2931
    %4919 = vmatpush.bf16.msra.mxu0 %v2921
    %4920 = vmatmul.bf16.gmra.mxu0 %v899
    %v4921 = vpop.f32.mrf.mxu0
    %v4922 = vadd.f32 %v4908, %v4921
    %v4923 = vpop.f32.mrf.mxu0
    %v4924 = vadd.f32 %v4910, %v4923
    %4925 = vdwg.mxu0
    %4926 = vmatpush.bf16.msra.mxu0 %v3071
    %4927 = vmatpush.bf16.msra.mxu0 %v3061
    %4928 = vmatpush.bf16.msra.mxu0 %v3051
    %4929 = vmatpush.bf16.msra.mxu0 %v3041
    %4930 = vmatpush.bf16.msra.mxu0 %v3031
    %4931 = vmatpush.bf16.msra.mxu0 %v3021
    %4932 = vmatpush.bf16.msra.mxu0 %v3011
    %4933 = vmatpush.bf16.msra.mxu0 %v3001
    %4934 = vmatmul.bf16.gmra.mxu0 %v900
    %v4935 = vpop.f32.mrf.mxu0
    %v4936 = vadd.f32 %v4922, %v4935
    %v4937 = vpop.f32.mrf.mxu0
    %v4938 = vadd.f32 %v4924, %v4937
    %4939 = vdwg.mxu0
    %4940 = vmatpush.bf16.msra.mxu0 %v3151
    %4941 = vmatpush.bf16.msra.mxu0 %v3141
    %4942 = vmatpush.bf16.msra.mxu0 %v3131
    %4943 = vmatpush.bf16.msra.mxu0 %v3121
    %4944 = vmatpush.bf16.msra.mxu0 %v3111
    %4945 = vmatpush.bf16.msra.mxu0 %v3101
    %4946 = vmatpush.bf16.msra.mxu0 %v3091
    %4947 = vmatpush.bf16.msra.mxu0 %v3081
    %4948 = vmatmul.bf16.gmra.mxu0 %v901
    %v4949 = vpop.f32.mrf.mxu0
    %v4950 = vadd.f32 %v4936, %v4949
    %v4951 = vpop.f32.mrf.mxu0
    %v4952 = vadd.f32 %v4938, %v4951
    %4953 = vdwg.mxu0
    %4954 = vmatpush.bf16.msra.mxu0 %v3231
    %4955 = vmatpush.bf16.msra.mxu0 %v3221
    %4956 = vmatpush.bf16.msra.mxu0 %v3211
    %4957 = vmatpush.bf16.msra.mxu0 %v3201
    %4958 = vmatpush.bf16.msra.mxu0 %v3191
    %4959 = vmatpush.bf16.msra.mxu0 %v3181
    %4960 = vmatpush.bf16.msra.mxu0 %v3171
    %4961 = vmatpush.bf16.msra.mxu0 %v3161
    %4962 = vmatmul.bf16.gmra.mxu0 %v902
    %v4963 = vpop.f32.mrf.mxu0
    %v4964 = vadd.f32 %v4950, %v4963
    %v4965 = vpop.f32.mrf.mxu0
    %v4966 = vadd.f32 %v4952, %v4965
    %4967 = vdwg.mxu0
    %4968 = vmatpush.bf16.msra.mxu0 %v3311
    %4969 = vmatpush.bf16.msra.mxu0 %v3301
    %4970 = vmatpush.bf16.msra.mxu0 %v3291
    %4971 = vmatpush.bf16.msra.mxu0 %v3281
    %4972 = vmatpush.bf16.msra.mxu0 %v3271
    %4973 = vmatpush.bf16.msra.mxu0 %v3261
    %4974 = vmatpush.bf16.msra.mxu0 %v3251
    %4975 = vmatpush.bf16.msra.mxu0 %v3241
    %4976 = vmatmul.bf16.gmra.mxu0 %v903
    %v4977 = vpop.f32.mrf.mxu0
    %v4978 = vadd.f32 %v4964, %v4977
    %v4979 = vpop.f32.mrf.mxu0
    %v4980 = vadd.f32 %v4966, %v4979
    %4981 = vdwg.mxu0
    %4982 = vmatpush.bf16.msra.mxu0 %v3391
    %4983 = vmatpush.bf16.msra.mxu0 %v3381
    %4984 = vmatpush.bf16.msra.mxu0 %v3371
    %4985 = vmatpush.bf16.msra.mxu0 %v3361
    %4986 = vmatpush.bf16.msra.mxu0 %v3351
    %4987 = vmatpush.bf16.msra.mxu0 %v3341
    %4988 = vmatpush.bf16.msra.mxu0 %v3331
    %4989 = vmatpush.bf16.msra.mxu0 %v3321
    %4990 = vmatmul.bf16.gmra.mxu0 %v904
    %v4991 = vpop.f32.mrf.mxu0
    %v4992 = vadd.f32 %v4978, %v4991
    %v4993 = vpop.f32.mrf.mxu0
    %v4994 = vadd.f32 %v4980, %v4993
    %4995 = vdwg.mxu0
    %4996 = vmatpush.bf16.msra.mxu0 %v3471
    %4997 = vmatpush.bf16.msra.mxu0 %v3461
    %4998 = vmatpush.bf16.msra.mxu0 %v3451
    %4999 = vmatpush.bf16.msra.mxu0 %v3441
    %5000 = vmatpush.bf16.msra.mxu0 %v3431
    %5001 = vmatpush.bf16.msra.mxu0 %v3421
    %5002 = vmatpush.bf16.msra.mxu0 %v3411
    %5003 = vmatpush.bf16.msra.mxu0 %v3401
    %5004 = vmatmul.bf16.gmra.mxu0 %v905
    %v5005 = vpop.f32.mrf.mxu0
    %v5006 = vadd.f32 %v4992, %v5005
    %v5007 = vpop.f32.mrf.mxu0
    %v5008 = vadd.f32 %v4994, %v5007
    %5009 = vdwg.mxu0
    %5010 = vmatpush.bf16.msra.mxu0 %v2912
    %5011 = vmatpush.bf16.msra.mxu0 %v2902
    %5012 = vmatpush.bf16.msra.mxu0 %v2892
    %5013 = vmatpush.bf16.msra.mxu0 %v2882
    %5014 = vmatpush.bf16.msra.mxu0 %v2872
    %5015 = vmatpush.bf16.msra.mxu0 %v2862
    %5016 = vmatpush.bf16.msra.mxu0 %v2852
    %5017 = vmatpush.bf16.msra.mxu0 %v2842
    %5018 = vmatmul.bf16.gmra.mxu0 %v898
    %v5019 = vpop.f32.mrf.mxu0
    %v5020 = vadd.f32 %v862, %v5019
    %v5021 = vpop.f32.mrf.mxu0
    %v5022 = vadd.f32 %v862, %v5021
    %5023 = vdwg.mxu0
    %5024 = vmatpush.bf16.msra.mxu0 %v2992
    %5025 = vmatpush.bf16.msra.mxu0 %v2982
    %5026 = vmatpush.bf16.msra.mxu0 %v2972
    %5027 = vmatpush.bf16.msra.mxu0 %v2962
    %5028 = vmatpush.bf16.msra.mxu0 %v2952
    %5029 = vmatpush.bf16.msra.mxu0 %v2942
    %5030 = vmatpush.bf16.msra.mxu0 %v2932
    %5031 = vmatpush.bf16.msra.mxu0 %v2922
    %5032 = vmatmul.bf16.gmra.mxu0 %v899
    %v5033 = vpop.f32.mrf.mxu0
    %v5034 = vadd.f32 %v5020, %v5033
    %v5035 = vpop.f32.mrf.mxu0
    %v5036 = vadd.f32 %v5022, %v5035
    %5037 = vdwg.mxu0
    %5038 = vmatpush.bf16.msra.mxu0 %v3072
    %5039 = vmatpush.bf16.msra.mxu0 %v3062
    %5040 = vmatpush.bf16.msra.mxu0 %v3052
    %5041 = vmatpush.bf16.msra.mxu0 %v3042
    %5042 = vmatpush.bf16.msra.mxu0 %v3032
    %5043 = vmatpush.bf16.msra.mxu0 %v3022
    %5044 = vmatpush.bf16.msra.mxu0 %v3012
    %5045 = vmatpush.bf16.msra.mxu0 %v3002
    %5046 = vmatmul.bf16.gmra.mxu0 %v900
    %v5047 = vpop.f32.mrf.mxu0
    %v5048 = vadd.f32 %v5034, %v5047
    %v5049 = vpop.f32.mrf.mxu0
    %v5050 = vadd.f32 %v5036, %v5049
    %5051 = vdwg.mxu0
    %5052 = vmatpush.bf16.msra.mxu0 %v3152
    %5053 = vmatpush.bf16.msra.mxu0 %v3142
    %5054 = vmatpush.bf16.msra.mxu0 %v3132
    %5055 = vmatpush.bf16.msra.mxu0 %v3122
    %5056 = vmatpush.bf16.msra.mxu0 %v3112
    %5057 = vmatpush.bf16.msra.mxu0 %v3102
    %5058 = vmatpush.bf16.msra.mxu0 %v3092
    %5059 = vmatpush.bf16.msra.mxu0 %v3082
    %5060 = vmatmul.bf16.gmra.mxu0 %v901
    %v5061 = vpop.f32.mrf.mxu0
    %v5062 = vadd.f32 %v5048, %v5061
    %v5063 = vpop.f32.mrf.mxu0
    %v5064 = vadd.f32 %v5050, %v5063
    %5065 = vdwg.mxu0
    %5066 = vmatpush.bf16.msra.mxu0 %v3232
    %5067 = vmatpush.bf16.msra.mxu0 %v3222
    %5068 = vmatpush.bf16.msra.mxu0 %v3212
    %5069 = vmatpush.bf16.msra.mxu0 %v3202
    %5070 = vmatpush.bf16.msra.mxu0 %v3192
    %5071 = vmatpush.bf16.msra.mxu0 %v3182
    %5072 = vmatpush.bf16.msra.mxu0 %v3172
    %5073 = vmatpush.bf16.msra.mxu0 %v3162
    %5074 = vmatmul.bf16.gmra.mxu0 %v902
    %v5075 = vpop.f32.mrf.mxu0
    %v5076 = vadd.f32 %v5062, %v5075
    %v5077 = vpop.f32.mrf.mxu0
    %v5078 = vadd.f32 %v5064, %v5077
    %5079 = vdwg.mxu0
    %5080 = vmatpush.bf16.msra.mxu0 %v3312
    %5081 = vmatpush.bf16.msra.mxu0 %v3302
    %5082 = vmatpush.bf16.msra.mxu0 %v3292
    %5083 = vmatpush.bf16.msra.mxu0 %v3282
    %5084 = vmatpush.bf16.msra.mxu0 %v3272
    %5085 = vmatpush.bf16.msra.mxu0 %v3262
    %5086 = vmatpush.bf16.msra.mxu0 %v3252
    %5087 = vmatpush.bf16.msra.mxu0 %v3242
    %5088 = vmatmul.bf16.gmra.mxu0 %v903
    %v5089 = vpop.f32.mrf.mxu0
    %v5090 = vadd.f32 %v5076, %v5089
    %v5091 = vpop.f32.mrf.mxu0
    %v5092 = vadd.f32 %v5078, %v5091
    %5093 = vdwg.mxu0
    %5094 = vmatpush.bf16.msra.mxu0 %v3392
    %5095 = vmatpush.bf16.msra.mxu0 %v3382
    %5096 = vmatpush.bf16.msra.mxu0 %v3372
    %5097 = vmatpush.bf16.msra.mxu0 %v3362
    %5098 = vmatpush.bf16.msra.mxu0 %v3352
    %5099 = vmatpush.bf16.msra.mxu0 %v3342
    %5100 = vmatpush.bf16.msra.mxu0 %v3332
    %5101 = vmatpush.bf16.msra.mxu0 %v3322
    %5102 = vmatmul.bf16.gmra.mxu0 %v904
    %v5103 = vpop.f32.mrf.mxu0
    %v5104 = vadd.f32 %v5090, %v5103
    %v5105 = vpop.f32.mrf.mxu0
    %v5106 = vadd.f32 %v5092, %v5105
    %5107 = vdwg.mxu0
    %5108 = vmatpush.bf16.msra.mxu0 %v3472
    %5109 = vmatpush.bf16.msra.mxu0 %v3462
    %5110 = vmatpush.bf16.msra.mxu0 %v3452
    %5111 = vmatpush.bf16.msra.mxu0 %v3442
    %5112 = vmatpush.bf16.msra.mxu0 %v3432
    %5113 = vmatpush.bf16.msra.mxu0 %v3422
    %5114 = vmatpush.bf16.msra.mxu0 %v3412
    %5115 = vmatpush.bf16.msra.mxu0 %v3402
    %5116 = vmatmul.bf16.gmra.mxu0 %v905
    %v5117 = vpop.f32.mrf.mxu0
    %v5118 = vadd.f32 %v5104, %v5117
    %v5119 = vpop.f32.mrf.mxu0
    %v5120 = vadd.f32 %v5106, %v5119
    %5121 = vdwg.mxu0
    %5122 = vmatpush.bf16.msra.mxu0 %v2913
    %5123 = vmatpush.bf16.msra.mxu0 %v2903
    %5124 = vmatpush.bf16.msra.mxu0 %v2893
    %5125 = vmatpush.bf16.msra.mxu0 %v2883
    %5126 = vmatpush.bf16.msra.mxu0 %v2873
    %5127 = vmatpush.bf16.msra.mxu0 %v2863
    %5128 = vmatpush.bf16.msra.mxu0 %v2853
    %5129 = vmatpush.bf16.msra.mxu0 %v2843
    %5130 = vmatmul.bf16.gmra.mxu0 %v898
    %v5131 = vpop.f32.mrf.mxu0
    %v5132 = vadd.f32 %v863, %v5131
    %v5133 = vpop.f32.mrf.mxu0
    %v5134 = vadd.f32 %v863, %v5133
    %5135 = vdwg.mxu0
    %5136 = vmatpush.bf16.msra.mxu0 %v2993
    %5137 = vmatpush.bf16.msra.mxu0 %v2983
    %5138 = vmatpush.bf16.msra.mxu0 %v2973
    %5139 = vmatpush.bf16.msra.mxu0 %v2963
    %5140 = vmatpush.bf16.msra.mxu0 %v2953
    %5141 = vmatpush.bf16.msra.mxu0 %v2943
    %5142 = vmatpush.bf16.msra.mxu0 %v2933
    %5143 = vmatpush.bf16.msra.mxu0 %v2923
    %5144 = vmatmul.bf16.gmra.mxu0 %v899
    %v5145 = vpop.f32.mrf.mxu0
    %v5146 = vadd.f32 %v5132, %v5145
    %v5147 = vpop.f32.mrf.mxu0
    %v5148 = vadd.f32 %v5134, %v5147
    %5149 = vdwg.mxu0
    %5150 = vmatpush.bf16.msra.mxu0 %v3073
    %5151 = vmatpush.bf16.msra.mxu0 %v3063
    %5152 = vmatpush.bf16.msra.mxu0 %v3053
    %5153 = vmatpush.bf16.msra.mxu0 %v3043
    %5154 = vmatpush.bf16.msra.mxu0 %v3033
    %5155 = vmatpush.bf16.msra.mxu0 %v3023
    %5156 = vmatpush.bf16.msra.mxu0 %v3013
    %5157 = vmatpush.bf16.msra.mxu0 %v3003
    %5158 = vmatmul.bf16.gmra.mxu0 %v900
    %v5159 = vpop.f32.mrf.mxu0
    %v5160 = vadd.f32 %v5146, %v5159
    %v5161 = vpop.f32.mrf.mxu0
    %v5162 = vadd.f32 %v5148, %v5161
    %5163 = vdwg.mxu0
    %5164 = vmatpush.bf16.msra.mxu0 %v3153
    %5165 = vmatpush.bf16.msra.mxu0 %v3143
    %5166 = vmatpush.bf16.msra.mxu0 %v3133
    %5167 = vmatpush.bf16.msra.mxu0 %v3123
    %5168 = vmatpush.bf16.msra.mxu0 %v3113
    %5169 = vmatpush.bf16.msra.mxu0 %v3103
    %5170 = vmatpush.bf16.msra.mxu0 %v3093
    %5171 = vmatpush.bf16.msra.mxu0 %v3083
    %5172 = vmatmul.bf16.gmra.mxu0 %v901
    %v5173 = vpop.f32.mrf.mxu0
    %v5174 = vadd.f32 %v5160, %v5173
    %v5175 = vpop.f32.mrf.mxu0
    %v5176 = vadd.f32 %v5162, %v5175
    %5177 = vdwg.mxu0
    %5178 = vmatpush.bf16.msra.mxu0 %v3233
    %5179 = vmatpush.bf16.msra.mxu0 %v3223
    %5180 = vmatpush.bf16.msra.mxu0 %v3213
    %5181 = vmatpush.bf16.msra.mxu0 %v3203
    %5182 = vmatpush.bf16.msra.mxu0 %v3193
    %5183 = vmatpush.bf16.msra.mxu0 %v3183
    %5184 = vmatpush.bf16.msra.mxu0 %v3173
    %5185 = vmatpush.bf16.msra.mxu0 %v3163
    %5186 = vmatmul.bf16.gmra.mxu0 %v902
    %v5187 = vpop.f32.mrf.mxu0
    %v5188 = vadd.f32 %v5174, %v5187
    %v5189 = vpop.f32.mrf.mxu0
    %v5190 = vadd.f32 %v5176, %v5189
    %5191 = vdwg.mxu0
    %5192 = vmatpush.bf16.msra.mxu0 %v3313
    %5193 = vmatpush.bf16.msra.mxu0 %v3303
    %5194 = vmatpush.bf16.msra.mxu0 %v3293
    %5195 = vmatpush.bf16.msra.mxu0 %v3283
    %5196 = vmatpush.bf16.msra.mxu0 %v3273
    %5197 = vmatpush.bf16.msra.mxu0 %v3263
    %5198 = vmatpush.bf16.msra.mxu0 %v3253
    %5199 = vmatpush.bf16.msra.mxu0 %v3243
    %5200 = vmatmul.bf16.gmra.mxu0 %v903
    %v5201 = vpop.f32.mrf.mxu0
    %v5202 = vadd.f32 %v5188, %v5201
    %v5203 = vpop.f32.mrf.mxu0
    %v5204 = vadd.f32 %v5190, %v5203
    %5205 = vdwg.mxu0
    %5206 = vmatpush.bf16.msra.mxu0 %v3393
    %5207 = vmatpush.bf16.msra.mxu0 %v3383
    %5208 = vmatpush.bf16.msra.mxu0 %v3373
    %5209 = vmatpush.bf16.msra.mxu0 %v3363
    %5210 = vmatpush.bf16.msra.mxu0 %v3353
    %5211 = vmatpush.bf16.msra.mxu0 %v3343
    %5212 = vmatpush.bf16.msra.mxu0 %v3333
    %5213 = vmatpush.bf16.msra.mxu0 %v3323
    %5214 = vmatmul.bf16.gmra.mxu0 %v904
    %v5215 = vpop.f32.mrf.mxu0
    %v5216 = vadd.f32 %v5202, %v5215
    %v5217 = vpop.f32.mrf.mxu0
    %v5218 = vadd.f32 %v5204, %v5217
    %5219 = vdwg.mxu0
    %5220 = vmatpush.bf16.msra.mxu0 %v3473
    %5221 = vmatpush.bf16.msra.mxu0 %v3463
    %5222 = vmatpush.bf16.msra.mxu0 %v3453
    %5223 = vmatpush.bf16.msra.mxu0 %v3443
    %5224 = vmatpush.bf16.msra.mxu0 %v3433
    %5225 = vmatpush.bf16.msra.mxu0 %v3423
    %5226 = vmatpush.bf16.msra.mxu0 %v3413
    %5227 = vmatpush.bf16.msra.mxu0 %v3403
    %5228 = vmatmul.bf16.gmra.mxu0 %v905
    %v5229 = vpop.f32.mrf.mxu0
    %v5230 = vadd.f32 %v5216, %v5229
    %v5231 = vpop.f32.mrf.mxu0
    %v5232 = vadd.f32 %v5218, %v5231
    %5233 = vdwg.mxu0
    %v5234 = vmax.f32 %v4222, 0.0
    %v5235 = vmax.f32 %v4334, 0.0
    %v5236 = vmax.f32 %v4446, 0.0
    %v5237 = vmax.f32 %v4558, 0.0
    %v5238 = vmax.f32 %v4670, 0.0
    %v5239 = vmax.f32 %v4782, 0.0
    %v5240 = vmax.f32 %v4894, 0.0
    %v5241 = vmax.f32 %v5006, 0.0
    %v5242 = vmax.f32 %v5118, 0.0
    %v5243 = vmax.f32 %v5230, 0.0
    %v5244 = vmax.f32 %v4224, 0.0
    %v5245 = vmax.f32 %v4336, 0.0
    %v5246 = vmax.f32 %v4448, 0.0
    %v5247 = vmax.f32 %v4560, 0.0
    %v5248 = vmax.f32 %v4672, 0.0
    %v5249 = vmax.f32 %v4784, 0.0
    %v5250 = vmax.f32 %v4896, 0.0
    %v5251 = vmax.f32 %v5008, 0.0
    %v5252 = vmax.f32 %v5120, 0.0
    %v5253 = vmax.f32 %v5232, 0.0
    %v5254 = vpack.c.bf16 %v5244, %v5234
    %v5255 = vpack.c.bf16 %v5245, %v5235
    %v5256 = vpack.c.bf16 %v5246, %v5236
    %v5257 = vpack.c.bf16 %v5247, %v5237
    %v5258 = vpack.c.bf16 %v5248, %v5238
    %v5259 = vpack.c.bf16 %v5249, %v5239
    %v5260 = vpack.c.bf16 %v5250, %v5240
    %v5261 = vpack.c.bf16 %v5251, %v5241
    %v5262 = vpack.c.bf16 %v5252, %v5242
    %v5263 = vpack.c.bf16 %v5253, %v5243
    %v5264 = vld [vmem:[#allocation6] sm:$0xff]
    %v5265 = vld [vmem:[#allocation6 + $0x8] sm:$0xff]
    %v5266 = vld [vmem:[#allocation6 + $0x10] sm:$0xf]
    %v5267 = vld [vmem:[#allocation6 + $0x14] sm:$0xff]
    %v5268 = vld [vmem:[#allocation6 + $0x1c] sm:$0xff]
    %v5269 = vld [vmem:[#allocation6 + $0x24] sm:$0xf]
    %v5270 = vld [vmem:[#allocation6 + $0x28] sm:$0xff]
    %v5271 = vld [vmem:[#allocation6 + $0x30] sm:$0xff]
    %v5272 = vld [vmem:[#allocation6 + $0x38] sm:$0xf]
    %v5273 = vld [vmem:[#allocation6 + $0x3c] sm:$0xff]
    %v5274 = vld [vmem:[#allocation6 + $0x44] sm:$0xff]
    %v5275 = vld [vmem:[#allocation6 + $0x4c] sm:$0xf]
    %v5276 = vld [vmem:[#allocation6 + $0x50] sm:$0xff]
    %v5277 = vld [vmem:[#allocation6 + $0x58] sm:$0xff]
    %v5278 = vld [vmem:[#allocation6 + $0x60] sm:$0xf]
    %v5279 = vld [vmem:[#allocation6 + $0x64] sm:$0xff]
    %v5280 = vld [vmem:[#allocation6 + $0x6c] sm:$0xff]
    %v5281 = vld [vmem:[#allocation6 + $0x74] sm:$0xf]
    %v5282 = vld [vmem:[#allocation6 + $0x78] sm:$0xff]
    %v5283 = vld [vmem:[#allocation6 + $0x80] sm:$0xff]
    %v5284 = vld [vmem:[#allocation6 + $0x88] sm:$0xf]
    %v5285 = vld [vmem:[#allocation6 + $0x8c] sm:$0xff]
    %v5286 = vld [vmem:[#allocation6 + $0x94] sm:$0xff]
    %v5287 = vld [vmem:[#allocation6 + $0x9c] sm:$0xf]
    %v5288 = vld [vmem:[#allocation6 + $0xa0] sm:$0xff]
    %v5289 = vld [vmem:[#allocation6 + $0xa8] sm:$0xff]
    %v5290 = vld [vmem:[#allocation6 + $0xb0] sm:$0xf]
    %v5291 = vld [vmem:[#allocation6 + $0xb4] sm:$0xff]
    %v5292 = vld [vmem:[#allocation6 + $0xbc] sm:$0xff]
    %v5293 = vld [vmem:[#allocation6 + $0xc4] sm:$0xf]
    %v5294 = vld [vmem:[#allocation6 + $0xc8] sm:$0xff]
    %v5295 = vld [vmem:[#allocation6 + $0xd0] sm:$0xff]
    %v5296 = vld [vmem:[#allocation6 + $0xd8] sm:$0xf]
    %v5297 = vld [vmem:[#allocation6 + $0xdc] sm:$0xff]
    %v5298 = vld [vmem:[#allocation6 + $0xe4] sm:$0xff]
    %v5299 = vld [vmem:[#allocation6 + $0xec] sm:$0xf]
    %v5300 = vld [vmem:[#allocation6 + $0xf0] sm:$0xff]
    %v5301 = vld [vmem:[#allocation6 + $0xf8] sm:$0xff]
    %v5302 = vld [vmem:[#allocation6 + $0x100] sm:$0xf]
    %v5303 = vld [vmem:[#allocation6 + $0x104] sm:$0xff]
    %v5304 = vld [vmem:[#allocation6 + $0x10c] sm:$0xff]
    %v5305 = vld [vmem:[#allocation6 + $0x114] sm:$0xf]
    %v5306 = vld [vmem:[#allocation6 + $0x118] sm:$0xff]
    %v5307 = vld [vmem:[#allocation6 + $0x120] sm:$0xff]
    %v5308 = vld [vmem:[#allocation6 + $0x128] sm:$0xf]
    %v5309 = vld [vmem:[#allocation6 + $0x12c] sm:$0xff]
    %v5310 = vld [vmem:[#allocation6 + $0x134] sm:$0xff]
    %v5311 = vld [vmem:[#allocation6 + $0x13c] sm:$0xf]
    %v5312 = vld [vmem:[#allocation6 + $0x140] sm:$0xff]
    %v5313 = vld [vmem:[#allocation6 + $0x148] sm:$0xff]
    %v5314 = vld [vmem:[#allocation6 + $0x150] sm:$0xf]
    %v5315 = vld [vmem:[#allocation6 + $0x154] sm:$0xff]
    %v5316 = vld [vmem:[#allocation6 + $0x15c] sm:$0xff]
    %v5317 = vld [vmem:[#allocation6 + $0x164] sm:$0xf]
    %v5318 = vld [vmem:[#allocation6 + $0x168] sm:$0xff]
    %v5319 = vld [vmem:[#allocation6 + $0x170] sm:$0xff]
    %v5320 = vld [vmem:[#allocation6 + $0x178] sm:$0xf]
    %v5321 = vld [vmem:[#allocation6 + $0x17c] sm:$0xff]
    %v5322 = vld [vmem:[#allocation6 + $0x184] sm:$0xff]
    %v5323 = vld [vmem:[#allocation6 + $0x18c] sm:$0xf]
    %v5324 = vld [vmem:[#allocation6 + $0x190] sm:$0xff]
    %v5325 = vld [vmem:[#allocation6 + $0x198] sm:$0xff]
    %v5326 = vld [vmem:[#allocation6 + $0x1a0] sm:$0xf]
    %v5327 = vld [vmem:[#allocation6 + $0x1a4] sm:$0xff]
    %v5328 = vld [vmem:[#allocation6 + $0x1ac] sm:$0xff]
    %v5329 = vld [vmem:[#allocation6 + $0x1b4] sm:$0xf]
    %v5330 = vld [vmem:[#allocation6 + $0x1b8] sm:$0xff]
    %v5331 = vld [vmem:[#allocation6 + $0x1c0] sm:$0xff]
    %v5332 = vld [vmem:[#allocation6 + $0x1c8] sm:$0xf]
    %v5333 = vld [vmem:[#allocation6 + $0x1cc] sm:$0xff]
    %v5334 = vld [vmem:[#allocation6 + $0x1d4] sm:$0xff]
    %v5335 = vld [vmem:[#allocation6 + $0x1dc] sm:$0xf]
    %v5336 = vld [vmem:[#allocation6 + $0x1e0] sm:$0xff]
    %v5337 = vld [vmem:[#allocation6 + $0x1e8] sm:$0xff]
    %v5338 = vld [vmem:[#allocation6 + $0x1f0] sm:$0xf]
    %v5339 = vld [vmem:[#allocation6 + $0x1f4] sm:$0xff]
    %v5340 = vld [vmem:[#allocation6 + $0x1fc] sm:$0xff]
    %v5341 = vld [vmem:[#allocation6 + $0x204] sm:$0xf]
    %v5342 = vld [vmem:[#allocation6 + $0x208] sm:$0xff]
    %v5343 = vld [vmem:[#allocation6 + $0x210] sm:$0xff]
    %v5344 = vld [vmem:[#allocation6 + $0x218] sm:$0xf]
    %v5345 = vld [vmem:[#allocation6 + $0x21c] sm:$0xff]
    %v5346 = vld [vmem:[#allocation6 + $0x224] sm:$0xff]
    %v5347 = vld [vmem:[#allocation6 + $0x22c] sm:$0xf]
    %v5348 = vld [vmem:[#allocation6 + $0x230] sm:$0xff]
    %v5349 = vld [vmem:[#allocation6 + $0x238] sm:$0xff]
    %v5350 = vld [vmem:[#allocation6 + $0x240] sm:$0xf]
    %v5351 = vld [vmem:[#allocation6 + $0x244] sm:$0xff]
    %v5352 = vld [vmem:[#allocation6 + $0x24c] sm:$0xff]
    %v5353 = vld [vmem:[#allocation6 + $0x254] sm:$0xf]
    %v5354 = vld [vmem:[#allocation6 + $0x258] sm:$0xff]
    %v5355 = vld [vmem:[#allocation6 + $0x260] sm:$0xff]
    %v5356 = vld [vmem:[#allocation6 + $0x268] sm:$0xf]
    %v5357 = vld [vmem:[#allocation6 + $0x26c] sm:$0xff]
    %v5358 = vld [vmem:[#allocation6 + $0x274] sm:$0xff]
    %v5359 = vld [vmem:[#allocation6 + $0x27c] sm:$0xf]
    %v5360 = vld [vmem:[#allocation6 + $0x280] sm:$0xff]
    %v5361 = vld [vmem:[#allocation6 + $0x288] sm:$0xff]
    %v5362 = vld [vmem:[#allocation6 + $0x290] sm:$0xf]
    %v5363 = vld [vmem:[#allocation6 + $0x294] sm:$0xff]
    %v5364 = vld [vmem:[#allocation6 + $0x29c] sm:$0xff]
    %v5365 = vld [vmem:[#allocation6 + $0x2a4] sm:$0xf]
    %v5366 = vld [vmem:[#allocation6 + $0x2a8] sm:$0xff]
    %v5367 = vld [vmem:[#allocation6 + $0x2b0] sm:$0xff]
    %v5368 = vld [vmem:[#allocation6 + $0x2b8] sm:$0xf]
    %v5369 = vld [vmem:[#allocation6 + $0x2bc] sm:$0xff]
    %v5370 = vld [vmem:[#allocation6 + $0x2c4] sm:$0xff]
    %v5371 = vld [vmem:[#allocation6 + $0x2cc] sm:$0xf]
    %v5372 = vld [vmem:[#allocation6 + $0x2d0] sm:$0xff]
    %v5373 = vld [vmem:[#allocation6 + $0x2d8] sm:$0xff]
    %v5374 = vld [vmem:[#allocation6 + $0x2e0] sm:$0xf]
    %v5375 = vld [vmem:[#allocation6 + $0x2e4] sm:$0xff]
    %v5376 = vld [vmem:[#allocation6 + $0x2ec] sm:$0xff]
    %v5377 = vld [vmem:[#allocation6 + $0x2f4] sm:$0xf]
    %v5378 = vld [vmem:[#allocation6 + $0x2f8] sm:$0xff]
    %v5379 = vld [vmem:[#allocation6 + $0x300] sm:$0xff]
    %v5380 = vld [vmem:[#allocation6 + $0x308] sm:$0xf]
    %v5381 = vld [vmem:[#allocation6 + $0x30c] sm:$0xff]
    %v5382 = vld [vmem:[#allocation6 + $0x314] sm:$0xff]
    %v5383 = vld [vmem:[#allocation6 + $0x31c] sm:$0xf]
    %v5384 = vld [vmem:[#allocation6 + $0x320] sm:$0xff]
    %v5385 = vld [vmem:[#allocation6 + $0x328] sm:$0xff]
    %v5386 = vld [vmem:[#allocation6 + $0x330] sm:$0xf]
    %v5387 = vld [vmem:[#allocation6 + $0x334] sm:$0xff]
    %v5388 = vld [vmem:[#allocation6 + $0x33c] sm:$0xff]
    %v5389 = vld [vmem:[#allocation6 + $0x344] sm:$0xf]
    %v5390 = vld [vmem:[#allocation6 + $0x348] sm:$0xff]
    %v5391 = vld [vmem:[#allocation6 + $0x350] sm:$0xff]
    %v5392 = vld [vmem:[#allocation6 + $0x358] sm:$0xf]
    %v5393 = vld [vmem:[#allocation6 + $0x35c] sm:$0xff]
    %v5394 = vld [vmem:[#allocation6 + $0x364] sm:$0xff]
    %v5395 = vld [vmem:[#allocation6 + $0x36c] sm:$0xf]
    %v5396 = vld [vmem:[#allocation6 + $0x370] sm:$0xff]
    %v5397 = vld [vmem:[#allocation6 + $0x378] sm:$0xff]
    %v5398 = vld [vmem:[#allocation6 + $0x380] sm:$0xf]
    %v5399 = vld [vmem:[#allocation6 + $0x384] sm:$0xff]
    %v5400 = vld [vmem:[#allocation6 + $0x38c] sm:$0xff]
    %v5401 = vld [vmem:[#allocation6 + $0x394] sm:$0xf]
    %v5402 = vld [vmem:[#allocation6 + $0x398] sm:$0xff]
    %v5403 = vld [vmem:[#allocation6 + $0x3a0] sm:$0xff]
    %v5404 = vld [vmem:[#allocation6 + $0x3a8] sm:$0xf]
    %v5405 = vld [vmem:[#allocation6 + $0x3ac] sm:$0xff]
    %v5406 = vld [vmem:[#allocation6 + $0x3b4] sm:$0xff]
    %v5407 = vld [vmem:[#allocation6 + $0x3bc] sm:$0xf]
    %v5408 = vld [vmem:[#allocation6 + $0x3c0] sm:$0xff]
    %v5409 = vld [vmem:[#allocation6 + $0x3c8] sm:$0xff]
    %v5410 = vld [vmem:[#allocation6 + $0x3d0] sm:$0xf]
    %v5411 = vld [vmem:[#allocation6 + $0x3d4] sm:$0xff]
    %v5412 = vld [vmem:[#allocation6 + $0x3dc] sm:$0xff]
    %v5413 = vld [vmem:[#allocation6 + $0x3e4] sm:$0xf]
    %v5414 = vld [vmem:[#allocation6 + $0x3e8] sm:$0xff]
    %v5415 = vld [vmem:[#allocation6 + $0x3f0] sm:$0xff]
    %v5416 = vld [vmem:[#allocation6 + $0x3f8] sm:$0xf]
    %v5417 = vld [vmem:[#allocation6 + $0x3fc] sm:$0xff]
    %v5418 = vld [vmem:[#allocation6 + $0x404] sm:$0xff]
    %v5419 = vld [vmem:[#allocation6 + $0x40c] sm:$0xf]
    %v5420 = vld [vmem:[#allocation6 + $0x410] sm:$0xff]
    %v5421 = vld [vmem:[#allocation6 + $0x418] sm:$0xff]
    %v5422 = vld [vmem:[#allocation6 + $0x420] sm:$0xf]
    %v5423 = vld [vmem:[#allocation6 + $0x424] sm:$0xff]
    %v5424 = vld [vmem:[#allocation6 + $0x42c] sm:$0xff]
    %v5425 = vld [vmem:[#allocation6 + $0x434] sm:$0xf]
    %v5426 = vld [vmem:[#allocation6 + $0x438] sm:$0xff]
    %v5427 = vld [vmem:[#allocation6 + $0x440] sm:$0xff]
    %v5428 = vld [vmem:[#allocation6 + $0x448] sm:$0xf]
    %v5429 = vld [vmem:[#allocation6 + $0x44c] sm:$0xff]
    %v5430 = vld [vmem:[#allocation6 + $0x454] sm:$0xff]
    %v5431 = vld [vmem:[#allocation6 + $0x45c] sm:$0xf]
    %v5432 = vld [vmem:[#allocation6 + $0x460] sm:$0xff]
    %v5433 = vld [vmem:[#allocation6 + $0x468] sm:$0xff]
    %v5434 = vld [vmem:[#allocation6 + $0x470] sm:$0xf]
    %v5435 = vld [vmem:[#allocation6 + $0x474] sm:$0xff]
    %v5436 = vld [vmem:[#allocation6 + $0x47c] sm:$0xff]
    %v5437 = vld [vmem:[#allocation6 + $0x484] sm:$0xf]
    %v5438 = vld [vmem:[#allocation6 + $0x488] sm:$0xff]
    %v5439 = vld [vmem:[#allocation6 + $0x490] sm:$0xff]
    %v5440 = vld [vmem:[#allocation6 + $0x498] sm:$0xf]
    %v5441 = vld [vmem:[#allocation6 + $0x49c] sm:$0xff]
    %v5442 = vld [vmem:[#allocation6 + $0x4a4] sm:$0xff]
    %v5443 = vld [vmem:[#allocation6 + $0x4ac] sm:$0xf]
    %v5444 = vld [vmem:[#allocation6 + $0x4b0] sm:$0xff]
    %v5445 = vld [vmem:[#allocation6 + $0x4b8] sm:$0xff]
    %v5446 = vld [vmem:[#allocation6 + $0x4c0] sm:$0xf]
    %v5447 = vld [vmem:[#allocation6 + $0x4c4] sm:$0xff]
    %v5448 = vld [vmem:[#allocation6 + $0x4cc] sm:$0xff]
    %v5449 = vld [vmem:[#allocation6 + $0x4d4] sm:$0xf]
    %v5450 = vld [vmem:[#allocation6 + $0x4d8] sm:$0xff]
    %v5451 = vld [vmem:[#allocation6 + $0x4e0] sm:$0xff]
    %v5452 = vld [vmem:[#allocation6 + $0x4e8] sm:$0xf]
    %v5453 = vld [vmem:[#allocation6 + $0x4ec] sm:$0xff]
    %v5454 = vld [vmem:[#allocation6 + $0x4f4] sm:$0xff]
    %v5455 = vld [vmem:[#allocation6 + $0x4fc] sm:$0xf]
    %v5456 = vld [vmem:[#allocation6 + $0x500] sm:$0xff]
    %v5457 = vld [vmem:[#allocation6 + $0x508] sm:$0xff]
    %v5458 = vld [vmem:[#allocation6 + $0x510] sm:$0xf]
    %v5459 = vld [vmem:[#allocation6 + $0x514] sm:$0xff]
    %v5460 = vld [vmem:[#allocation6 + $0x51c] sm:$0xff]
    %v5461 = vld [vmem:[#allocation6 + $0x524] sm:$0xf]
    %v5462 = vld [vmem:[#allocation6 + $0x528] sm:$0xff]
    %v5463 = vld [vmem:[#allocation6 + $0x530] sm:$0xff]
    %v5464 = vld [vmem:[#allocation6 + $0x538] sm:$0xf]
    %v5465 = vld [vmem:[#allocation6 + $0x53c] sm:$0xff]
    %v5466 = vld [vmem:[#allocation6 + $0x544] sm:$0xff]
    %v5467 = vld [vmem:[#allocation6 + $0x54c] sm:$0xf]
    %v5468 = vld [vmem:[#allocation6 + $0x550] sm:$0xff]
    %v5469 = vld [vmem:[#allocation6 + $0x558] sm:$0xff]
    %v5470 = vld [vmem:[#allocation6 + $0x560] sm:$0xf]
    %v5471 = vld [vmem:[#allocation6 + $0x564] sm:$0xff]
    %v5472 = vld [vmem:[#allocation6 + $0x56c] sm:$0xff]
    %v5473 = vld [vmem:[#allocation6 + $0x574] sm:$0xf]
    %v5474 = vld [vmem:[#allocation6 + $0x578] sm:$0xff]
    %v5475 = vld [vmem:[#allocation6 + $0x580] sm:$0xff]
    %v5476 = vld [vmem:[#allocation6 + $0x588] sm:$0xf]
    %v5477 = vld [vmem:[#allocation6 + $0x58c] sm:$0xff]
    %v5478 = vld [vmem:[#allocation6 + $0x594] sm:$0xff]
    %v5479 = vld [vmem:[#allocation6 + $0x59c] sm:$0xf]
    %v5480 = vld [vmem:[#allocation6 + $0x5a0] sm:$0xff]
    %v5481 = vld [vmem:[#allocation6 + $0x5a8] sm:$0xff]
    %v5482 = vld [vmem:[#allocation6 + $0x5b0] sm:$0xf]
    %v5483 = vld [vmem:[#allocation6 + $0x5b4] sm:$0xff]
    %v5484 = vld [vmem:[#allocation6 + $0x5bc] sm:$0xff]
    %v5485 = vld [vmem:[#allocation6 + $0x5c4] sm:$0xf]
    %v5486 = vld [vmem:[#allocation6 + $0x5c8] sm:$0xff]
    %v5487 = vld [vmem:[#allocation6 + $0x5d0] sm:$0xff]
    %v5488 = vld [vmem:[#allocation6 + $0x5d8] sm:$0xf]
    %v5489 = vld [vmem:[#allocation6 + $0x5dc] sm:$0xff]
    %v5490 = vld [vmem:[#allocation6 + $0x5e4] sm:$0xff]
    %v5491 = vld [vmem:[#allocation6 + $0x5ec] sm:$0xf]
    %v5492 = vld [vmem:[#allocation6 + $0x5f0] sm:$0xff]
    %v5493 = vld [vmem:[#allocation6 + $0x5f8] sm:$0xff]
    %v5494 = vld [vmem:[#allocation6 + $0x600] sm:$0xf]
    %v5495 = vld [vmem:[#allocation6 + $0x604] sm:$0xff]
    %v5496 = vld [vmem:[#allocation6 + $0x60c] sm:$0xff]
    %v5497 = vld [vmem:[#allocation6 + $0x614] sm:$0xf]
    %v5498 = vld [vmem:[#allocation6 + $0x618] sm:$0xff]
    %v5499 = vld [vmem:[#allocation6 + $0x620] sm:$0xff]
    %v5500 = vld [vmem:[#allocation6 + $0x628] sm:$0xf]
    %v5501 = vld [vmem:[#allocation6 + $0x62c] sm:$0xff]
    %v5502 = vld [vmem:[#allocation6 + $0x634] sm:$0xff]
    %v5503 = vld [vmem:[#allocation6 + $0x63c] sm:$0xf]
    %v5504 = vld [vmem:[#allocation6 + $0x640] sm:$0xff]
    %v5505 = vld [vmem:[#allocation6 + $0x648] sm:$0xff]
    %v5506 = vld [vmem:[#allocation6 + $0x650] sm:$0xf]
    %v5507 = vld [vmem:[#allocation6 + $0x654] sm:$0xff]
    %v5508 = vld [vmem:[#allocation6 + $0x65c] sm:$0xff]
    %v5509 = vld [vmem:[#allocation6 + $0x664] sm:$0xf]
    %v5510 = vld [vmem:[#allocation6 + $0x668] sm:$0xff]
    %v5511 = vld [vmem:[#allocation6 + $0x670] sm:$0xff]
    %v5512 = vld [vmem:[#allocation6 + $0x678] sm:$0xf]
    %v5513 = vld [vmem:[#allocation6 + $0x67c] sm:$0xff]
    %v5514 = vld [vmem:[#allocation6 + $0x684] sm:$0xff]
    %v5515 = vld [vmem:[#allocation6 + $0x68c] sm:$0xf]
    %v5516 = vld [vmem:[#allocation6 + $0x690] sm:$0xff]
    %v5517 = vld [vmem:[#allocation6 + $0x698] sm:$0xff]
    %v5518 = vld [vmem:[#allocation6 + $0x6a0] sm:$0xf]
    %v5519 = vld [vmem:[#allocation6 + $0x6a4] sm:$0xff]
    %v5520 = vld [vmem:[#allocation6 + $0x6ac] sm:$0xff]
    %v5521 = vld [vmem:[#allocation6 + $0x6b4] sm:$0xf]
    %v5522 = vld [vmem:[#allocation6 + $0x6b8] sm:$0xff]
    %v5523 = vld [vmem:[#allocation6 + $0x6c0] sm:$0xff]
    %v5524 = vld [vmem:[#allocation6 + $0x6c8] sm:$0xf]
    %v5525 = vld [vmem:[#allocation6 + $0x6cc] sm:$0xff]
    %v5526 = vld [vmem:[#allocation6 + $0x6d4] sm:$0xff]
    %v5527 = vld [vmem:[#allocation6 + $0x6dc] sm:$0xf]
    %v5528 = vld [vmem:[#allocation6 + $0x6e0] sm:$0xff]
    %v5529 = vld [vmem:[#allocation6 + $0x6e8] sm:$0xff]
    %v5530 = vld [vmem:[#allocation6 + $0x6f0] sm:$0xf]
    %v5531 = vld [vmem:[#allocation6 + $0x6f4] sm:$0xff]
    %v5532 = vld [vmem:[#allocation6 + $0x6fc] sm:$0xff]
    %v5533 = vld [vmem:[#allocation6 + $0x704] sm:$0xf]
    %v5534 = vld [vmem:[#allocation6 + $0x708] sm:$0xff]
    %v5535 = vld [vmem:[#allocation6 + $0x710] sm:$0xff]
    %v5536 = vld [vmem:[#allocation6 + $0x718] sm:$0xf]
    %v5537 = vld [vmem:[#allocation6 + $0x71c] sm:$0xff]
    %v5538 = vld [vmem:[#allocation6 + $0x724] sm:$0xff]
    %v5539 = vld [vmem:[#allocation6 + $0x72c] sm:$0xf]
    %v5540 = vld [vmem:[#allocation6 + $0x730] sm:$0xff]
    %v5541 = vld [vmem:[#allocation6 + $0x738] sm:$0xff]
    %v5542 = vld [vmem:[#allocation6 + $0x740] sm:$0xf]
    %v5543 = vld [vmem:[#allocation6 + $0x744] sm:$0xff]
    %v5544 = vld [vmem:[#allocation6 + $0x74c] sm:$0xff]
    %v5545 = vld [vmem:[#allocation6 + $0x754] sm:$0xf]
    %v5546 = vld [vmem:[#allocation6 + $0x758] sm:$0xff]
    %v5547 = vld [vmem:[#allocation6 + $0x760] sm:$0xff]
    %v5548 = vld [vmem:[#allocation6 + $0x768] sm:$0xf]
    %v5549 = vld [vmem:[#allocation6 + $0x76c] sm:$0xff]
    %v5550 = vld [vmem:[#allocation6 + $0x774] sm:$0xff]
    %v5551 = vld [vmem:[#allocation6 + $0x77c] sm:$0xf]
    %v5552 = vld [vmem:[#allocation6 + $0x780] sm:$0xff]
    %v5553 = vld [vmem:[#allocation6 + $0x788] sm:$0xff]
    %v5554 = vld [vmem:[#allocation6 + $0x790] sm:$0xf]
    %v5555 = vld [vmem:[#allocation6 + $0x794] sm:$0xff]
    %v5556 = vld [vmem:[#allocation6 + $0x79c] sm:$0xff]
    %v5557 = vld [vmem:[#allocation6 + $0x7a4] sm:$0xf]
    %v5558 = vld [vmem:[#allocation6 + $0x7a8] sm:$0xff]
    %v5559 = vld [vmem:[#allocation6 + $0x7b0] sm:$0xff]
    %v5560 = vld [vmem:[#allocation6 + $0x7b8] sm:$0xf]
    %v5561 = vld [vmem:[#allocation6 + $0x7bc] sm:$0xff]
    %v5562 = vld [vmem:[#allocation6 + $0x7c4] sm:$0xff]
    %v5563 = vld [vmem:[#allocation6 + $0x7cc] sm:$0xf]
    %v5564 = vld [vmem:[#allocation6 + $0x7d0] sm:$0xff]
    %v5565 = vld [vmem:[#allocation6 + $0x7d8] sm:$0xff]
    %v5566 = vld [vmem:[#allocation6 + $0x7e0] sm:$0xf]
    %v5567 = vld [vmem:[#allocation6 + $0x7e4] sm:$0xff]
    %v5568 = vld [vmem:[#allocation6 + $0x7ec] sm:$0xff]
    %v5569 = vld [vmem:[#allocation6 + $0x7f4] sm:$0xf]
    %v5570 = vld [vmem:[#allocation6 + $0x7f8] sm:$0xff]
    %v5571 = vld [vmem:[#allocation6 + $0x800] sm:$0xff]
    %v5572 = vld [vmem:[#allocation6 + $0x808] sm:$0xf]
    %v5573 = vld [vmem:[#allocation6 + $0x80c] sm:$0xff]
    %v5574 = vld [vmem:[#allocation6 + $0x814] sm:$0xff]
    %v5575 = vld [vmem:[#allocation6 + $0x81c] sm:$0xf]
    %v5576 = vld [vmem:[#allocation6 + $0x820] sm:$0xff]
    %v5577 = vld [vmem:[#allocation6 + $0x828] sm:$0xff]
    %v5578 = vld [vmem:[#allocation6 + $0x830] sm:$0xf]
    %v5579 = vld [vmem:[#allocation6 + $0x834] sm:$0xff]
    %v5580 = vld [vmem:[#allocation6 + $0x83c] sm:$0xff]
    %v5581 = vld [vmem:[#allocation6 + $0x844] sm:$0xf]
    %v5582 = vld [vmem:[#allocation6 + $0x848] sm:$0xff]
    %v5583 = vld [vmem:[#allocation6 + $0x850] sm:$0xff]
    %v5584 = vld [vmem:[#allocation6 + $0x858] sm:$0xf]
    %v5585 = vld [vmem:[#allocation6 + $0x85c] sm:$0xff]
    %v5586 = vld [vmem:[#allocation6 + $0x864] sm:$0xff]
    %v5587 = vld [vmem:[#allocation6 + $0x86c] sm:$0xf]
    %v5588 = vld [vmem:[#allocation6 + $0x870] sm:$0xff]
    %v5589 = vld [vmem:[#allocation6 + $0x878] sm:$0xff]
    %v5590 = vld [vmem:[#allocation6 + $0x880] sm:$0xf]
    %v5591 = vld [vmem:[#allocation6 + $0x884] sm:$0xff]
    %v5592 = vld [vmem:[#allocation6 + $0x88c] sm:$0xff]
    %v5593 = vld [vmem:[#allocation6 + $0x894] sm:$0xf]
    %v5594 = vld [vmem:[#allocation6 + $0x898] sm:$0xff]
    %v5595 = vld [vmem:[#allocation6 + $0x8a0] sm:$0xff]
    %v5596 = vld [vmem:[#allocation6 + $0x8a8] sm:$0xf]
    %v5597 = vld [vmem:[#allocation6 + $0x8ac] sm:$0xff]
    %v5598 = vld [vmem:[#allocation6 + $0x8b4] sm:$0xff]
    %v5599 = vld [vmem:[#allocation6 + $0x8bc] sm:$0xf]
    %v5600 = vld [vmem:[#allocation6 + $0x8c0] sm:$0xff]
    %v5601 = vld [vmem:[#allocation6 + $0x8c8] sm:$0xff]
    %v5602 = vld [vmem:[#allocation6 + $0x8d0] sm:$0xf]
    %v5603 = vld [vmem:[#allocation6 + $0x8d4] sm:$0xff]
    %v5604 = vld [vmem:[#allocation6 + $0x8dc] sm:$0xff]
    %v5605 = vld [vmem:[#allocation6 + $0x8e4] sm:$0xf]
    %v5606 = vld [vmem:[#allocation6 + $0x8e8] sm:$0xff]
    %v5607 = vld [vmem:[#allocation6 + $0x8f0] sm:$0xff]
    %v5608 = vld [vmem:[#allocation6 + $0x8f8] sm:$0xf]
    %v5609 = vld [vmem:[#allocation6 + $0x8fc] sm:$0xff]
    %v5610 = vld [vmem:[#allocation6 + $0x904] sm:$0xff]
    %v5611 = vld [vmem:[#allocation6 + $0x90c] sm:$0xf]
    %v5612 = vld [vmem:[#allocation6 + $0x910] sm:$0xff]
    %v5613 = vld [vmem:[#allocation6 + $0x918] sm:$0xff]
    %v5614 = vld [vmem:[#allocation6 + $0x920] sm:$0xf]
    %v5615 = vld [vmem:[#allocation6 + $0x924] sm:$0xff]
    %v5616 = vld [vmem:[#allocation6 + $0x92c] sm:$0xff]
    %v5617 = vld [vmem:[#allocation6 + $0x934] sm:$0xf]
    %v5618 = vld [vmem:[#allocation6 + $0x938] sm:$0xff]
    %v5619 = vld [vmem:[#allocation6 + $0x940] sm:$0xff]
    %v5620 = vld [vmem:[#allocation6 + $0x948] sm:$0xf]
    %v5621 = vld [vmem:[#allocation6 + $0x94c] sm:$0xff]
    %v5622 = vld [vmem:[#allocation6 + $0x954] sm:$0xff]
    %v5623 = vld [vmem:[#allocation6 + $0x95c] sm:$0xf]
    %v5624 = vld [vmem:[#allocation6 + $0x960] sm:$0xff]
    %v5625 = vld [vmem:[#allocation6 + $0x968] sm:$0xff]
    %v5626 = vld [vmem:[#allocation6 + $0x970] sm:$0xf]
    %v5627 = vld [vmem:[#allocation6 + $0x974] sm:$0xff]
    %v5628 = vld [vmem:[#allocation6 + $0x97c] sm:$0xff]
    %v5629 = vld [vmem:[#allocation6 + $0x984] sm:$0xf]
    %v5630 = vld [vmem:[#allocation6 + $0x988] sm:$0xff]
    %v5631 = vld [vmem:[#allocation6 + $0x990] sm:$0xff]
    %v5632 = vld [vmem:[#allocation6 + $0x998] sm:$0xf]
    %v5633 = vld [vmem:[#allocation6 + $0x99c] sm:$0xff]
    %v5634 = vld [vmem:[#allocation6 + $0x9a4] sm:$0xff]
    %v5635 = vld [vmem:[#allocation6 + $0x9ac] sm:$0xf]
    %v5636 = vld [vmem:[#allocation6 + $0x9b0] sm:$0xff]
    %v5637 = vld [vmem:[#allocation6 + $0x9b8] sm:$0xff]
    %v5638 = vld [vmem:[#allocation6 + $0x9c0] sm:$0xf]
    %v5639 = vld [vmem:[#allocation6 + $0x9c4] sm:$0xff]
    %v5640 = vld [vmem:[#allocation6 + $0x9cc] sm:$0xff]
    %v5641 = vld [vmem:[#allocation6 + $0x9d4] sm:$0xf]
    %v5642 = vld [vmem:[#allocation6 + $0x9d8] sm:$0xff]
    %v5643 = vld [vmem:[#allocation6 + $0x9e0] sm:$0xff]
    %v5644 = vld [vmem:[#allocation6 + $0x9e8] sm:$0xf]
    %v5645 = vld [vmem:[#allocation6 + $0x9ec] sm:$0xff]
    %v5646 = vld [vmem:[#allocation6 + $0x9f4] sm:$0xff]
    %v5647 = vld [vmem:[#allocation6 + $0x9fc] sm:$0xf]
    %v5648 = vld [vmem:[#allocation6 + $0xa00] sm:$0xff]
    %v5649 = vld [vmem:[#allocation6 + $0xa08] sm:$0xff]
    %v5650 = vld [vmem:[#allocation6 + $0xa10] sm:$0xf]
    %v5651 = vld [vmem:[#allocation6 + $0xa14] sm:$0xff]
    %v5652 = vld [vmem:[#allocation6 + $0xa1c] sm:$0xff]
    %v5653 = vld [vmem:[#allocation6 + $0xa24] sm:$0xf]
    %v5654 = vld [vmem:[#allocation6 + $0xa28] sm:$0xff]
    %v5655 = vld [vmem:[#allocation6 + $0xa30] sm:$0xff]
    %v5656 = vld [vmem:[#allocation6 + $0xa38] sm:$0xf]
    %v5657 = vld [vmem:[#allocation6 + $0xa3c] sm:$0xff]
    %v5658 = vld [vmem:[#allocation6 + $0xa44] sm:$0xff]
    %v5659 = vld [vmem:[#allocation6 + $0xa4c] sm:$0xf]
    %v5660 = vld [vmem:[#allocation6 + $0xa50] sm:$0xff]
    %v5661 = vld [vmem:[#allocation6 + $0xa58] sm:$0xff]
    %v5662 = vld [vmem:[#allocation6 + $0xa60] sm:$0xf]
    %v5663 = vld [vmem:[#allocation6 + $0xa64] sm:$0xff]
    %v5664 = vld [vmem:[#allocation6 + $0xa6c] sm:$0xff]
    %v5665 = vld [vmem:[#allocation6 + $0xa74] sm:$0xf]
    %v5666 = vld [vmem:[#allocation6 + $0xa78] sm:$0xff]
    %v5667 = vld [vmem:[#allocation6 + $0xa80] sm:$0xff]
    %v5668 = vld [vmem:[#allocation6 + $0xa88] sm:$0xf]
    %v5669 = vld [vmem:[#allocation6 + $0xa8c] sm:$0xff]
    %v5670 = vld [vmem:[#allocation6 + $0xa94] sm:$0xff]
    %v5671 = vld [vmem:[#allocation6 + $0xa9c] sm:$0xf]
    %v5672 = vld [vmem:[#allocation6 + $0xaa0] sm:$0xff]
    %v5673 = vld [vmem:[#allocation6 + $0xaa8] sm:$0xff]
    %v5674 = vld [vmem:[#allocation6 + $0xab0] sm:$0xf]
    %v5675 = vld [vmem:[#allocation6 + $0xab4] sm:$0xff]
    %v5676 = vld [vmem:[#allocation6 + $0xabc] sm:$0xff]
    %v5677 = vld [vmem:[#allocation6 + $0xac4] sm:$0xf]
    %v5678 = vld [vmem:[#allocation6 + $0xac8] sm:$0xff]
    %v5679 = vld [vmem:[#allocation6 + $0xad0] sm:$0xff]
    %v5680 = vld [vmem:[#allocation6 + $0xad8] sm:$0xf]
    %v5681 = vld [vmem:[#allocation6 + $0xadc] sm:$0xff]
    %v5682 = vld [vmem:[#allocation6 + $0xae4] sm:$0xff]
    %v5683 = vld [vmem:[#allocation6 + $0xaec] sm:$0xf]
    %v5684 = vld [vmem:[#allocation6 + $0xaf0] sm:$0xff]
    %v5685 = vld [vmem:[#allocation6 + $0xaf8] sm:$0xff]
    %v5686 = vld [vmem:[#allocation6 + $0xb00] sm:$0xf]
    %v5687 = vld [vmem:[#allocation6 + $0xb04] sm:$0xff]
    %v5688 = vld [vmem:[#allocation6 + $0xb0c] sm:$0xff]
    %v5689 = vld [vmem:[#allocation6 + $0xb14] sm:$0xf]
    %v5690 = vld [vmem:[#allocation6 + $0xb18] sm:$0xff]
    %v5691 = vld [vmem:[#allocation6 + $0xb20] sm:$0xff]
    %v5692 = vld [vmem:[#allocation6 + $0xb28] sm:$0xf]
    %v5693 = vld [vmem:[#allocation6 + $0xb2c] sm:$0xff]
    %v5694 = vld [vmem:[#allocation6 + $0xb34] sm:$0xff]
    %v5695 = vld [vmem:[#allocation6 + $0xb3c] sm:$0xf]
    %v5696 = vld [vmem:[#allocation6 + $0xb40] sm:$0xff]
    %v5697 = vld [vmem:[#allocation6 + $0xb48] sm:$0xff]
    %v5698 = vld [vmem:[#allocation6 + $0xb50] sm:$0xf]
    %v5699 = vld [vmem:[#allocation6 + $0xb54] sm:$0xff]
    %v5700 = vld [vmem:[#allocation6 + $0xb5c] sm:$0xff]
    %v5701 = vld [vmem:[#allocation6 + $0xb64] sm:$0xf]
    %v5702 = vld [vmem:[#allocation6 + $0xb68] sm:$0xff]
    %v5703 = vld [vmem:[#allocation6 + $0xb70] sm:$0xff]
    %v5704 = vld [vmem:[#allocation6 + $0xb78] sm:$0xf]
    %v5705 = vld [vmem:[#allocation6 + $0xb7c] sm:$0xff]
    %v5706 = vld [vmem:[#allocation6 + $0xb84] sm:$0xff]
    %v5707 = vld [vmem:[#allocation6 + $0xb8c] sm:$0xf]
    %v5708 = vld [vmem:[#allocation6 + $0xb90] sm:$0xff]
    %v5709 = vld [vmem:[#allocation6 + $0xb98] sm:$0xff]
    %v5710 = vld [vmem:[#allocation6 + $0xba0] sm:$0xf]
    %v5711 = vld [vmem:[#allocation6 + $0xba4] sm:$0xff]
    %v5712 = vld [vmem:[#allocation6 + $0xbac] sm:$0xff]
    %v5713 = vld [vmem:[#allocation6 + $0xbb4] sm:$0xf]
    %v5714 = vld [vmem:[#allocation6 + $0xbb8] sm:$0xff]
    %v5715 = vld [vmem:[#allocation6 + $0xbc0] sm:$0xff]
    %v5716 = vld [vmem:[#allocation6 + $0xbc8] sm:$0xf]
    %v5717 = vld [vmem:[#allocation6 + $0xbcc] sm:$0xff]
    %v5718 = vld [vmem:[#allocation6 + $0xbd4] sm:$0xff]
    %v5719 = vld [vmem:[#allocation6 + $0xbdc] sm:$0xf]
    %v5720 = vld [vmem:[#allocation6 + $0xbe0] sm:$0xff]
    %v5721 = vld [vmem:[#allocation6 + $0xbe8] sm:$0xff]
    %v5722 = vld [vmem:[#allocation6 + $0xbf0] sm:$0xf]
    %v5723 = vld [vmem:[#allocation6 + $0xbf4] sm:$0xff]
    %v5724 = vld [vmem:[#allocation6 + $0xbfc] sm:$0xff]
    %v5725 = vld [vmem:[#allocation6 + $0xc04] sm:$0xf]
    %v5726 = vld [vmem:[#allocation6 + $0xc08] sm:$0xff]
    %v5727 = vld [vmem:[#allocation6 + $0xc10] sm:$0xff]
    %v5728 = vld [vmem:[#allocation6 + $0xc18] sm:$0xf]
    %v5729 = vld [vmem:[#allocation6 + $0xc1c] sm:$0xff]
    %v5730 = vld [vmem:[#allocation6 + $0xc24] sm:$0xff]
    %v5731 = vld [vmem:[#allocation6 + $0xc2c] sm:$0xf]
    %v5732 = vld [vmem:[#allocation6 + $0xc30] sm:$0xff]
    %v5733 = vld [vmem:[#allocation6 + $0xc38] sm:$0xff]
    %v5734 = vld [vmem:[#allocation6 + $0xc40] sm:$0xf]
    %v5735 = vld [vmem:[#allocation6 + $0xc44] sm:$0xff]
    %v5736 = vld [vmem:[#allocation6 + $0xc4c] sm:$0xff]
    %v5737 = vld [vmem:[#allocation6 + $0xc54] sm:$0xf]
    %v5738 = vld [vmem:[#allocation6 + $0xc58] sm:$0xff]
    %v5739 = vld [vmem:[#allocation6 + $0xc60] sm:$0xff]
    %v5740 = vld [vmem:[#allocation6 + $0xc68] sm:$0xf]
    %v5741 = vld [vmem:[#allocation6 + $0xc6c] sm:$0xff]
    %v5742 = vld [vmem:[#allocation6 + $0xc74] sm:$0xff]
    %v5743 = vld [vmem:[#allocation6 + $0xc7c] sm:$0xf]
    %v5744 = vld [vmem:[#allocation7] sm:$0x1f]
    %v5746 = vperm.slane %v5744, 0
    %v5747 = vperm.slane %v5744, 1
    %v5748 = vperm.slane %v5744, 2
    %v5749 = vperm.slane %v5744, 3
    %v5750 = vperm.slane %v5744, 4
    %v6236 = vunpack.c.l.b16 %v5264
    %v6237 = vunpack.c.h.b16 %v5264
    %v6238 = vunpack.c.l.b16 %v5265
    %v6239 = vunpack.c.h.b16 %v5265
    %v6240 = vunpack.c.l.b16 %v5266
    %v6241 = vunpack.c.l.b16 %v5267
    %v6242 = vunpack.c.h.b16 %v5267
    %v6243 = vunpack.c.l.b16 %v5268
    %v6244 = vunpack.c.h.b16 %v5268
    %v6245 = vunpack.c.l.b16 %v5269
    %v6246 = vunpack.c.l.b16 %v5270
    %v6247 = vunpack.c.h.b16 %v5270
    %v6248 = vunpack.c.l.b16 %v5271
    %v6249 = vunpack.c.h.b16 %v5271
    %v6250 = vunpack.c.l.b16 %v5272
    %v6251 = vunpack.c.l.b16 %v5273
    %v6252 = vunpack.c.h.b16 %v5273
    %v6253 = vunpack.c.l.b16 %v5274
    %v6254 = vunpack.c.h.b16 %v5274
    %v6255 = vunpack.c.l.b16 %v5275
    %v6256 = vunpack.c.l.b16 %v5276
    %v6257 = vunpack.c.h.b16 %v5276
    %v6258 = vunpack.c.l.b16 %v5277
    %v6259 = vunpack.c.h.b16 %v5277
    %v6260 = vunpack.c.l.b16 %v5278
    %v6261 = vunpack.c.l.b16 %v5279
    %v6262 = vunpack.c.h.b16 %v5279
    %v6263 = vunpack.c.l.b16 %v5280
    %v6264 = vunpack.c.h.b16 %v5280
    %v6265 = vunpack.c.l.b16 %v5281
    %v6266 = vunpack.c.l.b16 %v5282
    %v6267 = vunpack.c.h.b16 %v5282
    %v6268 = vunpack.c.l.b16 %v5283
    %v6269 = vunpack.c.h.b16 %v5283
    %v6270 = vunpack.c.l.b16 %v5284
    %v6271 = vunpack.c.l.b16 %v5285
    %v6272 = vunpack.c.h.b16 %v5285
    %v6273 = vunpack.c.l.b16 %v5286
    %v6274 = vunpack.c.h.b16 %v5286
    %v6275 = vunpack.c.l.b16 %v5287
    %v6276 = vunpack.c.l.b16 %v5288
    %v6277 = vunpack.c.h.b16 %v5288
    %v6278 = vunpack.c.l.b16 %v5289
    %v6279 = vunpack.c.h.b16 %v5289
    %v6280 = vunpack.c.l.b16 %v5290
    %v6281 = vunpack.c.l.b16 %v5291
    %v6282 = vunpack.c.h.b16 %v5291
    %v6283 = vunpack.c.l.b16 %v5292
    %v6284 = vunpack.c.h.b16 %v5292
    %v6285 = vunpack.c.l.b16 %v5293
    %v6286 = vunpack.c.l.b16 %v5294
    %v6287 = vunpack.c.h.b16 %v5294
    %v6288 = vunpack.c.l.b16 %v5295
    %v6289 = vunpack.c.h.b16 %v5295
    %v6290 = vunpack.c.l.b16 %v5296
    %v6291 = vunpack.c.l.b16 %v5297
    %v6292 = vunpack.c.h.b16 %v5297
    %v6293 = vunpack.c.l.b16 %v5298
    %v6294 = vunpack.c.h.b16 %v5298
    %v6295 = vunpack.c.l.b16 %v5299
    %v6296 = vunpack.c.l.b16 %v5300
    %v6297 = vunpack.c.h.b16 %v5300
    %v6298 = vunpack.c.l.b16 %v5301
    %v6299 = vunpack.c.h.b16 %v5301
    %v6300 = vunpack.c.l.b16 %v5302
    %v6301 = vunpack.c.l.b16 %v5303
    %v6302 = vunpack.c.h.b16 %v5303
    %v6303 = vunpack.c.l.b16 %v5304
    %v6304 = vunpack.c.h.b16 %v5304
    %v6305 = vunpack.c.l.b16 %v5305
    %v6306 = vunpack.c.l.b16 %v5306
    %v6307 = vunpack.c.h.b16 %v5306
    %v6308 = vunpack.c.l.b16 %v5307
    %v6309 = vunpack.c.h.b16 %v5307
    %v6310 = vunpack.c.l.b16 %v5308
    %v6311 = vunpack.c.l.b16 %v5309
    %v6312 = vunpack.c.h.b16 %v5309
    %v6313 = vunpack.c.l.b16 %v5310
    %v6314 = vunpack.c.h.b16 %v5310
    %v6315 = vunpack.c.l.b16 %v5311
    %v6316 = vunpack.c.l.b16 %v5312
    %v6317 = vunpack.c.h.b16 %v5312
    %v6318 = vunpack.c.l.b16 %v5313
    %v6319 = vunpack.c.h.b16 %v5313
    %v6320 = vunpack.c.l.b16 %v5314
    %v6321 = vunpack.c.l.b16 %v5315
    %v6322 = vunpack.c.h.b16 %v5315
    %v6323 = vunpack.c.l.b16 %v5316
    %v6324 = vunpack.c.h.b16 %v5316
    %v6325 = vunpack.c.l.b16 %v5317
    %v6326 = vunpack.c.l.b16 %v5318
    %v6327 = vunpack.c.h.b16 %v5318
    %v6328 = vunpack.c.l.b16 %v5319
    %v6329 = vunpack.c.h.b16 %v5319
    %v6330 = vunpack.c.l.b16 %v5320
    %v6331 = vunpack.c.l.b16 %v5321
    %v6332 = vunpack.c.h.b16 %v5321
    %v6333 = vunpack.c.l.b16 %v5322
    %v6334 = vunpack.c.h.b16 %v5322
    %v6335 = vunpack.c.l.b16 %v5323
    %v6336 = vunpack.c.l.b16 %v5324
    %v6337 = vunpack.c.h.b16 %v5324
    %v6338 = vunpack.c.l.b16 %v5325
    %v6339 = vunpack.c.h.b16 %v5325
    %v6340 = vunpack.c.l.b16 %v5326
    %v6341 = vunpack.c.l.b16 %v5327
    %v6342 = vunpack.c.h.b16 %v5327
    %v6343 = vunpack.c.l.b16 %v5328
    %v6344 = vunpack.c.h.b16 %v5328
    %v6345 = vunpack.c.l.b16 %v5329
    %v6346 = vunpack.c.l.b16 %v5330
    %v6347 = vunpack.c.h.b16 %v5330
    %v6348 = vunpack.c.l.b16 %v5331
    %v6349 = vunpack.c.h.b16 %v5331
    %v6350 = vunpack.c.l.b16 %v5332
    %v6351 = vunpack.c.l.b16 %v5333
    %v6352 = vunpack.c.h.b16 %v5333
    %v6353 = vunpack.c.l.b16 %v5334
    %v6354 = vunpack.c.h.b16 %v5334
    %v6355 = vunpack.c.l.b16 %v5335
    %v6356 = vunpack.c.l.b16 %v5336
    %v6357 = vunpack.c.h.b16 %v5336
    %v6358 = vunpack.c.l.b16 %v5337
    %v6359 = vunpack.c.h.b16 %v5337
    %v6360 = vunpack.c.l.b16 %v5338
    %v6361 = vunpack.c.l.b16 %v5339
    %v6362 = vunpack.c.h.b16 %v5339
    %v6363 = vunpack.c.l.b16 %v5340
    %v6364 = vunpack.c.h.b16 %v5340
    %v6365 = vunpack.c.l.b16 %v5341
    %v6366 = vunpack.c.l.b16 %v5342
    %v6367 = vunpack.c.h.b16 %v5342
    %v6368 = vunpack.c.l.b16 %v5343
    %v6369 = vunpack.c.h.b16 %v5343
    %v6370 = vunpack.c.l.b16 %v5344
    %v6371 = vunpack.c.l.b16 %v5345
    %v6372 = vunpack.c.h.b16 %v5345
    %v6373 = vunpack.c.l.b16 %v5346
    %v6374 = vunpack.c.h.b16 %v5346
    %v6375 = vunpack.c.l.b16 %v5347
    %v6376 = vunpack.c.l.b16 %v5348
    %v6377 = vunpack.c.h.b16 %v5348
    %v6378 = vunpack.c.l.b16 %v5349
    %v6379 = vunpack.c.h.b16 %v5349
    %v6380 = vunpack.c.l.b16 %v5350
    %v6381 = vunpack.c.l.b16 %v5351
    %v6382 = vunpack.c.h.b16 %v5351
    %v6383 = vunpack.c.l.b16 %v5352
    %v6384 = vunpack.c.h.b16 %v5352
    %v6385 = vunpack.c.l.b16 %v5353
    %v6386 = vunpack.c.l.b16 %v5354
    %v6387 = vunpack.c.h.b16 %v5354
    %v6388 = vunpack.c.l.b16 %v5355
    %v6389 = vunpack.c.h.b16 %v5355
    %v6390 = vunpack.c.l.b16 %v5356
    %v6391 = vunpack.c.l.b16 %v5357
    %v6392 = vunpack.c.h.b16 %v5357
    %v6393 = vunpack.c.l.b16 %v5358
    %v6394 = vunpack.c.h.b16 %v5358
    %v6395 = vunpack.c.l.b16 %v5359
    %v6396 = vunpack.c.l.b16 %v5360
    %v6397 = vunpack.c.h.b16 %v5360
    %v6398 = vunpack.c.l.b16 %v5361
    %v6399 = vunpack.c.h.b16 %v5361
    %v6400 = vunpack.c.l.b16 %v5362
    %v6401 = vunpack.c.l.b16 %v5363
    %v6402 = vunpack.c.h.b16 %v5363
    %v6403 = vunpack.c.l.b16 %v5364
    %v6404 = vunpack.c.h.b16 %v5364
    %v6405 = vunpack.c.l.b16 %v5365
    %v6406 = vunpack.c.l.b16 %v5366
    %v6407 = vunpack.c.h.b16 %v5366
    %v6408 = vunpack.c.l.b16 %v5367
    %v6409 = vunpack.c.h.b16 %v5367
    %v6410 = vunpack.c.l.b16 %v5368
    %v6411 = vunpack.c.l.b16 %v5369
    %v6412 = vunpack.c.h.b16 %v5369
    %v6413 = vunpack.c.l.b16 %v5370
    %v6414 = vunpack.c.h.b16 %v5370
    %v6415 = vunpack.c.l.b16 %v5371
    %v6416 = vunpack.c.l.b16 %v5372
    %v6417 = vunpack.c.h.b16 %v5372
    %v6418 = vunpack.c.l.b16 %v5373
    %v6419 = vunpack.c.h.b16 %v5373
    %v6420 = vunpack.c.l.b16 %v5374
    %v6421 = vunpack.c.l.b16 %v5375
    %v6422 = vunpack.c.h.b16 %v5375
    %v6423 = vunpack.c.l.b16 %v5376
    %v6424 = vunpack.c.h.b16 %v5376
    %v6425 = vunpack.c.l.b16 %v5377
    %v6426 = vunpack.c.l.b16 %v5378
    %v6427 = vunpack.c.h.b16 %v5378
    %v6428 = vunpack.c.l.b16 %v5379
    %v6429 = vunpack.c.h.b16 %v5379
    %v6430 = vunpack.c.l.b16 %v5380
    %v6431 = vunpack.c.l.b16 %v5381
    %v6432 = vunpack.c.h.b16 %v5381
    %v6433 = vunpack.c.l.b16 %v5382
    %v6434 = vunpack.c.h.b16 %v5382
    %v6435 = vunpack.c.l.b16 %v5383
    %v6436 = vunpack.c.l.b16 %v5384
    %v6437 = vunpack.c.h.b16 %v5384
    %v6438 = vunpack.c.l.b16 %v5385
    %v6439 = vunpack.c.h.b16 %v5385
    %v6440 = vunpack.c.l.b16 %v5386
    %v6441 = vunpack.c.l.b16 %v5387
    %v6442 = vunpack.c.h.b16 %v5387
    %v6443 = vunpack.c.l.b16 %v5388
    %v6444 = vunpack.c.h.b16 %v5388
    %v6445 = vunpack.c.l.b16 %v5389
    %v6446 = vunpack.c.l.b16 %v5390
    %v6447 = vunpack.c.h.b16 %v5390
    %v6448 = vunpack.c.l.b16 %v5391
    %v6449 = vunpack.c.h.b16 %v5391
    %v6450 = vunpack.c.l.b16 %v5392
    %v6451 = vunpack.c.l.b16 %v5393
    %v6452 = vunpack.c.h.b16 %v5393
    %v6453 = vunpack.c.l.b16 %v5394
    %v6454 = vunpack.c.h.b16 %v5394
    %v6455 = vunpack.c.l.b16 %v5395
    %v6456 = vunpack.c.l.b16 %v5396
    %v6457 = vunpack.c.h.b16 %v5396
    %v6458 = vunpack.c.l.b16 %v5397
    %v6459 = vunpack.c.h.b16 %v5397
    %v6460 = vunpack.c.l.b16 %v5398
    %v6461 = vunpack.c.l.b16 %v5399
    %v6462 = vunpack.c.h.b16 %v5399
    %v6463 = vunpack.c.l.b16 %v5400
    %v6464 = vunpack.c.h.b16 %v5400
    %v6465 = vunpack.c.l.b16 %v5401
    %v6466 = vunpack.c.l.b16 %v5402
    %v6467 = vunpack.c.h.b16 %v5402
    %v6468 = vunpack.c.l.b16 %v5403
    %v6469 = vunpack.c.h.b16 %v5403
    %v6470 = vunpack.c.l.b16 %v5404
    %v6471 = vunpack.c.l.b16 %v5405
    %v6472 = vunpack.c.h.b16 %v5405
    %v6473 = vunpack.c.l.b16 %v5406
    %v6474 = vunpack.c.h.b16 %v5406
    %v6475 = vunpack.c.l.b16 %v5407
    %v6476 = vunpack.c.l.b16 %v5408
    %v6477 = vunpack.c.h.b16 %v5408
    %v6478 = vunpack.c.l.b16 %v5409
    %v6479 = vunpack.c.h.b16 %v5409
    %v6480 = vunpack.c.l.b16 %v5410
    %v6481 = vunpack.c.l.b16 %v5411
    %v6482 = vunpack.c.h.b16 %v5411
    %v6483 = vunpack.c.l.b16 %v5412
    %v6484 = vunpack.c.h.b16 %v5412
    %v6485 = vunpack.c.l.b16 %v5413
    %v6486 = vunpack.c.l.b16 %v5414
    %v6487 = vunpack.c.h.b16 %v5414
    %v6488 = vunpack.c.l.b16 %v5415
    %v6489 = vunpack.c.h.b16 %v5415
    %v6490 = vunpack.c.l.b16 %v5416
    %v6491 = vunpack.c.l.b16 %v5417
    %v6492 = vunpack.c.h.b16 %v5417
    %v6493 = vunpack.c.l.b16 %v5418
    %v6494 = vunpack.c.h.b16 %v5418
    %v6495 = vunpack.c.l.b16 %v5419
    %v6496 = vunpack.c.l.b16 %v5420
    %v6497 = vunpack.c.h.b16 %v5420
    %v6498 = vunpack.c.l.b16 %v5421
    %v6499 = vunpack.c.h.b16 %v5421
    %v6500 = vunpack.c.l.b16 %v5422
    %v6501 = vunpack.c.l.b16 %v5423
    %v6502 = vunpack.c.h.b16 %v5423
    %v6503 = vunpack.c.l.b16 %v5424
    %v6504 = vunpack.c.h.b16 %v5424
    %v6505 = vunpack.c.l.b16 %v5425
    %v6506 = vunpack.c.l.b16 %v5426
    %v6507 = vunpack.c.h.b16 %v5426
    %v6508 = vunpack.c.l.b16 %v5427
    %v6509 = vunpack.c.h.b16 %v5427
    %v6510 = vunpack.c.l.b16 %v5428
    %v6511 = vunpack.c.l.b16 %v5429
    %v6512 = vunpack.c.h.b16 %v5429
    %v6513 = vunpack.c.l.b16 %v5430
    %v6514 = vunpack.c.h.b16 %v5430
    %v6515 = vunpack.c.l.b16 %v5431
    %v6516 = vunpack.c.l.b16 %v5432
    %v6517 = vunpack.c.h.b16 %v5432
    %v6518 = vunpack.c.l.b16 %v5433
    %v6519 = vunpack.c.h.b16 %v5433
    %v6520 = vunpack.c.l.b16 %v5434
    %v6521 = vunpack.c.l.b16 %v5435
    %v6522 = vunpack.c.h.b16 %v5435
    %v6523 = vunpack.c.l.b16 %v5436
    %v6524 = vunpack.c.h.b16 %v5436
    %v6525 = vunpack.c.l.b16 %v5437
    %v6526 = vunpack.c.l.b16 %v5438
    %v6527 = vunpack.c.h.b16 %v5438
    %v6528 = vunpack.c.l.b16 %v5439
    %v6529 = vunpack.c.h.b16 %v5439
    %v6530 = vunpack.c.l.b16 %v5440
    %v6531 = vunpack.c.l.b16 %v5441
    %v6532 = vunpack.c.h.b16 %v5441
    %v6533 = vunpack.c.l.b16 %v5442
    %v6534 = vunpack.c.h.b16 %v5442
    %v6535 = vunpack.c.l.b16 %v5443
    %v6536 = vunpack.c.l.b16 %v5444
    %v6537 = vunpack.c.h.b16 %v5444
    %v6538 = vunpack.c.l.b16 %v5445
    %v6539 = vunpack.c.h.b16 %v5445
    %v6540 = vunpack.c.l.b16 %v5446
    %v6541 = vunpack.c.l.b16 %v5447
    %v6542 = vunpack.c.h.b16 %v5447
    %v6543 = vunpack.c.l.b16 %v5448
    %v6544 = vunpack.c.h.b16 %v5448
    %v6545 = vunpack.c.l.b16 %v5449
    %v6546 = vunpack.c.l.b16 %v5450
    %v6547 = vunpack.c.h.b16 %v5450
    %v6548 = vunpack.c.l.b16 %v5451
    %v6549 = vunpack.c.h.b16 %v5451
    %v6550 = vunpack.c.l.b16 %v5452
    %v6551 = vunpack.c.l.b16 %v5453
    %v6552 = vunpack.c.h.b16 %v5453
    %v6553 = vunpack.c.l.b16 %v5454
    %v6554 = vunpack.c.h.b16 %v5454
    %v6555 = vunpack.c.l.b16 %v5455
    %v6556 = vunpack.c.l.b16 %v5456
    %v6557 = vunpack.c.h.b16 %v5456
    %v6558 = vunpack.c.l.b16 %v5457
    %v6559 = vunpack.c.h.b16 %v5457
    %v6560 = vunpack.c.l.b16 %v5458
    %v6561 = vunpack.c.l.b16 %v5459
    %v6562 = vunpack.c.h.b16 %v5459
    %v6563 = vunpack.c.l.b16 %v5460
    %v6564 = vunpack.c.h.b16 %v5460
    %v6565 = vunpack.c.l.b16 %v5461
    %v6566 = vunpack.c.l.b16 %v5462
    %v6567 = vunpack.c.h.b16 %v5462
    %v6568 = vunpack.c.l.b16 %v5463
    %v6569 = vunpack.c.h.b16 %v5463
    %v6570 = vunpack.c.l.b16 %v5464
    %v6571 = vunpack.c.l.b16 %v5465
    %v6572 = vunpack.c.h.b16 %v5465
    %v6573 = vunpack.c.l.b16 %v5466
    %v6574 = vunpack.c.h.b16 %v5466
    %v6575 = vunpack.c.l.b16 %v5467
    %v6576 = vunpack.c.l.b16 %v5468
    %v6577 = vunpack.c.h.b16 %v5468
    %v6578 = vunpack.c.l.b16 %v5469
    %v6579 = vunpack.c.h.b16 %v5469
    %v6580 = vunpack.c.l.b16 %v5470
    %v6581 = vunpack.c.l.b16 %v5471
    %v6582 = vunpack.c.h.b16 %v5471
    %v6583 = vunpack.c.l.b16 %v5472
    %v6584 = vunpack.c.h.b16 %v5472
    %v6585 = vunpack.c.l.b16 %v5473
    %v6586 = vunpack.c.l.b16 %v5474
    %v6587 = vunpack.c.h.b16 %v5474
    %v6588 = vunpack.c.l.b16 %v5475
    %v6589 = vunpack.c.h.b16 %v5475
    %v6590 = vunpack.c.l.b16 %v5476
    %v6591 = vunpack.c.l.b16 %v5477
    %v6592 = vunpack.c.h.b16 %v5477
    %v6593 = vunpack.c.l.b16 %v5478
    %v6594 = vunpack.c.h.b16 %v5478
    %v6595 = vunpack.c.l.b16 %v5479
    %v6596 = vunpack.c.l.b16 %v5480
    %v6597 = vunpack.c.h.b16 %v5480
    %v6598 = vunpack.c.l.b16 %v5481
    %v6599 = vunpack.c.h.b16 %v5481
    %v6600 = vunpack.c.l.b16 %v5482
    %v6601 = vunpack.c.l.b16 %v5483
    %v6602 = vunpack.c.h.b16 %v5483
    %v6603 = vunpack.c.l.b16 %v5484
    %v6604 = vunpack.c.h.b16 %v5484
    %v6605 = vunpack.c.l.b16 %v5485
    %v6606 = vunpack.c.l.b16 %v5486
    %v6607 = vunpack.c.h.b16 %v5486
    %v6608 = vunpack.c.l.b16 %v5487
    %v6609 = vunpack.c.h.b16 %v5487
    %v6610 = vunpack.c.l.b16 %v5488
    %v6611 = vunpack.c.l.b16 %v5489
    %v6612 = vunpack.c.h.b16 %v5489
    %v6613 = vunpack.c.l.b16 %v5490
    %v6614 = vunpack.c.h.b16 %v5490
    %v6615 = vunpack.c.l.b16 %v5491
    %v6616 = vunpack.c.l.b16 %v5492
    %v6617 = vunpack.c.h.b16 %v5492
    %v6618 = vunpack.c.l.b16 %v5493
    %v6619 = vunpack.c.h.b16 %v5493
    %v6620 = vunpack.c.l.b16 %v5494
    %v6621 = vunpack.c.l.b16 %v5495
    %v6622 = vunpack.c.h.b16 %v5495
    %v6623 = vunpack.c.l.b16 %v5496
    %v6624 = vunpack.c.h.b16 %v5496
    %v6625 = vunpack.c.l.b16 %v5497
    %v6626 = vunpack.c.l.b16 %v5498
    %v6627 = vunpack.c.h.b16 %v5498
    %v6628 = vunpack.c.l.b16 %v5499
    %v6629 = vunpack.c.h.b16 %v5499
    %v6630 = vunpack.c.l.b16 %v5500
    %v6631 = vunpack.c.l.b16 %v5501
    %v6632 = vunpack.c.h.b16 %v5501
    %v6633 = vunpack.c.l.b16 %v5502
    %v6634 = vunpack.c.h.b16 %v5502
    %v6635 = vunpack.c.l.b16 %v5503
    %v6636 = vunpack.c.l.b16 %v5504
    %v6637 = vunpack.c.h.b16 %v5504
    %v6638 = vunpack.c.l.b16 %v5505
    %v6639 = vunpack.c.h.b16 %v5505
    %v6640 = vunpack.c.l.b16 %v5506
    %v6641 = vunpack.c.l.b16 %v5507
    %v6642 = vunpack.c.h.b16 %v5507
    %v6643 = vunpack.c.l.b16 %v5508
    %v6644 = vunpack.c.h.b16 %v5508
    %v6645 = vunpack.c.l.b16 %v5509
    %v6646 = vunpack.c.l.b16 %v5510
    %v6647 = vunpack.c.h.b16 %v5510
    %v6648 = vunpack.c.l.b16 %v5511
    %v6649 = vunpack.c.h.b16 %v5511
    %v6650 = vunpack.c.l.b16 %v5512
    %v6651 = vunpack.c.l.b16 %v5513
    %v6652 = vunpack.c.h.b16 %v5513
    %v6653 = vunpack.c.l.b16 %v5514
    %v6654 = vunpack.c.h.b16 %v5514
    %v6655 = vunpack.c.l.b16 %v5515
    %v6656 = vunpack.c.l.b16 %v5516
    %v6657 = vunpack.c.h.b16 %v5516
    %v6658 = vunpack.c.l.b16 %v5517
    %v6659 = vunpack.c.h.b16 %v5517
    %v6660 = vunpack.c.l.b16 %v5518
    %v6661 = vunpack.c.l.b16 %v5519
    %v6662 = vunpack.c.h.b16 %v5519
    %v6663 = vunpack.c.l.b16 %v5520
    %v6664 = vunpack.c.h.b16 %v5520
    %v6665 = vunpack.c.l.b16 %v5521
    %v6666 = vunpack.c.l.b16 %v5522
    %v6667 = vunpack.c.h.b16 %v5522
    %v6668 = vunpack.c.l.b16 %v5523
    %v6669 = vunpack.c.h.b16 %v5523
    %v6670 = vunpack.c.l.b16 %v5524
    %v6671 = vunpack.c.l.b16 %v5525
    %v6672 = vunpack.c.h.b16 %v5525
    %v6673 = vunpack.c.l.b16 %v5526
    %v6674 = vunpack.c.h.b16 %v5526
    %v6675 = vunpack.c.l.b16 %v5527
    %v6676 = vunpack.c.l.b16 %v5528
    %v6677 = vunpack.c.h.b16 %v5528
    %v6678 = vunpack.c.l.b16 %v5529
    %v6679 = vunpack.c.h.b16 %v5529
    %v6680 = vunpack.c.l.b16 %v5530
    %v6681 = vunpack.c.l.b16 %v5531
    %v6682 = vunpack.c.h.b16 %v5531
    %v6683 = vunpack.c.l.b16 %v5532
    %v6684 = vunpack.c.h.b16 %v5532
    %v6685 = vunpack.c.l.b16 %v5533
    %v6686 = vunpack.c.l.b16 %v5534
    %v6687 = vunpack.c.h.b16 %v5534
    %v6688 = vunpack.c.l.b16 %v5535
    %v6689 = vunpack.c.h.b16 %v5535
    %v6690 = vunpack.c.l.b16 %v5536
    %v6691 = vunpack.c.l.b16 %v5537
    %v6692 = vunpack.c.h.b16 %v5537
    %v6693 = vunpack.c.l.b16 %v5538
    %v6694 = vunpack.c.h.b16 %v5538
    %v6695 = vunpack.c.l.b16 %v5539
    %v6696 = vunpack.c.l.b16 %v5540
    %v6697 = vunpack.c.h.b16 %v5540
    %v6698 = vunpack.c.l.b16 %v5541
    %v6699 = vunpack.c.h.b16 %v5541
    %v6700 = vunpack.c.l.b16 %v5542
    %v6701 = vunpack.c.l.b16 %v5543
    %v6702 = vunpack.c.h.b16 %v5543
    %v6703 = vunpack.c.l.b16 %v5544
    %v6704 = vunpack.c.h.b16 %v5544
    %v6705 = vunpack.c.l.b16 %v5545
    %v6706 = vunpack.c.l.b16 %v5546
    %v6707 = vunpack.c.h.b16 %v5546
    %v6708 = vunpack.c.l.b16 %v5547
    %v6709 = vunpack.c.h.b16 %v5547
    %v6710 = vunpack.c.l.b16 %v5548
    %v6711 = vunpack.c.l.b16 %v5549
    %v6712 = vunpack.c.h.b16 %v5549
    %v6713 = vunpack.c.l.b16 %v5550
    %v6714 = vunpack.c.h.b16 %v5550
    %v6715 = vunpack.c.l.b16 %v5551
    %v6716 = vunpack.c.l.b16 %v5552
    %v6717 = vunpack.c.h.b16 %v5552
    %v6718 = vunpack.c.l.b16 %v5553
    %v6719 = vunpack.c.h.b16 %v5553
    %v6720 = vunpack.c.l.b16 %v5554
    %v6721 = vunpack.c.l.b16 %v5555
    %v6722 = vunpack.c.h.b16 %v5555
    %v6723 = vunpack.c.l.b16 %v5556
    %v6724 = vunpack.c.h.b16 %v5556
    %v6725 = vunpack.c.l.b16 %v5557
    %v6726 = vunpack.c.l.b16 %v5558
    %v6727 = vunpack.c.h.b16 %v5558
    %v6728 = vunpack.c.l.b16 %v5559
    %v6729 = vunpack.c.h.b16 %v5559
    %v6730 = vunpack.c.l.b16 %v5560
    %v6731 = vunpack.c.l.b16 %v5561
    %v6732 = vunpack.c.h.b16 %v5561
    %v6733 = vunpack.c.l.b16 %v5562
    %v6734 = vunpack.c.h.b16 %v5562
    %v6735 = vunpack.c.l.b16 %v5563
    %v6736 = vunpack.c.l.b16 %v5564
    %v6737 = vunpack.c.h.b16 %v5564
    %v6738 = vunpack.c.l.b16 %v5565
    %v6739 = vunpack.c.h.b16 %v5565
    %v6740 = vunpack.c.l.b16 %v5566
    %v6741 = vunpack.c.l.b16 %v5567
    %v6742 = vunpack.c.h.b16 %v5567
    %v6743 = vunpack.c.l.b16 %v5568
    %v6744 = vunpack.c.h.b16 %v5568
    %v6745 = vunpack.c.l.b16 %v5569
    %v6746 = vunpack.c.l.b16 %v5570
    %v6747 = vunpack.c.h.b16 %v5570
    %v6748 = vunpack.c.l.b16 %v5571
    %v6749 = vunpack.c.h.b16 %v5571
    %v6750 = vunpack.c.l.b16 %v5572
    %v6751 = vunpack.c.l.b16 %v5573
    %v6752 = vunpack.c.h.b16 %v5573
    %v6753 = vunpack.c.l.b16 %v5574
    %v6754 = vunpack.c.h.b16 %v5574
    %v6755 = vunpack.c.l.b16 %v5575
    %v6756 = vunpack.c.l.b16 %v5576
    %v6757 = vunpack.c.h.b16 %v5576
    %v6758 = vunpack.c.l.b16 %v5577
    %v6759 = vunpack.c.h.b16 %v5577
    %v6760 = vunpack.c.l.b16 %v5578
    %v6761 = vunpack.c.l.b16 %v5579
    %v6762 = vunpack.c.h.b16 %v5579
    %v6763 = vunpack.c.l.b16 %v5580
    %v6764 = vunpack.c.h.b16 %v5580
    %v6765 = vunpack.c.l.b16 %v5581
    %v6766 = vunpack.c.l.b16 %v5582
    %v6767 = vunpack.c.h.b16 %v5582
    %v6768 = vunpack.c.l.b16 %v5583
    %v6769 = vunpack.c.h.b16 %v5583
    %v6770 = vunpack.c.l.b16 %v5584
    %v6771 = vunpack.c.l.b16 %v5585
    %v6772 = vunpack.c.h.b16 %v5585
    %v6773 = vunpack.c.l.b16 %v5586
    %v6774 = vunpack.c.h.b16 %v5586
    %v6775 = vunpack.c.l.b16 %v5587
    %v6776 = vunpack.c.l.b16 %v5588
    %v6777 = vunpack.c.h.b16 %v5588
    %v6778 = vunpack.c.l.b16 %v5589
    %v6779 = vunpack.c.h.b16 %v5589
    %v6780 = vunpack.c.l.b16 %v5590
    %v6781 = vunpack.c.l.b16 %v5591
    %v6782 = vunpack.c.h.b16 %v5591
    %v6783 = vunpack.c.l.b16 %v5592
    %v6784 = vunpack.c.h.b16 %v5592
    %v6785 = vunpack.c.l.b16 %v5593
    %v6786 = vunpack.c.l.b16 %v5594
    %v6787 = vunpack.c.h.b16 %v5594
    %v6788 = vunpack.c.l.b16 %v5595
    %v6789 = vunpack.c.h.b16 %v5595
    %v6790 = vunpack.c.l.b16 %v5596
    %v6791 = vunpack.c.l.b16 %v5597
    %v6792 = vunpack.c.h.b16 %v5597
    %v6793 = vunpack.c.l.b16 %v5598
    %v6794 = vunpack.c.h.b16 %v5598
    %v6795 = vunpack.c.l.b16 %v5599
    %v6796 = vunpack.c.l.b16 %v5600
    %v6797 = vunpack.c.h.b16 %v5600
    %v6798 = vunpack.c.l.b16 %v5601
    %v6799 = vunpack.c.h.b16 %v5601
    %v6800 = vunpack.c.l.b16 %v5602
    %v6801 = vunpack.c.l.b16 %v5603
    %v6802 = vunpack.c.h.b16 %v5603
    %v6803 = vunpack.c.l.b16 %v5604
    %v6804 = vunpack.c.h.b16 %v5604
    %v6805 = vunpack.c.l.b16 %v5605
    %v6806 = vunpack.c.l.b16 %v5606
    %v6807 = vunpack.c.h.b16 %v5606
    %v6808 = vunpack.c.l.b16 %v5607
    %v6809 = vunpack.c.h.b16 %v5607
    %v6810 = vunpack.c.l.b16 %v5608
    %v6811 = vunpack.c.l.b16 %v5609
    %v6812 = vunpack.c.h.b16 %v5609
    %v6813 = vunpack.c.l.b16 %v5610
    %v6814 = vunpack.c.h.b16 %v5610
    %v6815 = vunpack.c.l.b16 %v5611
    %v6816 = vunpack.c.l.b16 %v5612
    %v6817 = vunpack.c.h.b16 %v5612
    %v6818 = vunpack.c.l.b16 %v5613
    %v6819 = vunpack.c.h.b16 %v5613
    %v6820 = vunpack.c.l.b16 %v5614
    %v6821 = vunpack.c.l.b16 %v5615
    %v6822 = vunpack.c.h.b16 %v5615
    %v6823 = vunpack.c.l.b16 %v5616
    %v6824 = vunpack.c.h.b16 %v5616
    %v6825 = vunpack.c.l.b16 %v5617
    %v6826 = vunpack.c.l.b16 %v5618
    %v6827 = vunpack.c.h.b16 %v5618
    %v6828 = vunpack.c.l.b16 %v5619
    %v6829 = vunpack.c.h.b16 %v5619
    %v6830 = vunpack.c.l.b16 %v5620
    %v6831 = vunpack.c.l.b16 %v5621
    %v6832 = vunpack.c.h.b16 %v5621
    %v6833 = vunpack.c.l.b16 %v5622
    %v6834 = vunpack.c.h.b16 %v5622
    %v6835 = vunpack.c.l.b16 %v5623
    %v6836 = vunpack.c.l.b16 %v5624
    %v6837 = vunpack.c.h.b16 %v5624
    %v6838 = vunpack.c.l.b16 %v5625
    %v6839 = vunpack.c.h.b16 %v5625
    %v6840 = vunpack.c.l.b16 %v5626
    %v6841 = vunpack.c.l.b16 %v5627
    %v6842 = vunpack.c.h.b16 %v5627
    %v6843 = vunpack.c.l.b16 %v5628
    %v6844 = vunpack.c.h.b16 %v5628
    %v6845 = vunpack.c.l.b16 %v5629
    %v6846 = vunpack.c.l.b16 %v5630
    %v6847 = vunpack.c.h.b16 %v5630
    %v6848 = vunpack.c.l.b16 %v5631
    %v6849 = vunpack.c.h.b16 %v5631
    %v6850 = vunpack.c.l.b16 %v5632
    %v6851 = vunpack.c.l.b16 %v5633
    %v6852 = vunpack.c.h.b16 %v5633
    %v6853 = vunpack.c.l.b16 %v5634
    %v6854 = vunpack.c.h.b16 %v5634
    %v6855 = vunpack.c.l.b16 %v5635
    %v6856 = vunpack.c.l.b16 %v5636
    %v6857 = vunpack.c.h.b16 %v5636
    %v6858 = vunpack.c.l.b16 %v5637
    %v6859 = vunpack.c.h.b16 %v5637
    %v6860 = vunpack.c.l.b16 %v5638
    %v6861 = vunpack.c.l.b16 %v5639
    %v6862 = vunpack.c.h.b16 %v5639
    %v6863 = vunpack.c.l.b16 %v5640
    %v6864 = vunpack.c.h.b16 %v5640
    %v6865 = vunpack.c.l.b16 %v5641
    %v6866 = vunpack.c.l.b16 %v5642
    %v6867 = vunpack.c.h.b16 %v5642
    %v6868 = vunpack.c.l.b16 %v5643
    %v6869 = vunpack.c.h.b16 %v5643
    %v6870 = vunpack.c.l.b16 %v5644
    %v6871 = vunpack.c.l.b16 %v5645
    %v6872 = vunpack.c.h.b16 %v5645
    %v6873 = vunpack.c.l.b16 %v5646
    %v6874 = vunpack.c.h.b16 %v5646
    %v6875 = vunpack.c.l.b16 %v5647
    %v6876 = vunpack.c.l.b16 %v5648
    %v6877 = vunpack.c.h.b16 %v5648
    %v6878 = vunpack.c.l.b16 %v5649
    %v6879 = vunpack.c.h.b16 %v5649
    %v6880 = vunpack.c.l.b16 %v5650
    %v6881 = vunpack.c.l.b16 %v5651
    %v6882 = vunpack.c.h.b16 %v5651
    %v6883 = vunpack.c.l.b16 %v5652
    %v6884 = vunpack.c.h.b16 %v5652
    %v6885 = vunpack.c.l.b16 %v5653
    %v6886 = vunpack.c.l.b16 %v5654
    %v6887 = vunpack.c.h.b16 %v5654
    %v6888 = vunpack.c.l.b16 %v5655
    %v6889 = vunpack.c.h.b16 %v5655
    %v6890 = vunpack.c.l.b16 %v5656
    %v6891 = vunpack.c.l.b16 %v5657
    %v6892 = vunpack.c.h.b16 %v5657
    %v6893 = vunpack.c.l.b16 %v5658
    %v6894 = vunpack.c.h.b16 %v5658
    %v6895 = vunpack.c.l.b16 %v5659
    %v6896 = vunpack.c.l.b16 %v5660
    %v6897 = vunpack.c.h.b16 %v5660
    %v6898 = vunpack.c.l.b16 %v5661
    %v6899 = vunpack.c.h.b16 %v5661
    %v6900 = vunpack.c.l.b16 %v5662
    %v6901 = vunpack.c.l.b16 %v5663
    %v6902 = vunpack.c.h.b16 %v5663
    %v6903 = vunpack.c.l.b16 %v5664
    %v6904 = vunpack.c.h.b16 %v5664
    %v6905 = vunpack.c.l.b16 %v5665
    %v6906 = vunpack.c.l.b16 %v5666
    %v6907 = vunpack.c.h.b16 %v5666
    %v6908 = vunpack.c.l.b16 %v5667
    %v6909 = vunpack.c.h.b16 %v5667
    %v6910 = vunpack.c.l.b16 %v5668
    %v6911 = vunpack.c.l.b16 %v5669
    %v6912 = vunpack.c.h.b16 %v5669
    %v6913 = vunpack.c.l.b16 %v5670
    %v6914 = vunpack.c.h.b16 %v5670
    %v6915 = vunpack.c.l.b16 %v5671
    %v6916 = vunpack.c.l.b16 %v5672
    %v6917 = vunpack.c.h.b16 %v5672
    %v6918 = vunpack.c.l.b16 %v5673
    %v6919 = vunpack.c.h.b16 %v5673
    %v6920 = vunpack.c.l.b16 %v5674
    %v6921 = vunpack.c.l.b16 %v5675
    %v6922 = vunpack.c.h.b16 %v5675
    %v6923 = vunpack.c.l.b16 %v5676
    %v6924 = vunpack.c.h.b16 %v5676
    %v6925 = vunpack.c.l.b16 %v5677
    %v6926 = vunpack.c.l.b16 %v5678
    %v6927 = vunpack.c.h.b16 %v5678
    %v6928 = vunpack.c.l.b16 %v5679
    %v6929 = vunpack.c.h.b16 %v5679
    %v6930 = vunpack.c.l.b16 %v5680
    %v6931 = vunpack.c.l.b16 %v5681
    %v6932 = vunpack.c.h.b16 %v5681
    %v6933 = vunpack.c.l.b16 %v5682
    %v6934 = vunpack.c.h.b16 %v5682
    %v6935 = vunpack.c.l.b16 %v5683
    %v6936 = vunpack.c.l.b16 %v5684
    %v6937 = vunpack.c.h.b16 %v5684
    %v6938 = vunpack.c.l.b16 %v5685
    %v6939 = vunpack.c.h.b16 %v5685
    %v6940 = vunpack.c.l.b16 %v5686
    %v6941 = vunpack.c.l.b16 %v5687
    %v6942 = vunpack.c.h.b16 %v5687
    %v6943 = vunpack.c.l.b16 %v5688
    %v6944 = vunpack.c.h.b16 %v5688
    %v6945 = vunpack.c.l.b16 %v5689
    %v6946 = vunpack.c.l.b16 %v5690
    %v6947 = vunpack.c.h.b16 %v5690
    %v6948 = vunpack.c.l.b16 %v5691
    %v6949 = vunpack.c.h.b16 %v5691
    %v6950 = vunpack.c.l.b16 %v5692
    %v6951 = vunpack.c.l.b16 %v5693
    %v6952 = vunpack.c.h.b16 %v5693
    %v6953 = vunpack.c.l.b16 %v5694
    %v6954 = vunpack.c.h.b16 %v5694
    %v6955 = vunpack.c.l.b16 %v5695
    %v6956 = vunpack.c.l.b16 %v5696
    %v6957 = vunpack.c.h.b16 %v5696
    %v6958 = vunpack.c.l.b16 %v5697
    %v6959 = vunpack.c.h.b16 %v5697
    %v6960 = vunpack.c.l.b16 %v5698
    %v6961 = vunpack.c.l.b16 %v5699
    %v6962 = vunpack.c.h.b16 %v5699
    %v6963 = vunpack.c.l.b16 %v5700
    %v6964 = vunpack.c.h.b16 %v5700
    %v6965 = vunpack.c.l.b16 %v5701
    %v6966 = vunpack.c.l.b16 %v5702
    %v6967 = vunpack.c.h.b16 %v5702
    %v6968 = vunpack.c.l.b16 %v5703
    %v6969 = vunpack.c.h.b16 %v5703
    %v6970 = vunpack.c.l.b16 %v5704
    %v6971 = vunpack.c.l.b16 %v5705
    %v6972 = vunpack.c.h.b16 %v5705
    %v6973 = vunpack.c.l.b16 %v5706
    %v6974 = vunpack.c.h.b16 %v5706
    %v6975 = vunpack.c.l.b16 %v5707
    %v6976 = vunpack.c.l.b16 %v5708
    %v6977 = vunpack.c.h.b16 %v5708
    %v6978 = vunpack.c.l.b16 %v5709
    %v6979 = vunpack.c.h.b16 %v5709
    %v6980 = vunpack.c.l.b16 %v5710
    %v6981 = vunpack.c.l.b16 %v5711
    %v6982 = vunpack.c.h.b16 %v5711
    %v6983 = vunpack.c.l.b16 %v5712
    %v6984 = vunpack.c.h.b16 %v5712
    %v6985 = vunpack.c.l.b16 %v5713
    %v6986 = vunpack.c.l.b16 %v5714
    %v6987 = vunpack.c.h.b16 %v5714
    %v6988 = vunpack.c.l.b16 %v5715
    %v6989 = vunpack.c.h.b16 %v5715
    %v6990 = vunpack.c.l.b16 %v5716
    %v6991 = vunpack.c.l.b16 %v5717
    %v6992 = vunpack.c.h.b16 %v5717
    %v6993 = vunpack.c.l.b16 %v5718
    %v6994 = vunpack.c.h.b16 %v5718
    %v6995 = vunpack.c.l.b16 %v5719
    %v6996 = vunpack.c.l.b16 %v5720
    %v6997 = vunpack.c.h.b16 %v5720
    %v6998 = vunpack.c.l.b16 %v5721
    %v6999 = vunpack.c.h.b16 %v5721
    %v7000 = vunpack.c.l.b16 %v5722
    %v7001 = vunpack.c.l.b16 %v5723
    %v7002 = vunpack.c.h.b16 %v5723
    %v7003 = vunpack.c.l.b16 %v5724
    %v7004 = vunpack.c.h.b16 %v5724
    %v7005 = vunpack.c.l.b16 %v5725
    %v7006 = vunpack.c.l.b16 %v5726
    %v7007 = vunpack.c.h.b16 %v5726
    %v7008 = vunpack.c.l.b16 %v5727
    %v7009 = vunpack.c.h.b16 %v5727
    %v7010 = vunpack.c.l.b16 %v5728
    %v7011 = vunpack.c.l.b16 %v5729
    %v7012 = vunpack.c.h.b16 %v5729
    %v7013 = vunpack.c.l.b16 %v5730
    %v7014 = vunpack.c.h.b16 %v5730
    %v7015 = vunpack.c.l.b16 %v5731
    %v7016 = vunpack.c.l.b16 %v5732
    %v7017 = vunpack.c.h.b16 %v5732
    %v7018 = vunpack.c.l.b16 %v5733
    %v7019 = vunpack.c.h.b16 %v5733
    %v7020 = vunpack.c.l.b16 %v5734
    %v7021 = vunpack.c.l.b16 %v5735
    %v7022 = vunpack.c.h.b16 %v5735
    %v7023 = vunpack.c.l.b16 %v5736
    %v7024 = vunpack.c.h.b16 %v5736
    %v7025 = vunpack.c.l.b16 %v5737
    %v7026 = vunpack.c.l.b16 %v5738
    %v7027 = vunpack.c.h.b16 %v5738
    %v7028 = vunpack.c.l.b16 %v5739
    %v7029 = vunpack.c.h.b16 %v5739
    %v7030 = vunpack.c.l.b16 %v5740
    %v7031 = vunpack.c.l.b16 %v5741
    %v7032 = vunpack.c.h.b16 %v5741
    %v7033 = vunpack.c.l.b16 %v5742
    %v7034 = vunpack.c.h.b16 %v5742
    %v7035 = vunpack.c.l.b16 %v5743
    %v7036 = vpack.c.b16 %v6241, %v6236
    %v7037 = vpack.c.b16 %v6242, %v6237
    %v7038 = vpack.c.b16 %v6243, %v6238
    %v7039 = vpack.c.b16 %v6244, %v6239
    %v7040 = vpack.c.b16 %v6245, %v6240
    %v7041 = vpack.c.b16 %v6251, %v6246
    %v7042 = vpack.c.b16 %v6252, %v6247
    %v7043 = vpack.c.b16 %v6253, %v6248
    %v7044 = vpack.c.b16 %v6254, %v6249
    %v7045 = vpack.c.b16 %v6255, %v6250
    %v7046 = vpack.c.b16 %v6261, %v6256
    %v7047 = vpack.c.b16 %v6262, %v6257
    %v7048 = vpack.c.b16 %v6263, %v6258
    %v7049 = vpack.c.b16 %v6264, %v6259
    %v7050 = vpack.c.b16 %v6265, %v6260
    %v7051 = vpack.c.b16 %v6271, %v6266
    %v7052 = vpack.c.b16 %v6272, %v6267
    %v7053 = vpack.c.b16 %v6273, %v6268
    %v7054 = vpack.c.b16 %v6274, %v6269
    %v7055 = vpack.c.b16 %v6275, %v6270
    %v7056 = vpack.c.b16 %v6281, %v6276
    %v7057 = vpack.c.b16 %v6282, %v6277
    %v7058 = vpack.c.b16 %v6283, %v6278
    %v7059 = vpack.c.b16 %v6284, %v6279
    %v7060 = vpack.c.b16 %v6285, %v6280
    %v7061 = vpack.c.b16 %v6291, %v6286
    %v7062 = vpack.c.b16 %v6292, %v6287
    %v7063 = vpack.c.b16 %v6293, %v6288
    %v7064 = vpack.c.b16 %v6294, %v6289
    %v7065 = vpack.c.b16 %v6295, %v6290
    %v7066 = vpack.c.b16 %v6301, %v6296
    %v7067 = vpack.c.b16 %v6302, %v6297
    %v7068 = vpack.c.b16 %v6303, %v6298
    %v7069 = vpack.c.b16 %v6304, %v6299
    %v7070 = vpack.c.b16 %v6305, %v6300
    %v7071 = vpack.c.b16 %v6311, %v6306
    %v7072 = vpack.c.b16 %v6312, %v6307
    %v7073 = vpack.c.b16 %v6313, %v6308
    %v7074 = vpack.c.b16 %v6314, %v6309
    %v7075 = vpack.c.b16 %v6315, %v6310
    %v7076 = vpack.c.b16 %v6321, %v6316
    %v7077 = vpack.c.b16 %v6322, %v6317
    %v7078 = vpack.c.b16 %v6323, %v6318
    %v7079 = vpack.c.b16 %v6324, %v6319
    %v7080 = vpack.c.b16 %v6325, %v6320
    %v7081 = vpack.c.b16 %v6331, %v6326
    %v7082 = vpack.c.b16 %v6332, %v6327
    %v7083 = vpack.c.b16 %v6333, %v6328
    %v7084 = vpack.c.b16 %v6334, %v6329
    %v7085 = vpack.c.b16 %v6335, %v6330
    %v7086 = vpack.c.b16 %v6341, %v6336
    %v7087 = vpack.c.b16 %v6342, %v6337
    %v7088 = vpack.c.b16 %v6343, %v6338
    %v7089 = vpack.c.b16 %v6344, %v6339
    %v7090 = vpack.c.b16 %v6345, %v6340
    %v7091 = vpack.c.b16 %v6351, %v6346
    %v7092 = vpack.c.b16 %v6352, %v6347
    %v7093 = vpack.c.b16 %v6353, %v6348
    %v7094 = vpack.c.b16 %v6354, %v6349
    %v7095 = vpack.c.b16 %v6355, %v6350
    %v7096 = vpack.c.b16 %v6361, %v6356
    %v7097 = vpack.c.b16 %v6362, %v6357
    %v7098 = vpack.c.b16 %v6363, %v6358
    %v7099 = vpack.c.b16 %v6364, %v6359
    %v7100 = vpack.c.b16 %v6365, %v6360
    %v7101 = vpack.c.b16 %v6371, %v6366
    %v7102 = vpack.c.b16 %v6372, %v6367
    %v7103 = vpack.c.b16 %v6373, %v6368
    %v7104 = vpack.c.b16 %v6374, %v6369
    %v7105 = vpack.c.b16 %v6375, %v6370
    %v7106 = vpack.c.b16 %v6381, %v6376
    %v7107 = vpack.c.b16 %v6382, %v6377
    %v7108 = vpack.c.b16 %v6383, %v6378
    %v7109 = vpack.c.b16 %v6384, %v6379
    %v7110 = vpack.c.b16 %v6385, %v6380
    %v7111 = vpack.c.b16 %v6391, %v6386
    %v7112 = vpack.c.b16 %v6392, %v6387
    %v7113 = vpack.c.b16 %v6393, %v6388
    %v7114 = vpack.c.b16 %v6394, %v6389
    %v7115 = vpack.c.b16 %v6395, %v6390
    %v7116 = vpack.c.b16 %v6401, %v6396
    %v7117 = vpack.c.b16 %v6402, %v6397
    %v7118 = vpack.c.b16 %v6403, %v6398
    %v7119 = vpack.c.b16 %v6404, %v6399
    %v7120 = vpack.c.b16 %v6405, %v6400
    %v7121 = vpack.c.b16 %v6411, %v6406
    %v7122 = vpack.c.b16 %v6412, %v6407
    %v7123 = vpack.c.b16 %v6413, %v6408
    %v7124 = vpack.c.b16 %v6414, %v6409
    %v7125 = vpack.c.b16 %v6415, %v6410
    %v7126 = vpack.c.b16 %v6421, %v6416
    %v7127 = vpack.c.b16 %v6422, %v6417
    %v7128 = vpack.c.b16 %v6423, %v6418
    %v7129 = vpack.c.b16 %v6424, %v6419
    %v7130 = vpack.c.b16 %v6425, %v6420
    %v7131 = vpack.c.b16 %v6431, %v6426
    %v7132 = vpack.c.b16 %v6432, %v6427
    %v7133 = vpack.c.b16 %v6433, %v6428
    %v7134 = vpack.c.b16 %v6434, %v6429
    %v7135 = vpack.c.b16 %v6435, %v6430
    %v7136 = vpack.c.b16 %v6441, %v6436
    %v7137 = vpack.c.b16 %v6442, %v6437
    %v7138 = vpack.c.b16 %v6443, %v6438
    %v7139 = vpack.c.b16 %v6444, %v6439
    %v7140 = vpack.c.b16 %v6445, %v6440
    %v7141 = vpack.c.b16 %v6451, %v6446
    %v7142 = vpack.c.b16 %v6452, %v6447
    %v7143 = vpack.c.b16 %v6453, %v6448
    %v7144 = vpack.c.b16 %v6454, %v6449
    %v7145 = vpack.c.b16 %v6455, %v6450
    %v7146 = vpack.c.b16 %v6461, %v6456
    %v7147 = vpack.c.b16 %v6462, %v6457
    %v7148 = vpack.c.b16 %v6463, %v6458
    %v7149 = vpack.c.b16 %v6464, %v6459
    %v7150 = vpack.c.b16 %v6465, %v6460
    %v7151 = vpack.c.b16 %v6471, %v6466
    %v7152 = vpack.c.b16 %v6472, %v6467
    %v7153 = vpack.c.b16 %v6473, %v6468
    %v7154 = vpack.c.b16 %v6474, %v6469
    %v7155 = vpack.c.b16 %v6475, %v6470
    %v7156 = vpack.c.b16 %v6481, %v6476
    %v7157 = vpack.c.b16 %v6482, %v6477
    %v7158 = vpack.c.b16 %v6483, %v6478
    %v7159 = vpack.c.b16 %v6484, %v6479
    %v7160 = vpack.c.b16 %v6485, %v6480
    %v7161 = vpack.c.b16 %v6491, %v6486
    %v7162 = vpack.c.b16 %v6492, %v6487
    %v7163 = vpack.c.b16 %v6493, %v6488
    %v7164 = vpack.c.b16 %v6494, %v6489
    %v7165 = vpack.c.b16 %v6495, %v6490
    %v7166 = vpack.c.b16 %v6501, %v6496
    %v7167 = vpack.c.b16 %v6502, %v6497
    %v7168 = vpack.c.b16 %v6503, %v6498
    %v7169 = vpack.c.b16 %v6504, %v6499
    %v7170 = vpack.c.b16 %v6505, %v6500
    %v7171 = vpack.c.b16 %v6511, %v6506
    %v7172 = vpack.c.b16 %v6512, %v6507
    %v7173 = vpack.c.b16 %v6513, %v6508
    %v7174 = vpack.c.b16 %v6514, %v6509
    %v7175 = vpack.c.b16 %v6515, %v6510
    %v7176 = vpack.c.b16 %v6521, %v6516
    %v7177 = vpack.c.b16 %v6522, %v6517
    %v7178 = vpack.c.b16 %v6523, %v6518
    %v7179 = vpack.c.b16 %v6524, %v6519
    %v7180 = vpack.c.b16 %v6525, %v6520
    %v7181 = vpack.c.b16 %v6531, %v6526
    %v7182 = vpack.c.b16 %v6532, %v6527
    %v7183 = vpack.c.b16 %v6533, %v6528
    %v7184 = vpack.c.b16 %v6534, %v6529
    %v7185 = vpack.c.b16 %v6535, %v6530
    %v7186 = vpack.c.b16 %v6541, %v6536
    %v7187 = vpack.c.b16 %v6542, %v6537
    %v7188 = vpack.c.b16 %v6543, %v6538
    %v7189 = vpack.c.b16 %v6544, %v6539
    %v7190 = vpack.c.b16 %v6545, %v6540
    %v7191 = vpack.c.b16 %v6551, %v6546
    %v7192 = vpack.c.b16 %v6552, %v6547
    %v7193 = vpack.c.b16 %v6553, %v6548
    %v7194 = vpack.c.b16 %v6554, %v6549
    %v7195 = vpack.c.b16 %v6555, %v6550
    %v7196 = vpack.c.b16 %v6561, %v6556
    %v7197 = vpack.c.b16 %v6562, %v6557
    %v7198 = vpack.c.b16 %v6563, %v6558
    %v7199 = vpack.c.b16 %v6564, %v6559
    %v7200 = vpack.c.b16 %v6565, %v6560
    %v7201 = vpack.c.b16 %v6571, %v6566
    %v7202 = vpack.c.b16 %v6572, %v6567
    %v7203 = vpack.c.b16 %v6573, %v6568
    %v7204 = vpack.c.b16 %v6574, %v6569
    %v7205 = vpack.c.b16 %v6575, %v6570
    %v7206 = vpack.c.b16 %v6581, %v6576
    %v7207 = vpack.c.b16 %v6582, %v6577
    %v7208 = vpack.c.b16 %v6583, %v6578
    %v7209 = vpack.c.b16 %v6584, %v6579
    %v7210 = vpack.c.b16 %v6585, %v6580
    %v7211 = vpack.c.b16 %v6591, %v6586
    %v7212 = vpack.c.b16 %v6592, %v6587
    %v7213 = vpack.c.b16 %v6593, %v6588
    %v7214 = vpack.c.b16 %v6594, %v6589
    %v7215 = vpack.c.b16 %v6595, %v6590
    %v7216 = vpack.c.b16 %v6601, %v6596
    %v7217 = vpack.c.b16 %v6602, %v6597
    %v7218 = vpack.c.b16 %v6603, %v6598
    %v7219 = vpack.c.b16 %v6604, %v6599
    %v7220 = vpack.c.b16 %v6605, %v6600
    %v7221 = vpack.c.b16 %v6611, %v6606
    %v7222 = vpack.c.b16 %v6612, %v6607
    %v7223 = vpack.c.b16 %v6613, %v6608
    %v7224 = vpack.c.b16 %v6614, %v6609
    %v7225 = vpack.c.b16 %v6615, %v6610
    %v7226 = vpack.c.b16 %v6621, %v6616
    %v7227 = vpack.c.b16 %v6622, %v6617
    %v7228 = vpack.c.b16 %v6623, %v6618
    %v7229 = vpack.c.b16 %v6624, %v6619
    %v7230 = vpack.c.b16 %v6625, %v6620
    %v7231 = vpack.c.b16 %v6631, %v6626
    %v7232 = vpack.c.b16 %v6632, %v6627
    %v7233 = vpack.c.b16 %v6633, %v6628
    %v7234 = vpack.c.b16 %v6634, %v6629
    %v7235 = vpack.c.b16 %v6635, %v6630
    %v7236 = vpack.c.b16 %v6641, %v6636
    %v7237 = vpack.c.b16 %v6642, %v6637
    %v7238 = vpack.c.b16 %v6643, %v6638
    %v7239 = vpack.c.b16 %v6644, %v6639
    %v7240 = vpack.c.b16 %v6645, %v6640
    %v7241 = vpack.c.b16 %v6651, %v6646
    %v7242 = vpack.c.b16 %v6652, %v6647
    %v7243 = vpack.c.b16 %v6653, %v6648
    %v7244 = vpack.c.b16 %v6654, %v6649
    %v7245 = vpack.c.b16 %v6655, %v6650
    %v7246 = vpack.c.b16 %v6661, %v6656
    %v7247 = vpack.c.b16 %v6662, %v6657
    %v7248 = vpack.c.b16 %v6663, %v6658
    %v7249 = vpack.c.b16 %v6664, %v6659
    %v7250 = vpack.c.b16 %v6665, %v6660
    %v7251 = vpack.c.b16 %v6671, %v6666
    %v7252 = vpack.c.b16 %v6672, %v6667
    %v7253 = vpack.c.b16 %v6673, %v6668
    %v7254 = vpack.c.b16 %v6674, %v6669
    %v7255 = vpack.c.b16 %v6675, %v6670
    %v7256 = vpack.c.b16 %v6681, %v6676
    %v7257 = vpack.c.b16 %v6682, %v6677
    %v7258 = vpack.c.b16 %v6683, %v6678
    %v7259 = vpack.c.b16 %v6684, %v6679
    %v7260 = vpack.c.b16 %v6685, %v6680
    %v7261 = vpack.c.b16 %v6691, %v6686
    %v7262 = vpack.c.b16 %v6692, %v6687
    %v7263 = vpack.c.b16 %v6693, %v6688
    %v7264 = vpack.c.b16 %v6694, %v6689
    %v7265 = vpack.c.b16 %v6695, %v6690
    %v7266 = vpack.c.b16 %v6701, %v6696
    %v7267 = vpack.c.b16 %v6702, %v6697
    %v7268 = vpack.c.b16 %v6703, %v6698
    %v7269 = vpack.c.b16 %v6704, %v6699
    %v7270 = vpack.c.b16 %v6705, %v6700
    %v7271 = vpack.c.b16 %v6711, %v6706
    %v7272 = vpack.c.b16 %v6712, %v6707
    %v7273 = vpack.c.b16 %v6713, %v6708
    %v7274 = vpack.c.b16 %v6714, %v6709
    %v7275 = vpack.c.b16 %v6715, %v6710
    %v7276 = vpack.c.b16 %v6721, %v6716
    %v7277 = vpack.c.b16 %v6722, %v6717
    %v7278 = vpack.c.b16 %v6723, %v6718
    %v7279 = vpack.c.b16 %v6724, %v6719
    %v7280 = vpack.c.b16 %v6725, %v6720
    %v7281 = vpack.c.b16 %v6731, %v6726
    %v7282 = vpack.c.b16 %v6732, %v6727
    %v7283 = vpack.c.b16 %v6733, %v6728
    %v7284 = vpack.c.b16 %v6734, %v6729
    %v7285 = vpack.c.b16 %v6735, %v6730
    %v7286 = vpack.c.b16 %v6741, %v6736
    %v7287 = vpack.c.b16 %v6742, %v6737
    %v7288 = vpack.c.b16 %v6743, %v6738
    %v7289 = vpack.c.b16 %v6744, %v6739
    %v7290 = vpack.c.b16 %v6745, %v6740
    %v7291 = vpack.c.b16 %v6751, %v6746
    %v7292 = vpack.c.b16 %v6752, %v6747
    %v7293 = vpack.c.b16 %v6753, %v6748
    %v7294 = vpack.c.b16 %v6754, %v6749
    %v7295 = vpack.c.b16 %v6755, %v6750
    %v7296 = vpack.c.b16 %v6761, %v6756
    %v7297 = vpack.c.b16 %v6762, %v6757
    %v7298 = vpack.c.b16 %v6763, %v6758
    %v7299 = vpack.c.b16 %v6764, %v6759
    %v7300 = vpack.c.b16 %v6765, %v6760
    %v7301 = vpack.c.b16 %v6771, %v6766
    %v7302 = vpack.c.b16 %v6772, %v6767
    %v7303 = vpack.c.b16 %v6773, %v6768
    %v7304 = vpack.c.b16 %v6774, %v6769
    %v7305 = vpack.c.b16 %v6775, %v6770
    %v7306 = vpack.c.b16 %v6781, %v6776
    %v7307 = vpack.c.b16 %v6782, %v6777
    %v7308 = vpack.c.b16 %v6783, %v6778
    %v7309 = vpack.c.b16 %v6784, %v6779
    %v7310 = vpack.c.b16 %v6785, %v6780
    %v7311 = vpack.c.b16 %v6791, %v6786
    %v7312 = vpack.c.b16 %v6792, %v6787
    %v7313 = vpack.c.b16 %v6793, %v6788
    %v7314 = vpack.c.b16 %v6794, %v6789
    %v7315 = vpack.c.b16 %v6795, %v6790
    %v7316 = vpack.c.b16 %v6801, %v6796
    %v7317 = vpack.c.b16 %v6802, %v6797
    %v7318 = vpack.c.b16 %v6803, %v6798
    %v7319 = vpack.c.b16 %v6804, %v6799
    %v7320 = vpack.c.b16 %v6805, %v6800
    %v7321 = vpack.c.b16 %v6811, %v6806
    %v7322 = vpack.c.b16 %v6812, %v6807
    %v7323 = vpack.c.b16 %v6813, %v6808
    %v7324 = vpack.c.b16 %v6814, %v6809
    %v7325 = vpack.c.b16 %v6815, %v6810
    %v7326 = vpack.c.b16 %v6821, %v6816
    %v7327 = vpack.c.b16 %v6822, %v6817
    %v7328 = vpack.c.b16 %v6823, %v6818
    %v7329 = vpack.c.b16 %v6824, %v6819
    %v7330 = vpack.c.b16 %v6825, %v6820
    %v7331 = vpack.c.b16 %v6831, %v6826
    %v7332 = vpack.c.b16 %v6832, %v6827
    %v7333 = vpack.c.b16 %v6833, %v6828
    %v7334 = vpack.c.b16 %v6834, %v6829
    %v7335 = vpack.c.b16 %v6835, %v6830
    %v7336 = vpack.c.b16 %v6841, %v6836
    %v7337 = vpack.c.b16 %v6842, %v6837
    %v7338 = vpack.c.b16 %v6843, %v6838
    %v7339 = vpack.c.b16 %v6844, %v6839
    %v7340 = vpack.c.b16 %v6845, %v6840
    %v7341 = vpack.c.b16 %v6851, %v6846
    %v7342 = vpack.c.b16 %v6852, %v6847
    %v7343 = vpack.c.b16 %v6853, %v6848
    %v7344 = vpack.c.b16 %v6854, %v6849
    %v7345 = vpack.c.b16 %v6855, %v6850
    %v7346 = vpack.c.b16 %v6861, %v6856
    %v7347 = vpack.c.b16 %v6862, %v6857
    %v7348 = vpack.c.b16 %v6863, %v6858
    %v7349 = vpack.c.b16 %v6864, %v6859
    %v7350 = vpack.c.b16 %v6865, %v6860
    %v7351 = vpack.c.b16 %v6871, %v6866
    %v7352 = vpack.c.b16 %v6872, %v6867
    %v7353 = vpack.c.b16 %v6873, %v6868
    %v7354 = vpack.c.b16 %v6874, %v6869
    %v7355 = vpack.c.b16 %v6875, %v6870
    %v7356 = vpack.c.b16 %v6881, %v6876
    %v7357 = vpack.c.b16 %v6882, %v6877
    %v7358 = vpack.c.b16 %v6883, %v6878
    %v7359 = vpack.c.b16 %v6884, %v6879
    %v7360 = vpack.c.b16 %v6885, %v6880
    %v7361 = vpack.c.b16 %v6891, %v6886
    %v7362 = vpack.c.b16 %v6892, %v6887
    %v7363 = vpack.c.b16 %v6893, %v6888
    %v7364 = vpack.c.b16 %v6894, %v6889
    %v7365 = vpack.c.b16 %v6895, %v6890
    %v7366 = vpack.c.b16 %v6901, %v6896
    %v7367 = vpack.c.b16 %v6902, %v6897
    %v7368 = vpack.c.b16 %v6903, %v6898
    %v7369 = vpack.c.b16 %v6904, %v6899
    %v7370 = vpack.c.b16 %v6905, %v6900
    %v7371 = vpack.c.b16 %v6911, %v6906
    %v7372 = vpack.c.b16 %v6912, %v6907
    %v7373 = vpack.c.b16 %v6913, %v6908
    %v7374 = vpack.c.b16 %v6914, %v6909
    %v7375 = vpack.c.b16 %v6915, %v6910
    %v7376 = vpack.c.b16 %v6921, %v6916
    %v7377 = vpack.c.b16 %v6922, %v6917
    %v7378 = vpack.c.b16 %v6923, %v6918
    %v7379 = vpack.c.b16 %v6924, %v6919
    %v7380 = vpack.c.b16 %v6925, %v6920
    %v7381 = vpack.c.b16 %v6931, %v6926
    %v7382 = vpack.c.b16 %v6932, %v6927
    %v7383 = vpack.c.b16 %v6933, %v6928
    %v7384 = vpack.c.b16 %v6934, %v6929
    %v7385 = vpack.c.b16 %v6935, %v6930
    %v7386 = vpack.c.b16 %v6941, %v6936
    %v7387 = vpack.c.b16 %v6942, %v6937
    %v7388 = vpack.c.b16 %v6943, %v6938
    %v7389 = vpack.c.b16 %v6944, %v6939
    %v7390 = vpack.c.b16 %v6945, %v6940
    %v7391 = vpack.c.b16 %v6951, %v6946
    %v7392 = vpack.c.b16 %v6952, %v6947
    %v7393 = vpack.c.b16 %v6953, %v6948
    %v7394 = vpack.c.b16 %v6954, %v6949
    %v7395 = vpack.c.b16 %v6955, %v6950
    %v7396 = vpack.c.b16 %v6961, %v6956
    %v7397 = vpack.c.b16 %v6962, %v6957
    %v7398 = vpack.c.b16 %v6963, %v6958
    %v7399 = vpack.c.b16 %v6964, %v6959
    %v7400 = vpack.c.b16 %v6965, %v6960
    %v7401 = vpack.c.b16 %v6971, %v6966
    %v7402 = vpack.c.b16 %v6972, %v6967
    %v7403 = vpack.c.b16 %v6973, %v6968
    %v7404 = vpack.c.b16 %v6974, %v6969
    %v7405 = vpack.c.b16 %v6975, %v6970
    %v7406 = vpack.c.b16 %v6981, %v6976
    %v7407 = vpack.c.b16 %v6982, %v6977
    %v7408 = vpack.c.b16 %v6983, %v6978
    %v7409 = vpack.c.b16 %v6984, %v6979
    %v7410 = vpack.c.b16 %v6985, %v6980
    %v7411 = vpack.c.b16 %v6991, %v6986
    %v7412 = vpack.c.b16 %v6992, %v6987
    %v7413 = vpack.c.b16 %v6993, %v6988
    %v7414 = vpack.c.b16 %v6994, %v6989
    %v7415 = vpack.c.b16 %v6995, %v6990
    %v7416 = vpack.c.b16 %v7001, %v6996
    %v7417 = vpack.c.b16 %v7002, %v6997
    %v7418 = vpack.c.b16 %v7003, %v6998
    %v7419 = vpack.c.b16 %v7004, %v6999
    %v7420 = vpack.c.b16 %v7005, %v7000
    %v7421 = vpack.c.b16 %v7011, %v7006
    %v7422 = vpack.c.b16 %v7012, %v7007
    %v7423 = vpack.c.b16 %v7013, %v7008
    %v7424 = vpack.c.b16 %v7014, %v7009
    %v7425 = vpack.c.b16 %v7015, %v7010
    %v7426 = vpack.c.b16 %v7021, %v7016
    %v7427 = vpack.c.b16 %v7022, %v7017
    %v7428 = vpack.c.b16 %v7023, %v7018
    %v7429 = vpack.c.b16 %v7024, %v7019
    %v7430 = vpack.c.b16 %v7025, %v7020
    %v7431 = vpack.c.b16 %v7031, %v7026
    %v7432 = vpack.c.b16 %v7032, %v7027
    %v7433 = vpack.c.b16 %v7033, %v7028
    %v7434 = vpack.c.b16 %v7034, %v7029
    %v7435 = vpack.c.b16 %v7035, %v7030
    %7836 = vmatpush.bf16.msra.mxu0 %v7071
    %7837 = vmatpush.bf16.msra.mxu0 %v7066
    %7838 = vmatpush.bf16.msra.mxu0 %v7061
    %7839 = vmatpush.bf16.msra.mxu0 %v7056
    %7840 = vmatpush.bf16.msra.mxu0 %v7051
    %7841 = vmatpush.bf16.msra.mxu0 %v7046
    %7842 = vmatpush.bf16.msra.mxu0 %v7041
    %7843 = vmatpush.bf16.msra.mxu0 %v7036
    %7844 = vmatmul.bf16.gmra.mxu0 %v5254
    %v7845 = vpop.f32.mrf.mxu0
    %v7846 = vadd.f32 %v5746, %v7845
    %v7847 = vpop.f32.mrf.mxu0
    %v7848 = vadd.f32 %v5746, %v7847
    %7849 = vdwg.mxu0
    %7850 = vmatpush.bf16.msra.mxu0 %v7111
    %7851 = vmatpush.bf16.msra.mxu0 %v7106
    %7852 = vmatpush.bf16.msra.mxu0 %v7101
    %7853 = vmatpush.bf16.msra.mxu0 %v7096
    %7854 = vmatpush.bf16.msra.mxu0 %v7091
    %7855 = vmatpush.bf16.msra.mxu0 %v7086
    %7856 = vmatpush.bf16.msra.mxu0 %v7081
    %7857 = vmatpush.bf16.msra.mxu0 %v7076
    %7858 = vmatmul.bf16.gmra.mxu0 %v5255
    %v7859 = vpop.f32.mrf.mxu0
    %v7860 = vadd.f32 %v7846, %v7859
    %v7861 = vpop.f32.mrf.mxu0
    %v7862 = vadd.f32 %v7848, %v7861
    %7863 = vdwg.mxu0
    %7864 = vmatpush.bf16.msra.mxu0 %v7151
    %7865 = vmatpush.bf16.msra.mxu0 %v7146
    %7866 = vmatpush.bf16.msra.mxu0 %v7141
    %7867 = vmatpush.bf16.msra.mxu0 %v7136
    %7868 = vmatpush.bf16.msra.mxu0 %v7131
    %7869 = vmatpush.bf16.msra.mxu0 %v7126
    %7870 = vmatpush.bf16.msra.mxu0 %v7121
    %7871 = vmatpush.bf16.msra.mxu0 %v7116
    %7872 = vmatmul.bf16.gmra.mxu0 %v5256
    %v7873 = vpop.f32.mrf.mxu0
    %v7874 = vadd.f32 %v7860, %v7873
    %v7875 = vpop.f32.mrf.mxu0
    %v7876 = vadd.f32 %v7862, %v7875
    %7877 = vdwg.mxu0
    %7878 = vmatpush.bf16.msra.mxu0 %v7191
    %7879 = vmatpush.bf16.msra.mxu0 %v7186
    %7880 = vmatpush.bf16.msra.mxu0 %v7181
    %7881 = vmatpush.bf16.msra.mxu0 %v7176
    %7882 = vmatpush.bf16.msra.mxu0 %v7171
    %7883 = vmatpush.bf16.msra.mxu0 %v7166
    %7884 = vmatpush.bf16.msra.mxu0 %v7161
    %7885 = vmatpush.bf16.msra.mxu0 %v7156
    %7886 = vmatmul.bf16.gmra.mxu0 %v5257
    %v7887 = vpop.f32.mrf.mxu0
    %v7888 = vadd.f32 %v7874, %v7887
    %v7889 = vpop.f32.mrf.mxu0
    %v7890 = vadd.f32 %v7876, %v7889
    %7891 = vdwg.mxu0
    %7892 = vmatpush.bf16.msra.mxu0 %v7231
    %7893 = vmatpush.bf16.msra.mxu0 %v7226
    %7894 = vmatpush.bf16.msra.mxu0 %v7221
    %7895 = vmatpush.bf16.msra.mxu0 %v7216
    %7896 = vmatpush.bf16.msra.mxu0 %v7211
    %7897 = vmatpush.bf16.msra.mxu0 %v7206
    %7898 = vmatpush.bf16.msra.mxu0 %v7201
    %7899 = vmatpush.bf16.msra.mxu0 %v7196
    %7900 = vmatmul.bf16.gmra.mxu0 %v5258
    %v7901 = vpop.f32.mrf.mxu0
    %v7902 = vadd.f32 %v7888, %v7901
    %v7903 = vpop.f32.mrf.mxu0
    %v7904 = vadd.f32 %v7890, %v7903
    %7905 = vdwg.mxu0
    %7906 = vmatpush.bf16.msra.mxu0 %v7271
    %7907 = vmatpush.bf16.msra.mxu0 %v7266
    %7908 = vmatpush.bf16.msra.mxu0 %v7261
    %7909 = vmatpush.bf16.msra.mxu0 %v7256
    %7910 = vmatpush.bf16.msra.mxu0 %v7251
    %7911 = vmatpush.bf16.msra.mxu0 %v7246
    %7912 = vmatpush.bf16.msra.mxu0 %v7241
    %7913 = vmatpush.bf16.msra.mxu0 %v7236
    %7914 = vmatmul.bf16.gmra.mxu0 %v5259
    %v7915 = vpop.f32.mrf.mxu0
    %v7916 = vadd.f32 %v7902, %v7915
    %v7917 = vpop.f32.mrf.mxu0
    %v7918 = vadd.f32 %v7904, %v7917
    %7919 = vdwg.mxu0
    %7920 = vmatpush.bf16.msra.mxu0 %v7311
    %7921 = vmatpush.bf16.msra.mxu0 %v7306
    %7922 = vmatpush.bf16.msra.mxu0 %v7301
    %7923 = vmatpush.bf16.msra.mxu0 %v7296
    %7924 = vmatpush.bf16.msra.mxu0 %v7291
    %7925 = vmatpush.bf16.msra.mxu0 %v7286
    %7926 = vmatpush.bf16.msra.mxu0 %v7281
    %7927 = vmatpush.bf16.msra.mxu0 %v7276
    %7928 = vmatmul.bf16.gmra.mxu0 %v5260
    %v7929 = vpop.f32.mrf.mxu0
    %v7930 = vadd.f32 %v7916, %v7929
    %v7931 = vpop.f32.mrf.mxu0
    %v7932 = vadd.f32 %v7918, %v7931
    %7933 = vdwg.mxu0
    %7934 = vmatpush.bf16.msra.mxu0 %v7351
    %7935 = vmatpush.bf16.msra.mxu0 %v7346
    %7936 = vmatpush.bf16.msra.mxu0 %v7341
    %7937 = vmatpush.bf16.msra.mxu0 %v7336
    %7938 = vmatpush.bf16.msra.mxu0 %v7331
    %7939 = vmatpush.bf16.msra.mxu0 %v7326
    %7940 = vmatpush.bf16.msra.mxu0 %v7321
    %7941 = vmatpush.bf16.msra.mxu0 %v7316
    %7942 = vmatmul.bf16.gmra.mxu0 %v5261
    %v7943 = vpop.f32.mrf.mxu0
    %v7944 = vadd.f32 %v7930, %v7943
    %v7945 = vpop.f32.mrf.mxu0
    %v7946 = vadd.f32 %v7932, %v7945
    %7947 = vdwg.mxu0
    %7948 = vmatpush.bf16.msra.mxu0 %v7391
    %7949 = vmatpush.bf16.msra.mxu0 %v7386
    %7950 = vmatpush.bf16.msra.mxu0 %v7381
    %7951 = vmatpush.bf16.msra.mxu0 %v7376
    %7952 = vmatpush.bf16.msra.mxu0 %v7371
    %7953 = vmatpush.bf16.msra.mxu0 %v7366
    %7954 = vmatpush.bf16.msra.mxu0 %v7361
    %7955 = vmatpush.bf16.msra.mxu0 %v7356
    %7956 = vmatmul.bf16.gmra.mxu0 %v5262
    %v7957 = vpop.f32.mrf.mxu0
    %v7958 = vadd.f32 %v7944, %v7957
    %v7959 = vpop.f32.mrf.mxu0
    %v7960 = vadd.f32 %v7946, %v7959
    %7961 = vdwg.mxu0
    %7962 = vmatpush.bf16.msra.mxu0 %v7431
    %7963 = vmatpush.bf16.msra.mxu0 %v7426
    %7964 = vmatpush.bf16.msra.mxu0 %v7421
    %7965 = vmatpush.bf16.msra.mxu0 %v7416
    %7966 = vmatpush.bf16.msra.mxu0 %v7411
    %7967 = vmatpush.bf16.msra.mxu0 %v7406
    %7968 = vmatpush.bf16.msra.mxu0 %v7401
    %7969 = vmatpush.bf16.msra.mxu0 %v7396
    %7970 = vmatmul.bf16.gmra.mxu0 %v5263
    %v7971 = vpop.f32.mrf.mxu0
    %v7972 = vadd.f32 %v7958, %v7971
    %v7973 = vpop.f32.mrf.mxu0
    %v7974 = vadd.f32 %v7960, %v7973
    %7975 = vdwg.mxu0
    %7976 = vmatpush.bf16.msra.mxu0 %v7072
    %7977 = vmatpush.bf16.msra.mxu0 %v7067
    %7978 = vmatpush.bf16.msra.mxu0 %v7062
    %7979 = vmatpush.bf16.msra.mxu0 %v7057
    %7980 = vmatpush.bf16.msra.mxu0 %v7052
    %7981 = vmatpush.bf16.msra.mxu0 %v7047
    %7982 = vmatpush.bf16.msra.mxu0 %v7042
    %7983 = vmatpush.bf16.msra.mxu0 %v7037
    %7984 = vmatmul.bf16.gmra.mxu0 %v5254
    %v7985 = vpop.f32.mrf.mxu0
    %v7986 = vadd.f32 %v5747, %v7985
    %v7987 = vpop.f32.mrf.mxu0
    %v7988 = vadd.f32 %v5747, %v7987
    %7989 = vdwg.mxu0
    %7990 = vmatpush.bf16.msra.mxu0 %v7112
    %7991 = vmatpush.bf16.msra.mxu0 %v7107
    %7992 = vmatpush.bf16.msra.mxu0 %v7102
    %7993 = vmatpush.bf16.msra.mxu0 %v7097
    %7994 = vmatpush.bf16.msra.mxu0 %v7092
    %7995 = vmatpush.bf16.msra.mxu0 %v7087
    %7996 = vmatpush.bf16.msra.mxu0 %v7082
    %7997 = vmatpush.bf16.msra.mxu0 %v7077
    %7998 = vmatmul.bf16.gmra.mxu0 %v5255
    %v7999 = vpop.f32.mrf.mxu0
    %v8000 = vadd.f32 %v7986, %v7999
    %v8001 = vpop.f32.mrf.mxu0
    %v8002 = vadd.f32 %v7988, %v8001
    %8003 = vdwg.mxu0
    %8004 = vmatpush.bf16.msra.mxu0 %v7152
    %8005 = vmatpush.bf16.msra.mxu0 %v7147
    %8006 = vmatpush.bf16.msra.mxu0 %v7142
    %8007 = vmatpush.bf16.msra.mxu0 %v7137
    %8008 = vmatpush.bf16.msra.mxu0 %v7132
    %8009 = vmatpush.bf16.msra.mxu0 %v7127
    %8010 = vmatpush.bf16.msra.mxu0 %v7122
    %8011 = vmatpush.bf16.msra.mxu0 %v7117
    %8012 = vmatmul.bf16.gmra.mxu0 %v5256
    %v8013 = vpop.f32.mrf.mxu0
    %v8014 = vadd.f32 %v8000, %v8013
    %v8015 = vpop.f32.mrf.mxu0
    %v8016 = vadd.f32 %v8002, %v8015
    %8017 = vdwg.mxu0
    %8018 = vmatpush.bf16.msra.mxu0 %v7192
    %8019 = vmatpush.bf16.msra.mxu0 %v7187
    %8020 = vmatpush.bf16.msra.mxu0 %v7182
    %8021 = vmatpush.bf16.msra.mxu0 %v7177
    %8022 = vmatpush.bf16.msra.mxu0 %v7172
    %8023 = vmatpush.bf16.msra.mxu0 %v7167
    %8024 = vmatpush.bf16.msra.mxu0 %v7162
    %8025 = vmatpush.bf16.msra.mxu0 %v7157
    %8026 = vmatmul.bf16.gmra.mxu0 %v5257
    %v8027 = vpop.f32.mrf.mxu0
    %v8028 = vadd.f32 %v8014, %v8027
    %v8029 = vpop.f32.mrf.mxu0
    %v8030 = vadd.f32 %v8016, %v8029
    %8031 = vdwg.mxu0
    %8032 = vmatpush.bf16.msra.mxu0 %v7232
    %8033 = vmatpush.bf16.msra.mxu0 %v7227
    %8034 = vmatpush.bf16.msra.mxu0 %v7222
    %8035 = vmatpush.bf16.msra.mxu0 %v7217
    %8036 = vmatpush.bf16.msra.mxu0 %v7212
    %8037 = vmatpush.bf16.msra.mxu0 %v7207
    %8038 = vmatpush.bf16.msra.mxu0 %v7202
    %8039 = vmatpush.bf16.msra.mxu0 %v7197
    %8040 = vmatmul.bf16.gmra.mxu0 %v5258
    %v8041 = vpop.f32.mrf.mxu0
    %v8042 = vadd.f32 %v8028, %v8041
    %v8043 = vpop.f32.mrf.mxu0
    %v8044 = vadd.f32 %v8030, %v8043
    %8045 = vdwg.mxu0
    %8046 = vmatpush.bf16.msra.mxu0 %v7272
    %8047 = vmatpush.bf16.msra.mxu0 %v7267
    %8048 = vmatpush.bf16.msra.mxu0 %v7262
    %8049 = vmatpush.bf16.msra.mxu0 %v7257
    %8050 = vmatpush.bf16.msra.mxu0 %v7252
    %8051 = vmatpush.bf16.msra.mxu0 %v7247
    %8052 = vmatpush.bf16.msra.mxu0 %v7242
    %8053 = vmatpush.bf16.msra.mxu0 %v7237
    %8054 = vmatmul.bf16.gmra.mxu0 %v5259
    %v8055 = vpop.f32.mrf.mxu0
    %v8056 = vadd.f32 %v8042, %v8055
    %v8057 = vpop.f32.mrf.mxu0
    %v8058 = vadd.f32 %v8044, %v8057
    %8059 = vdwg.mxu0
    %8060 = vmatpush.bf16.msra.mxu0 %v7312
    %8061 = vmatpush.bf16.msra.mxu0 %v7307
    %8062 = vmatpush.bf16.msra.mxu0 %v7302
    %8063 = vmatpush.bf16.msra.mxu0 %v7297
    %8064 = vmatpush.bf16.msra.mxu0 %v7292
    %8065 = vmatpush.bf16.msra.mxu0 %v7287
    %8066 = vmatpush.bf16.msra.mxu0 %v7282
    %8067 = vmatpush.bf16.msra.mxu0 %v7277
    %8068 = vmatmul.bf16.gmra.mxu0 %v5260
    %v8069 = vpop.f32.mrf.mxu0
    %v8070 = vadd.f32 %v8056, %v8069
    %v8071 = vpop.f32.mrf.mxu0
    %v8072 = vadd.f32 %v8058, %v8071
    %8073 = vdwg.mxu0
    %8074 = vmatpush.bf16.msra.mxu0 %v7352
    %8075 = vmatpush.bf16.msra.mxu0 %v7347
    %8076 = vmatpush.bf16.msra.mxu0 %v7342
    %8077 = vmatpush.bf16.msra.mxu0 %v7337
    %8078 = vmatpush.bf16.msra.mxu0 %v7332
    %8079 = vmatpush.bf16.msra.mxu0 %v7327
    %8080 = vmatpush.bf16.msra.mxu0 %v7322
    %8081 = vmatpush.bf16.msra.mxu0 %v7317
    %8082 = vmatmul.bf16.gmra.mxu0 %v5261
    %v8083 = vpop.f32.mrf.mxu0
    %v8084 = vadd.f32 %v8070, %v8083
    %v8085 = vpop.f32.mrf.mxu0
    %v8086 = vadd.f32 %v8072, %v8085
    %8087 = vdwg.mxu0
    %8088 = vmatpush.bf16.msra.mxu0 %v7392
    %8089 = vmatpush.bf16.msra.mxu0 %v7387
    %8090 = vmatpush.bf16.msra.mxu0 %v7382
    %8091 = vmatpush.bf16.msra.mxu0 %v7377
    %8092 = vmatpush.bf16.msra.mxu0 %v7372
    %8093 = vmatpush.bf16.msra.mxu0 %v7367
    %8094 = vmatpush.bf16.msra.mxu0 %v7362
    %8095 = vmatpush.bf16.msra.mxu0 %v7357
    %8096 = vmatmul.bf16.gmra.mxu0 %v5262
    %v8097 = vpop.f32.mrf.mxu0
    %v8098 = vadd.f32 %v8084, %v8097
    %v8099 = vpop.f32.mrf.mxu0
    %v8100 = vadd.f32 %v8086, %v8099
    %8101 = vdwg.mxu0
    %8102 = vmatpush.bf16.msra.mxu0 %v7432
    %8103 = vmatpush.bf16.msra.mxu0 %v7427
    %8104 = vmatpush.bf16.msra.mxu0 %v7422
    %8105 = vmatpush.bf16.msra.mxu0 %v7417
    %8106 = vmatpush.bf16.msra.mxu0 %v7412
    %8107 = vmatpush.bf16.msra.mxu0 %v7407
    %8108 = vmatpush.bf16.msra.mxu0 %v7402
    %8109 = vmatpush.bf16.msra.mxu0 %v7397
    %8110 = vmatmul.bf16.gmra.mxu0 %v5263
    %v8111 = vpop.f32.mrf.mxu0
    %v8112 = vadd.f32 %v8098, %v8111
    %v8113 = vpop.f32.mrf.mxu0
    %v8114 = vadd.f32 %v8100, %v8113
    %8115 = vdwg.mxu0
    %8116 = vmatpush.bf16.msra.mxu0 %v7073
    %8117 = vmatpush.bf16.msra.mxu0 %v7068
    %8118 = vmatpush.bf16.msra.mxu0 %v7063
    %8119 = vmatpush.bf16.msra.mxu0 %v7058
    %8120 = vmatpush.bf16.msra.mxu0 %v7053
    %8121 = vmatpush.bf16.msra.mxu0 %v7048
    %8122 = vmatpush.bf16.msra.mxu0 %v7043
    %8123 = vmatpush.bf16.msra.mxu0 %v7038
    %8124 = vmatmul.bf16.gmra.mxu0 %v5254
    %v8125 = vpop.f32.mrf.mxu0
    %v8126 = vadd.f32 %v5748, %v8125
    %v8127 = vpop.f32.mrf.mxu0
    %v8128 = vadd.f32 %v5748, %v8127
    %8129 = vdwg.mxu0
    %8130 = vmatpush.bf16.msra.mxu0 %v7113
    %8131 = vmatpush.bf16.msra.mxu0 %v7108
    %8132 = vmatpush.bf16.msra.mxu0 %v7103
    %8133 = vmatpush.bf16.msra.mxu0 %v7098
    %8134 = vmatpush.bf16.msra.mxu0 %v7093
    %8135 = vmatpush.bf16.msra.mxu0 %v7088
    %8136 = vmatpush.bf16.msra.mxu0 %v7083
    %8137 = vmatpush.bf16.msra.mxu0 %v7078
    %8138 = vmatmul.bf16.gmra.mxu0 %v5255
    %v8139 = vpop.f32.mrf.mxu0
    %v8140 = vadd.f32 %v8126, %v8139
    %v8141 = vpop.f32.mrf.mxu0
    %v8142 = vadd.f32 %v8128, %v8141
    %8143 = vdwg.mxu0
    %8144 = vmatpush.bf16.msra.mxu0 %v7153
    %8145 = vmatpush.bf16.msra.mxu0 %v7148
    %8146 = vmatpush.bf16.msra.mxu0 %v7143
    %8147 = vmatpush.bf16.msra.mxu0 %v7138
    %8148 = vmatpush.bf16.msra.mxu0 %v7133
    %8149 = vmatpush.bf16.msra.mxu0 %v7128
    %8150 = vmatpush.bf16.msra.mxu0 %v7123
    %8151 = vmatpush.bf16.msra.mxu0 %v7118
    %8152 = vmatmul.bf16.gmra.mxu0 %v5256
    %v8153 = vpop.f32.mrf.mxu0
    %v8154 = vadd.f32 %v8140, %v8153
    %v8155 = vpop.f32.mrf.mxu0
    %v8156 = vadd.f32 %v8142, %v8155
    %8157 = vdwg.mxu0
    %8158 = vmatpush.bf16.msra.mxu0 %v7193
    %8159 = vmatpush.bf16.msra.mxu0 %v7188
    %8160 = vmatpush.bf16.msra.mxu0 %v7183
    %8161 = vmatpush.bf16.msra.mxu0 %v7178
    %8162 = vmatpush.bf16.msra.mxu0 %v7173
    %8163 = vmatpush.bf16.msra.mxu0 %v7168
    %8164 = vmatpush.bf16.msra.mxu0 %v7163
    %8165 = vmatpush.bf16.msra.mxu0 %v7158
    %8166 = vmatmul.bf16.gmra.mxu0 %v5257
    %v8167 = vpop.f32.mrf.mxu0
    %v8168 = vadd.f32 %v8154, %v8167
    %v8169 = vpop.f32.mrf.mxu0
    %v8170 = vadd.f32 %v8156, %v8169
    %8171 = vdwg.mxu0
    %8172 = vmatpush.bf16.msra.mxu0 %v7233
    %8173 = vmatpush.bf16.msra.mxu0 %v7228
    %8174 = vmatpush.bf16.msra.mxu0 %v7223
    %8175 = vmatpush.bf16.msra.mxu0 %v7218
    %8176 = vmatpush.bf16.msra.mxu0 %v7213
    %8177 = vmatpush.bf16.msra.mxu0 %v7208
    %8178 = vmatpush.bf16.msra.mxu0 %v7203
    %8179 = vmatpush.bf16.msra.mxu0 %v7198
    %8180 = vmatmul.bf16.gmra.mxu0 %v5258
    %v8181 = vpop.f32.mrf.mxu0
    %v8182 = vadd.f32 %v8168, %v8181
    %v8183 = vpop.f32.mrf.mxu0
    %v8184 = vadd.f32 %v8170, %v8183
    %8185 = vdwg.mxu0
    %8186 = vmatpush.bf16.msra.mxu0 %v7273
    %8187 = vmatpush.bf16.msra.mxu0 %v7268
    %8188 = vmatpush.bf16.msra.mxu0 %v7263
    %8189 = vmatpush.bf16.msra.mxu0 %v7258
    %8190 = vmatpush.bf16.msra.mxu0 %v7253
    %8191 = vmatpush.bf16.msra.mxu0 %v7248
    %8192 = vmatpush.bf16.msra.mxu0 %v7243
    %8193 = vmatpush.bf16.msra.mxu0 %v7238
    %8194 = vmatmul.bf16.gmra.mxu0 %v5259
    %v8195 = vpop.f32.mrf.mxu0
    %v8196 = vadd.f32 %v8182, %v8195
    %v8197 = vpop.f32.mrf.mxu0
    %v8198 = vadd.f32 %v8184, %v8197
    %8199 = vdwg.mxu0
    %8200 = vmatpush.bf16.msra.mxu0 %v7313
    %8201 = vmatpush.bf16.msra.mxu0 %v7308
    %8202 = vmatpush.bf16.msra.mxu0 %v7303
    %8203 = vmatpush.bf16.msra.mxu0 %v7298
    %8204 = vmatpush.bf16.msra.mxu0 %v7293
    %8205 = vmatpush.bf16.msra.mxu0 %v7288
    %8206 = vmatpush.bf16.msra.mxu0 %v7283
    %8207 = vmatpush.bf16.msra.mxu0 %v7278
    %8208 = vmatmul.bf16.gmra.mxu0 %v5260
    %v8209 = vpop.f32.mrf.mxu0
    %v8210 = vadd.f32 %v8196, %v8209
    %v8211 = vpop.f32.mrf.mxu0
    %v8212 = vadd.f32 %v8198, %v8211
    %8213 = vdwg.mxu0
    %8214 = vmatpush.bf16.msra.mxu0 %v7353
    %8215 = vmatpush.bf16.msra.mxu0 %v7348
    %8216 = vmatpush.bf16.msra.mxu0 %v7343
    %8217 = vmatpush.bf16.msra.mxu0 %v7338
    %8218 = vmatpush.bf16.msra.mxu0 %v7333
    %8219 = vmatpush.bf16.msra.mxu0 %v7328
    %8220 = vmatpush.bf16.msra.mxu0 %v7323
    %8221 = vmatpush.bf16.msra.mxu0 %v7318
    %8222 = vmatmul.bf16.gmra.mxu0 %v5261
    %v8223 = vpop.f32.mrf.mxu0
    %v8224 = vadd.f32 %v8210, %v8223
    %v8225 = vpop.f32.mrf.mxu0
    %v8226 = vadd.f32 %v8212, %v8225
    %8227 = vdwg.mxu0
    %8228 = vmatpush.bf16.msra.mxu0 %v7393
    %8229 = vmatpush.bf16.msra.mxu0 %v7388
    %8230 = vmatpush.bf16.msra.mxu0 %v7383
    %8231 = vmatpush.bf16.msra.mxu0 %v7378
    %8232 = vmatpush.bf16.msra.mxu0 %v7373
    %8233 = vmatpush.bf16.msra.mxu0 %v7368
    %8234 = vmatpush.bf16.msra.mxu0 %v7363
    %8235 = vmatpush.bf16.msra.mxu0 %v7358
    %8236 = vmatmul.bf16.gmra.mxu0 %v5262
    %v8237 = vpop.f32.mrf.mxu0
    %v8238 = vadd.f32 %v8224, %v8237
    %v8239 = vpop.f32.mrf.mxu0
    %v8240 = vadd.f32 %v8226, %v8239
    %8241 = vdwg.mxu0
    %8242 = vmatpush.bf16.msra.mxu0 %v7433
    %8243 = vmatpush.bf16.msra.mxu0 %v7428
    %8244 = vmatpush.bf16.msra.mxu0 %v7423
    %8245 = vmatpush.bf16.msra.mxu0 %v7418
    %8246 = vmatpush.bf16.msra.mxu0 %v7413
    %8247 = vmatpush.bf16.msra.mxu0 %v7408
    %8248 = vmatpush.bf16.msra.mxu0 %v7403
    %8249 = vmatpush.bf16.msra.mxu0 %v7398
    %8250 = vmatmul.bf16.gmra.mxu0 %v5263
    %v8251 = vpop.f32.mrf.mxu0
    %v8252 = vadd.f32 %v8238, %v8251
    %v8253 = vpop.f32.mrf.mxu0
    %v8254 = vadd.f32 %v8240, %v8253
    %8255 = vdwg.mxu0
    %8256 = vmatpush.bf16.msra.mxu0 %v7074
    %8257 = vmatpush.bf16.msra.mxu0 %v7069
    %8258 = vmatpush.bf16.msra.mxu0 %v7064
    %8259 = vmatpush.bf16.msra.mxu0 %v7059
    %8260 = vmatpush.bf16.msra.mxu0 %v7054
    %8261 = vmatpush.bf16.msra.mxu0 %v7049
    %8262 = vmatpush.bf16.msra.mxu0 %v7044
    %8263 = vmatpush.bf16.msra.mxu0 %v7039
    %8264 = vmatmul.bf16.gmra.mxu0 %v5254
    %v8265 = vpop.f32.mrf.mxu0
    %v8266 = vadd.f32 %v5749, %v8265
    %v8267 = vpop.f32.mrf.mxu0
    %v8268 = vadd.f32 %v5749, %v8267
    %8269 = vdwg.mxu0
    %8270 = vmatpush.bf16.msra.mxu0 %v7114
    %8271 = vmatpush.bf16.msra.mxu0 %v7109
    %8272 = vmatpush.bf16.msra.mxu0 %v7104
    %8273 = vmatpush.bf16.msra.mxu0 %v7099
    %8274 = vmatpush.bf16.msra.mxu0 %v7094
    %8275 = vmatpush.bf16.msra.mxu0 %v7089
    %8276 = vmatpush.bf16.msra.mxu0 %v7084
    %8277 = vmatpush.bf16.msra.mxu0 %v7079
    %8278 = vmatmul.bf16.gmra.mxu0 %v5255
    %v8279 = vpop.f32.mrf.mxu0
    %v8280 = vadd.f32 %v8266, %v8279
    %v8281 = vpop.f32.mrf.mxu0
    %v8282 = vadd.f32 %v8268, %v8281
    %8283 = vdwg.mxu0
    %8284 = vmatpush.bf16.msra.mxu0 %v7154
    %8285 = vmatpush.bf16.msra.mxu0 %v7149
    %8286 = vmatpush.bf16.msra.mxu0 %v7144
    %8287 = vmatpush.bf16.msra.mxu0 %v7139
    %8288 = vmatpush.bf16.msra.mxu0 %v7134
    %8289 = vmatpush.bf16.msra.mxu0 %v7129
    %8290 = vmatpush.bf16.msra.mxu0 %v7124
    %8291 = vmatpush.bf16.msra.mxu0 %v7119
    %8292 = vmatmul.bf16.gmra.mxu0 %v5256
    %v8293 = vpop.f32.mrf.mxu0
    %v8294 = vadd.f32 %v8280, %v8293
    %v8295 = vpop.f32.mrf.mxu0
    %v8296 = vadd.f32 %v8282, %v8295
    %8297 = vdwg.mxu0
    %8298 = vmatpush.bf16.msra.mxu0 %v7194
    %8299 = vmatpush.bf16.msra.mxu0 %v7189
    %8300 = vmatpush.bf16.msra.mxu0 %v7184
    %8301 = vmatpush.bf16.msra.mxu0 %v7179
    %8302 = vmatpush.bf16.msra.mxu0 %v7174
    %8303 = vmatpush.bf16.msra.mxu0 %v7169
    %8304 = vmatpush.bf16.msra.mxu0 %v7164
    %8305 = vmatpush.bf16.msra.mxu0 %v7159
    %8306 = vmatmul.bf16.gmra.mxu0 %v5257
    %v8307 = vpop.f32.mrf.mxu0
    %v8308 = vadd.f32 %v8294, %v8307
    %v8309 = vpop.f32.mrf.mxu0
    %v8310 = vadd.f32 %v8296, %v8309
    %8311 = vdwg.mxu0
    %8312 = vmatpush.bf16.msra.mxu0 %v7234
    %8313 = vmatpush.bf16.msra.mxu0 %v7229
    %8314 = vmatpush.bf16.msra.mxu0 %v7224
    %8315 = vmatpush.bf16.msra.mxu0 %v7219
    %8316 = vmatpush.bf16.msra.mxu0 %v7214
    %8317 = vmatpush.bf16.msra.mxu0 %v7209
    %8318 = vmatpush.bf16.msra.mxu0 %v7204
    %8319 = vmatpush.bf16.msra.mxu0 %v7199
    %8320 = vmatmul.bf16.gmra.mxu0 %v5258
    %v8321 = vpop.f32.mrf.mxu0
    %v8322 = vadd.f32 %v8308, %v8321
    %v8323 = vpop.f32.mrf.mxu0
    %v8324 = vadd.f32 %v8310, %v8323
    %8325 = vdwg.mxu0
    %8326 = vmatpush.bf16.msra.mxu0 %v7274
    %8327 = vmatpush.bf16.msra.mxu0 %v7269
    %8328 = vmatpush.bf16.msra.mxu0 %v7264
    %8329 = vmatpush.bf16.msra.mxu0 %v7259
    %8330 = vmatpush.bf16.msra.mxu0 %v7254
    %8331 = vmatpush.bf16.msra.mxu0 %v7249
    %8332 = vmatpush.bf16.msra.mxu0 %v7244
    %8333 = vmatpush.bf16.msra.mxu0 %v7239
    %8334 = vmatmul.bf16.gmra.mxu0 %v5259
    %v8335 = vpop.f32.mrf.mxu0
    %v8336 = vadd.f32 %v8322, %v8335
    %v8337 = vpop.f32.mrf.mxu0
    %v8338 = vadd.f32 %v8324, %v8337
    %8339 = vdwg.mxu0
    %8340 = vmatpush.bf16.msra.mxu0 %v7314
    %8341 = vmatpush.bf16.msra.mxu0 %v7309
    %8342 = vmatpush.bf16.msra.mxu0 %v7304
    %8343 = vmatpush.bf16.msra.mxu0 %v7299
    %8344 = vmatpush.bf16.msra.mxu0 %v7294
    %8345 = vmatpush.bf16.msra.mxu0 %v7289
    %8346 = vmatpush.bf16.msra.mxu0 %v7284
    %8347 = vmatpush.bf16.msra.mxu0 %v7279
    %8348 = vmatmul.bf16.gmra.mxu0 %v5260
    %v8349 = vpop.f32.mrf.mxu0
    %v8350 = vadd.f32 %v8336, %v8349
    %v8351 = vpop.f32.mrf.mxu0
    %v8352 = vadd.f32 %v8338, %v8351
    %8353 = vdwg.mxu0
    %8354 = vmatpush.bf16.msra.mxu0 %v7354
    %8355 = vmatpush.bf16.msra.mxu0 %v7349
    %8356 = vmatpush.bf16.msra.mxu0 %v7344
    %8357 = vmatpush.bf16.msra.mxu0 %v7339
    %8358 = vmatpush.bf16.msra.mxu0 %v7334
    %8359 = vmatpush.bf16.msra.mxu0 %v7329
    %8360 = vmatpush.bf16.msra.mxu0 %v7324
    %8361 = vmatpush.bf16.msra.mxu0 %v7319
    %8362 = vmatmul.bf16.gmra.mxu0 %v5261
    %v8363 = vpop.f32.mrf.mxu0
    %v8364 = vadd.f32 %v8350, %v8363
    %v8365 = vpop.f32.mrf.mxu0
    %v8366 = vadd.f32 %v8352, %v8365
    %8367 = vdwg.mxu0
    %8368 = vmatpush.bf16.msra.mxu0 %v7394
    %8369 = vmatpush.bf16.msra.mxu0 %v7389
    %8370 = vmatpush.bf16.msra.mxu0 %v7384
    %8371 = vmatpush.bf16.msra.mxu0 %v7379
    %8372 = vmatpush.bf16.msra.mxu0 %v7374
    %8373 = vmatpush.bf16.msra.mxu0 %v7369
    %8374 = vmatpush.bf16.msra.mxu0 %v7364
    %8375 = vmatpush.bf16.msra.mxu0 %v7359
    %8376 = vmatmul.bf16.gmra.mxu0 %v5262
    %v8377 = vpop.f32.mrf.mxu0
    %v8378 = vadd.f32 %v8364, %v8377
    %v8379 = vpop.f32.mrf.mxu0
    %v8380 = vadd.f32 %v8366, %v8379
    %8381 = vdwg.mxu0
    %8382 = vmatpush.bf16.msra.mxu0 %v7434
    %8383 = vmatpush.bf16.msra.mxu0 %v7429
    %8384 = vmatpush.bf16.msra.mxu0 %v7424
    %8385 = vmatpush.bf16.msra.mxu0 %v7419
    %8386 = vmatpush.bf16.msra.mxu0 %v7414
    %8387 = vmatpush.bf16.msra.mxu0 %v7409
    %8388 = vmatpush.bf16.msra.mxu0 %v7404
    %8389 = vmatpush.bf16.msra.mxu0 %v7399
    %8390 = vmatmul.bf16.gmra.mxu0 %v5263
    %v8391 = vpop.f32.mrf.mxu0
    %v8392 = vadd.f32 %v8378, %v8391
    %v8393 = vpop.f32.mrf.mxu0
    %v8394 = vadd.f32 %v8380, %v8393
    %8395 = vdwg.mxu0
    %8396 = vmatpush.bf16.msra.mxu0 %v7075
    %8397 = vmatpush.bf16.msra.mxu0 %v7070
    %8398 = vmatpush.bf16.msra.mxu0 %v7065
    %8399 = vmatpush.bf16.msra.mxu0 %v7060
    %8400 = vmatpush.bf16.msra.mxu0 %v7055
    %8401 = vmatpush.bf16.msra.mxu0 %v7050
    %8402 = vmatpush.bf16.msra.mxu0 %v7045
    %8403 = vmatpush.bf16.msra.mxu0 %v7040
    %8404 = vmatmul.bf16.gmra.mxu0 %v5254
    %v8405 = vpop.f32.mrf.mxu0
    %v8406 = vadd.f32 %v5750, %v8405
    %v8407 = vpop.f32.mrf.mxu0
    %v8408 = vadd.f32 %v5750, %v8407
    %8409 = vdwg.mxu0
    %8410 = vmatpush.bf16.msra.mxu0 %v7115
    %8411 = vmatpush.bf16.msra.mxu0 %v7110
    %8412 = vmatpush.bf16.msra.mxu0 %v7105
    %8413 = vmatpush.bf16.msra.mxu0 %v7100
    %8414 = vmatpush.bf16.msra.mxu0 %v7095
    %8415 = vmatpush.bf16.msra.mxu0 %v7090
    %8416 = vmatpush.bf16.msra.mxu0 %v7085
    %8417 = vmatpush.bf16.msra.mxu0 %v7080
    %8418 = vmatmul.bf16.gmra.mxu0 %v5255
    %v8419 = vpop.f32.mrf.mxu0
    %v8420 = vadd.f32 %v8406, %v8419
    %v8421 = vpop.f32.mrf.mxu0
    %v8422 = vadd.f32 %v8408, %v8421
    %8423 = vdwg.mxu0
    %8424 = vmatpush.bf16.msra.mxu0 %v7155
    %8425 = vmatpush.bf16.msra.mxu0 %v7150
    %8426 = vmatpush.bf16.msra.mxu0 %v7145
    %8427 = vmatpush.bf16.msra.mxu0 %v7140
    %8428 = vmatpush.bf16.msra.mxu0 %v7135
    %8429 = vmatpush.bf16.msra.mxu0 %v7130
    %8430 = vmatpush.bf16.msra.mxu0 %v7125
    %8431 = vmatpush.bf16.msra.mxu0 %v7120
    %8432 = vmatmul.bf16.gmra.mxu0 %v5256
    %v8433 = vpop.f32.mrf.mxu0
    %v8434 = vadd.f32 %v8420, %v8433
    %v8435 = vpop.f32.mrf.mxu0
    %v8436 = vadd.f32 %v8422, %v8435
    %8437 = vdwg.mxu0
    %8438 = vmatpush.bf16.msra.mxu0 %v7195
    %8439 = vmatpush.bf16.msra.mxu0 %v7190
    %8440 = vmatpush.bf16.msra.mxu0 %v7185
    %8441 = vmatpush.bf16.msra.mxu0 %v7180
    %8442 = vmatpush.bf16.msra.mxu0 %v7175
    %8443 = vmatpush.bf16.msra.mxu0 %v7170
    %8444 = vmatpush.bf16.msra.mxu0 %v7165
    %8445 = vmatpush.bf16.msra.mxu0 %v7160
    %8446 = vmatmul.bf16.gmra.mxu0 %v5257
    %v8447 = vpop.f32.mrf.mxu0
    %v8448 = vadd.f32 %v8434, %v8447
    %v8449 = vpop.f32.mrf.mxu0
    %v8450 = vadd.f32 %v8436, %v8449
    %8451 = vdwg.mxu0
    %8452 = vmatpush.bf16.msra.mxu0 %v7235
    %8453 = vmatpush.bf16.msra.mxu0 %v7230
    %8454 = vmatpush.bf16.msra.mxu0 %v7225
    %8455 = vmatpush.bf16.msra.mxu0 %v7220
    %8456 = vmatpush.bf16.msra.mxu0 %v7215
    %8457 = vmatpush.bf16.msra.mxu0 %v7210
    %8458 = vmatpush.bf16.msra.mxu0 %v7205
    %8459 = vmatpush.bf16.msra.mxu0 %v7200
    %8460 = vmatmul.bf16.gmra.mxu0 %v5258
    %v8461 = vpop.f32.mrf.mxu0
    %v8462 = vadd.f32 %v8448, %v8461
    %v8463 = vpop.f32.mrf.mxu0
    %v8464 = vadd.f32 %v8450, %v8463
    %8465 = vdwg.mxu0
    %8466 = vmatpush.bf16.msra.mxu0 %v7275
    %8467 = vmatpush.bf16.msra.mxu0 %v7270
    %8468 = vmatpush.bf16.msra.mxu0 %v7265
    %8469 = vmatpush.bf16.msra.mxu0 %v7260
    %8470 = vmatpush.bf16.msra.mxu0 %v7255
    %8471 = vmatpush.bf16.msra.mxu0 %v7250
    %8472 = vmatpush.bf16.msra.mxu0 %v7245
    %8473 = vmatpush.bf16.msra.mxu0 %v7240
    %8474 = vmatmul.bf16.gmra.mxu0 %v5259
    %v8475 = vpop.f32.mrf.mxu0
    %v8476 = vadd.f32 %v8462, %v8475
    %v8477 = vpop.f32.mrf.mxu0
    %v8478 = vadd.f32 %v8464, %v8477
    %8479 = vdwg.mxu0
    %8480 = vmatpush.bf16.msra.mxu0 %v7315
    %8481 = vmatpush.bf16.msra.mxu0 %v7310
    %8482 = vmatpush.bf16.msra.mxu0 %v7305
    %8483 = vmatpush.bf16.msra.mxu0 %v7300
    %8484 = vmatpush.bf16.msra.mxu0 %v7295
    %8485 = vmatpush.bf16.msra.mxu0 %v7290
    %8486 = vmatpush.bf16.msra.mxu0 %v7285
    %8487 = vmatpush.bf16.msra.mxu0 %v7280
    %8488 = vmatmul.bf16.gmra.mxu0 %v5260
    %v8489 = vpop.f32.mrf.mxu0
    %v8490 = vadd.f32 %v8476, %v8489
    %v8491 = vpop.f32.mrf.mxu0
    %v8492 = vadd.f32 %v8478, %v8491
    %8493 = vdwg.mxu0
    %8494 = vmatpush.bf16.msra.mxu0 %v7355
    %8495 = vmatpush.bf16.msra.mxu0 %v7350
    %8496 = vmatpush.bf16.msra.mxu0 %v7345
    %8497 = vmatpush.bf16.msra.mxu0 %v7340
    %8498 = vmatpush.bf16.msra.mxu0 %v7335
    %8499 = vmatpush.bf16.msra.mxu0 %v7330
    %8500 = vmatpush.bf16.msra.mxu0 %v7325
    %8501 = vmatpush.bf16.msra.mxu0 %v7320
    %8502 = vmatmul.bf16.gmra.mxu0 %v5261
    %v8503 = vpop.f32.mrf.mxu0
    %v8504 = vadd.f32 %v8490, %v8503
    %v8505 = vpop.f32.mrf.mxu0
    %v8506 = vadd.f32 %v8492, %v8505
    %8507 = vdwg.mxu0
    %8508 = vmatpush.bf16.msra.mxu0 %v7395
    %8509 = vmatpush.bf16.msra.mxu0 %v7390
    %8510 = vmatpush.bf16.msra.mxu0 %v7385
    %8511 = vmatpush.bf16.msra.mxu0 %v7380
    %8512 = vmatpush.bf16.msra.mxu0 %v7375
    %8513 = vmatpush.bf16.msra.mxu0 %v7370
    %8514 = vmatpush.bf16.msra.mxu0 %v7365
    %8515 = vmatpush.bf16.msra.mxu0 %v7360
    %8516 = vmatmul.bf16.gmra.mxu0 %v5262
    %v8517 = vpop.f32.mrf.mxu0
    %v8518 = vadd.f32 %v8504, %v8517
    %v8519 = vpop.f32.mrf.mxu0
    %v8520 = vadd.f32 %v8506, %v8519
    %8521 = vdwg.mxu0
    %8522 = vmatpush.bf16.msra.mxu0 %v7435
    %8523 = vmatpush.bf16.msra.mxu0 %v7430
    %8524 = vmatpush.bf16.msra.mxu0 %v7425
    %8525 = vmatpush.bf16.msra.mxu0 %v7420
    %8526 = vmatpush.bf16.msra.mxu0 %v7415
    %8527 = vmatpush.bf16.msra.mxu0 %v7410
    %8528 = vmatpush.bf16.msra.mxu0 %v7405
    %8529 = vmatpush.bf16.msra.mxu0 %v7400
    %8530 = vmatmul.bf16.gmra.mxu0 %v5263
    %v8531 = vpop.f32.mrf.mxu0
    %v8532 = vadd.f32 %v8518, %v8531
    %v8533 = vpop.f32.mrf.mxu0
    %v8534 = vadd.f32 %v8520, %v8533
    %8535 = vdwg.mxu0
    %v8536 = vmax.f32 %v7972, 0.0
    %v8537 = vmax.f32 %v8112, 0.0
    %v8538 = vmax.f32 %v8252, 0.0
    %v8539 = vmax.f32 %v8392, 0.0
    %v8540 = vmax.f32 %v8532, 0.0
    %v8541 = vmax.f32 %v7974, 0.0
    %v8542 = vmax.f32 %v8114, 0.0
    %v8543 = vmax.f32 %v8254, 0.0
    %v8544 = vmax.f32 %v8394, 0.0
    %v8545 = vmax.f32 %v8534, 0.0
    %v8546 = vpack.c.bf16 %v8541, %v8536
    %v8547 = vpack.c.bf16 %v8542, %v8537
    %v8548 = vpack.c.bf16 %v8543, %v8538
    %v8549 = vpack.c.bf16 %v8544, %v8539
    %v8550 = vpack.c.bf16 %v8545, %v8540
    %v8551 = vld [vmem:[#allocation9] sm:$0xff]
    %v8552 = vld [vmem:[#allocation9 + $0x8] sm:$0xff]
    %v8553 = vld [vmem:[#allocation9 + $0x10] sm:$0xff]
    %v8554 = vld [vmem:[#allocation9 + $0x18] sm:$0xff]
    %v8555 = vld [vmem:[#allocation9 + $0x20] sm:$0xff]
    %v8556 = vld [vmem:[#allocation9 + $0x28] sm:$0xff]
    %v8557 = vld [vmem:[#allocation9 + $0x30] sm:$0xff]
    %v8558 = vld [vmem:[#allocation9 + $0x38] sm:$0xff]
    %v8559 = vld [vmem:[#allocation9 + $0x40] sm:$0xff]
    %v8560 = vld [vmem:[#allocation9 + $0x48] sm:$0xff]
    %v8561 = vld [vmem:[#allocation9 + $0x50] sm:$0xff]
    %v8562 = vld [vmem:[#allocation9 + $0x58] sm:$0xff]
    %v8563 = vld [vmem:[#allocation9 + $0x60] sm:$0xff]
    %v8564 = vld [vmem:[#allocation9 + $0x68] sm:$0xff]
    %v8565 = vld [vmem:[#allocation9 + $0x70] sm:$0xff]
    %v8566 = vld [vmem:[#allocation9 + $0x78] sm:$0xff]
    %v8567 = vld [vmem:[#allocation9 + $0x80] sm:$0xff]
    %v8568 = vld [vmem:[#allocation9 + $0x88] sm:$0xff]
    %v8569 = vld [vmem:[#allocation9 + $0x90] sm:$0xff]
    %v8570 = vld [vmem:[#allocation9 + $0x98] sm:$0xff]
    %v8571 = vld [vmem:[#allocation9 + $0xa0] sm:$0xff]
    %v8572 = vld [vmem:[#allocation9 + $0xa8] sm:$0xff]
    %v8573 = vld [vmem:[#allocation9 + $0xb0] sm:$0xff]
    %v8574 = vld [vmem:[#allocation9 + $0xb8] sm:$0xff]
    %v8575 = vld [vmem:[#allocation9 + $0xc0] sm:$0xff]
    %v8576 = vld [vmem:[#allocation9 + $0xc8] sm:$0xff]
    %v8577 = vld [vmem:[#allocation9 + $0xd0] sm:$0xff]
    %v8578 = vld [vmem:[#allocation9 + $0xd8] sm:$0xff]
    %v8579 = vld [vmem:[#allocation9 + $0xe0] sm:$0xff]
    %v8580 = vld [vmem:[#allocation9 + $0xe8] sm:$0xff]
    %v8581 = vld [vmem:[#allocation9 + $0xf0] sm:$0xff]
    %v8582 = vld [vmem:[#allocation9 + $0xf8] sm:$0xff]
    %v8583 = vld [vmem:[#allocation9 + $0x100] sm:$0xff]
    %v8584 = vld [vmem:[#allocation9 + $0x108] sm:$0xff]
    %v8585 = vld [vmem:[#allocation9 + $0x110] sm:$0xff]
    %v8586 = vld [vmem:[#allocation9 + $0x118] sm:$0xff]
    %v8587 = vld [vmem:[#allocation9 + $0x120] sm:$0xff]
    %v8588 = vld [vmem:[#allocation9 + $0x128] sm:$0xff]
    %v8589 = vld [vmem:[#allocation9 + $0x130] sm:$0xff]
    %v8590 = vld [vmem:[#allocation9 + $0x138] sm:$0xff]
    %v8591 = vld [vmem:[#allocation9 + $0x140] sm:$0xff]
    %v8592 = vld [vmem:[#allocation9 + $0x148] sm:$0xff]
    %v8593 = vld [vmem:[#allocation9 + $0x150] sm:$0xff]
    %v8594 = vld [vmem:[#allocation9 + $0x158] sm:$0xff]
    %v8595 = vld [vmem:[#allocation9 + $0x160] sm:$0xff]
    %v8596 = vld [vmem:[#allocation9 + $0x168] sm:$0xff]
    %v8597 = vld [vmem:[#allocation9 + $0x170] sm:$0xff]
    %v8598 = vld [vmem:[#allocation9 + $0x178] sm:$0xff]
    %v8599 = vld [vmem:[#allocation9 + $0x180] sm:$0xff]
    %v8600 = vld [vmem:[#allocation9 + $0x188] sm:$0xff]
    %v8601 = vld [vmem:[#allocation9 + $0x190] sm:$0xff]
    %v8602 = vld [vmem:[#allocation9 + $0x198] sm:$0xff]
    %v8603 = vld [vmem:[#allocation9 + $0x1a0] sm:$0xff]
    %v8604 = vld [vmem:[#allocation9 + $0x1a8] sm:$0xff]
    %v8605 = vld [vmem:[#allocation9 + $0x1b0] sm:$0xff]
    %v8606 = vld [vmem:[#allocation9 + $0x1b8] sm:$0xff]
    %v8607 = vld [vmem:[#allocation9 + $0x1c0] sm:$0xff]
    %v8608 = vld [vmem:[#allocation9 + $0x1c8] sm:$0xff]
    %v8609 = vld [vmem:[#allocation9 + $0x1d0] sm:$0xff]
    %v8610 = vld [vmem:[#allocation9 + $0x1d8] sm:$0xff]
    %v8611 = vld [vmem:[#allocation9 + $0x1e0] sm:$0xff]
    %v8612 = vld [vmem:[#allocation9 + $0x1e8] sm:$0xff]
    %v8613 = vld [vmem:[#allocation9 + $0x1f0] sm:$0xff]
    %v8614 = vld [vmem:[#allocation9 + $0x1f8] sm:$0xff]
    %v8615 = vld [vmem:[#allocation9 + $0x200] sm:$0xff]
    %v8616 = vld [vmem:[#allocation9 + $0x208] sm:$0xff]
    %v8617 = vld [vmem:[#allocation9 + $0x210] sm:$0xff]
    %v8618 = vld [vmem:[#allocation9 + $0x218] sm:$0xff]
    %v8619 = vld [vmem:[#allocation9 + $0x220] sm:$0xff]
    %v8620 = vld [vmem:[#allocation9 + $0x228] sm:$0xff]
    %v8621 = vld [vmem:[#allocation9 + $0x230] sm:$0xff]
    %v8622 = vld [vmem:[#allocation9 + $0x238] sm:$0xff]
    %v8623 = vld [vmem:[#allocation9 + $0x240] sm:$0xff]
    %v8624 = vld [vmem:[#allocation9 + $0x248] sm:$0xff]
    %v8625 = vld [vmem:[#allocation9 + $0x250] sm:$0xff]
    %v8626 = vld [vmem:[#allocation9 + $0x258] sm:$0xff]
    %v8627 = vld [vmem:[#allocation9 + $0x260] sm:$0xff]
    %v8628 = vld [vmem:[#allocation9 + $0x268] sm:$0xff]
    %v8629 = vld [vmem:[#allocation9 + $0x270] sm:$0xff]
    %v8630 = vld [vmem:[#allocation9 + $0x278] sm:$0xff]
    %v8631 = vld [vmem:[#allocation9 + $0x280] sm:$0xff]
    %v8632 = vld [vmem:[#allocation9 + $0x288] sm:$0xff]
    %v8633 = vld [vmem:[#allocation9 + $0x290] sm:$0xff]
    %v8634 = vld [vmem:[#allocation9 + $0x298] sm:$0xff]
    %v8635 = vld [vmem:[#allocation9 + $0x2a0] sm:$0xff]
    %v8636 = vld [vmem:[#allocation9 + $0x2a8] sm:$0xff]
    %v8637 = vld [vmem:[#allocation9 + $0x2b0] sm:$0xff]
    %v8638 = vld [vmem:[#allocation9 + $0x2b8] sm:$0xff]
    %v8639 = vld [vmem:[#allocation9 + $0x2c0] sm:$0xff]
    %v8640 = vld [vmem:[#allocation9 + $0x2c8] sm:$0xff]
    %v8641 = vld [vmem:[#allocation9 + $0x2d0] sm:$0xff]
    %v8642 = vld [vmem:[#allocation9 + $0x2d8] sm:$0xff]
    %v8643 = vld [vmem:[#allocation9 + $0x2e0] sm:$0xff]
    %v8644 = vld [vmem:[#allocation9 + $0x2e8] sm:$0xff]
    %v8645 = vld [vmem:[#allocation9 + $0x2f0] sm:$0xff]
    %v8646 = vld [vmem:[#allocation9 + $0x2f8] sm:$0xff]
    %v8647 = vld [vmem:[#allocation9 + $0x300] sm:$0xff]
    %v8648 = vld [vmem:[#allocation9 + $0x308] sm:$0xff]
    %v8649 = vld [vmem:[#allocation9 + $0x310] sm:$0xff]
    %v8650 = vld [vmem:[#allocation9 + $0x318] sm:$0xff]
    %v8651 = vld [vmem:[#allocation9 + $0x320] sm:$0xff]
    %v8652 = vld [vmem:[#allocation9 + $0x328] sm:$0xff]
    %v8653 = vld [vmem:[#allocation9 + $0x330] sm:$0xff]
    %v8654 = vld [vmem:[#allocation9 + $0x338] sm:$0xff]
    %v8655 = vld [vmem:[#allocation9 + $0x340] sm:$0xff]
    %v8656 = vld [vmem:[#allocation9 + $0x348] sm:$0xff]
    %v8657 = vld [vmem:[#allocation9 + $0x350] sm:$0xff]
    %v8658 = vld [vmem:[#allocation9 + $0x358] sm:$0xff]
    %v8659 = vld [vmem:[#allocation9 + $0x360] sm:$0xff]
    %v8660 = vld [vmem:[#allocation9 + $0x368] sm:$0xff]
    %v8661 = vld [vmem:[#allocation9 + $0x370] sm:$0xff]
    %v8662 = vld [vmem:[#allocation9 + $0x378] sm:$0xff]
    %v8663 = vld [vmem:[#allocation9 + $0x380] sm:$0xff]
    %v8664 = vld [vmem:[#allocation9 + $0x388] sm:$0xff]
    %v8665 = vld [vmem:[#allocation9 + $0x390] sm:$0xff]
    %v8666 = vld [vmem:[#allocation9 + $0x398] sm:$0xff]
    %v8667 = vld [vmem:[#allocation9 + $0x3a0] sm:$0xff]
    %v8668 = vld [vmem:[#allocation9 + $0x3a8] sm:$0xff]
    %v8669 = vld [vmem:[#allocation9 + $0x3b0] sm:$0xff]
    %v8670 = vld [vmem:[#allocation9 + $0x3b8] sm:$0xff]
    %v8671 = vld [vmem:[#allocation9 + $0x3c0] sm:$0xff]
    %v8672 = vld [vmem:[#allocation9 + $0x3c8] sm:$0xff]
    %v8673 = vld [vmem:[#allocation9 + $0x3d0] sm:$0xff]
    %v8674 = vld [vmem:[#allocation9 + $0x3d8] sm:$0xff]
    %v8675 = vld [vmem:[#allocation9 + $0x3e0] sm:$0xff]
    %v8676 = vld [vmem:[#allocation9 + $0x3e8] sm:$0xff]
    %v8677 = vld [vmem:[#allocation9 + $0x3f0] sm:$0xff]
    %v8678 = vld [vmem:[#allocation9 + $0x3f8] sm:$0xff]
    %v8679 = vld [vmem:[#allocation9 + $0x400] sm:$0xff]
    %v8680 = vld [vmem:[#allocation9 + $0x408] sm:$0xff]
    %v8681 = vld [vmem:[#allocation9 + $0x410] sm:$0xff]
    %v8682 = vld [vmem:[#allocation9 + $0x418] sm:$0xff]
    %v8683 = vld [vmem:[#allocation9 + $0x420] sm:$0xff]
    %v8684 = vld [vmem:[#allocation9 + $0x428] sm:$0xff]
    %v8685 = vld [vmem:[#allocation9 + $0x430] sm:$0xff]
    %v8686 = vld [vmem:[#allocation9 + $0x438] sm:$0xff]
    %v8687 = vld [vmem:[#allocation9 + $0x440] sm:$0xff]
    %v8688 = vld [vmem:[#allocation9 + $0x448] sm:$0xff]
    %v8689 = vld [vmem:[#allocation9 + $0x450] sm:$0xff]
    %v8690 = vld [vmem:[#allocation9 + $0x458] sm:$0xff]
    %v8691 = vld [vmem:[#allocation9 + $0x460] sm:$0xff]
    %v8692 = vld [vmem:[#allocation9 + $0x468] sm:$0xff]
    %v8693 = vld [vmem:[#allocation9 + $0x470] sm:$0xff]
    %v8694 = vld [vmem:[#allocation9 + $0x478] sm:$0xff]
    %v8695 = vld [vmem:[#allocation9 + $0x480] sm:$0xff]
    %v8696 = vld [vmem:[#allocation9 + $0x488] sm:$0xff]
    %v8697 = vld [vmem:[#allocation9 + $0x490] sm:$0xff]
    %v8698 = vld [vmem:[#allocation9 + $0x498] sm:$0xff]
    %v8699 = vld [vmem:[#allocation9 + $0x4a0] sm:$0xff]
    %v8700 = vld [vmem:[#allocation9 + $0x4a8] sm:$0xff]
    %v8701 = vld [vmem:[#allocation9 + $0x4b0] sm:$0xff]
    %v8702 = vld [vmem:[#allocation9 + $0x4b8] sm:$0xff]
    %v8703 = vld [vmem:[#allocation9 + $0x4c0] sm:$0xff]
    %v8704 = vld [vmem:[#allocation9 + $0x4c8] sm:$0xff]
    %v8705 = vld [vmem:[#allocation9 + $0x4d0] sm:$0xff]
    %v8706 = vld [vmem:[#allocation9 + $0x4d8] sm:$0xff]
    %v8707 = vld [vmem:[#allocation9 + $0x4e0] sm:$0xff]
    %v8708 = vld [vmem:[#allocation9 + $0x4e8] sm:$0xff]
    %v8709 = vld [vmem:[#allocation9 + $0x4f0] sm:$0xff]
    %v8710 = vld [vmem:[#allocation9 + $0x4f8] sm:$0xff]
    %v8711 = vld [vmem:[#allocation9 + $0x500] sm:$0xff]
    %v8712 = vld [vmem:[#allocation9 + $0x508] sm:$0xff]
    %v8713 = vld [vmem:[#allocation9 + $0x510] sm:$0xff]
    %v8714 = vld [vmem:[#allocation9 + $0x518] sm:$0xff]
    %v8715 = vld [vmem:[#allocation9 + $0x520] sm:$0xff]
    %v8716 = vld [vmem:[#allocation9 + $0x528] sm:$0xff]
    %v8717 = vld [vmem:[#allocation9 + $0x530] sm:$0xff]
    %v8718 = vld [vmem:[#allocation9 + $0x538] sm:$0xff]
    %v8719 = vld [vmem:[#allocation9 + $0x540] sm:$0xff]
    %v8720 = vld [vmem:[#allocation9 + $0x548] sm:$0xff]
    %v8721 = vld [vmem:[#allocation9 + $0x550] sm:$0xff]
    %v8722 = vld [vmem:[#allocation9 + $0x558] sm:$0xff]
    %v8723 = vld [vmem:[#allocation9 + $0x560] sm:$0xff]
    %v8724 = vld [vmem:[#allocation9 + $0x568] sm:$0xff]
    %v8725 = vld [vmem:[#allocation9 + $0x570] sm:$0xff]
    %v8726 = vld [vmem:[#allocation9 + $0x578] sm:$0xff]
    %v8727 = vld [vmem:[#allocation9 + $0x580] sm:$0xff]
    %v8728 = vld [vmem:[#allocation9 + $0x588] sm:$0xff]
    %v8729 = vld [vmem:[#allocation9 + $0x590] sm:$0xff]
    %v8730 = vld [vmem:[#allocation9 + $0x598] sm:$0xff]
    %v8731 = vld [vmem:[#allocation9 + $0x5a0] sm:$0xff]
    %v8732 = vld [vmem:[#allocation9 + $0x5a8] sm:$0xff]
    %v8733 = vld [vmem:[#allocation9 + $0x5b0] sm:$0xff]
    %v8734 = vld [vmem:[#allocation9 + $0x5b8] sm:$0xff]
    %v8735 = vld [vmem:[#allocation9 + $0x5c0] sm:$0xff]
    %v8736 = vld [vmem:[#allocation9 + $0x5c8] sm:$0xff]
    %v8737 = vld [vmem:[#allocation9 + $0x5d0] sm:$0xff]
    %v8738 = vld [vmem:[#allocation9 + $0x5d8] sm:$0xff]
    %v8739 = vld [vmem:[#allocation9 + $0x5e0] sm:$0xff]
    %v8740 = vld [vmem:[#allocation9 + $0x5e8] sm:$0xff]
    %v8741 = vld [vmem:[#allocation9 + $0x5f0] sm:$0xff]
    %v8742 = vld [vmem:[#allocation9 + $0x5f8] sm:$0xff]
    %v8743 = vld [vmem:[#allocation9 + $0x600] sm:$0xff]
    %v8744 = vld [vmem:[#allocation9 + $0x608] sm:$0xff]
    %v8745 = vld [vmem:[#allocation9 + $0x610] sm:$0xff]
    %v8746 = vld [vmem:[#allocation9 + $0x618] sm:$0xff]
    %v8747 = vld [vmem:[#allocation9 + $0x620] sm:$0xff]
    %v8748 = vld [vmem:[#allocation9 + $0x628] sm:$0xff]
    %v8749 = vld [vmem:[#allocation9 + $0x630] sm:$0xff]
    %v8750 = vld [vmem:[#allocation9 + $0x638] sm:$0xff]
    %v8751 = vld [vmem:[#allocation9 + $0x640] sm:$0xff]
    %v8752 = vld [vmem:[#allocation9 + $0x648] sm:$0xff]
    %v8753 = vld [vmem:[#allocation9 + $0x650] sm:$0xff]
    %v8754 = vld [vmem:[#allocation9 + $0x658] sm:$0xff]
    %v8755 = vld [vmem:[#allocation9 + $0x660] sm:$0xff]
    %v8756 = vld [vmem:[#allocation9 + $0x668] sm:$0xff]
    %v8757 = vld [vmem:[#allocation9 + $0x670] sm:$0xff]
    %v8758 = vld [vmem:[#allocation9 + $0x678] sm:$0xff]
    %v8759 = vld [vmem:[#allocation9 + $0x680] sm:$0xff]
    %v8760 = vld [vmem:[#allocation9 + $0x688] sm:$0xff]
    %v8761 = vld [vmem:[#allocation9 + $0x690] sm:$0xff]
    %v8762 = vld [vmem:[#allocation9 + $0x698] sm:$0xff]
    %v8763 = vld [vmem:[#allocation9 + $0x6a0] sm:$0xff]
    %v8764 = vld [vmem:[#allocation9 + $0x6a8] sm:$0xff]
    %v8765 = vld [vmem:[#allocation9 + $0x6b0] sm:$0xff]
    %v8766 = vld [vmem:[#allocation9 + $0x6b8] sm:$0xff]
    %v8767 = vld [vmem:[#allocation9 + $0x6c0] sm:$0xff]
    %v8768 = vld [vmem:[#allocation9 + $0x6c8] sm:$0xff]
    %v8769 = vld [vmem:[#allocation9 + $0x6d0] sm:$0xff]
    %v8770 = vld [vmem:[#allocation9 + $0x6d8] sm:$0xff]
    %v8771 = vld [vmem:[#allocation9 + $0x6e0] sm:$0xff]
    %v8772 = vld [vmem:[#allocation9 + $0x6e8] sm:$0xff]
    %v8773 = vld [vmem:[#allocation9 + $0x6f0] sm:$0xff]
    %v8774 = vld [vmem:[#allocation9 + $0x6f8] sm:$0xff]
    %v8775 = vld [vmem:[#allocation9 + $0x700] sm:$0xff]
    %v8776 = vld [vmem:[#allocation9 + $0x708] sm:$0xff]
    %v8777 = vld [vmem:[#allocation9 + $0x710] sm:$0xff]
    %v8778 = vld [vmem:[#allocation9 + $0x718] sm:$0xff]
    %v8779 = vld [vmem:[#allocation9 + $0x720] sm:$0xff]
    %v8780 = vld [vmem:[#allocation9 + $0x728] sm:$0xff]
    %v8781 = vld [vmem:[#allocation9 + $0x730] sm:$0xff]
    %v8782 = vld [vmem:[#allocation9 + $0x738] sm:$0xff]
    %v8783 = vld [vmem:[#allocation9 + $0x740] sm:$0xff]
    %v8784 = vld [vmem:[#allocation9 + $0x748] sm:$0xff]
    %v8785 = vld [vmem:[#allocation9 + $0x750] sm:$0xff]
    %v8786 = vld [vmem:[#allocation9 + $0x758] sm:$0xff]
    %v8787 = vld [vmem:[#allocation9 + $0x760] sm:$0xff]
    %v8788 = vld [vmem:[#allocation9 + $0x768] sm:$0xff]
    %v8789 = vld [vmem:[#allocation9 + $0x770] sm:$0xff]
    %v8790 = vld [vmem:[#allocation9 + $0x778] sm:$0xff]
    %v8791 = vld [vmem:[#allocation9 + $0x780] sm:$0xff]
    %v8792 = vld [vmem:[#allocation9 + $0x788] sm:$0xff]
    %v8793 = vld [vmem:[#allocation9 + $0x790] sm:$0xff]
    %v8794 = vld [vmem:[#allocation9 + $0x798] sm:$0xff]
    %v8795 = vld [vmem:[#allocation9 + $0x7a0] sm:$0xff]
    %v8796 = vld [vmem:[#allocation9 + $0x7a8] sm:$0xff]
    %v8797 = vld [vmem:[#allocation9 + $0x7b0] sm:$0xff]
    %v8798 = vld [vmem:[#allocation9 + $0x7b8] sm:$0xff]
    %v8799 = vld [vmem:[#allocation9 + $0x7c0] sm:$0xff]
    %v8800 = vld [vmem:[#allocation9 + $0x7c8] sm:$0xff]
    %v8801 = vld [vmem:[#allocation9 + $0x7d0] sm:$0xff]
    %v8802 = vld [vmem:[#allocation9 + $0x7d8] sm:$0xff]
    %v8803 = vld [vmem:[#allocation9 + $0x7e0] sm:$0xff]
    %v8804 = vld [vmem:[#allocation9 + $0x7e8] sm:$0xff]
    %v8805 = vld [vmem:[#allocation9 + $0x7f0] sm:$0xff]
    %v8806 = vld [vmem:[#allocation9 + $0x7f8] sm:$0xff]
    %v8807 = vld [vmem:[#allocation9 + $0x800] sm:$0xff]
    %v8808 = vld [vmem:[#allocation9 + $0x808] sm:$0xff]
    %v8809 = vld [vmem:[#allocation9 + $0x810] sm:$0xff]
    %v8810 = vld [vmem:[#allocation9 + $0x818] sm:$0xff]
    %v8811 = vld [vmem:[#allocation9 + $0x820] sm:$0xff]
    %v8812 = vld [vmem:[#allocation9 + $0x828] sm:$0xff]
    %v8813 = vld [vmem:[#allocation9 + $0x830] sm:$0xff]
    %v8814 = vld [vmem:[#allocation9 + $0x838] sm:$0xff]
    %v8815 = vld [vmem:[#allocation9 + $0x840] sm:$0xff]
    %v8816 = vld [vmem:[#allocation9 + $0x848] sm:$0xff]
    %v8817 = vld [vmem:[#allocation9 + $0x850] sm:$0xff]
    %v8818 = vld [vmem:[#allocation9 + $0x858] sm:$0xff]
    %v8819 = vld [vmem:[#allocation9 + $0x860] sm:$0xff]
    %v8820 = vld [vmem:[#allocation9 + $0x868] sm:$0xff]
    %v8821 = vld [vmem:[#allocation9 + $0x870] sm:$0xff]
    %v8822 = vld [vmem:[#allocation9 + $0x878] sm:$0xff]
    %v8823 = vld [vmem:[#allocation9 + $0x880] sm:$0xff]
    %v8824 = vld [vmem:[#allocation9 + $0x888] sm:$0xff]
    %v8825 = vld [vmem:[#allocation9 + $0x890] sm:$0xff]
    %v8826 = vld [vmem:[#allocation9 + $0x898] sm:$0xff]
    %v8827 = vld [vmem:[#allocation9 + $0x8a0] sm:$0xff]
    %v8828 = vld [vmem:[#allocation9 + $0x8a8] sm:$0xff]
    %v8829 = vld [vmem:[#allocation9 + $0x8b0] sm:$0xff]
    %v8830 = vld [vmem:[#allocation9 + $0x8b8] sm:$0xff]
    %v8831 = vld [vmem:[#allocation9 + $0x8c0] sm:$0xff]
    %v8832 = vld [vmem:[#allocation9 + $0x8c8] sm:$0xff]
    %v8833 = vld [vmem:[#allocation9 + $0x8d0] sm:$0xff]
    %v8834 = vld [vmem:[#allocation9 + $0x8d8] sm:$0xff]
    %v8835 = vld [vmem:[#allocation9 + $0x8e0] sm:$0xff]
    %v8836 = vld [vmem:[#allocation9 + $0x8e8] sm:$0xff]
    %v8837 = vld [vmem:[#allocation9 + $0x8f0] sm:$0xff]
    %v8838 = vld [vmem:[#allocation9 + $0x8f8] sm:$0xff]
    %v8839 = vld [vmem:[#allocation9 + $0x900] sm:$0xff]
    %v8840 = vld [vmem:[#allocation9 + $0x908] sm:$0xff]
    %v8841 = vld [vmem:[#allocation9 + $0x910] sm:$0xff]
    %v8842 = vld [vmem:[#allocation9 + $0x918] sm:$0xff]
    %v8843 = vld [vmem:[#allocation9 + $0x920] sm:$0xff]
    %v8844 = vld [vmem:[#allocation9 + $0x928] sm:$0xff]
    %v8845 = vld [vmem:[#allocation9 + $0x930] sm:$0xff]
    %v8846 = vld [vmem:[#allocation9 + $0x938] sm:$0xff]
    %v8847 = vld [vmem:[#allocation9 + $0x940] sm:$0xff]
    %v8848 = vld [vmem:[#allocation9 + $0x948] sm:$0xff]
    %v8849 = vld [vmem:[#allocation9 + $0x950] sm:$0xff]
    %v8850 = vld [vmem:[#allocation9 + $0x958] sm:$0xff]
    %v8851 = vld [vmem:[#allocation9 + $0x960] sm:$0xff]
    %v8852 = vld [vmem:[#allocation9 + $0x968] sm:$0xff]
    %v8853 = vld [vmem:[#allocation9 + $0x970] sm:$0xff]
    %v8854 = vld [vmem:[#allocation9 + $0x978] sm:$0xff]
    %v8855 = vld [vmem:[#allocation9 + $0x980] sm:$0xff]
    %v8856 = vld [vmem:[#allocation9 + $0x988] sm:$0xff]
    %v8857 = vld [vmem:[#allocation9 + $0x990] sm:$0xff]
    %v8858 = vld [vmem:[#allocation9 + $0x998] sm:$0xff]
    %v8859 = vld [vmem:[#allocation9 + $0x9a0] sm:$0xff]
    %v8860 = vld [vmem:[#allocation9 + $0x9a8] sm:$0xff]
    %v8861 = vld [vmem:[#allocation9 + $0x9b0] sm:$0xff]
    %v8862 = vld [vmem:[#allocation9 + $0x9b8] sm:$0xff]
    %v8863 = vld [vmem:[#allocation9 + $0x9c0] sm:$0xff]
    %v8864 = vld [vmem:[#allocation9 + $0x9c8] sm:$0xff]
    %v8865 = vld [vmem:[#allocation9 + $0x9d0] sm:$0xff]
    %v8866 = vld [vmem:[#allocation9 + $0x9d8] sm:$0xff]
    %v8867 = vld [vmem:[#allocation9 + $0x9e0] sm:$0xff]
    %v8868 = vld [vmem:[#allocation9 + $0x9e8] sm:$0xff]
    %v8869 = vld [vmem:[#allocation9 + $0x9f0] sm:$0xff]
    %v8870 = vld [vmem:[#allocation9 + $0x9f8] sm:$0xff]
    %v8871 = vld [vmem:[#allocation9 + $0xa00] sm:$0xff]
    %v8872 = vld [vmem:[#allocation9 + $0xa08] sm:$0xff]
    %v8873 = vld [vmem:[#allocation9 + $0xa10] sm:$0xff]
    %v8874 = vld [vmem:[#allocation9 + $0xa18] sm:$0xff]
    %v8875 = vld [vmem:[#allocation9 + $0xa20] sm:$0xff]
    %v8876 = vld [vmem:[#allocation9 + $0xa28] sm:$0xff]
    %v8877 = vld [vmem:[#allocation9 + $0xa30] sm:$0xff]
    %v8878 = vld [vmem:[#allocation9 + $0xa38] sm:$0xff]
    %v8879 = vld [vmem:[#allocation9 + $0xa40] sm:$0xff]
    %v8880 = vld [vmem:[#allocation9 + $0xa48] sm:$0xff]
    %v8881 = vld [vmem:[#allocation9 + $0xa50] sm:$0xff]
    %v8882 = vld [vmem:[#allocation9 + $0xa58] sm:$0xff]
    %v8883 = vld [vmem:[#allocation9 + $0xa60] sm:$0xff]
    %v8884 = vld [vmem:[#allocation9 + $0xa68] sm:$0xff]
    %v8885 = vld [vmem:[#allocation9 + $0xa70] sm:$0xff]
    %v8886 = vld [vmem:[#allocation9 + $0xa78] sm:$0xff]
    %v8887 = vld [vmem:[#allocation9 + $0xa80] sm:$0xff]
    %v8888 = vld [vmem:[#allocation9 + $0xa88] sm:$0xff]
    %v8889 = vld [vmem:[#allocation9 + $0xa90] sm:$0xff]
    %v8890 = vld [vmem:[#allocation9 + $0xa98] sm:$0xff]
    %v8891 = vld [vmem:[#allocation9 + $0xaa0] sm:$0xff]
    %v8892 = vld [vmem:[#allocation9 + $0xaa8] sm:$0xff]
    %v8893 = vld [vmem:[#allocation9 + $0xab0] sm:$0xff]
    %v8894 = vld [vmem:[#allocation9 + $0xab8] sm:$0xff]
    %v8895 = vld [vmem:[#allocation9 + $0xac0] sm:$0xff]
    %v8896 = vld [vmem:[#allocation9 + $0xac8] sm:$0xff]
    %v8897 = vld [vmem:[#allocation9 + $0xad0] sm:$0xff]
    %v8898 = vld [vmem:[#allocation9 + $0xad8] sm:$0xff]
    %v8899 = vld [vmem:[#allocation9 + $0xae0] sm:$0xff]
    %v8900 = vld [vmem:[#allocation9 + $0xae8] sm:$0xff]
    %v8901 = vld [vmem:[#allocation9 + $0xaf0] sm:$0xff]
    %v8902 = vld [vmem:[#allocation9 + $0xaf8] sm:$0xff]
    %v8903 = vld [vmem:[#allocation9 + $0xb00] sm:$0xff]
    %v8904 = vld [vmem:[#allocation9 + $0xb08] sm:$0xff]
    %v8905 = vld [vmem:[#allocation9 + $0xb10] sm:$0xff]
    %v8906 = vld [vmem:[#allocation9 + $0xb18] sm:$0xff]
    %v8907 = vld [vmem:[#allocation9 + $0xb20] sm:$0xff]
    %v8908 = vld [vmem:[#allocation9 + $0xb28] sm:$0xff]
    %v8909 = vld [vmem:[#allocation9 + $0xb30] sm:$0xff]
    %v8910 = vld [vmem:[#allocation9 + $0xb38] sm:$0xff]
    %v8911 = vld [vmem:[#allocation9 + $0xb40] sm:$0xff]
    %v8912 = vld [vmem:[#allocation9 + $0xb48] sm:$0xff]
    %v8913 = vld [vmem:[#allocation9 + $0xb50] sm:$0xff]
    %v8914 = vld [vmem:[#allocation9 + $0xb58] sm:$0xff]
    %v8915 = vld [vmem:[#allocation9 + $0xb60] sm:$0xff]
    %v8916 = vld [vmem:[#allocation9 + $0xb68] sm:$0xff]
    %v8917 = vld [vmem:[#allocation9 + $0xb70] sm:$0xff]
    %v8918 = vld [vmem:[#allocation9 + $0xb78] sm:$0xff]
    %v8919 = vld [vmem:[#allocation9 + $0xb80] sm:$0xff]
    %v8920 = vld [vmem:[#allocation9 + $0xb88] sm:$0xff]
    %v8921 = vld [vmem:[#allocation9 + $0xb90] sm:$0xff]
    %v8922 = vld [vmem:[#allocation9 + $0xb98] sm:$0xff]
    %v8923 = vld [vmem:[#allocation9 + $0xba0] sm:$0xff]
    %v8924 = vld [vmem:[#allocation9 + $0xba8] sm:$0xff]
    %v8925 = vld [vmem:[#allocation9 + $0xbb0] sm:$0xff]
    %v8926 = vld [vmem:[#allocation9 + $0xbb8] sm:$0xff]
    %v8927 = vld [vmem:[#allocation9 + $0xbc0] sm:$0xff]
    %v8928 = vld [vmem:[#allocation9 + $0xbc8] sm:$0xff]
    %v8929 = vld [vmem:[#allocation9 + $0xbd0] sm:$0xff]
    %v8930 = vld [vmem:[#allocation9 + $0xbd8] sm:$0xff]
    %v8931 = vld [vmem:[#allocation9 + $0xbe0] sm:$0xff]
    %v8932 = vld [vmem:[#allocation9 + $0xbe8] sm:$0xff]
    %v8933 = vld [vmem:[#allocation9 + $0xbf0] sm:$0xff]
    %v8934 = vld [vmem:[#allocation9 + $0xbf8] sm:$0xff]
    %v8935 = vld [vmem:[#allocation9 + $0xc00] sm:$0xff]
    %v8936 = vld [vmem:[#allocation9 + $0xc08] sm:$0xff]
    %v8937 = vld [vmem:[#allocation9 + $0xc10] sm:$0xff]
    %v8938 = vld [vmem:[#allocation9 + $0xc18] sm:$0xff]
    %v8939 = vld [vmem:[#allocation9 + $0xc20] sm:$0xff]
    %v8940 = vld [vmem:[#allocation9 + $0xc28] sm:$0xff]
    %v8941 = vld [vmem:[#allocation9 + $0xc30] sm:$0xff]
    %v8942 = vld [vmem:[#allocation9 + $0xc38] sm:$0xff]
    %v8943 = vld [vmem:[#allocation9 + $0xc40] sm:$0xff]
    %v8944 = vld [vmem:[#allocation9 + $0xc48] sm:$0xff]
    %v8945 = vld [vmem:[#allocation9 + $0xc50] sm:$0xff]
    %v8946 = vld [vmem:[#allocation9 + $0xc58] sm:$0xff]
    %v8947 = vld [vmem:[#allocation9 + $0xc60] sm:$0xff]
    %v8948 = vld [vmem:[#allocation9 + $0xc68] sm:$0xff]
    %v8949 = vld [vmem:[#allocation9 + $0xc70] sm:$0xff]
    %v8950 = vld [vmem:[#allocation9 + $0xc78] sm:$0xff]
    %v8951 = vld [vmem:[#allocation10] sm:$0xff]
    %v8952 = vld [vmem:[#allocation10 + $0x8] sm:$0x3]
    %v8955 = vperm.slane %v8951, 0
    %v8956 = vperm.slane %v8951, 1
    %v8957 = vperm.slane %v8951, 2
    %v8958 = vperm.slane %v8951, 3
    %v8959 = vperm.slane %v8951, 4
    %v8960 = vperm.slane %v8951, 5
    %v8961 = vperm.slane %v8951, 6
    %v8962 = vperm.slane %v8951, 7
    %v8963 = vperm.slane %v8952, 0
    %v8964 = vperm.slane %v8952, 1
    %v9375 = vunpack.c.l.b16 %v8551
    %v9376 = vunpack.c.h.b16 %v8551
    %v9377 = vunpack.c.l.b16 %v8552
    %v9378 = vunpack.c.h.b16 %v8552
    %v9379 = vunpack.c.l.b16 %v8553
    %v9380 = vunpack.c.h.b16 %v8553
    %v9381 = vunpack.c.l.b16 %v8554
    %v9382 = vunpack.c.h.b16 %v8554
    %v9383 = vunpack.c.l.b16 %v8555
    %v9384 = vunpack.c.h.b16 %v8555
    %v9385 = vunpack.c.l.b16 %v8556
    %v9386 = vunpack.c.h.b16 %v8556
    %v9387 = vunpack.c.l.b16 %v8557
    %v9388 = vunpack.c.h.b16 %v8557
    %v9389 = vunpack.c.l.b16 %v8558
    %v9390 = vunpack.c.h.b16 %v8558
    %v9391 = vunpack.c.l.b16 %v8559
    %v9392 = vunpack.c.h.b16 %v8559
    %v9393 = vunpack.c.l.b16 %v8560
    %v9394 = vunpack.c.h.b16 %v8560
    %v9395 = vunpack.c.l.b16 %v8561
    %v9396 = vunpack.c.h.b16 %v8561
    %v9397 = vunpack.c.l.b16 %v8562
    %v9398 = vunpack.c.h.b16 %v8562
    %v9399 = vunpack.c.l.b16 %v8563
    %v9400 = vunpack.c.h.b16 %v8563
    %v9401 = vunpack.c.l.b16 %v8564
    %v9402 = vunpack.c.h.b16 %v8564
    %v9403 = vunpack.c.l.b16 %v8565
    %v9404 = vunpack.c.h.b16 %v8565
    %v9405 = vunpack.c.l.b16 %v8566
    %v9406 = vunpack.c.h.b16 %v8566
    %v9407 = vunpack.c.l.b16 %v8567
    %v9408 = vunpack.c.h.b16 %v8567
    %v9409 = vunpack.c.l.b16 %v8568
    %v9410 = vunpack.c.h.b16 %v8568
    %v9411 = vunpack.c.l.b16 %v8569
    %v9412 = vunpack.c.h.b16 %v8569
    %v9413 = vunpack.c.l.b16 %v8570
    %v9414 = vunpack.c.h.b16 %v8570
    %v9415 = vunpack.c.l.b16 %v8571
    %v9416 = vunpack.c.h.b16 %v8571
    %v9417 = vunpack.c.l.b16 %v8572
    %v9418 = vunpack.c.h.b16 %v8572
    %v9419 = vunpack.c.l.b16 %v8573
    %v9420 = vunpack.c.h.b16 %v8573
    %v9421 = vunpack.c.l.b16 %v8574
    %v9422 = vunpack.c.h.b16 %v8574
    %v9423 = vunpack.c.l.b16 %v8575
    %v9424 = vunpack.c.h.b16 %v8575
    %v9425 = vunpack.c.l.b16 %v8576
    %v9426 = vunpack.c.h.b16 %v8576
    %v9427 = vunpack.c.l.b16 %v8577
    %v9428 = vunpack.c.h.b16 %v8577
    %v9429 = vunpack.c.l.b16 %v8578
    %v9430 = vunpack.c.h.b16 %v8578
    %v9431 = vunpack.c.l.b16 %v8579
    %v9432 = vunpack.c.h.b16 %v8579
    %v9433 = vunpack.c.l.b16 %v8580
    %v9434 = vunpack.c.h.b16 %v8580
    %v9435 = vunpack.c.l.b16 %v8581
    %v9436 = vunpack.c.h.b16 %v8581
    %v9437 = vunpack.c.l.b16 %v8582
    %v9438 = vunpack.c.h.b16 %v8582
    %v9439 = vunpack.c.l.b16 %v8583
    %v9440 = vunpack.c.h.b16 %v8583
    %v9441 = vunpack.c.l.b16 %v8584
    %v9442 = vunpack.c.h.b16 %v8584
    %v9443 = vunpack.c.l.b16 %v8585
    %v9444 = vunpack.c.h.b16 %v8585
    %v9445 = vunpack.c.l.b16 %v8586
    %v9446 = vunpack.c.h.b16 %v8586
    %v9447 = vunpack.c.l.b16 %v8587
    %v9448 = vunpack.c.h.b16 %v8587
    %v9449 = vunpack.c.l.b16 %v8588
    %v9450 = vunpack.c.h.b16 %v8588
    %v9451 = vunpack.c.l.b16 %v8589
    %v9452 = vunpack.c.h.b16 %v8589
    %v9453 = vunpack.c.l.b16 %v8590
    %v9454 = vunpack.c.h.b16 %v8590
    %v9455 = vunpack.c.l.b16 %v8591
    %v9456 = vunpack.c.h.b16 %v8591
    %v9457 = vunpack.c.l.b16 %v8592
    %v9458 = vunpack.c.h.b16 %v8592
    %v9459 = vunpack.c.l.b16 %v8593
    %v9460 = vunpack.c.h.b16 %v8593
    %v9461 = vunpack.c.l.b16 %v8594
    %v9462 = vunpack.c.h.b16 %v8594
    %v9463 = vunpack.c.l.b16 %v8595
    %v9464 = vunpack.c.h.b16 %v8595
    %v9465 = vunpack.c.l.b16 %v8596
    %v9466 = vunpack.c.h.b16 %v8596
    %v9467 = vunpack.c.l.b16 %v8597
    %v9468 = vunpack.c.h.b16 %v8597
    %v9469 = vunpack.c.l.b16 %v8598
    %v9470 = vunpack.c.h.b16 %v8598
    %v9471 = vunpack.c.l.b16 %v8599
    %v9472 = vunpack.c.h.b16 %v8599
    %v9473 = vunpack.c.l.b16 %v8600
    %v9474 = vunpack.c.h.b16 %v8600
    %v9475 = vunpack.c.l.b16 %v8601
    %v9476 = vunpack.c.h.b16 %v8601
    %v9477 = vunpack.c.l.b16 %v8602
    %v9478 = vunpack.c.h.b16 %v8602
    %v9479 = vunpack.c.l.b16 %v8603
    %v9480 = vunpack.c.h.b16 %v8603
    %v9481 = vunpack.c.l.b16 %v8604
    %v9482 = vunpack.c.h.b16 %v8604
    %v9483 = vunpack.c.l.b16 %v8605
    %v9484 = vunpack.c.h.b16 %v8605
    %v9485 = vunpack.c.l.b16 %v8606
    %v9486 = vunpack.c.h.b16 %v8606
    %v9487 = vunpack.c.l.b16 %v8607
    %v9488 = vunpack.c.h.b16 %v8607
    %v9489 = vunpack.c.l.b16 %v8608
    %v9490 = vunpack.c.h.b16 %v8608
    %v9491 = vunpack.c.l.b16 %v8609
    %v9492 = vunpack.c.h.b16 %v8609
    %v9493 = vunpack.c.l.b16 %v8610
    %v9494 = vunpack.c.h.b16 %v8610
    %v9495 = vunpack.c.l.b16 %v8611
    %v9496 = vunpack.c.h.b16 %v8611
    %v9497 = vunpack.c.l.b16 %v8612
    %v9498 = vunpack.c.h.b16 %v8612
    %v9499 = vunpack.c.l.b16 %v8613
    %v9500 = vunpack.c.h.b16 %v8613
    %v9501 = vunpack.c.l.b16 %v8614
    %v9502 = vunpack.c.h.b16 %v8614
    %v9503 = vunpack.c.l.b16 %v8615
    %v9504 = vunpack.c.h.b16 %v8615
    %v9505 = vunpack.c.l.b16 %v8616
    %v9506 = vunpack.c.h.b16 %v8616
    %v9507 = vunpack.c.l.b16 %v8617
    %v9508 = vunpack.c.h.b16 %v8617
    %v9509 = vunpack.c.l.b16 %v8618
    %v9510 = vunpack.c.h.b16 %v8618
    %v9511 = vunpack.c.l.b16 %v8619
    %v9512 = vunpack.c.h.b16 %v8619
    %v9513 = vunpack.c.l.b16 %v8620
    %v9514 = vunpack.c.h.b16 %v8620
    %v9515 = vunpack.c.l.b16 %v8621
    %v9516 = vunpack.c.h.b16 %v8621
    %v9517 = vunpack.c.l.b16 %v8622
    %v9518 = vunpack.c.h.b16 %v8622
    %v9519 = vunpack.c.l.b16 %v8623
    %v9520 = vunpack.c.h.b16 %v8623
    %v9521 = vunpack.c.l.b16 %v8624
    %v9522 = vunpack.c.h.b16 %v8624
    %v9523 = vunpack.c.l.b16 %v8625
    %v9524 = vunpack.c.h.b16 %v8625
    %v9525 = vunpack.c.l.b16 %v8626
    %v9526 = vunpack.c.h.b16 %v8626
    %v9527 = vunpack.c.l.b16 %v8627
    %v9528 = vunpack.c.h.b16 %v8627
    %v9529 = vunpack.c.l.b16 %v8628
    %v9530 = vunpack.c.h.b16 %v8628
    %v9531 = vunpack.c.l.b16 %v8629
    %v9532 = vunpack.c.h.b16 %v8629
    %v9533 = vunpack.c.l.b16 %v8630
    %v9534 = vunpack.c.h.b16 %v8630
    %v9535 = vunpack.c.l.b16 %v8631
    %v9536 = vunpack.c.h.b16 %v8631
    %v9537 = vunpack.c.l.b16 %v8632
    %v9538 = vunpack.c.h.b16 %v8632
    %v9539 = vunpack.c.l.b16 %v8633
    %v9540 = vunpack.c.h.b16 %v8633
    %v9541 = vunpack.c.l.b16 %v8634
    %v9542 = vunpack.c.h.b16 %v8634
    %v9543 = vunpack.c.l.b16 %v8635
    %v9544 = vunpack.c.h.b16 %v8635
    %v9545 = vunpack.c.l.b16 %v8636
    %v9546 = vunpack.c.h.b16 %v8636
    %v9547 = vunpack.c.l.b16 %v8637
    %v9548 = vunpack.c.h.b16 %v8637
    %v9549 = vunpack.c.l.b16 %v8638
    %v9550 = vunpack.c.h.b16 %v8638
    %v9551 = vunpack.c.l.b16 %v8639
    %v9552 = vunpack.c.h.b16 %v8639
    %v9553 = vunpack.c.l.b16 %v8640
    %v9554 = vunpack.c.h.b16 %v8640
    %v9555 = vunpack.c.l.b16 %v8641
    %v9556 = vunpack.c.h.b16 %v8641
    %v9557 = vunpack.c.l.b16 %v8642
    %v9558 = vunpack.c.h.b16 %v8642
    %v9559 = vunpack.c.l.b16 %v8643
    %v9560 = vunpack.c.h.b16 %v8643
    %v9561 = vunpack.c.l.b16 %v8644
    %v9562 = vunpack.c.h.b16 %v8644
    %v9563 = vunpack.c.l.b16 %v8645
    %v9564 = vunpack.c.h.b16 %v8645
    %v9565 = vunpack.c.l.b16 %v8646
    %v9566 = vunpack.c.h.b16 %v8646
    %v9567 = vunpack.c.l.b16 %v8647
    %v9568 = vunpack.c.h.b16 %v8647
    %v9569 = vunpack.c.l.b16 %v8648
    %v9570 = vunpack.c.h.b16 %v8648
    %v9571 = vunpack.c.l.b16 %v8649
    %v9572 = vunpack.c.h.b16 %v8649
    %v9573 = vunpack.c.l.b16 %v8650
    %v9574 = vunpack.c.h.b16 %v8650
    %v9575 = vunpack.c.l.b16 %v8651
    %v9576 = vunpack.c.h.b16 %v8651
    %v9577 = vunpack.c.l.b16 %v8652
    %v9578 = vunpack.c.h.b16 %v8652
    %v9579 = vunpack.c.l.b16 %v8653
    %v9580 = vunpack.c.h.b16 %v8653
    %v9581 = vunpack.c.l.b16 %v8654
    %v9582 = vunpack.c.h.b16 %v8654
    %v9583 = vunpack.c.l.b16 %v8655
    %v9584 = vunpack.c.h.b16 %v8655
    %v9585 = vunpack.c.l.b16 %v8656
    %v9586 = vunpack.c.h.b16 %v8656
    %v9587 = vunpack.c.l.b16 %v8657
    %v9588 = vunpack.c.h.b16 %v8657
    %v9589 = vunpack.c.l.b16 %v8658
    %v9590 = vunpack.c.h.b16 %v8658
    %v9591 = vunpack.c.l.b16 %v8659
    %v9592 = vunpack.c.h.b16 %v8659
    %v9593 = vunpack.c.l.b16 %v8660
    %v9594 = vunpack.c.h.b16 %v8660
    %v9595 = vunpack.c.l.b16 %v8661
    %v9596 = vunpack.c.h.b16 %v8661
    %v9597 = vunpack.c.l.b16 %v8662
    %v9598 = vunpack.c.h.b16 %v8662
    %v9599 = vunpack.c.l.b16 %v8663
    %v9600 = vunpack.c.h.b16 %v8663
    %v9601 = vunpack.c.l.b16 %v8664
    %v9602 = vunpack.c.h.b16 %v8664
    %v9603 = vunpack.c.l.b16 %v8665
    %v9604 = vunpack.c.h.b16 %v8665
    %v9605 = vunpack.c.l.b16 %v8666
    %v9606 = vunpack.c.h.b16 %v8666
    %v9607 = vunpack.c.l.b16 %v8667
    %v9608 = vunpack.c.h.b16 %v8667
    %v9609 = vunpack.c.l.b16 %v8668
    %v9610 = vunpack.c.h.b16 %v8668
    %v9611 = vunpack.c.l.b16 %v8669
    %v9612 = vunpack.c.h.b16 %v8669
    %v9613 = vunpack.c.l.b16 %v8670
    %v9614 = vunpack.c.h.b16 %v8670
    %v9615 = vunpack.c.l.b16 %v8671
    %v9616 = vunpack.c.h.b16 %v8671
    %v9617 = vunpack.c.l.b16 %v8672
    %v9618 = vunpack.c.h.b16 %v8672
    %v9619 = vunpack.c.l.b16 %v8673
    %v9620 = vunpack.c.h.b16 %v8673
    %v9621 = vunpack.c.l.b16 %v8674
    %v9622 = vunpack.c.h.b16 %v8674
    %v9623 = vunpack.c.l.b16 %v8675
    %v9624 = vunpack.c.h.b16 %v8675
    %v9625 = vunpack.c.l.b16 %v8676
    %v9626 = vunpack.c.h.b16 %v8676
    %v9627 = vunpack.c.l.b16 %v8677
    %v9628 = vunpack.c.h.b16 %v8677
    %v9629 = vunpack.c.l.b16 %v8678
    %v9630 = vunpack.c.h.b16 %v8678
    %v9631 = vunpack.c.l.b16 %v8679
    %v9632 = vunpack.c.h.b16 %v8679
    %v9633 = vunpack.c.l.b16 %v8680
    %v9634 = vunpack.c.h.b16 %v8680
    %v9635 = vunpack.c.l.b16 %v8681
    %v9636 = vunpack.c.h.b16 %v8681
    %v9637 = vunpack.c.l.b16 %v8682
    %v9638 = vunpack.c.h.b16 %v8682
    %v9639 = vunpack.c.l.b16 %v8683
    %v9640 = vunpack.c.h.b16 %v8683
    %v9641 = vunpack.c.l.b16 %v8684
    %v9642 = vunpack.c.h.b16 %v8684
    %v9643 = vunpack.c.l.b16 %v8685
    %v9644 = vunpack.c.h.b16 %v8685
    %v9645 = vunpack.c.l.b16 %v8686
    %v9646 = vunpack.c.h.b16 %v8686
    %v9647 = vunpack.c.l.b16 %v8687
    %v9648 = vunpack.c.h.b16 %v8687
    %v9649 = vunpack.c.l.b16 %v8688
    %v9650 = vunpack.c.h.b16 %v8688
    %v9651 = vunpack.c.l.b16 %v8689
    %v9652 = vunpack.c.h.b16 %v8689
    %v9653 = vunpack.c.l.b16 %v8690
    %v9654 = vunpack.c.h.b16 %v8690
    %v9655 = vunpack.c.l.b16 %v8691
    %v9656 = vunpack.c.h.b16 %v8691
    %v9657 = vunpack.c.l.b16 %v8692
    %v9658 = vunpack.c.h.b16 %v8692
    %v9659 = vunpack.c.l.b16 %v8693
    %v9660 = vunpack.c.h.b16 %v8693
    %v9661 = vunpack.c.l.b16 %v8694
    %v9662 = vunpack.c.h.b16 %v8694
    %v9663 = vunpack.c.l.b16 %v8695
    %v9664 = vunpack.c.h.b16 %v8695
    %v9665 = vunpack.c.l.b16 %v8696
    %v9666 = vunpack.c.h.b16 %v8696
    %v9667 = vunpack.c.l.b16 %v8697
    %v9668 = vunpack.c.h.b16 %v8697
    %v9669 = vunpack.c.l.b16 %v8698
    %v9670 = vunpack.c.h.b16 %v8698
    %v9671 = vunpack.c.l.b16 %v8699
    %v9672 = vunpack.c.h.b16 %v8699
    %v9673 = vunpack.c.l.b16 %v8700
    %v9674 = vunpack.c.h.b16 %v8700
    %v9675 = vunpack.c.l.b16 %v8701
    %v9676 = vunpack.c.h.b16 %v8701
    %v9677 = vunpack.c.l.b16 %v8702
    %v9678 = vunpack.c.h.b16 %v8702
    %v9679 = vunpack.c.l.b16 %v8703
    %v9680 = vunpack.c.h.b16 %v8703
    %v9681 = vunpack.c.l.b16 %v8704
    %v9682 = vunpack.c.h.b16 %v8704
    %v9683 = vunpack.c.l.b16 %v8705
    %v9684 = vunpack.c.h.b16 %v8705
    %v9685 = vunpack.c.l.b16 %v8706
    %v9686 = vunpack.c.h.b16 %v8706
    %v9687 = vunpack.c.l.b16 %v8707
    %v9688 = vunpack.c.h.b16 %v8707
    %v9689 = vunpack.c.l.b16 %v8708
    %v9690 = vunpack.c.h.b16 %v8708
    %v9691 = vunpack.c.l.b16 %v8709
    %v9692 = vunpack.c.h.b16 %v8709
    %v9693 = vunpack.c.l.b16 %v8710
    %v9694 = vunpack.c.h.b16 %v8710
    %v9695 = vunpack.c.l.b16 %v8711
    %v9696 = vunpack.c.h.b16 %v8711
    %v9697 = vunpack.c.l.b16 %v8712
    %v9698 = vunpack.c.h.b16 %v8712
    %v9699 = vunpack.c.l.b16 %v8713
    %v9700 = vunpack.c.h.b16 %v8713
    %v9701 = vunpack.c.l.b16 %v8714
    %v9702 = vunpack.c.h.b16 %v8714
    %v9703 = vunpack.c.l.b16 %v8715
    %v9704 = vunpack.c.h.b16 %v8715
    %v9705 = vunpack.c.l.b16 %v8716
    %v9706 = vunpack.c.h.b16 %v8716
    %v9707 = vunpack.c.l.b16 %v8717
    %v9708 = vunpack.c.h.b16 %v8717
    %v9709 = vunpack.c.l.b16 %v8718
    %v9710 = vunpack.c.h.b16 %v8718
    %v9711 = vunpack.c.l.b16 %v8719
    %v9712 = vunpack.c.h.b16 %v8719
    %v9713 = vunpack.c.l.b16 %v8720
    %v9714 = vunpack.c.h.b16 %v8720
    %v9715 = vunpack.c.l.b16 %v8721
    %v9716 = vunpack.c.h.b16 %v8721
    %v9717 = vunpack.c.l.b16 %v8722
    %v9718 = vunpack.c.h.b16 %v8722
    %v9719 = vunpack.c.l.b16 %v8723
    %v9720 = vunpack.c.h.b16 %v8723
    %v9721 = vunpack.c.l.b16 %v8724
    %v9722 = vunpack.c.h.b16 %v8724
    %v9723 = vunpack.c.l.b16 %v8725
    %v9724 = vunpack.c.h.b16 %v8725
    %v9725 = vunpack.c.l.b16 %v8726
    %v9726 = vunpack.c.h.b16 %v8726
    %v9727 = vunpack.c.l.b16 %v8727
    %v9728 = vunpack.c.h.b16 %v8727
    %v9729 = vunpack.c.l.b16 %v8728
    %v9730 = vunpack.c.h.b16 %v8728
    %v9731 = vunpack.c.l.b16 %v8729
    %v9732 = vunpack.c.h.b16 %v8729
    %v9733 = vunpack.c.l.b16 %v8730
    %v9734 = vunpack.c.h.b16 %v8730
    %v9735 = vunpack.c.l.b16 %v8731
    %v9736 = vunpack.c.h.b16 %v8731
    %v9737 = vunpack.c.l.b16 %v8732
    %v9738 = vunpack.c.h.b16 %v8732
    %v9739 = vunpack.c.l.b16 %v8733
    %v9740 = vunpack.c.h.b16 %v8733
    %v9741 = vunpack.c.l.b16 %v8734
    %v9742 = vunpack.c.h.b16 %v8734
    %v9743 = vunpack.c.l.b16 %v8735
    %v9744 = vunpack.c.h.b16 %v8735
    %v9745 = vunpack.c.l.b16 %v8736
    %v9746 = vunpack.c.h.b16 %v8736
    %v9747 = vunpack.c.l.b16 %v8737
    %v9748 = vunpack.c.h.b16 %v8737
    %v9749 = vunpack.c.l.b16 %v8738
    %v9750 = vunpack.c.h.b16 %v8738
    %v9751 = vunpack.c.l.b16 %v8739
    %v9752 = vunpack.c.h.b16 %v8739
    %v9753 = vunpack.c.l.b16 %v8740
    %v9754 = vunpack.c.h.b16 %v8740
    %v9755 = vunpack.c.l.b16 %v8741
    %v9756 = vunpack.c.h.b16 %v8741
    %v9757 = vunpack.c.l.b16 %v8742
    %v9758 = vunpack.c.h.b16 %v8742
    %v9759 = vunpack.c.l.b16 %v8743
    %v9760 = vunpack.c.h.b16 %v8743
    %v9761 = vunpack.c.l.b16 %v8744
    %v9762 = vunpack.c.h.b16 %v8744
    %v9763 = vunpack.c.l.b16 %v8745
    %v9764 = vunpack.c.h.b16 %v8745
    %v9765 = vunpack.c.l.b16 %v8746
    %v9766 = vunpack.c.h.b16 %v8746
    %v9767 = vunpack.c.l.b16 %v8747
    %v9768 = vunpack.c.h.b16 %v8747
    %v9769 = vunpack.c.l.b16 %v8748
    %v9770 = vunpack.c.h.b16 %v8748
    %v9771 = vunpack.c.l.b16 %v8749
    %v9772 = vunpack.c.h.b16 %v8749
    %v9773 = vunpack.c.l.b16 %v8750
    %v9774 = vunpack.c.h.b16 %v8750
    %v9775 = vunpack.c.l.b16 %v8751
    %v9776 = vunpack.c.h.b16 %v8751
    %v9777 = vunpack.c.l.b16 %v8752
    %v9778 = vunpack.c.h.b16 %v8752
    %v9779 = vunpack.c.l.b16 %v8753
    %v9780 = vunpack.c.h.b16 %v8753
    %v9781 = vunpack.c.l.b16 %v8754
    %v9782 = vunpack.c.h.b16 %v8754
    %v9783 = vunpack.c.l.b16 %v8755
    %v9784 = vunpack.c.h.b16 %v8755
    %v9785 = vunpack.c.l.b16 %v8756
    %v9786 = vunpack.c.h.b16 %v8756
    %v9787 = vunpack.c.l.b16 %v8757
    %v9788 = vunpack.c.h.b16 %v8757
    %v9789 = vunpack.c.l.b16 %v8758
    %v9790 = vunpack.c.h.b16 %v8758
    %v9791 = vunpack.c.l.b16 %v8759
    %v9792 = vunpack.c.h.b16 %v8759
    %v9793 = vunpack.c.l.b16 %v8760
    %v9794 = vunpack.c.h.b16 %v8760
    %v9795 = vunpack.c.l.b16 %v8761
    %v9796 = vunpack.c.h.b16 %v8761
    %v9797 = vunpack.c.l.b16 %v8762
    %v9798 = vunpack.c.h.b16 %v8762
    %v9799 = vunpack.c.l.b16 %v8763
    %v9800 = vunpack.c.h.b16 %v8763
    %v9801 = vunpack.c.l.b16 %v8764
    %v9802 = vunpack.c.h.b16 %v8764
    %v9803 = vunpack.c.l.b16 %v8765
    %v9804 = vunpack.c.h.b16 %v8765
    %v9805 = vunpack.c.l.b16 %v8766
    %v9806 = vunpack.c.h.b16 %v8766
    %v9807 = vunpack.c.l.b16 %v8767
    %v9808 = vunpack.c.h.b16 %v8767
    %v9809 = vunpack.c.l.b16 %v8768
    %v9810 = vunpack.c.h.b16 %v8768
    %v9811 = vunpack.c.l.b16 %v8769
    %v9812 = vunpack.c.h.b16 %v8769
    %v9813 = vunpack.c.l.b16 %v8770
    %v9814 = vunpack.c.h.b16 %v8770
    %v9815 = vunpack.c.l.b16 %v8771
    %v9816 = vunpack.c.h.b16 %v8771
    %v9817 = vunpack.c.l.b16 %v8772
    %v9818 = vunpack.c.h.b16 %v8772
    %v9819 = vunpack.c.l.b16 %v8773
    %v9820 = vunpack.c.h.b16 %v8773
    %v9821 = vunpack.c.l.b16 %v8774
    %v9822 = vunpack.c.h.b16 %v8774
    %v9823 = vunpack.c.l.b16 %v8775
    %v9824 = vunpack.c.h.b16 %v8775
    %v9825 = vunpack.c.l.b16 %v8776
    %v9826 = vunpack.c.h.b16 %v8776
    %v9827 = vunpack.c.l.b16 %v8777
    %v9828 = vunpack.c.h.b16 %v8777
    %v9829 = vunpack.c.l.b16 %v8778
    %v9830 = vunpack.c.h.b16 %v8778
    %v9831 = vunpack.c.l.b16 %v8779
    %v9832 = vunpack.c.h.b16 %v8779
    %v9833 = vunpack.c.l.b16 %v8780
    %v9834 = vunpack.c.h.b16 %v8780
    %v9835 = vunpack.c.l.b16 %v8781
    %v9836 = vunpack.c.h.b16 %v8781
    %v9837 = vunpack.c.l.b16 %v8782
    %v9838 = vunpack.c.h.b16 %v8782
    %v9839 = vunpack.c.l.b16 %v8783
    %v9840 = vunpack.c.h.b16 %v8783
    %v9841 = vunpack.c.l.b16 %v8784
    %v9842 = vunpack.c.h.b16 %v8784
    %v9843 = vunpack.c.l.b16 %v8785
    %v9844 = vunpack.c.h.b16 %v8785
    %v9845 = vunpack.c.l.b16 %v8786
    %v9846 = vunpack.c.h.b16 %v8786
    %v9847 = vunpack.c.l.b16 %v8787
    %v9848 = vunpack.c.h.b16 %v8787
    %v9849 = vunpack.c.l.b16 %v8788
    %v9850 = vunpack.c.h.b16 %v8788
    %v9851 = vunpack.c.l.b16 %v8789
    %v9852 = vunpack.c.h.b16 %v8789
    %v9853 = vunpack.c.l.b16 %v8790
    %v9854 = vunpack.c.h.b16 %v8790
    %v9855 = vunpack.c.l.b16 %v8791
    %v9856 = vunpack.c.h.b16 %v8791
    %v9857 = vunpack.c.l.b16 %v8792
    %v9858 = vunpack.c.h.b16 %v8792
    %v9859 = vunpack.c.l.b16 %v8793
    %v9860 = vunpack.c.h.b16 %v8793
    %v9861 = vunpack.c.l.b16 %v8794
    %v9862 = vunpack.c.h.b16 %v8794
    %v9863 = vunpack.c.l.b16 %v8795
    %v9864 = vunpack.c.h.b16 %v8795
    %v9865 = vunpack.c.l.b16 %v8796
    %v9866 = vunpack.c.h.b16 %v8796
    %v9867 = vunpack.c.l.b16 %v8797
    %v9868 = vunpack.c.h.b16 %v8797
    %v9869 = vunpack.c.l.b16 %v8798
    %v9870 = vunpack.c.h.b16 %v8798
    %v9871 = vunpack.c.l.b16 %v8799
    %v9872 = vunpack.c.h.b16 %v8799
    %v9873 = vunpack.c.l.b16 %v8800
    %v9874 = vunpack.c.h.b16 %v8800
    %v9875 = vunpack.c.l.b16 %v8801
    %v9876 = vunpack.c.h.b16 %v8801
    %v9877 = vunpack.c.l.b16 %v8802
    %v9878 = vunpack.c.h.b16 %v8802
    %v9879 = vunpack.c.l.b16 %v8803
    %v9880 = vunpack.c.h.b16 %v8803
    %v9881 = vunpack.c.l.b16 %v8804
    %v9882 = vunpack.c.h.b16 %v8804
    %v9883 = vunpack.c.l.b16 %v8805
    %v9884 = vunpack.c.h.b16 %v8805
    %v9885 = vunpack.c.l.b16 %v8806
    %v9886 = vunpack.c.h.b16 %v8806
    %v9887 = vunpack.c.l.b16 %v8807
    %v9888 = vunpack.c.h.b16 %v8807
    %v9889 = vunpack.c.l.b16 %v8808
    %v9890 = vunpack.c.h.b16 %v8808
    %v9891 = vunpack.c.l.b16 %v8809
    %v9892 = vunpack.c.h.b16 %v8809
    %v9893 = vunpack.c.l.b16 %v8810
    %v9894 = vunpack.c.h.b16 %v8810
    %v9895 = vunpack.c.l.b16 %v8811
    %v9896 = vunpack.c.h.b16 %v8811
    %v9897 = vunpack.c.l.b16 %v8812
    %v9898 = vunpack.c.h.b16 %v8812
    %v9899 = vunpack.c.l.b16 %v8813
    %v9900 = vunpack.c.h.b16 %v8813
    %v9901 = vunpack.c.l.b16 %v8814
    %v9902 = vunpack.c.h.b16 %v8814
    %v9903 = vunpack.c.l.b16 %v8815
    %v9904 = vunpack.c.h.b16 %v8815
    %v9905 = vunpack.c.l.b16 %v8816
    %v9906 = vunpack.c.h.b16 %v8816
    %v9907 = vunpack.c.l.b16 %v8817
    %v9908 = vunpack.c.h.b16 %v8817
    %v9909 = vunpack.c.l.b16 %v8818
    %v9910 = vunpack.c.h.b16 %v8818
    %v9911 = vunpack.c.l.b16 %v8819
    %v9912 = vunpack.c.h.b16 %v8819
    %v9913 = vunpack.c.l.b16 %v8820
    %v9914 = vunpack.c.h.b16 %v8820
    %v9915 = vunpack.c.l.b16 %v8821
    %v9916 = vunpack.c.h.b16 %v8821
    %v9917 = vunpack.c.l.b16 %v8822
    %v9918 = vunpack.c.h.b16 %v8822
    %v9919 = vunpack.c.l.b16 %v8823
    %v9920 = vunpack.c.h.b16 %v8823
    %v9921 = vunpack.c.l.b16 %v8824
    %v9922 = vunpack.c.h.b16 %v8824
    %v9923 = vunpack.c.l.b16 %v8825
    %v9924 = vunpack.c.h.b16 %v8825
    %v9925 = vunpack.c.l.b16 %v8826
    %v9926 = vunpack.c.h.b16 %v8826
    %v9927 = vunpack.c.l.b16 %v8827
    %v9928 = vunpack.c.h.b16 %v8827
    %v9929 = vunpack.c.l.b16 %v8828
    %v9930 = vunpack.c.h.b16 %v8828
    %v9931 = vunpack.c.l.b16 %v8829
    %v9932 = vunpack.c.h.b16 %v8829
    %v9933 = vunpack.c.l.b16 %v8830
    %v9934 = vunpack.c.h.b16 %v8830
    %v9935 = vunpack.c.l.b16 %v8831
    %v9936 = vunpack.c.h.b16 %v8831
    %v9937 = vunpack.c.l.b16 %v8832
    %v9938 = vunpack.c.h.b16 %v8832
    %v9939 = vunpack.c.l.b16 %v8833
    %v9940 = vunpack.c.h.b16 %v8833
    %v9941 = vunpack.c.l.b16 %v8834
    %v9942 = vunpack.c.h.b16 %v8834
    %v9943 = vunpack.c.l.b16 %v8835
    %v9944 = vunpack.c.h.b16 %v8835
    %v9945 = vunpack.c.l.b16 %v8836
    %v9946 = vunpack.c.h.b16 %v8836
    %v9947 = vunpack.c.l.b16 %v8837
    %v9948 = vunpack.c.h.b16 %v8837
    %v9949 = vunpack.c.l.b16 %v8838
    %v9950 = vunpack.c.h.b16 %v8838
    %v9951 = vunpack.c.l.b16 %v8839
    %v9952 = vunpack.c.h.b16 %v8839
    %v9953 = vunpack.c.l.b16 %v8840
    %v9954 = vunpack.c.h.b16 %v8840
    %v9955 = vunpack.c.l.b16 %v8841
    %v9956 = vunpack.c.h.b16 %v8841
    %v9957 = vunpack.c.l.b16 %v8842
    %v9958 = vunpack.c.h.b16 %v8842
    %v9959 = vunpack.c.l.b16 %v8843
    %v9960 = vunpack.c.h.b16 %v8843
    %v9961 = vunpack.c.l.b16 %v8844
    %v9962 = vunpack.c.h.b16 %v8844
    %v9963 = vunpack.c.l.b16 %v8845
    %v9964 = vunpack.c.h.b16 %v8845
    %v9965 = vunpack.c.l.b16 %v8846
    %v9966 = vunpack.c.h.b16 %v8846
    %v9967 = vunpack.c.l.b16 %v8847
    %v9968 = vunpack.c.h.b16 %v8847
    %v9969 = vunpack.c.l.b16 %v8848
    %v9970 = vunpack.c.h.b16 %v8848
    %v9971 = vunpack.c.l.b16 %v8849
    %v9972 = vunpack.c.h.b16 %v8849
    %v9973 = vunpack.c.l.b16 %v8850
    %v9974 = vunpack.c.h.b16 %v8850
    %v9975 = vunpack.c.l.b16 %v8851
    %v9976 = vunpack.c.h.b16 %v8851
    %v9977 = vunpack.c.l.b16 %v8852
    %v9978 = vunpack.c.h.b16 %v8852
    %v9979 = vunpack.c.l.b16 %v8853
    %v9980 = vunpack.c.h.b16 %v8853
    %v9981 = vunpack.c.l.b16 %v8854
    %v9982 = vunpack.c.h.b16 %v8854
    %v9983 = vunpack.c.l.b16 %v8855
    %v9984 = vunpack.c.h.b16 %v8855
    %v9985 = vunpack.c.l.b16 %v8856
    %v9986 = vunpack.c.h.b16 %v8856
    %v9987 = vunpack.c.l.b16 %v8857
    %v9988 = vunpack.c.h.b16 %v8857
    %v9989 = vunpack.c.l.b16 %v8858
    %v9990 = vunpack.c.h.b16 %v8858
    %v9991 = vunpack.c.l.b16 %v8859
    %v9992 = vunpack.c.h.b16 %v8859
    %v9993 = vunpack.c.l.b16 %v8860
    %v9994 = vunpack.c.h.b16 %v8860
    %v9995 = vunpack.c.l.b16 %v8861
    %v9996 = vunpack.c.h.b16 %v8861
    %v9997 = vunpack.c.l.b16 %v8862
    %v9998 = vunpack.c.h.b16 %v8862
    %v9999 = vunpack.c.l.b16 %v8863
    %v10000 = vunpack.c.h.b16 %v8863
    %v10001 = vunpack.c.l.b16 %v8864
    %v10002 = vunpack.c.h.b16 %v8864
    %v10003 = vunpack.c.l.b16 %v8865
    %v10004 = vunpack.c.h.b16 %v8865
    %v10005 = vunpack.c.l.b16 %v8866
    %v10006 = vunpack.c.h.b16 %v8866
    %v10007 = vunpack.c.l.b16 %v8867
    %v10008 = vunpack.c.h.b16 %v8867
    %v10009 = vunpack.c.l.b16 %v8868
    %v10010 = vunpack.c.h.b16 %v8868
    %v10011 = vunpack.c.l.b16 %v8869
    %v10012 = vunpack.c.h.b16 %v8869
    %v10013 = vunpack.c.l.b16 %v8870
    %v10014 = vunpack.c.h.b16 %v8870
    %v10015 = vunpack.c.l.b16 %v8871
    %v10016 = vunpack.c.h.b16 %v8871
    %v10017 = vunpack.c.l.b16 %v8872
    %v10018 = vunpack.c.h.b16 %v8872
    %v10019 = vunpack.c.l.b16 %v8873
    %v10020 = vunpack.c.h.b16 %v8873
    %v10021 = vunpack.c.l.b16 %v8874
    %v10022 = vunpack.c.h.b16 %v8874
    %v10023 = vunpack.c.l.b16 %v8875
    %v10024 = vunpack.c.h.b16 %v8875
    %v10025 = vunpack.c.l.b16 %v8876
    %v10026 = vunpack.c.h.b16 %v8876
    %v10027 = vunpack.c.l.b16 %v8877
    %v10028 = vunpack.c.h.b16 %v8877
    %v10029 = vunpack.c.l.b16 %v8878
    %v10030 = vunpack.c.h.b16 %v8878
    %v10031 = vunpack.c.l.b16 %v8879
    %v10032 = vunpack.c.h.b16 %v8879
    %v10033 = vunpack.c.l.b16 %v8880
    %v10034 = vunpack.c.h.b16 %v8880
    %v10035 = vunpack.c.l.b16 %v8881
    %v10036 = vunpack.c.h.b16 %v8881
    %v10037 = vunpack.c.l.b16 %v8882
    %v10038 = vunpack.c.h.b16 %v8882
    %v10039 = vunpack.c.l.b16 %v8883
    %v10040 = vunpack.c.h.b16 %v8883
    %v10041 = vunpack.c.l.b16 %v8884
    %v10042 = vunpack.c.h.b16 %v8884
    %v10043 = vunpack.c.l.b16 %v8885
    %v10044 = vunpack.c.h.b16 %v8885
    %v10045 = vunpack.c.l.b16 %v8886
    %v10046 = vunpack.c.h.b16 %v8886
    %v10047 = vunpack.c.l.b16 %v8887
    %v10048 = vunpack.c.h.b16 %v8887
    %v10049 = vunpack.c.l.b16 %v8888
    %v10050 = vunpack.c.h.b16 %v8888
    %v10051 = vunpack.c.l.b16 %v8889
    %v10052 = vunpack.c.h.b16 %v8889
    %v10053 = vunpack.c.l.b16 %v8890
    %v10054 = vunpack.c.h.b16 %v8890
    %v10055 = vunpack.c.l.b16 %v8891
    %v10056 = vunpack.c.h.b16 %v8891
    %v10057 = vunpack.c.l.b16 %v8892
    %v10058 = vunpack.c.h.b16 %v8892
    %v10059 = vunpack.c.l.b16 %v8893
    %v10060 = vunpack.c.h.b16 %v8893
    %v10061 = vunpack.c.l.b16 %v8894
    %v10062 = vunpack.c.h.b16 %v8894
    %v10063 = vunpack.c.l.b16 %v8895
    %v10064 = vunpack.c.h.b16 %v8895
    %v10065 = vunpack.c.l.b16 %v8896
    %v10066 = vunpack.c.h.b16 %v8896
    %v10067 = vunpack.c.l.b16 %v8897
    %v10068 = vunpack.c.h.b16 %v8897
    %v10069 = vunpack.c.l.b16 %v8898
    %v10070 = vunpack.c.h.b16 %v8898
    %v10071 = vunpack.c.l.b16 %v8899
    %v10072 = vunpack.c.h.b16 %v8899
    %v10073 = vunpack.c.l.b16 %v8900
    %v10074 = vunpack.c.h.b16 %v8900
    %v10075 = vunpack.c.l.b16 %v8901
    %v10076 = vunpack.c.h.b16 %v8901
    %v10077 = vunpack.c.l.b16 %v8902
    %v10078 = vunpack.c.h.b16 %v8902
    %v10079 = vunpack.c.l.b16 %v8903
    %v10080 = vunpack.c.h.b16 %v8903
    %v10081 = vunpack.c.l.b16 %v8904
    %v10082 = vunpack.c.h.b16 %v8904
    %v10083 = vunpack.c.l.b16 %v8905
    %v10084 = vunpack.c.h.b16 %v8905
    %v10085 = vunpack.c.l.b16 %v8906
    %v10086 = vunpack.c.h.b16 %v8906
    %v10087 = vunpack.c.l.b16 %v8907
    %v10088 = vunpack.c.h.b16 %v8907
    %v10089 = vunpack.c.l.b16 %v8908
    %v10090 = vunpack.c.h.b16 %v8908
    %v10091 = vunpack.c.l.b16 %v8909
    %v10092 = vunpack.c.h.b16 %v8909
    %v10093 = vunpack.c.l.b16 %v8910
    %v10094 = vunpack.c.h.b16 %v8910
    %v10095 = vunpack.c.l.b16 %v8911
    %v10096 = vunpack.c.h.b16 %v8911
    %v10097 = vunpack.c.l.b16 %v8912
    %v10098 = vunpack.c.h.b16 %v8912
    %v10099 = vunpack.c.l.b16 %v8913
    %v10100 = vunpack.c.h.b16 %v8913
    %v10101 = vunpack.c.l.b16 %v8914
    %v10102 = vunpack.c.h.b16 %v8914
    %v10103 = vunpack.c.l.b16 %v8915
    %v10104 = vunpack.c.h.b16 %v8915
    %v10105 = vunpack.c.l.b16 %v8916
    %v10106 = vunpack.c.h.b16 %v8916
    %v10107 = vunpack.c.l.b16 %v8917
    %v10108 = vunpack.c.h.b16 %v8917
    %v10109 = vunpack.c.l.b16 %v8918
    %v10110 = vunpack.c.h.b16 %v8918
    %v10111 = vunpack.c.l.b16 %v8919
    %v10112 = vunpack.c.h.b16 %v8919
    %v10113 = vunpack.c.l.b16 %v8920
    %v10114 = vunpack.c.h.b16 %v8920
    %v10115 = vunpack.c.l.b16 %v8921
    %v10116 = vunpack.c.h.b16 %v8921
    %v10117 = vunpack.c.l.b16 %v8922
    %v10118 = vunpack.c.h.b16 %v8922
    %v10119 = vunpack.c.l.b16 %v8923
    %v10120 = vunpack.c.h.b16 %v8923
    %v10121 = vunpack.c.l.b16 %v8924
    %v10122 = vunpack.c.h.b16 %v8924
    %v10123 = vunpack.c.l.b16 %v8925
    %v10124 = vunpack.c.h.b16 %v8925
    %v10125 = vunpack.c.l.b16 %v8926
    %v10126 = vunpack.c.h.b16 %v8926
    %v10127 = vunpack.c.l.b16 %v8927
    %v10128 = vunpack.c.h.b16 %v8927
    %v10129 = vunpack.c.l.b16 %v8928
    %v10130 = vunpack.c.h.b16 %v8928
    %v10131 = vunpack.c.l.b16 %v8929
    %v10132 = vunpack.c.h.b16 %v8929
    %v10133 = vunpack.c.l.b16 %v8930
    %v10134 = vunpack.c.h.b16 %v8930
    %v10135 = vunpack.c.l.b16 %v8931
    %v10136 = vunpack.c.h.b16 %v8931
    %v10137 = vunpack.c.l.b16 %v8932
    %v10138 = vunpack.c.h.b16 %v8932
    %v10139 = vunpack.c.l.b16 %v8933
    %v10140 = vunpack.c.h.b16 %v8933
    %v10141 = vunpack.c.l.b16 %v8934
    %v10142 = vunpack.c.h.b16 %v8934
    %v10143 = vunpack.c.l.b16 %v8935
    %v10144 = vunpack.c.h.b16 %v8935
    %v10145 = vunpack.c.l.b16 %v8936
    %v10146 = vunpack.c.h.b16 %v8936
    %v10147 = vunpack.c.l.b16 %v8937
    %v10148 = vunpack.c.h.b16 %v8937
    %v10149 = vunpack.c.l.b16 %v8938
    %v10150 = vunpack.c.h.b16 %v8938
    %v10151 = vunpack.c.l.b16 %v8939
    %v10152 = vunpack.c.h.b16 %v8939
    %v10153 = vunpack.c.l.b16 %v8940
    %v10154 = vunpack.c.h.b16 %v8940
    %v10155 = vunpack.c.l.b16 %v8941
    %v10156 = vunpack.c.h.b16 %v8941
    %v10157 = vunpack.c.l.b16 %v8942
    %v10158 = vunpack.c.h.b16 %v8942
    %v10159 = vunpack.c.l.b16 %v8943
    %v10160 = vunpack.c.h.b16 %v8943
    %v10161 = vunpack.c.l.b16 %v8944
    %v10162 = vunpack.c.h.b16 %v8944
    %v10163 = vunpack.c.l.b16 %v8945
    %v10164 = vunpack.c.h.b16 %v8945
    %v10165 = vunpack.c.l.b16 %v8946
    %v10166 = vunpack.c.h.b16 %v8946
    %v10167 = vunpack.c.l.b16 %v8947
    %v10168 = vunpack.c.h.b16 %v8947
    %v10169 = vunpack.c.l.b16 %v8948
    %v10170 = vunpack.c.h.b16 %v8948
    %v10171 = vunpack.c.l.b16 %v8949
    %v10172 = vunpack.c.h.b16 %v8949
    %v10173 = vunpack.c.l.b16 %v8950
    %v10174 = vunpack.c.h.b16 %v8950
    %v10175 = vpack.c.b16 %v9385, %v9375
    %v10176 = vpack.c.b16 %v9386, %v9376
    %v10177 = vpack.c.b16 %v9387, %v9377
    %v10178 = vpack.c.b16 %v9388, %v9378
    %v10179 = vpack.c.b16 %v9389, %v9379
    %v10180 = vpack.c.b16 %v9390, %v9380
    %v10181 = vpack.c.b16 %v9391, %v9381
    %v10182 = vpack.c.b16 %v9392, %v9382
    %v10183 = vpack.c.b16 %v9393, %v9383
    %v10184 = vpack.c.b16 %v9394, %v9384
    %v10185 = vpack.c.b16 %v9405, %v9395
    %v10186 = vpack.c.b16 %v9406, %v9396
    %v10187 = vpack.c.b16 %v9407, %v9397
    %v10188 = vpack.c.b16 %v9408, %v9398
    %v10189 = vpack.c.b16 %v9409, %v9399
    %v10190 = vpack.c.b16 %v9410, %v9400
    %v10191 = vpack.c.b16 %v9411, %v9401
    %v10192 = vpack.c.b16 %v9412, %v9402
    %v10193 = vpack.c.b16 %v9413, %v9403
    %v10194 = vpack.c.b16 %v9414, %v9404
    %v10195 = vpack.c.b16 %v9425, %v9415
    %v10196 = vpack.c.b16 %v9426, %v9416
    %v10197 = vpack.c.b16 %v9427, %v9417
    %v10198 = vpack.c.b16 %v9428, %v9418
    %v10199 = vpack.c.b16 %v9429, %v9419
    %v10200 = vpack.c.b16 %v9430, %v9420
    %v10201 = vpack.c.b16 %v9431, %v9421
    %v10202 = vpack.c.b16 %v9432, %v9422
    %v10203 = vpack.c.b16 %v9433, %v9423
    %v10204 = vpack.c.b16 %v9434, %v9424
    %v10205 = vpack.c.b16 %v9445, %v9435
    %v10206 = vpack.c.b16 %v9446, %v9436
    %v10207 = vpack.c.b16 %v9447, %v9437
    %v10208 = vpack.c.b16 %v9448, %v9438
    %v10209 = vpack.c.b16 %v9449, %v9439
    %v10210 = vpack.c.b16 %v9450, %v9440
    %v10211 = vpack.c.b16 %v9451, %v9441
    %v10212 = vpack.c.b16 %v9452, %v9442
    %v10213 = vpack.c.b16 %v9453, %v9443
    %v10214 = vpack.c.b16 %v9454, %v9444
    %v10215 = vpack.c.b16 %v9465, %v9455
    %v10216 = vpack.c.b16 %v9466, %v9456
    %v10217 = vpack.c.b16 %v9467, %v9457
    %v10218 = vpack.c.b16 %v9468, %v9458
    %v10219 = vpack.c.b16 %v9469, %v9459
    %v10220 = vpack.c.b16 %v9470, %v9460
    %v10221 = vpack.c.b16 %v9471, %v9461
    %v10222 = vpack.c.b16 %v9472, %v9462
    %v10223 = vpack.c.b16 %v9473, %v9463
    %v10224 = vpack.c.b16 %v9474, %v9464
    %v10225 = vpack.c.b16 %v9485, %v9475
    %v10226 = vpack.c.b16 %v9486, %v9476
    %v10227 = vpack.c.b16 %v9487, %v9477
    %v10228 = vpack.c.b16 %v9488, %v9478
    %v10229 = vpack.c.b16 %v9489, %v9479
    %v10230 = vpack.c.b16 %v9490, %v9480
    %v10231 = vpack.c.b16 %v9491, %v9481
    %v10232 = vpack.c.b16 %v9492, %v9482
    %v10233 = vpack.c.b16 %v9493, %v9483
    %v10234 = vpack.c.b16 %v9494, %v9484
    %v10235 = vpack.c.b16 %v9505, %v9495
    %v10236 = vpack.c.b16 %v9506, %v9496
    %v10237 = vpack.c.b16 %v9507, %v9497
    %v10238 = vpack.c.b16 %v9508, %v9498
    %v10239 = vpack.c.b16 %v9509, %v9499
    %v10240 = vpack.c.b16 %v9510, %v9500
    %v10241 = vpack.c.b16 %v9511, %v9501
    %v10242 = vpack.c.b16 %v9512, %v9502
    %v10243 = vpack.c.b16 %v9513, %v9503
    %v10244 = vpack.c.b16 %v9514, %v9504
    %v10245 = vpack.c.b16 %v9525, %v9515
    %v10246 = vpack.c.b16 %v9526, %v9516
    %v10247 = vpack.c.b16 %v9527, %v9517
    %v10248 = vpack.c.b16 %v9528, %v9518
    %v10249 = vpack.c.b16 %v9529, %v9519
    %v10250 = vpack.c.b16 %v9530, %v9520
    %v10251 = vpack.c.b16 %v9531, %v9521
    %v10252 = vpack.c.b16 %v9532, %v9522
    %v10253 = vpack.c.b16 %v9533, %v9523
    %v10254 = vpack.c.b16 %v9534, %v9524
    %v10255 = vpack.c.b16 %v9545, %v9535
    %v10256 = vpack.c.b16 %v9546, %v9536
    %v10257 = vpack.c.b16 %v9547, %v9537
    %v10258 = vpack.c.b16 %v9548, %v9538
    %v10259 = vpack.c.b16 %v9549, %v9539
    %v10260 = vpack.c.b16 %v9550, %v9540
    %v10261 = vpack.c.b16 %v9551, %v9541
    %v10262 = vpack.c.b16 %v9552, %v9542
    %v10263 = vpack.c.b16 %v9553, %v9543
    %v10264 = vpack.c.b16 %v9554, %v9544
    %v10265 = vpack.c.b16 %v9565, %v9555
    %v10266 = vpack.c.b16 %v9566, %v9556
    %v10267 = vpack.c.b16 %v9567, %v9557
    %v10268 = vpack.c.b16 %v9568, %v9558
    %v10269 = vpack.c.b16 %v9569, %v9559
    %v10270 = vpack.c.b16 %v9570, %v9560
    %v10271 = vpack.c.b16 %v9571, %v9561
    %v10272 = vpack.c.b16 %v9572, %v9562
    %v10273 = vpack.c.b16 %v9573, %v9563
    %v10274 = vpack.c.b16 %v9574, %v9564
    %v10275 = vpack.c.b16 %v9585, %v9575
    %v10276 = vpack.c.b16 %v9586, %v9576
    %v10277 = vpack.c.b16 %v9587, %v9577
    %v10278 = vpack.c.b16 %v9588, %v9578
    %v10279 = vpack.c.b16 %v9589, %v9579
    %v10280 = vpack.c.b16 %v9590, %v9580
    %v10281 = vpack.c.b16 %v9591, %v9581
    %v10282 = vpack.c.b16 %v9592, %v9582
    %v10283 = vpack.c.b16 %v9593, %v9583
    %v10284 = vpack.c.b16 %v9594, %v9584
    %v10285 = vpack.c.b16 %v9605, %v9595
    %v10286 = vpack.c.b16 %v9606, %v9596
    %v10287 = vpack.c.b16 %v9607, %v9597
    %v10288 = vpack.c.b16 %v9608, %v9598
    %v10289 = vpack.c.b16 %v9609, %v9599
    %v10290 = vpack.c.b16 %v9610, %v9600
    %v10291 = vpack.c.b16 %v9611, %v9601
    %v10292 = vpack.c.b16 %v9612, %v9602
    %v10293 = vpack.c.b16 %v9613, %v9603
    %v10294 = vpack.c.b16 %v9614, %v9604
    %v10295 = vpack.c.b16 %v9625, %v9615
    %v10296 = vpack.c.b16 %v9626, %v9616
    %v10297 = vpack.c.b16 %v9627, %v9617
    %v10298 = vpack.c.b16 %v9628, %v9618
    %v10299 = vpack.c.b16 %v9629, %v9619
    %v10300 = vpack.c.b16 %v9630, %v9620
    %v10301 = vpack.c.b16 %v9631, %v9621
    %v10302 = vpack.c.b16 %v9632, %v9622
    %v10303 = vpack.c.b16 %v9633, %v9623
    %v10304 = vpack.c.b16 %v9634, %v9624
    %v10305 = vpack.c.b16 %v9645, %v9635
    %v10306 = vpack.c.b16 %v9646, %v9636
    %v10307 = vpack.c.b16 %v9647, %v9637
    %v10308 = vpack.c.b16 %v9648, %v9638
    %v10309 = vpack.c.b16 %v9649, %v9639
    %v10310 = vpack.c.b16 %v9650, %v9640
    %v10311 = vpack.c.b16 %v9651, %v9641
    %v10312 = vpack.c.b16 %v9652, %v9642
    %v10313 = vpack.c.b16 %v9653, %v9643
    %v10314 = vpack.c.b16 %v9654, %v9644
    %v10315 = vpack.c.b16 %v9665, %v9655
    %v10316 = vpack.c.b16 %v9666, %v9656
    %v10317 = vpack.c.b16 %v9667, %v9657
    %v10318 = vpack.c.b16 %v9668, %v9658
    %v10319 = vpack.c.b16 %v9669, %v9659
    %v10320 = vpack.c.b16 %v9670, %v9660
    %v10321 = vpack.c.b16 %v9671, %v9661
    %v10322 = vpack.c.b16 %v9672, %v9662
    %v10323 = vpack.c.b16 %v9673, %v9663
    %v10324 = vpack.c.b16 %v9674, %v9664
    %v10325 = vpack.c.b16 %v9685, %v9675
    %v10326 = vpack.c.b16 %v9686, %v9676
    %v10327 = vpack.c.b16 %v9687, %v9677
    %v10328 = vpack.c.b16 %v9688, %v9678
    %v10329 = vpack.c.b16 %v9689, %v9679
    %v10330 = vpack.c.b16 %v9690, %v9680
    %v10331 = vpack.c.b16 %v9691, %v9681
    %v10332 = vpack.c.b16 %v9692, %v9682
    %v10333 = vpack.c.b16 %v9693, %v9683
    %v10334 = vpack.c.b16 %v9694, %v9684
    %v10335 = vpack.c.b16 %v9705, %v9695
    %v10336 = vpack.c.b16 %v9706, %v9696
    %v10337 = vpack.c.b16 %v9707, %v9697
    %v10338 = vpack.c.b16 %v9708, %v9698
    %v10339 = vpack.c.b16 %v9709, %v9699
    %v10340 = vpack.c.b16 %v9710, %v9700
    %v10341 = vpack.c.b16 %v9711, %v9701
    %v10342 = vpack.c.b16 %v9712, %v9702
    %v10343 = vpack.c.b16 %v9713, %v9703
    %v10344 = vpack.c.b16 %v9714, %v9704
    %v10345 = vpack.c.b16 %v9725, %v9715
    %v10346 = vpack.c.b16 %v9726, %v9716
    %v10347 = vpack.c.b16 %v9727, %v9717
    %v10348 = vpack.c.b16 %v9728, %v9718
    %v10349 = vpack.c.b16 %v9729, %v9719
    %v10350 = vpack.c.b16 %v9730, %v9720
    %v10351 = vpack.c.b16 %v9731, %v9721
    %v10352 = vpack.c.b16 %v9732, %v9722
    %v10353 = vpack.c.b16 %v9733, %v9723
    %v10354 = vpack.c.b16 %v9734, %v9724
    %v10355 = vpack.c.b16 %v9745, %v9735
    %v10356 = vpack.c.b16 %v9746, %v9736
    %v10357 = vpack.c.b16 %v9747, %v9737
    %v10358 = vpack.c.b16 %v9748, %v9738
    %v10359 = vpack.c.b16 %v9749, %v9739
    %v10360 = vpack.c.b16 %v9750, %v9740
    %v10361 = vpack.c.b16 %v9751, %v9741
    %v10362 = vpack.c.b16 %v9752, %v9742
    %v10363 = vpack.c.b16 %v9753, %v9743
    %v10364 = vpack.c.b16 %v9754, %v9744
    %v10365 = vpack.c.b16 %v9765, %v9755
    %v10366 = vpack.c.b16 %v9766, %v9756
    %v10367 = vpack.c.b16 %v9767, %v9757
    %v10368 = vpack.c.b16 %v9768, %v9758
    %v10369 = vpack.c.b16 %v9769, %v9759
    %v10370 = vpack.c.b16 %v9770, %v9760
    %v10371 = vpack.c.b16 %v9771, %v9761
    %v10372 = vpack.c.b16 %v9772, %v9762
    %v10373 = vpack.c.b16 %v9773, %v9763
    %v10374 = vpack.c.b16 %v9774, %v9764
    %v10375 = vpack.c.b16 %v9785, %v9775
    %v10376 = vpack.c.b16 %v9786, %v9776
    %v10377 = vpack.c.b16 %v9787, %v9777
    %v10378 = vpack.c.b16 %v9788, %v9778
    %v10379 = vpack.c.b16 %v9789, %v9779
    %v10380 = vpack.c.b16 %v9790, %v9780
    %v10381 = vpack.c.b16 %v9791, %v9781
    %v10382 = vpack.c.b16 %v9792, %v9782
    %v10383 = vpack.c.b16 %v9793, %v9783
    %v10384 = vpack.c.b16 %v9794, %v9784
    %v10385 = vpack.c.b16 %v9805, %v9795
    %v10386 = vpack.c.b16 %v9806, %v9796
    %v10387 = vpack.c.b16 %v9807, %v9797
    %v10388 = vpack.c.b16 %v9808, %v9798
    %v10389 = vpack.c.b16 %v9809, %v9799
    %v10390 = vpack.c.b16 %v9810, %v9800
    %v10391 = vpack.c.b16 %v9811, %v9801
    %v10392 = vpack.c.b16 %v9812, %v9802
    %v10393 = vpack.c.b16 %v9813, %v9803
    %v10394 = vpack.c.b16 %v9814, %v9804
    %v10395 = vpack.c.b16 %v9825, %v9815
    %v10396 = vpack.c.b16 %v9826, %v9816
    %v10397 = vpack.c.b16 %v9827, %v9817
    %v10398 = vpack.c.b16 %v9828, %v9818
    %v10399 = vpack.c.b16 %v9829, %v9819
    %v10400 = vpack.c.b16 %v9830, %v9820
    %v10401 = vpack.c.b16 %v9831, %v9821
    %v10402 = vpack.c.b16 %v9832, %v9822
    %v10403 = vpack.c.b16 %v9833, %v9823
    %v10404 = vpack.c.b16 %v9834, %v9824
    %v10405 = vpack.c.b16 %v9845, %v9835
    %v10406 = vpack.c.b16 %v9846, %v9836
    %v10407 = vpack.c.b16 %v9847, %v9837
    %v10408 = vpack.c.b16 %v9848, %v9838
    %v10409 = vpack.c.b16 %v9849, %v9839
    %v10410 = vpack.c.b16 %v9850, %v9840
    %v10411 = vpack.c.b16 %v9851, %v9841
    %v10412 = vpack.c.b16 %v9852, %v9842
    %v10413 = vpack.c.b16 %v9853, %v9843
    %v10414 = vpack.c.b16 %v9854, %v9844
    %v10415 = vpack.c.b16 %v9865, %v9855
    %v10416 = vpack.c.b16 %v9866, %v9856
    %v10417 = vpack.c.b16 %v9867, %v9857
    %v10418 = vpack.c.b16 %v9868, %v9858
    %v10419 = vpack.c.b16 %v9869, %v9859
    %v10420 = vpack.c.b16 %v9870, %v9860
    %v10421 = vpack.c.b16 %v9871, %v9861
    %v10422 = vpack.c.b16 %v9872, %v9862
    %v10423 = vpack.c.b16 %v9873, %v9863
    %v10424 = vpack.c.b16 %v9874, %v9864
    %v10425 = vpack.c.b16 %v9885, %v9875
    %v10426 = vpack.c.b16 %v9886, %v9876
    %v10427 = vpack.c.b16 %v9887, %v9877
    %v10428 = vpack.c.b16 %v9888, %v9878
    %v10429 = vpack.c.b16 %v9889, %v9879
    %v10430 = vpack.c.b16 %v9890, %v9880
    %v10431 = vpack.c.b16 %v9891, %v9881
    %v10432 = vpack.c.b16 %v9892, %v9882
    %v10433 = vpack.c.b16 %v9893, %v9883
    %v10434 = vpack.c.b16 %v9894, %v9884
    %v10435 = vpack.c.b16 %v9905, %v9895
    %v10436 = vpack.c.b16 %v9906, %v9896
    %v10437 = vpack.c.b16 %v9907, %v9897
    %v10438 = vpack.c.b16 %v9908, %v9898
    %v10439 = vpack.c.b16 %v9909, %v9899
    %v10440 = vpack.c.b16 %v9910, %v9900
    %v10441 = vpack.c.b16 %v9911, %v9901
    %v10442 = vpack.c.b16 %v9912, %v9902
    %v10443 = vpack.c.b16 %v9913, %v9903
    %v10444 = vpack.c.b16 %v9914, %v9904
    %v10445 = vpack.c.b16 %v9925, %v9915
    %v10446 = vpack.c.b16 %v9926, %v9916
    %v10447 = vpack.c.b16 %v9927, %v9917
    %v10448 = vpack.c.b16 %v9928, %v9918
    %v10449 = vpack.c.b16 %v9929, %v9919
    %v10450 = vpack.c.b16 %v9930, %v9920
    %v10451 = vpack.c.b16 %v9931, %v9921
    %v10452 = vpack.c.b16 %v9932, %v9922
    %v10453 = vpack.c.b16 %v9933, %v9923
    %v10454 = vpack.c.b16 %v9934, %v9924
    %v10455 = vpack.c.b16 %v9945, %v9935
    %v10456 = vpack.c.b16 %v9946, %v9936
    %v10457 = vpack.c.b16 %v9947, %v9937
    %v10458 = vpack.c.b16 %v9948, %v9938
    %v10459 = vpack.c.b16 %v9949, %v9939
    %v10460 = vpack.c.b16 %v9950, %v9940
    %v10461 = vpack.c.b16 %v9951, %v9941
    %v10462 = vpack.c.b16 %v9952, %v9942
    %v10463 = vpack.c.b16 %v9953, %v9943
    %v10464 = vpack.c.b16 %v9954, %v9944
    %v10465 = vpack.c.b16 %v9965, %v9955
    %v10466 = vpack.c.b16 %v9966, %v9956
    %v10467 = vpack.c.b16 %v9967, %v9957
    %v10468 = vpack.c.b16 %v9968, %v9958
    %v10469 = vpack.c.b16 %v9969, %v9959
    %v10470 = vpack.c.b16 %v9970, %v9960
    %v10471 = vpack.c.b16 %v9971, %v9961
    %v10472 = vpack.c.b16 %v9972, %v9962
    %v10473 = vpack.c.b16 %v9973, %v9963
    %v10474 = vpack.c.b16 %v9974, %v9964
    %v10475 = vpack.c.b16 %v9985, %v9975
    %v10476 = vpack.c.b16 %v9986, %v9976
    %v10477 = vpack.c.b16 %v9987, %v9977
    %v10478 = vpack.c.b16 %v9988, %v9978
    %v10479 = vpack.c.b16 %v9989, %v9979
    %v10480 = vpack.c.b16 %v9990, %v9980
    %v10481 = vpack.c.b16 %v9991, %v9981
    %v10482 = vpack.c.b16 %v9992, %v9982
    %v10483 = vpack.c.b16 %v9993, %v9983
    %v10484 = vpack.c.b16 %v9994, %v9984
    %v10485 = vpack.c.b16 %v10005, %v9995
    %v10486 = vpack.c.b16 %v10006, %v9996
    %v10487 = vpack.c.b16 %v10007, %v9997
    %v10488 = vpack.c.b16 %v10008, %v9998
    %v10489 = vpack.c.b16 %v10009, %v9999
    %v10490 = vpack.c.b16 %v10010, %v10000
    %v10491 = vpack.c.b16 %v10011, %v10001
    %v10492 = vpack.c.b16 %v10012, %v10002
    %v10493 = vpack.c.b16 %v10013, %v10003
    %v10494 = vpack.c.b16 %v10014, %v10004
    %v10495 = vpack.c.b16 %v10025, %v10015
    %v10496 = vpack.c.b16 %v10026, %v10016
    %v10497 = vpack.c.b16 %v10027, %v10017
    %v10498 = vpack.c.b16 %v10028, %v10018
    %v10499 = vpack.c.b16 %v10029, %v10019
    %v10500 = vpack.c.b16 %v10030, %v10020
    %v10501 = vpack.c.b16 %v10031, %v10021
    %v10502 = vpack.c.b16 %v10032, %v10022
    %v10503 = vpack.c.b16 %v10033, %v10023
    %v10504 = vpack.c.b16 %v10034, %v10024
    %v10505 = vpack.c.b16 %v10045, %v10035
    %v10506 = vpack.c.b16 %v10046, %v10036
    %v10507 = vpack.c.b16 %v10047, %v10037
    %v10508 = vpack.c.b16 %v10048, %v10038
    %v10509 = vpack.c.b16 %v10049, %v10039
    %v10510 = vpack.c.b16 %v10050, %v10040
    %v10511 = vpack.c.b16 %v10051, %v10041
    %v10512 = vpack.c.b16 %v10052, %v10042
    %v10513 = vpack.c.b16 %v10053, %v10043
    %v10514 = vpack.c.b16 %v10054, %v10044
    %v10515 = vpack.c.b16 %v10065, %v10055
    %v10516 = vpack.c.b16 %v10066, %v10056
    %v10517 = vpack.c.b16 %v10067, %v10057
    %v10518 = vpack.c.b16 %v10068, %v10058
    %v10519 = vpack.c.b16 %v10069, %v10059
    %v10520 = vpack.c.b16 %v10070, %v10060
    %v10521 = vpack.c.b16 %v10071, %v10061
    %v10522 = vpack.c.b16 %v10072, %v10062
    %v10523 = vpack.c.b16 %v10073, %v10063
    %v10524 = vpack.c.b16 %v10074, %v10064
    %v10525 = vpack.c.b16 %v10085, %v10075
    %v10526 = vpack.c.b16 %v10086, %v10076
    %v10527 = vpack.c.b16 %v10087, %v10077
    %v10528 = vpack.c.b16 %v10088, %v10078
    %v10529 = vpack.c.b16 %v10089, %v10079
    %v10530 = vpack.c.b16 %v10090, %v10080
    %v10531 = vpack.c.b16 %v10091, %v10081
    %v10532 = vpack.c.b16 %v10092, %v10082
    %v10533 = vpack.c.b16 %v10093, %v10083
    %v10534 = vpack.c.b16 %v10094, %v10084
    %v10535 = vpack.c.b16 %v10105, %v10095
    %v10536 = vpack.c.b16 %v10106, %v10096
    %v10537 = vpack.c.b16 %v10107, %v10097
    %v10538 = vpack.c.b16 %v10108, %v10098
    %v10539 = vpack.c.b16 %v10109, %v10099
    %v10540 = vpack.c.b16 %v10110, %v10100
    %v10541 = vpack.c.b16 %v10111, %v10101
    %v10542 = vpack.c.b16 %v10112, %v10102
    %v10543 = vpack.c.b16 %v10113, %v10103
    %v10544 = vpack.c.b16 %v10114, %v10104
    %v10545 = vpack.c.b16 %v10125, %v10115
    %v10546 = vpack.c.b16 %v10126, %v10116
    %v10547 = vpack.c.b16 %v10127, %v10117
    %v10548 = vpack.c.b16 %v10128, %v10118
    %v10549 = vpack.c.b16 %v10129, %v10119
    %v10550 = vpack.c.b16 %v10130, %v10120
    %v10551 = vpack.c.b16 %v10131, %v10121
    %v10552 = vpack.c.b16 %v10132, %v10122
    %v10553 = vpack.c.b16 %v10133, %v10123
    %v10554 = vpack.c.b16 %v10134, %v10124
    %v10555 = vpack.c.b16 %v10145, %v10135
    %v10556 = vpack.c.b16 %v10146, %v10136
    %v10557 = vpack.c.b16 %v10147, %v10137
    %v10558 = vpack.c.b16 %v10148, %v10138
    %v10559 = vpack.c.b16 %v10149, %v10139
    %v10560 = vpack.c.b16 %v10150, %v10140
    %v10561 = vpack.c.b16 %v10151, %v10141
    %v10562 = vpack.c.b16 %v10152, %v10142
    %v10563 = vpack.c.b16 %v10153, %v10143
    %v10564 = vpack.c.b16 %v10154, %v10144
    %v10565 = vpack.c.b16 %v10165, %v10155
    %v10566 = vpack.c.b16 %v10166, %v10156
    %v10567 = vpack.c.b16 %v10167, %v10157
    %v10568 = vpack.c.b16 %v10168, %v10158
    %v10569 = vpack.c.b16 %v10169, %v10159
    %v10570 = vpack.c.b16 %v10170, %v10160
    %v10571 = vpack.c.b16 %v10171, %v10161
    %v10572 = vpack.c.b16 %v10172, %v10162
    %v10573 = vpack.c.b16 %v10173, %v10163
    %v10574 = vpack.c.b16 %v10174, %v10164
    %10975 = vmatpush.bf16.msra.mxu0 %v10245
    %10976 = vmatpush.bf16.msra.mxu0 %v10235
    %10977 = vmatpush.bf16.msra.mxu0 %v10225
    %10978 = vmatpush.bf16.msra.mxu0 %v10215
    %10979 = vmatpush.bf16.msra.mxu0 %v10205
    %10980 = vmatpush.bf16.msra.mxu0 %v10195
    %10981 = vmatpush.bf16.msra.mxu0 %v10185
    %10982 = vmatpush.bf16.msra.mxu0 %v10175
    %10983 = vmatmul.bf16.gmra.mxu0 %v8546
    %v10984 = vpop.f32.mrf.mxu0
    %v10985 = vadd.f32 %v8955, %v10984
    %v10986 = vpop.f32.mrf.mxu0
    %v10987 = vadd.f32 %v8955, %v10986
    %10988 = vdwg.mxu0
    %10989 = vmatpush.bf16.msra.mxu0 %v10325
    %10990 = vmatpush.bf16.msra.mxu0 %v10315
    %10991 = vmatpush.bf16.msra.mxu0 %v10305
    %10992 = vmatpush.bf16.msra.mxu0 %v10295
    %10993 = vmatpush.bf16.msra.mxu0 %v10285
    %10994 = vmatpush.bf16.msra.mxu0 %v10275
    %10995 = vmatpush.bf16.msra.mxu0 %v10265
    %10996 = vmatpush.bf16.msra.mxu0 %v10255
    %10997 = vmatmul.bf16.gmra.mxu0 %v8547
    %v10998 = vpop.f32.mrf.mxu0
    %v10999 = vadd.f32 %v10985, %v10998
    %v11000 = vpop.f32.mrf.mxu0
    %v11001 = vadd.f32 %v10987, %v11000
    %11002 = vdwg.mxu0
    %11003 = vmatpush.bf16.msra.mxu0 %v10405
    %11004 = vmatpush.bf16.msra.mxu0 %v10395
    %11005 = vmatpush.bf16.msra.mxu0 %v10385
    %11006 = vmatpush.bf16.msra.mxu0 %v10375
    %11007 = vmatpush.bf16.msra.mxu0 %v10365
    %11008 = vmatpush.bf16.msra.mxu0 %v10355
    %11009 = vmatpush.bf16.msra.mxu0 %v10345
    %11010 = vmatpush.bf16.msra.mxu0 %v10335
    %11011 = vmatmul.bf16.gmra.mxu0 %v8548
    %v11012 = vpop.f32.mrf.mxu0
    %v11013 = vadd.f32 %v10999, %v11012
    %v11014 = vpop.f32.mrf.mxu0
    %v11015 = vadd.f32 %v11001, %v11014
    %11016 = vdwg.mxu0
    %11017 = vmatpush.bf16.msra.mxu0 %v10485
    %11018 = vmatpush.bf16.msra.mxu0 %v10475
    %11019 = vmatpush.bf16.msra.mxu0 %v10465
    %11020 = vmatpush.bf16.msra.mxu0 %v10455
    %11021 = vmatpush.bf16.msra.mxu0 %v10445
    %11022 = vmatpush.bf16.msra.mxu0 %v10435
    %11023 = vmatpush.bf16.msra.mxu0 %v10425
    %11024 = vmatpush.bf16.msra.mxu0 %v10415
    %11025 = vmatmul.bf16.gmra.mxu0 %v8549
    %v11026 = vpop.f32.mrf.mxu0
    %v11027 = vadd.f32 %v11013, %v11026
    %v11028 = vpop.f32.mrf.mxu0
    %v11029 = vadd.f32 %v11015, %v11028
    %11030 = vdwg.mxu0
    %11031 = vmatpush.bf16.msra.mxu0 %v10565
    %11032 = vmatpush.bf16.msra.mxu0 %v10555
    %11033 = vmatpush.bf16.msra.mxu0 %v10545
    %11034 = vmatpush.bf16.msra.mxu0 %v10535
    %11035 = vmatpush.bf16.msra.mxu0 %v10525
    %11036 = vmatpush.bf16.msra.mxu0 %v10515
    %11037 = vmatpush.bf16.msra.mxu0 %v10505
    %11038 = vmatpush.bf16.msra.mxu0 %v10495
    %11039 = vmatmul.bf16.gmra.mxu0 %v8550
    %v11040 = vpop.f32.mrf.mxu0
    %v11041 = vadd.f32 %v11027, %v11040
    %v11042 = vpop.f32.mrf.mxu0
    %v11043 = vadd.f32 %v11029, %v11042
    %11044 = vdwg.mxu0
    %11045 = vmatpush.bf16.msra.mxu0 %v10246
    %11046 = vmatpush.bf16.msra.mxu0 %v10236
    %11047 = vmatpush.bf16.msra.mxu0 %v10226
    %11048 = vmatpush.bf16.msra.mxu0 %v10216
    %11049 = vmatpush.bf16.msra.mxu0 %v10206
    %11050 = vmatpush.bf16.msra.mxu0 %v10196
    %11051 = vmatpush.bf16.msra.mxu0 %v10186
    %11052 = vmatpush.bf16.msra.mxu0 %v10176
    %11053 = vmatmul.bf16.gmra.mxu0 %v8546
    %v11054 = vpop.f32.mrf.mxu0
    %v11055 = vadd.f32 %v8956, %v11054
    %v11056 = vpop.f32.mrf.mxu0
    %v11057 = vadd.f32 %v8956, %v11056
    %11058 = vdwg.mxu0
    %11059 = vmatpush.bf16.msra.mxu0 %v10326
    %11060 = vmatpush.bf16.msra.mxu0 %v10316
    %11061 = vmatpush.bf16.msra.mxu0 %v10306
    %11062 = vmatpush.bf16.msra.mxu0 %v10296
    %11063 = vmatpush.bf16.msra.mxu0 %v10286
    %11064 = vmatpush.bf16.msra.mxu0 %v10276
    %11065 = vmatpush.bf16.msra.mxu0 %v10266
    %11066 = vmatpush.bf16.msra.mxu0 %v10256
    %11067 = vmatmul.bf16.gmra.mxu0 %v8547
    %v11068 = vpop.f32.mrf.mxu0
    %v11069 = vadd.f32 %v11055, %v11068
    %v11070 = vpop.f32.mrf.mxu0
    %v11071 = vadd.f32 %v11057, %v11070
    %11072 = vdwg.mxu0
    %11073 = vmatpush.bf16.msra.mxu0 %v10406
    %11074 = vmatpush.bf16.msra.mxu0 %v10396
    %11075 = vmatpush.bf16.msra.mxu0 %v10386
    %11076 = vmatpush.bf16.msra.mxu0 %v10376
    %11077 = vmatpush.bf16.msra.mxu0 %v10366
    %11078 = vmatpush.bf16.msra.mxu0 %v10356
    %11079 = vmatpush.bf16.msra.mxu0 %v10346
    %11080 = vmatpush.bf16.msra.mxu0 %v10336
    %11081 = vmatmul.bf16.gmra.mxu0 %v8548
    %v11082 = vpop.f32.mrf.mxu0
    %v11083 = vadd.f32 %v11069, %v11082
    %v11084 = vpop.f32.mrf.mxu0
    %v11085 = vadd.f32 %v11071, %v11084
    %11086 = vdwg.mxu0
    %11087 = vmatpush.bf16.msra.mxu0 %v10486
    %11088 = vmatpush.bf16.msra.mxu0 %v10476
    %11089 = vmatpush.bf16.msra.mxu0 %v10466
    %11090 = vmatpush.bf16.msra.mxu0 %v10456
    %11091 = vmatpush.bf16.msra.mxu0 %v10446
    %11092 = vmatpush.bf16.msra.mxu0 %v10436
    %11093 = vmatpush.bf16.msra.mxu0 %v10426
    %11094 = vmatpush.bf16.msra.mxu0 %v10416
    %11095 = vmatmul.bf16.gmra.mxu0 %v8549
    %v11096 = vpop.f32.mrf.mxu0
    %v11097 = vadd.f32 %v11083, %v11096
    %v11098 = vpop.f32.mrf.mxu0
    %v11099 = vadd.f32 %v11085, %v11098
    %11100 = vdwg.mxu0
    %11101 = vmatpush.bf16.msra.mxu0 %v10566
    %11102 = vmatpush.bf16.msra.mxu0 %v10556
    %11103 = vmatpush.bf16.msra.mxu0 %v10546
    %11104 = vmatpush.bf16.msra.mxu0 %v10536
    %11105 = vmatpush.bf16.msra.mxu0 %v10526
    %11106 = vmatpush.bf16.msra.mxu0 %v10516
    %11107 = vmatpush.bf16.msra.mxu0 %v10506
    %11108 = vmatpush.bf16.msra.mxu0 %v10496
    %11109 = vmatmul.bf16.gmra.mxu0 %v8550
    %v11110 = vpop.f32.mrf.mxu0
    %v11111 = vadd.f32 %v11097, %v11110
    %v11112 = vpop.f32.mrf.mxu0
    %v11113 = vadd.f32 %v11099, %v11112
    %11114 = vdwg.mxu0
    %11115 = vmatpush.bf16.msra.mxu0 %v10247
    %11116 = vmatpush.bf16.msra.mxu0 %v10237
    %11117 = vmatpush.bf16.msra.mxu0 %v10227
    %11118 = vmatpush.bf16.msra.mxu0 %v10217
    %11119 = vmatpush.bf16.msra.mxu0 %v10207
    %11120 = vmatpush.bf16.msra.mxu0 %v10197
    %11121 = vmatpush.bf16.msra.mxu0 %v10187
    %11122 = vmatpush.bf16.msra.mxu0 %v10177
    %11123 = vmatmul.bf16.gmra.mxu0 %v8546
    %v11124 = vpop.f32.mrf.mxu0
    %v11125 = vadd.f32 %v8957, %v11124
    %v11126 = vpop.f32.mrf.mxu0
    %v11127 = vadd.f32 %v8957, %v11126
    %11128 = vdwg.mxu0
    %11129 = vmatpush.bf16.msra.mxu0 %v10327
    %11130 = vmatpush.bf16.msra.mxu0 %v10317
    %11131 = vmatpush.bf16.msra.mxu0 %v10307
    %11132 = vmatpush.bf16.msra.mxu0 %v10297
    %11133 = vmatpush.bf16.msra.mxu0 %v10287
    %11134 = vmatpush.bf16.msra.mxu0 %v10277
    %11135 = vmatpush.bf16.msra.mxu0 %v10267
    %11136 = vmatpush.bf16.msra.mxu0 %v10257
    %11137 = vmatmul.bf16.gmra.mxu0 %v8547
    %v11138 = vpop.f32.mrf.mxu0
    %v11139 = vadd.f32 %v11125, %v11138
    %v11140 = vpop.f32.mrf.mxu0
    %v11141 = vadd.f32 %v11127, %v11140
    %11142 = vdwg.mxu0
    %11143 = vmatpush.bf16.msra.mxu0 %v10407
    %11144 = vmatpush.bf16.msra.mxu0 %v10397
    %11145 = vmatpush.bf16.msra.mxu0 %v10387
    %11146 = vmatpush.bf16.msra.mxu0 %v10377
    %11147 = vmatpush.bf16.msra.mxu0 %v10367
    %11148 = vmatpush.bf16.msra.mxu0 %v10357
    %11149 = vmatpush.bf16.msra.mxu0 %v10347
    %11150 = vmatpush.bf16.msra.mxu0 %v10337
    %11151 = vmatmul.bf16.gmra.mxu0 %v8548
    %v11152 = vpop.f32.mrf.mxu0
    %v11153 = vadd.f32 %v11139, %v11152
    %v11154 = vpop.f32.mrf.mxu0
    %v11155 = vadd.f32 %v11141, %v11154
    %11156 = vdwg.mxu0
    %11157 = vmatpush.bf16.msra.mxu0 %v10487
    %11158 = vmatpush.bf16.msra.mxu0 %v10477
    %11159 = vmatpush.bf16.msra.mxu0 %v10467
    %11160 = vmatpush.bf16.msra.mxu0 %v10457
    %11161 = vmatpush.bf16.msra.mxu0 %v10447
    %11162 = vmatpush.bf16.msra.mxu0 %v10437
    %11163 = vmatpush.bf16.msra.mxu0 %v10427
    %11164 = vmatpush.bf16.msra.mxu0 %v10417
    %11165 = vmatmul.bf16.gmra.mxu0 %v8549
    %v11166 = vpop.f32.mrf.mxu0
    %v11167 = vadd.f32 %v11153, %v11166
    %v11168 = vpop.f32.mrf.mxu0
    %v11169 = vadd.f32 %v11155, %v11168
    %11170 = vdwg.mxu0
    %11171 = vmatpush.bf16.msra.mxu0 %v10567
    %11172 = vmatpush.bf16.msra.mxu0 %v10557
    %11173 = vmatpush.bf16.msra.mxu0 %v10547
    %11174 = vmatpush.bf16.msra.mxu0 %v10537
    %11175 = vmatpush.bf16.msra.mxu0 %v10527
    %11176 = vmatpush.bf16.msra.mxu0 %v10517
    %11177 = vmatpush.bf16.msra.mxu0 %v10507
    %11178 = vmatpush.bf16.msra.mxu0 %v10497
    %11179 = vmatmul.bf16.gmra.mxu0 %v8550
    %v11180 = vpop.f32.mrf.mxu0
    %v11181 = vadd.f32 %v11167, %v11180
    %v11182 = vpop.f32.mrf.mxu0
    %v11183 = vadd.f32 %v11169, %v11182
    %11184 = vdwg.mxu0
    %11185 = vmatpush.bf16.msra.mxu0 %v10248
    %11186 = vmatpush.bf16.msra.mxu0 %v10238
    %11187 = vmatpush.bf16.msra.mxu0 %v10228
    %11188 = vmatpush.bf16.msra.mxu0 %v10218
    %11189 = vmatpush.bf16.msra.mxu0 %v10208
    %11190 = vmatpush.bf16.msra.mxu0 %v10198
    %11191 = vmatpush.bf16.msra.mxu0 %v10188
    %11192 = vmatpush.bf16.msra.mxu0 %v10178
    %11193 = vmatmul.bf16.gmra.mxu0 %v8546
    %v11194 = vpop.f32.mrf.mxu0
    %v11195 = vadd.f32 %v8958, %v11194
    %v11196 = vpop.f32.mrf.mxu0
    %v11197 = vadd.f32 %v8958, %v11196
    %11198 = vdwg.mxu0
    %11199 = vmatpush.bf16.msra.mxu0 %v10328
    %11200 = vmatpush.bf16.msra.mxu0 %v10318
    %11201 = vmatpush.bf16.msra.mxu0 %v10308
    %11202 = vmatpush.bf16.msra.mxu0 %v10298
    %11203 = vmatpush.bf16.msra.mxu0 %v10288
    %11204 = vmatpush.bf16.msra.mxu0 %v10278
    %11205 = vmatpush.bf16.msra.mxu0 %v10268
    %11206 = vmatpush.bf16.msra.mxu0 %v10258
    %11207 = vmatmul.bf16.gmra.mxu0 %v8547
    %v11208 = vpop.f32.mrf.mxu0
    %v11209 = vadd.f32 %v11195, %v11208
    %v11210 = vpop.f32.mrf.mxu0
    %v11211 = vadd.f32 %v11197, %v11210
    %11212 = vdwg.mxu0
    %11213 = vmatpush.bf16.msra.mxu0 %v10408
    %11214 = vmatpush.bf16.msra.mxu0 %v10398
    %11215 = vmatpush.bf16.msra.mxu0 %v10388
    %11216 = vmatpush.bf16.msra.mxu0 %v10378
    %11217 = vmatpush.bf16.msra.mxu0 %v10368
    %11218 = vmatpush.bf16.msra.mxu0 %v10358
    %11219 = vmatpush.bf16.msra.mxu0 %v10348
    %11220 = vmatpush.bf16.msra.mxu0 %v10338
    %11221 = vmatmul.bf16.gmra.mxu0 %v8548
    %v11222 = vpop.f32.mrf.mxu0
    %v11223 = vadd.f32 %v11209, %v11222
    %v11224 = vpop.f32.mrf.mxu0
    %v11225 = vadd.f32 %v11211, %v11224
    %11226 = vdwg.mxu0
    %11227 = vmatpush.bf16.msra.mxu0 %v10488
    %11228 = vmatpush.bf16.msra.mxu0 %v10478
    %11229 = vmatpush.bf16.msra.mxu0 %v10468
    %11230 = vmatpush.bf16.msra.mxu0 %v10458
    %11231 = vmatpush.bf16.msra.mxu0 %v10448
    %11232 = vmatpush.bf16.msra.mxu0 %v10438
    %11233 = vmatpush.bf16.msra.mxu0 %v10428
    %11234 = vmatpush.bf16.msra.mxu0 %v10418
    %11235 = vmatmul.bf16.gmra.mxu0 %v8549
    %v11236 = vpop.f32.mrf.mxu0
    %v11237 = vadd.f32 %v11223, %v11236
    %v11238 = vpop.f32.mrf.mxu0
    %v11239 = vadd.f32 %v11225, %v11238
    %11240 = vdwg.mxu0
    %11241 = vmatpush.bf16.msra.mxu0 %v10568
    %11242 = vmatpush.bf16.msra.mxu0 %v10558
    %11243 = vmatpush.bf16.msra.mxu0 %v10548
    %11244 = vmatpush.bf16.msra.mxu0 %v10538
    %11245 = vmatpush.bf16.msra.mxu0 %v10528
    %11246 = vmatpush.bf16.msra.mxu0 %v10518
    %11247 = vmatpush.bf16.msra.mxu0 %v10508
    %11248 = vmatpush.bf16.msra.mxu0 %v10498
    %11249 = vmatmul.bf16.gmra.mxu0 %v8550
    %v11250 = vpop.f32.mrf.mxu0
    %v11251 = vadd.f32 %v11237, %v11250
    %v11252 = vpop.f32.mrf.mxu0
    %v11253 = vadd.f32 %v11239, %v11252
    %11254 = vdwg.mxu0
    %11255 = vmatpush.bf16.msra.mxu0 %v10249
    %11256 = vmatpush.bf16.msra.mxu0 %v10239
    %11257 = vmatpush.bf16.msra.mxu0 %v10229
    %11258 = vmatpush.bf16.msra.mxu0 %v10219
    %11259 = vmatpush.bf16.msra.mxu0 %v10209
    %11260 = vmatpush.bf16.msra.mxu0 %v10199
    %11261 = vmatpush.bf16.msra.mxu0 %v10189
    %11262 = vmatpush.bf16.msra.mxu0 %v10179
    %11263 = vmatmul.bf16.gmra.mxu0 %v8546
    %v11264 = vpop.f32.mrf.mxu0
    %v11265 = vadd.f32 %v8959, %v11264
    %v11266 = vpop.f32.mrf.mxu0
    %v11267 = vadd.f32 %v8959, %v11266
    %11268 = vdwg.mxu0
    %11269 = vmatpush.bf16.msra.mxu0 %v10329
    %11270 = vmatpush.bf16.msra.mxu0 %v10319
    %11271 = vmatpush.bf16.msra.mxu0 %v10309
    %11272 = vmatpush.bf16.msra.mxu0 %v10299
    %11273 = vmatpush.bf16.msra.mxu0 %v10289
    %11274 = vmatpush.bf16.msra.mxu0 %v10279
    %11275 = vmatpush.bf16.msra.mxu0 %v10269
    %11276 = vmatpush.bf16.msra.mxu0 %v10259
    %11277 = vmatmul.bf16.gmra.mxu0 %v8547
    %v11278 = vpop.f32.mrf.mxu0
    %v11279 = vadd.f32 %v11265, %v11278
    %v11280 = vpop.f32.mrf.mxu0
    %v11281 = vadd.f32 %v11267, %v11280
    %11282 = vdwg.mxu0
    %11283 = vmatpush.bf16.msra.mxu0 %v10409
    %11284 = vmatpush.bf16.msra.mxu0 %v10399
    %11285 = vmatpush.bf16.msra.mxu0 %v10389
    %11286 = vmatpush.bf16.msra.mxu0 %v10379
    %11287 = vmatpush.bf16.msra.mxu0 %v10369
    %11288 = vmatpush.bf16.msra.mxu0 %v10359
    %11289 = vmatpush.bf16.msra.mxu0 %v10349
    %11290 = vmatpush.bf16.msra.mxu0 %v10339
    %11291 = vmatmul.bf16.gmra.mxu0 %v8548
    %v11292 = vpop.f32.mrf.mxu0
    %v11293 = vadd.f32 %v11279, %v11292
    %v11294 = vpop.f32.mrf.mxu0
    %v11295 = vadd.f32 %v11281, %v11294
    %11296 = vdwg.mxu0
    %11297 = vmatpush.bf16.msra.mxu0 %v10489
    %11298 = vmatpush.bf16.msra.mxu0 %v10479
    %11299 = vmatpush.bf16.msra.mxu0 %v10469
    %11300 = vmatpush.bf16.msra.mxu0 %v10459
    %11301 = vmatpush.bf16.msra.mxu0 %v10449
    %11302 = vmatpush.bf16.msra.mxu0 %v10439
    %11303 = vmatpush.bf16.msra.mxu0 %v10429
    %11304 = vmatpush.bf16.msra.mxu0 %v10419
    %11305 = vmatmul.bf16.gmra.mxu0 %v8549
    %v11306 = vpop.f32.mrf.mxu0
    %v11307 = vadd.f32 %v11293, %v11306
    %v11308 = vpop.f32.mrf.mxu0
    %v11309 = vadd.f32 %v11295, %v11308
    %11310 = vdwg.mxu0
    %11311 = vmatpush.bf16.msra.mxu0 %v10569
    %11312 = vmatpush.bf16.msra.mxu0 %v10559
    %11313 = vmatpush.bf16.msra.mxu0 %v10549
    %11314 = vmatpush.bf16.msra.mxu0 %v10539
    %11315 = vmatpush.bf16.msra.mxu0 %v10529
    %11316 = vmatpush.bf16.msra.mxu0 %v10519
    %11317 = vmatpush.bf16.msra.mxu0 %v10509
    %11318 = vmatpush.bf16.msra.mxu0 %v10499
    %11319 = vmatmul.bf16.gmra.mxu0 %v8550
    %v11320 = vpop.f32.mrf.mxu0
    %v11321 = vadd.f32 %v11307, %v11320
    %v11322 = vpop.f32.mrf.mxu0
    %v11323 = vadd.f32 %v11309, %v11322
    %11324 = vdwg.mxu0
    %11325 = vmatpush.bf16.msra.mxu0 %v10250
    %11326 = vmatpush.bf16.msra.mxu0 %v10240
    %11327 = vmatpush.bf16.msra.mxu0 %v10230
    %11328 = vmatpush.bf16.msra.mxu0 %v10220
    %11329 = vmatpush.bf16.msra.mxu0 %v10210
    %11330 = vmatpush.bf16.msra.mxu0 %v10200
    %11331 = vmatpush.bf16.msra.mxu0 %v10190
    %11332 = vmatpush.bf16.msra.mxu0 %v10180
    %11333 = vmatmul.bf16.gmra.mxu0 %v8546
    %v11334 = vpop.f32.mrf.mxu0
    %v11335 = vadd.f32 %v8960, %v11334
    %v11336 = vpop.f32.mrf.mxu0
    %v11337 = vadd.f32 %v8960, %v11336
    %11338 = vdwg.mxu0
    %11339 = vmatpush.bf16.msra.mxu0 %v10330
    %11340 = vmatpush.bf16.msra.mxu0 %v10320
    %11341 = vmatpush.bf16.msra.mxu0 %v10310
    %11342 = vmatpush.bf16.msra.mxu0 %v10300
    %11343 = vmatpush.bf16.msra.mxu0 %v10290
    %11344 = vmatpush.bf16.msra.mxu0 %v10280
    %11345 = vmatpush.bf16.msra.mxu0 %v10270
    %11346 = vmatpush.bf16.msra.mxu0 %v10260
    %11347 = vmatmul.bf16.gmra.mxu0 %v8547
    %v11348 = vpop.f32.mrf.mxu0
    %v11349 = vadd.f32 %v11335, %v11348
    %v11350 = vpop.f32.mrf.mxu0
    %v11351 = vadd.f32 %v11337, %v11350
    %11352 = vdwg.mxu0
    %11353 = vmatpush.bf16.msra.mxu0 %v10410
    %11354 = vmatpush.bf16.msra.mxu0 %v10400
    %11355 = vmatpush.bf16.msra.mxu0 %v10390
    %11356 = vmatpush.bf16.msra.mxu0 %v10380
    %11357 = vmatpush.bf16.msra.mxu0 %v10370
    %11358 = vmatpush.bf16.msra.mxu0 %v10360
    %11359 = vmatpush.bf16.msra.mxu0 %v10350
    %11360 = vmatpush.bf16.msra.mxu0 %v10340
    %11361 = vmatmul.bf16.gmra.mxu0 %v8548
    %v11362 = vpop.f32.mrf.mxu0
    %v11363 = vadd.f32 %v11349, %v11362
    %v11364 = vpop.f32.mrf.mxu0
    %v11365 = vadd.f32 %v11351, %v11364
    %11366 = vdwg.mxu0
    %11367 = vmatpush.bf16.msra.mxu0 %v10490
    %11368 = vmatpush.bf16.msra.mxu0 %v10480
    %11369 = vmatpush.bf16.msra.mxu0 %v10470
    %11370 = vmatpush.bf16.msra.mxu0 %v10460
    %11371 = vmatpush.bf16.msra.mxu0 %v10450
    %11372 = vmatpush.bf16.msra.mxu0 %v10440
    %11373 = vmatpush.bf16.msra.mxu0 %v10430
    %11374 = vmatpush.bf16.msra.mxu0 %v10420
    %11375 = vmatmul.bf16.gmra.mxu0 %v8549
    %v11376 = vpop.f32.mrf.mxu0
    %v11377 = vadd.f32 %v11363, %v11376
    %v11378 = vpop.f32.mrf.mxu0
    %v11379 = vadd.f32 %v11365, %v11378
    %11380 = vdwg.mxu0
    %11381 = vmatpush.bf16.msra.mxu0 %v10570
    %11382 = vmatpush.bf16.msra.mxu0 %v10560
    %11383 = vmatpush.bf16.msra.mxu0 %v10550
    %11384 = vmatpush.bf16.msra.mxu0 %v10540
    %11385 = vmatpush.bf16.msra.mxu0 %v10530
    %11386 = vmatpush.bf16.msra.mxu0 %v10520
    %11387 = vmatpush.bf16.msra.mxu0 %v10510
    %11388 = vmatpush.bf16.msra.mxu0 %v10500
    %11389 = vmatmul.bf16.gmra.mxu0 %v8550
    %v11390 = vpop.f32.mrf.mxu0
    %v11391 = vadd.f32 %v11377, %v11390
    %v11392 = vpop.f32.mrf.mxu0
    %v11393 = vadd.f32 %v11379, %v11392
    %11394 = vdwg.mxu0
    %11395 = vmatpush.bf16.msra.mxu0 %v10251
    %11396 = vmatpush.bf16.msra.mxu0 %v10241
    %11397 = vmatpush.bf16.msra.mxu0 %v10231
    %11398 = vmatpush.bf16.msra.mxu0 %v10221
    %11399 = vmatpush.bf16.msra.mxu0 %v10211
    %11400 = vmatpush.bf16.msra.mxu0 %v10201
    %11401 = vmatpush.bf16.msra.mxu0 %v10191
    %11402 = vmatpush.bf16.msra.mxu0 %v10181
    %11403 = vmatmul.bf16.gmra.mxu0 %v8546
    %v11404 = vpop.f32.mrf.mxu0
    %v11405 = vadd.f32 %v8961, %v11404
    %v11406 = vpop.f32.mrf.mxu0
    %v11407 = vadd.f32 %v8961, %v11406
    %11408 = vdwg.mxu0
    %11409 = vmatpush.bf16.msra.mxu0 %v10331
    %11410 = vmatpush.bf16.msra.mxu0 %v10321
    %11411 = vmatpush.bf16.msra.mxu0 %v10311
    %11412 = vmatpush.bf16.msra.mxu0 %v10301
    %11413 = vmatpush.bf16.msra.mxu0 %v10291
    %11414 = vmatpush.bf16.msra.mxu0 %v10281
    %11415 = vmatpush.bf16.msra.mxu0 %v10271
    %11416 = vmatpush.bf16.msra.mxu0 %v10261
    %11417 = vmatmul.bf16.gmra.mxu0 %v8547
    %v11418 = vpop.f32.mrf.mxu0
    %v11419 = vadd.f32 %v11405, %v11418
    %v11420 = vpop.f32.mrf.mxu0
    %v11421 = vadd.f32 %v11407, %v11420
    %11422 = vdwg.mxu0
    %11423 = vmatpush.bf16.msra.mxu0 %v10411
    %11424 = vmatpush.bf16.msra.mxu0 %v10401
    %11425 = vmatpush.bf16.msra.mxu0 %v10391
    %11426 = vmatpush.bf16.msra.mxu0 %v10381
    %11427 = vmatpush.bf16.msra.mxu0 %v10371
    %11428 = vmatpush.bf16.msra.mxu0 %v10361
    %11429 = vmatpush.bf16.msra.mxu0 %v10351
    %11430 = vmatpush.bf16.msra.mxu0 %v10341
    %11431 = vmatmul.bf16.gmra.mxu0 %v8548
    %v11432 = vpop.f32.mrf.mxu0
    %v11433 = vadd.f32 %v11419, %v11432
    %v11434 = vpop.f32.mrf.mxu0
    %v11435 = vadd.f32 %v11421, %v11434
    %11436 = vdwg.mxu0
    %11437 = vmatpush.bf16.msra.mxu0 %v10491
    %11438 = vmatpush.bf16.msra.mxu0 %v10481
    %11439 = vmatpush.bf16.msra.mxu0 %v10471
    %11440 = vmatpush.bf16.msra.mxu0 %v10461
    %11441 = vmatpush.bf16.msra.mxu0 %v10451
    %11442 = vmatpush.bf16.msra.mxu0 %v10441
    %11443 = vmatpush.bf16.msra.mxu0 %v10431
    %11444 = vmatpush.bf16.msra.mxu0 %v10421
    %11445 = vmatmul.bf16.gmra.mxu0 %v8549
    %v11446 = vpop.f32.mrf.mxu0
    %v11447 = vadd.f32 %v11433, %v11446
    %v11448 = vpop.f32.mrf.mxu0
    %v11449 = vadd.f32 %v11435, %v11448
    %11450 = vdwg.mxu0
    %11451 = vmatpush.bf16.msra.mxu0 %v10571
    %11452 = vmatpush.bf16.msra.mxu0 %v10561
    %11453 = vmatpush.bf16.msra.mxu0 %v10551
    %11454 = vmatpush.bf16.msra.mxu0 %v10541
    %11455 = vmatpush.bf16.msra.mxu0 %v10531
    %11456 = vmatpush.bf16.msra.mxu0 %v10521
    %11457 = vmatpush.bf16.msra.mxu0 %v10511
    %11458 = vmatpush.bf16.msra.mxu0 %v10501
    %11459 = vmatmul.bf16.gmra.mxu0 %v8550
    %v11460 = vpop.f32.mrf.mxu0
    %v11461 = vadd.f32 %v11447, %v11460
    %v11462 = vpop.f32.mrf.mxu0
    %v11463 = vadd.f32 %v11449, %v11462
    %11464 = vdwg.mxu0
    %11465 = vmatpush.bf16.msra.mxu0 %v10252
    %11466 = vmatpush.bf16.msra.mxu0 %v10242
    %11467 = vmatpush.bf16.msra.mxu0 %v10232
    %11468 = vmatpush.bf16.msra.mxu0 %v10222
    %11469 = vmatpush.bf16.msra.mxu0 %v10212
    %11470 = vmatpush.bf16.msra.mxu0 %v10202
    %11471 = vmatpush.bf16.msra.mxu0 %v10192
    %11472 = vmatpush.bf16.msra.mxu0 %v10182
    %11473 = vmatmul.bf16.gmra.mxu0 %v8546
    %v11474 = vpop.f32.mrf.mxu0
    %v11475 = vadd.f32 %v8962, %v11474
    %v11476 = vpop.f32.mrf.mxu0
    %v11477 = vadd.f32 %v8962, %v11476
    %11478 = vdwg.mxu0
    %11479 = vmatpush.bf16.msra.mxu0 %v10332
    %11480 = vmatpush.bf16.msra.mxu0 %v10322
    %11481 = vmatpush.bf16.msra.mxu0 %v10312
    %11482 = vmatpush.bf16.msra.mxu0 %v10302
    %11483 = vmatpush.bf16.msra.mxu0 %v10292
    %11484 = vmatpush.bf16.msra.mxu0 %v10282
    %11485 = vmatpush.bf16.msra.mxu0 %v10272
    %11486 = vmatpush.bf16.msra.mxu0 %v10262
    %11487 = vmatmul.bf16.gmra.mxu0 %v8547
    %v11488 = vpop.f32.mrf.mxu0
    %v11489 = vadd.f32 %v11475, %v11488
    %v11490 = vpop.f32.mrf.mxu0
    %v11491 = vadd.f32 %v11477, %v11490
    %11492 = vdwg.mxu0
    %11493 = vmatpush.bf16.msra.mxu0 %v10412
    %11494 = vmatpush.bf16.msra.mxu0 %v10402
    %11495 = vmatpush.bf16.msra.mxu0 %v10392
    %11496 = vmatpush.bf16.msra.mxu0 %v10382
    %11497 = vmatpush.bf16.msra.mxu0 %v10372
    %11498 = vmatpush.bf16.msra.mxu0 %v10362
    %11499 = vmatpush.bf16.msra.mxu0 %v10352
    %11500 = vmatpush.bf16.msra.mxu0 %v10342
    %11501 = vmatmul.bf16.gmra.mxu0 %v8548
    %v11502 = vpop.f32.mrf.mxu0
    %v11503 = vadd.f32 %v11489, %v11502
    %v11504 = vpop.f32.mrf.mxu0
    %v11505 = vadd.f32 %v11491, %v11504
    %11506 = vdwg.mxu0
    %11507 = vmatpush.bf16.msra.mxu0 %v10492
    %11508 = vmatpush.bf16.msra.mxu0 %v10482
    %11509 = vmatpush.bf16.msra.mxu0 %v10472
    %11510 = vmatpush.bf16.msra.mxu0 %v10462
    %11511 = vmatpush.bf16.msra.mxu0 %v10452
    %11512 = vmatpush.bf16.msra.mxu0 %v10442
    %11513 = vmatpush.bf16.msra.mxu0 %v10432
    %11514 = vmatpush.bf16.msra.mxu0 %v10422
    %11515 = vmatmul.bf16.gmra.mxu0 %v8549
    %v11516 = vpop.f32.mrf.mxu0
    %v11517 = vadd.f32 %v11503, %v11516
    %v11518 = vpop.f32.mrf.mxu0
    %v11519 = vadd.f32 %v11505, %v11518
    %11520 = vdwg.mxu0
    %11521 = vmatpush.bf16.msra.mxu0 %v10572
    %11522 = vmatpush.bf16.msra.mxu0 %v10562
    %11523 = vmatpush.bf16.msra.mxu0 %v10552
    %11524 = vmatpush.bf16.msra.mxu0 %v10542
    %11525 = vmatpush.bf16.msra.mxu0 %v10532
    %11526 = vmatpush.bf16.msra.mxu0 %v10522
    %11527 = vmatpush.bf16.msra.mxu0 %v10512
    %11528 = vmatpush.bf16.msra.mxu0 %v10502
    %11529 = vmatmul.bf16.gmra.mxu0 %v8550
    %v11530 = vpop.f32.mrf.mxu0
    %v11531 = vadd.f32 %v11517, %v11530
    %v11532 = vpop.f32.mrf.mxu0
    %v11533 = vadd.f32 %v11519, %v11532
    %11534 = vdwg.mxu0
    %11535 = vmatpush.bf16.msra.mxu0 %v10253
    %11536 = vmatpush.bf16.msra.mxu0 %v10243
    %11537 = vmatpush.bf16.msra.mxu0 %v10233
    %11538 = vmatpush.bf16.msra.mxu0 %v10223
    %11539 = vmatpush.bf16.msra.mxu0 %v10213
    %11540 = vmatpush.bf16.msra.mxu0 %v10203
    %11541 = vmatpush.bf16.msra.mxu0 %v10193
    %11542 = vmatpush.bf16.msra.mxu0 %v10183
    %11543 = vmatmul.bf16.gmra.mxu0 %v8546
    %v11544 = vpop.f32.mrf.mxu0
    %v11545 = vadd.f32 %v8963, %v11544
    %v11546 = vpop.f32.mrf.mxu0
    %v11547 = vadd.f32 %v8963, %v11546
    %11548 = vdwg.mxu0
    %11549 = vmatpush.bf16.msra.mxu0 %v10333
    %11550 = vmatpush.bf16.msra.mxu0 %v10323
    %11551 = vmatpush.bf16.msra.mxu0 %v10313
    %11552 = vmatpush.bf16.msra.mxu0 %v10303
    %11553 = vmatpush.bf16.msra.mxu0 %v10293
    %11554 = vmatpush.bf16.msra.mxu0 %v10283
    %11555 = vmatpush.bf16.msra.mxu0 %v10273
    %11556 = vmatpush.bf16.msra.mxu0 %v10263
    %11557 = vmatmul.bf16.gmra.mxu0 %v8547
    %v11558 = vpop.f32.mrf.mxu0
    %v11559 = vadd.f32 %v11545, %v11558
    %v11560 = vpop.f32.mrf.mxu0
    %v11561 = vadd.f32 %v11547, %v11560
    %11562 = vdwg.mxu0
    %11563 = vmatpush.bf16.msra.mxu0 %v10413
    %11564 = vmatpush.bf16.msra.mxu0 %v10403
    %11565 = vmatpush.bf16.msra.mxu0 %v10393
    %11566 = vmatpush.bf16.msra.mxu0 %v10383
    %11567 = vmatpush.bf16.msra.mxu0 %v10373
    %11568 = vmatpush.bf16.msra.mxu0 %v10363
    %11569 = vmatpush.bf16.msra.mxu0 %v10353
    %11570 = vmatpush.bf16.msra.mxu0 %v10343
    %11571 = vmatmul.bf16.gmra.mxu0 %v8548
    %v11572 = vpop.f32.mrf.mxu0
    %v11573 = vadd.f32 %v11559, %v11572
    %v11574 = vpop.f32.mrf.mxu0
    %v11575 = vadd.f32 %v11561, %v11574
    %11576 = vdwg.mxu0
    %11577 = vmatpush.bf16.msra.mxu0 %v10493
    %11578 = vmatpush.bf16.msra.mxu0 %v10483
    %11579 = vmatpush.bf16.msra.mxu0 %v10473
    %11580 = vmatpush.bf16.msra.mxu0 %v10463
    %11581 = vmatpush.bf16.msra.mxu0 %v10453
    %11582 = vmatpush.bf16.msra.mxu0 %v10443
    %11583 = vmatpush.bf16.msra.mxu0 %v10433
    %11584 = vmatpush.bf16.msra.mxu0 %v10423
    %11585 = vmatmul.bf16.gmra.mxu0 %v8549
    %v11586 = vpop.f32.mrf.mxu0
    %v11587 = vadd.f32 %v11573, %v11586
    %v11588 = vpop.f32.mrf.mxu0
    %v11589 = vadd.f32 %v11575, %v11588
    %11590 = vdwg.mxu0
    %11591 = vmatpush.bf16.msra.mxu0 %v10573
    %11592 = vmatpush.bf16.msra.mxu0 %v10563
    %11593 = vmatpush.bf16.msra.mxu0 %v10553
    %11594 = vmatpush.bf16.msra.mxu0 %v10543
    %11595 = vmatpush.bf16.msra.mxu0 %v10533
    %11596 = vmatpush.bf16.msra.mxu0 %v10523
    %11597 = vmatpush.bf16.msra.mxu0 %v10513
    %11598 = vmatpush.bf16.msra.mxu0 %v10503
    %11599 = vmatmul.bf16.gmra.mxu0 %v8550
    %v11600 = vpop.f32.mrf.mxu0
    %v11601 = vadd.f32 %v11587, %v11600
    %v11602 = vpop.f32.mrf.mxu0
    %v11603 = vadd.f32 %v11589, %v11602
    %11604 = vdwg.mxu0
    %11605 = vmatpush.bf16.msra.mxu0 %v10254
    %11606 = vmatpush.bf16.msra.mxu0 %v10244
    %11607 = vmatpush.bf16.msra.mxu0 %v10234
    %11608 = vmatpush.bf16.msra.mxu0 %v10224
    %11609 = vmatpush.bf16.msra.mxu0 %v10214
    %11610 = vmatpush.bf16.msra.mxu0 %v10204
    %11611 = vmatpush.bf16.msra.mxu0 %v10194
    %11612 = vmatpush.bf16.msra.mxu0 %v10184
    %11613 = vmatmul.bf16.gmra.mxu0 %v8546
    %v11614 = vpop.f32.mrf.mxu0
    %v11615 = vadd.f32 %v8964, %v11614
    %v11616 = vpop.f32.mrf.mxu0
    %v11617 = vadd.f32 %v8964, %v11616
    %11618 = vdwg.mxu0
    %11619 = vmatpush.bf16.msra.mxu0 %v10334
    %11620 = vmatpush.bf16.msra.mxu0 %v10324
    %11621 = vmatpush.bf16.msra.mxu0 %v10314
    %11622 = vmatpush.bf16.msra.mxu0 %v10304
    %11623 = vmatpush.bf16.msra.mxu0 %v10294
    %11624 = vmatpush.bf16.msra.mxu0 %v10284
    %11625 = vmatpush.bf16.msra.mxu0 %v10274
    %11626 = vmatpush.bf16.msra.mxu0 %v10264
    %11627 = vmatmul.bf16.gmra.mxu0 %v8547
    %v11628 = vpop.f32.mrf.mxu0
    %v11629 = vadd.f32 %v11615, %v11628
    %v11630 = vpop.f32.mrf.mxu0
    %v11631 = vadd.f32 %v11617, %v11630
    %11632 = vdwg.mxu0
    %11633 = vmatpush.bf16.msra.mxu0 %v10414
    %11634 = vmatpush.bf16.msra.mxu0 %v10404
    %11635 = vmatpush.bf16.msra.mxu0 %v10394
    %11636 = vmatpush.bf16.msra.mxu0 %v10384
    %11637 = vmatpush.bf16.msra.mxu0 %v10374
    %11638 = vmatpush.bf16.msra.mxu0 %v10364
    %11639 = vmatpush.bf16.msra.mxu0 %v10354
    %11640 = vmatpush.bf16.msra.mxu0 %v10344
    %11641 = vmatmul.bf16.gmra.mxu0 %v8548
    %v11642 = vpop.f32.mrf.mxu0
    %v11643 = vadd.f32 %v11629, %v11642
    %v11644 = vpop.f32.mrf.mxu0
    %v11645 = vadd.f32 %v11631, %v11644
    %11646 = vdwg.mxu0
    %11647 = vmatpush.bf16.msra.mxu0 %v10494
    %11648 = vmatpush.bf16.msra.mxu0 %v10484
    %11649 = vmatpush.bf16.msra.mxu0 %v10474
    %11650 = vmatpush.bf16.msra.mxu0 %v10464
    %11651 = vmatpush.bf16.msra.mxu0 %v10454
    %11652 = vmatpush.bf16.msra.mxu0 %v10444
    %11653 = vmatpush.bf16.msra.mxu0 %v10434
    %11654 = vmatpush.bf16.msra.mxu0 %v10424
    %11655 = vmatmul.bf16.gmra.mxu0 %v8549
    %v11656 = vpop.f32.mrf.mxu0
    %v11657 = vadd.f32 %v11643, %v11656
    %v11658 = vpop.f32.mrf.mxu0
    %v11659 = vadd.f32 %v11645, %v11658
    %11660 = vdwg.mxu0
    %11661 = vmatpush.bf16.msra.mxu0 %v10574
    %11662 = vmatpush.bf16.msra.mxu0 %v10564
    %11663 = vmatpush.bf16.msra.mxu0 %v10554
    %11664 = vmatpush.bf16.msra.mxu0 %v10544
    %11665 = vmatpush.bf16.msra.mxu0 %v10534
    %11666 = vmatpush.bf16.msra.mxu0 %v10524
    %11667 = vmatpush.bf16.msra.mxu0 %v10514
    %11668 = vmatpush.bf16.msra.mxu0 %v10504
    %11669 = vmatmul.bf16.gmra.mxu0 %v8550
    %v11670 = vpop.f32.mrf.mxu0
    %v11671 = vadd.f32 %v11657, %v11670
    %v11672 = vpop.f32.mrf.mxu0
    %v11673 = vadd.f32 %v11659, %v11672
    %11674 = vdwg.mxu0
    %v11675 = vmax.f32 %v11041, 0.0
    %v11676 = vmax.f32 %v11111, 0.0
    %v11677 = vmax.f32 %v11181, 0.0
    %v11678 = vmax.f32 %v11251, 0.0
    %v11679 = vmax.f32 %v11321, 0.0
    %v11680 = vmax.f32 %v11391, 0.0
    %v11681 = vmax.f32 %v11461, 0.0
    %v11682 = vmax.f32 %v11531, 0.0
    %v11683 = vmax.f32 %v11601, 0.0
    %v11684 = vmax.f32 %v11671, 0.0
    %v11685 = vmax.f32 %v11043, 0.0
    %v11686 = vmax.f32 %v11113, 0.0
    %v11687 = vmax.f32 %v11183, 0.0
    %v11688 = vmax.f32 %v11253, 0.0
    %v11689 = vmax.f32 %v11323, 0.0
    %v11690 = vmax.f32 %v11393, 0.0
    %v11691 = vmax.f32 %v11463, 0.0
    %v11692 = vmax.f32 %v11533, 0.0
    %v11693 = vmax.f32 %v11603, 0.0
    %v11694 = vmax.f32 %v11673, 0.0
    %v11695 = vpack.c.bf16 %v11687, %v11677
    %v11696 = vpack.c.bf16 %v11688, %v11678
    %v11697 = vpack.c.bf16 %v11689, %v11679
    %v11698 = vpack.c.bf16 %v11690, %v11680
    %v11699 = vpack.c.bf16 %v11691, %v11681
    %v11700 = vpack.c.bf16 %v11692, %v11682
    %v11701 = vpack.c.bf16 %v11693, %v11683
    %v11702 = vpack.c.bf16 %v11694, %v11684
    %v11703 = vpack.c.bf16 %v11685, %v11675
    %v11704 = vpack.c.bf16 %v11686, %v11676
    %v11705 = vld [vmem:[#allocation12] sm:$0xff]
    %v11706 = vld [vmem:[#allocation12 + $0x8] sm:$0xff]
    %v11707 = vld [vmem:[#allocation12 + $0x10] sm:$0xff]
    %v11708 = vld [vmem:[#allocation12 + $0x18] sm:$0xff]
    %v11709 = vld [vmem:[#allocation12 + $0x20] sm:$0xff]
    %v11710 = vld [vmem:[#allocation12 + $0x28] sm:$0xff]
    %v11711 = vld [vmem:[#allocation12 + $0x30] sm:$0xff]
    %v11712 = vld [vmem:[#allocation12 + $0x38] sm:$0xff]
    %v11713 = vld [vmem:[#allocation12 + $0x40] sm:$0xff]
    %v11714 = vld [vmem:[#allocation12 + $0x48] sm:$0xff]
    %v11715 = vld [vmem:[#allocation12 + $0x50] sm:$0xff]
    %v11716 = vld [vmem:[#allocation12 + $0x58] sm:$0xff]
    %v11717 = vld [vmem:[#allocation12 + $0x60] sm:$0xff]
    %v11718 = vld [vmem:[#allocation12 + $0x68] sm:$0xff]
    %v11719 = vld [vmem:[#allocation12 + $0x70] sm:$0xff]
    %v11720 = vld [vmem:[#allocation12 + $0x78] sm:$0xff]
    %v11721 = vld [vmem:[#allocation12 + $0x80] sm:$0xff]
    %v11722 = vld [vmem:[#allocation12 + $0x88] sm:$0xff]
    %v11723 = vld [vmem:[#allocation12 + $0x90] sm:$0xff]
    %v11724 = vld [vmem:[#allocation12 + $0x98] sm:$0xff]
    %v11725 = vld [vmem:[#allocation12 + $0xa0] sm:$0xff]
    %v11726 = vld [vmem:[#allocation12 + $0xa8] sm:$0xff]
    %v11727 = vld [vmem:[#allocation12 + $0xb0] sm:$0xff]
    %v11728 = vld [vmem:[#allocation12 + $0xb8] sm:$0xff]
    %v11729 = vld [vmem:[#allocation12 + $0xc0] sm:$0xff]
    %v11730 = vld [vmem:[#allocation12 + $0xc8] sm:$0xff]
    %v11731 = vld [vmem:[#allocation12 + $0xd0] sm:$0xff]
    %v11732 = vld [vmem:[#allocation12 + $0xd8] sm:$0xff]
    %v11733 = vld [vmem:[#allocation12 + $0xe0] sm:$0xff]
    %v11734 = vld [vmem:[#allocation12 + $0xe8] sm:$0xff]
    %v11735 = vld [vmem:[#allocation12 + $0xf0] sm:$0xff]
    %v11736 = vld [vmem:[#allocation12 + $0xf8] sm:$0xff]
    %v11737 = vld [vmem:[#allocation12 + $0x100] sm:$0xff]
    %v11738 = vld [vmem:[#allocation12 + $0x108] sm:$0xff]
    %v11739 = vld [vmem:[#allocation12 + $0x110] sm:$0xff]
    %v11740 = vld [vmem:[#allocation12 + $0x118] sm:$0xff]
    %v11741 = vld [vmem:[#allocation12 + $0x120] sm:$0xff]
    %v11742 = vld [vmem:[#allocation12 + $0x128] sm:$0xff]
    %v11743 = vld [vmem:[#allocation12 + $0x130] sm:$0xff]
    %v11744 = vld [vmem:[#allocation12 + $0x138] sm:$0xff]
    %v11745 = vld [vmem:[#allocation12 + $0x140] sm:$0xff]
    %v11746 = vld [vmem:[#allocation12 + $0x148] sm:$0xff]
    %v11747 = vld [vmem:[#allocation12 + $0x150] sm:$0xff]
    %v11748 = vld [vmem:[#allocation12 + $0x158] sm:$0xff]
    %v11749 = vld [vmem:[#allocation12 + $0x160] sm:$0xff]
    %v11750 = vld [vmem:[#allocation12 + $0x168] sm:$0xff]
    %v11751 = vld [vmem:[#allocation12 + $0x170] sm:$0xff]
    %v11752 = vld [vmem:[#allocation12 + $0x178] sm:$0xff]
    %v11753 = vld [vmem:[#allocation12 + $0x180] sm:$0xff]
    %v11754 = vld [vmem:[#allocation12 + $0x188] sm:$0xff]
    %v11755 = vld [vmem:[#allocation12 + $0x190] sm:$0xff]
    %v11756 = vld [vmem:[#allocation12 + $0x198] sm:$0xff]
    %v11757 = vld [vmem:[#allocation12 + $0x1a0] sm:$0xff]
    %v11758 = vld [vmem:[#allocation12 + $0x1a8] sm:$0xff]
    %v11759 = vld [vmem:[#allocation12 + $0x1b0] sm:$0xff]
    %v11760 = vld [vmem:[#allocation12 + $0x1b8] sm:$0xff]
    %v11761 = vld [vmem:[#allocation12 + $0x1c0] sm:$0xff]
    %v11762 = vld [vmem:[#allocation12 + $0x1c8] sm:$0xff]
    %v11763 = vld [vmem:[#allocation12 + $0x1d0] sm:$0xff]
    %v11764 = vld [vmem:[#allocation12 + $0x1d8] sm:$0xff]
    %v11765 = vld [vmem:[#allocation12 + $0x1e0] sm:$0xff]
    %v11766 = vld [vmem:[#allocation12 + $0x1e8] sm:$0xff]
    %v11767 = vld [vmem:[#allocation12 + $0x1f0] sm:$0xff]
    %v11768 = vld [vmem:[#allocation12 + $0x1f8] sm:$0xff]
    %v11769 = vld [vmem:[#allocation12 + $0x200] sm:$0xff]
    %v11770 = vld [vmem:[#allocation12 + $0x208] sm:$0xff]
    %v11771 = vld [vmem:[#allocation12 + $0x210] sm:$0xff]
    %v11772 = vld [vmem:[#allocation12 + $0x218] sm:$0xff]
    %v11773 = vld [vmem:[#allocation12 + $0x220] sm:$0xff]
    %v11774 = vld [vmem:[#allocation12 + $0x228] sm:$0xff]
    %v11775 = vld [vmem:[#allocation12 + $0x230] sm:$0xff]
    %v11776 = vld [vmem:[#allocation12 + $0x238] sm:$0xff]
    %v11777 = vld [vmem:[#allocation12 + $0x240] sm:$0xff]
    %v11778 = vld [vmem:[#allocation12 + $0x248] sm:$0xff]
    %v11779 = vld [vmem:[#allocation12 + $0x250] sm:$0xff]
    %v11780 = vld [vmem:[#allocation12 + $0x258] sm:$0xff]
    %v11781 = vld [vmem:[#allocation12 + $0x260] sm:$0xff]
    %v11782 = vld [vmem:[#allocation12 + $0x268] sm:$0xff]
    %v11783 = vld [vmem:[#allocation12 + $0x270] sm:$0xff]
    %v11784 = vld [vmem:[#allocation12 + $0x278] sm:$0xff]
    %v11785 = vld [vmem:[#allocation12 + $0x280] sm:$0xff]
    %v11786 = vld [vmem:[#allocation12 + $0x288] sm:$0xff]
    %v11787 = vld [vmem:[#allocation12 + $0x290] sm:$0xff]
    %v11788 = vld [vmem:[#allocation12 + $0x298] sm:$0xff]
    %v11789 = vld [vmem:[#allocation12 + $0x2a0] sm:$0xff]
    %v11790 = vld [vmem:[#allocation12 + $0x2a8] sm:$0xff]
    %v11791 = vld [vmem:[#allocation12 + $0x2b0] sm:$0xff]
    %v11792 = vld [vmem:[#allocation12 + $0x2b8] sm:$0xff]
    %v11793 = vld [vmem:[#allocation12 + $0x2c0] sm:$0xff]
    %v11794 = vld [vmem:[#allocation12 + $0x2c8] sm:$0xff]
    %v11795 = vld [vmem:[#allocation12 + $0x2d0] sm:$0xff]
    %v11796 = vld [vmem:[#allocation12 + $0x2d8] sm:$0xff]
    %v11797 = vld [vmem:[#allocation12 + $0x2e0] sm:$0xff]
    %v11798 = vld [vmem:[#allocation12 + $0x2e8] sm:$0xff]
    %v11799 = vld [vmem:[#allocation12 + $0x2f0] sm:$0xff]
    %v11800 = vld [vmem:[#allocation12 + $0x2f8] sm:$0xff]
    %v11801 = vld [vmem:[#allocation12 + $0x300] sm:$0xff]
    %v11802 = vld [vmem:[#allocation12 + $0x308] sm:$0xff]
    %v11803 = vld [vmem:[#allocation12 + $0x310] sm:$0xff]
    %v11804 = vld [vmem:[#allocation12 + $0x318] sm:$0xff]
    %v11805 = vld [vmem:[#allocation12 + $0x320] sm:$0xff]
    %v11806 = vld [vmem:[#allocation12 + $0x328] sm:$0xff]
    %v11807 = vld [vmem:[#allocation12 + $0x330] sm:$0xff]
    %v11808 = vld [vmem:[#allocation12 + $0x338] sm:$0xff]
    %v11809 = vld [vmem:[#allocation12 + $0x340] sm:$0xff]
    %v11810 = vld [vmem:[#allocation12 + $0x348] sm:$0xff]
    %v11811 = vld [vmem:[#allocation12 + $0x350] sm:$0xff]
    %v11812 = vld [vmem:[#allocation12 + $0x358] sm:$0xff]
    %v11813 = vld [vmem:[#allocation12 + $0x360] sm:$0xff]
    %v11814 = vld [vmem:[#allocation12 + $0x368] sm:$0xff]
    %v11815 = vld [vmem:[#allocation12 + $0x370] sm:$0xff]
    %v11816 = vld [vmem:[#allocation12 + $0x378] sm:$0xff]
    %v11817 = vld [vmem:[#allocation12 + $0x380] sm:$0xff]
    %v11818 = vld [vmem:[#allocation12 + $0x388] sm:$0xff]
    %v11819 = vld [vmem:[#allocation12 + $0x390] sm:$0xff]
    %v11820 = vld [vmem:[#allocation12 + $0x398] sm:$0xff]
    %v11821 = vld [vmem:[#allocation12 + $0x3a0] sm:$0xff]
    %v11822 = vld [vmem:[#allocation12 + $0x3a8] sm:$0xff]
    %v11823 = vld [vmem:[#allocation12 + $0x3b0] sm:$0xff]
    %v11824 = vld [vmem:[#allocation12 + $0x3b8] sm:$0xff]
    %v11825 = vld [vmem:[#allocation12 + $0x3c0] sm:$0xff]
    %v11826 = vld [vmem:[#allocation12 + $0x3c8] sm:$0xff]
    %v11827 = vld [vmem:[#allocation12 + $0x3d0] sm:$0xff]
    %v11828 = vld [vmem:[#allocation12 + $0x3d8] sm:$0xff]
    %v11829 = vld [vmem:[#allocation12 + $0x3e0] sm:$0xff]
    %v11830 = vld [vmem:[#allocation12 + $0x3e8] sm:$0xff]
    %v11831 = vld [vmem:[#allocation12 + $0x3f0] sm:$0xff]
    %v11832 = vld [vmem:[#allocation12 + $0x3f8] sm:$0xff]
    %v11833 = vld [vmem:[#allocation13] sm:$0xff]
    %v11835 = vperm.slane %v11833, 0
    %v11836 = vperm.slane %v11833, 1
    %v11837 = vperm.slane %v11833, 2
    %v11838 = vperm.slane %v11833, 3
    %v11839 = vperm.slane %v11833, 4
    %v11840 = vperm.slane %v11833, 5
    %v11841 = vperm.slane %v11833, 6
    %v11842 = vperm.slane %v11833, 7
    %v11979 = vunpack.c.l.b16 %v11705
    %v11980 = vunpack.c.h.b16 %v11705
    %v11981 = vunpack.c.l.b16 %v11706
    %v11982 = vunpack.c.h.b16 %v11706
    %v11983 = vunpack.c.l.b16 %v11707
    %v11984 = vunpack.c.h.b16 %v11707
    %v11985 = vunpack.c.l.b16 %v11708
    %v11986 = vunpack.c.h.b16 %v11708
    %v11987 = vunpack.c.l.b16 %v11709
    %v11988 = vunpack.c.h.b16 %v11709
    %v11989 = vunpack.c.l.b16 %v11710
    %v11990 = vunpack.c.h.b16 %v11710
    %v11991 = vunpack.c.l.b16 %v11711
    %v11992 = vunpack.c.h.b16 %v11711
    %v11993 = vunpack.c.l.b16 %v11712
    %v11994 = vunpack.c.h.b16 %v11712
    %v11995 = vunpack.c.l.b16 %v11713
    %v11996 = vunpack.c.h.b16 %v11713
    %v11997 = vunpack.c.l.b16 %v11714
    %v11998 = vunpack.c.h.b16 %v11714
    %v11999 = vunpack.c.l.b16 %v11715
    %v12000 = vunpack.c.h.b16 %v11715
    %v12001 = vunpack.c.l.b16 %v11716
    %v12002 = vunpack.c.h.b16 %v11716
    %v12003 = vunpack.c.l.b16 %v11717
    %v12004 = vunpack.c.h.b16 %v11717
    %v12005 = vunpack.c.l.b16 %v11718
    %v12006 = vunpack.c.h.b16 %v11718
    %v12007 = vunpack.c.l.b16 %v11719
    %v12008 = vunpack.c.h.b16 %v11719
    %v12009 = vunpack.c.l.b16 %v11720
    %v12010 = vunpack.c.h.b16 %v11720
    %v12011 = vunpack.c.l.b16 %v11721
    %v12012 = vunpack.c.h.b16 %v11721
    %v12013 = vunpack.c.l.b16 %v11722
    %v12014 = vunpack.c.h.b16 %v11722
    %v12015 = vunpack.c.l.b16 %v11723
    %v12016 = vunpack.c.h.b16 %v11723
    %v12017 = vunpack.c.l.b16 %v11724
    %v12018 = vunpack.c.h.b16 %v11724
    %v12019 = vunpack.c.l.b16 %v11725
    %v12020 = vunpack.c.h.b16 %v11725
    %v12021 = vunpack.c.l.b16 %v11726
    %v12022 = vunpack.c.h.b16 %v11726
    %v12023 = vunpack.c.l.b16 %v11727
    %v12024 = vunpack.c.h.b16 %v11727
    %v12025 = vunpack.c.l.b16 %v11728
    %v12026 = vunpack.c.h.b16 %v11728
    %v12027 = vunpack.c.l.b16 %v11729
    %v12028 = vunpack.c.h.b16 %v11729
    %v12029 = vunpack.c.l.b16 %v11730
    %v12030 = vunpack.c.h.b16 %v11730
    %v12031 = vunpack.c.l.b16 %v11731
    %v12032 = vunpack.c.h.b16 %v11731
    %v12033 = vunpack.c.l.b16 %v11732
    %v12034 = vunpack.c.h.b16 %v11732
    %v12035 = vunpack.c.l.b16 %v11733
    %v12036 = vunpack.c.h.b16 %v11733
    %v12037 = vunpack.c.l.b16 %v11734
    %v12038 = vunpack.c.h.b16 %v11734
    %v12039 = vunpack.c.l.b16 %v11735
    %v12040 = vunpack.c.h.b16 %v11735
    %v12041 = vunpack.c.l.b16 %v11736
    %v12042 = vunpack.c.h.b16 %v11736
    %v12043 = vunpack.c.l.b16 %v11737
    %v12044 = vunpack.c.h.b16 %v11737
    %v12045 = vunpack.c.l.b16 %v11738
    %v12046 = vunpack.c.h.b16 %v11738
    %v12047 = vunpack.c.l.b16 %v11739
    %v12048 = vunpack.c.h.b16 %v11739
    %v12049 = vunpack.c.l.b16 %v11740
    %v12050 = vunpack.c.h.b16 %v11740
    %v12051 = vunpack.c.l.b16 %v11741
    %v12052 = vunpack.c.h.b16 %v11741
    %v12053 = vunpack.c.l.b16 %v11742
    %v12054 = vunpack.c.h.b16 %v11742
    %v12055 = vunpack.c.l.b16 %v11743
    %v12056 = vunpack.c.h.b16 %v11743
    %v12057 = vunpack.c.l.b16 %v11744
    %v12058 = vunpack.c.h.b16 %v11744
    %v12059 = vunpack.c.l.b16 %v11745
    %v12060 = vunpack.c.h.b16 %v11745
    %v12061 = vunpack.c.l.b16 %v11746
    %v12062 = vunpack.c.h.b16 %v11746
    %v12063 = vunpack.c.l.b16 %v11747
    %v12064 = vunpack.c.h.b16 %v11747
    %v12065 = vunpack.c.l.b16 %v11748
    %v12066 = vunpack.c.h.b16 %v11748
    %v12067 = vunpack.c.l.b16 %v11749
    %v12068 = vunpack.c.h.b16 %v11749
    %v12069 = vunpack.c.l.b16 %v11750
    %v12070 = vunpack.c.h.b16 %v11750
    %v12071 = vunpack.c.l.b16 %v11751
    %v12072 = vunpack.c.h.b16 %v11751
    %v12073 = vunpack.c.l.b16 %v11752
    %v12074 = vunpack.c.h.b16 %v11752
    %v12075 = vunpack.c.l.b16 %v11753
    %v12076 = vunpack.c.h.b16 %v11753
    %v12077 = vunpack.c.l.b16 %v11754
    %v12078 = vunpack.c.h.b16 %v11754
    %v12079 = vunpack.c.l.b16 %v11755
    %v12080 = vunpack.c.h.b16 %v11755
    %v12081 = vunpack.c.l.b16 %v11756
    %v12082 = vunpack.c.h.b16 %v11756
    %v12083 = vunpack.c.l.b16 %v11757
    %v12084 = vunpack.c.h.b16 %v11757
    %v12085 = vunpack.c.l.b16 %v11758
    %v12086 = vunpack.c.h.b16 %v11758
    %v12087 = vunpack.c.l.b16 %v11759
    %v12088 = vunpack.c.h.b16 %v11759
    %v12089 = vunpack.c.l.b16 %v11760
    %v12090 = vunpack.c.h.b16 %v11760
    %v12091 = vunpack.c.l.b16 %v11761
    %v12092 = vunpack.c.h.b16 %v11761
    %v12093 = vunpack.c.l.b16 %v11762
    %v12094 = vunpack.c.h.b16 %v11762
    %v12095 = vunpack.c.l.b16 %v11763
    %v12096 = vunpack.c.h.b16 %v11763
    %v12097 = vunpack.c.l.b16 %v11764
    %v12098 = vunpack.c.h.b16 %v11764
    %v12099 = vunpack.c.l.b16 %v11765
    %v12100 = vunpack.c.h.b16 %v11765
    %v12101 = vunpack.c.l.b16 %v11766
    %v12102 = vunpack.c.h.b16 %v11766
    %v12103 = vunpack.c.l.b16 %v11767
    %v12104 = vunpack.c.h.b16 %v11767
    %v12105 = vunpack.c.l.b16 %v11768
    %v12106 = vunpack.c.h.b16 %v11768
    %v12107 = vunpack.c.l.b16 %v11769
    %v12108 = vunpack.c.h.b16 %v11769
    %v12109 = vunpack.c.l.b16 %v11770
    %v12110 = vunpack.c.h.b16 %v11770
    %v12111 = vunpack.c.l.b16 %v11771
    %v12112 = vunpack.c.h.b16 %v11771
    %v12113 = vunpack.c.l.b16 %v11772
    %v12114 = vunpack.c.h.b16 %v11772
    %v12115 = vunpack.c.l.b16 %v11773
    %v12116 = vunpack.c.h.b16 %v11773
    %v12117 = vunpack.c.l.b16 %v11774
    %v12118 = vunpack.c.h.b16 %v11774
    %v12119 = vunpack.c.l.b16 %v11775
    %v12120 = vunpack.c.h.b16 %v11775
    %v12121 = vunpack.c.l.b16 %v11776
    %v12122 = vunpack.c.h.b16 %v11776
    %v12123 = vunpack.c.l.b16 %v11777
    %v12124 = vunpack.c.h.b16 %v11777
    %v12125 = vunpack.c.l.b16 %v11778
    %v12126 = vunpack.c.h.b16 %v11778
    %v12127 = vunpack.c.l.b16 %v11779
    %v12128 = vunpack.c.h.b16 %v11779
    %v12129 = vunpack.c.l.b16 %v11780
    %v12130 = vunpack.c.h.b16 %v11780
    %v12131 = vunpack.c.l.b16 %v11781
    %v12132 = vunpack.c.h.b16 %v11781
    %v12133 = vunpack.c.l.b16 %v11782
    %v12134 = vunpack.c.h.b16 %v11782
    %v12135 = vunpack.c.l.b16 %v11783
    %v12136 = vunpack.c.h.b16 %v11783
    %v12137 = vunpack.c.l.b16 %v11784
    %v12138 = vunpack.c.h.b16 %v11784
    %v12139 = vunpack.c.l.b16 %v11785
    %v12140 = vunpack.c.h.b16 %v11785
    %v12141 = vunpack.c.l.b16 %v11786
    %v12142 = vunpack.c.h.b16 %v11786
    %v12143 = vunpack.c.l.b16 %v11787
    %v12144 = vunpack.c.h.b16 %v11787
    %v12145 = vunpack.c.l.b16 %v11788
    %v12146 = vunpack.c.h.b16 %v11788
    %v12147 = vunpack.c.l.b16 %v11789
    %v12148 = vunpack.c.h.b16 %v11789
    %v12149 = vunpack.c.l.b16 %v11790
    %v12150 = vunpack.c.h.b16 %v11790
    %v12151 = vunpack.c.l.b16 %v11791
    %v12152 = vunpack.c.h.b16 %v11791
    %v12153 = vunpack.c.l.b16 %v11792
    %v12154 = vunpack.c.h.b16 %v11792
    %v12155 = vunpack.c.l.b16 %v11793
    %v12156 = vunpack.c.h.b16 %v11793
    %v12157 = vunpack.c.l.b16 %v11794
    %v12158 = vunpack.c.h.b16 %v11794
    %v12159 = vunpack.c.l.b16 %v11795
    %v12160 = vunpack.c.h.b16 %v11795
    %v12161 = vunpack.c.l.b16 %v11796
    %v12162 = vunpack.c.h.b16 %v11796
    %v12163 = vunpack.c.l.b16 %v11797
    %v12164 = vunpack.c.h.b16 %v11797
    %v12165 = vunpack.c.l.b16 %v11798
    %v12166 = vunpack.c.h.b16 %v11798
    %v12167 = vunpack.c.l.b16 %v11799
    %v12168 = vunpack.c.h.b16 %v11799
    %v12169 = vunpack.c.l.b16 %v11800
    %v12170 = vunpack.c.h.b16 %v11800
    %v12171 = vunpack.c.l.b16 %v11801
    %v12172 = vunpack.c.h.b16 %v11801
    %v12173 = vunpack.c.l.b16 %v11802
    %v12174 = vunpack.c.h.b16 %v11802
    %v12175 = vunpack.c.l.b16 %v11803
    %v12176 = vunpack.c.h.b16 %v11803
    %v12177 = vunpack.c.l.b16 %v11804
    %v12178 = vunpack.c.h.b16 %v11804
    %v12179 = vunpack.c.l.b16 %v11805
    %v12180 = vunpack.c.h.b16 %v11805
    %v12181 = vunpack.c.l.b16 %v11806
    %v12182 = vunpack.c.h.b16 %v11806
    %v12183 = vunpack.c.l.b16 %v11807
    %v12184 = vunpack.c.h.b16 %v11807
    %v12185 = vunpack.c.l.b16 %v11808
    %v12186 = vunpack.c.h.b16 %v11808
    %v12187 = vunpack.c.l.b16 %v11809
    %v12188 = vunpack.c.h.b16 %v11809
    %v12189 = vunpack.c.l.b16 %v11810
    %v12190 = vunpack.c.h.b16 %v11810
    %v12191 = vunpack.c.l.b16 %v11811
    %v12192 = vunpack.c.h.b16 %v11811
    %v12193 = vunpack.c.l.b16 %v11812
    %v12194 = vunpack.c.h.b16 %v11812
    %v12195 = vunpack.c.l.b16 %v11813
    %v12196 = vunpack.c.h.b16 %v11813
    %v12197 = vunpack.c.l.b16 %v11814
    %v12198 = vunpack.c.h.b16 %v11814
    %v12199 = vunpack.c.l.b16 %v11815
    %v12200 = vunpack.c.h.b16 %v11815
    %v12201 = vunpack.c.l.b16 %v11816
    %v12202 = vunpack.c.h.b16 %v11816
    %v12203 = vunpack.c.l.b16 %v11817
    %v12204 = vunpack.c.h.b16 %v11817
    %v12205 = vunpack.c.l.b16 %v11818
    %v12206 = vunpack.c.h.b16 %v11818
    %v12207 = vunpack.c.l.b16 %v11819
    %v12208 = vunpack.c.h.b16 %v11819
    %v12209 = vunpack.c.l.b16 %v11820
    %v12210 = vunpack.c.h.b16 %v11820
    %v12211 = vunpack.c.l.b16 %v11821
    %v12212 = vunpack.c.h.b16 %v11821
    %v12213 = vunpack.c.l.b16 %v11822
    %v12214 = vunpack.c.h.b16 %v11822
    %v12215 = vunpack.c.l.b16 %v11823
    %v12216 = vunpack.c.h.b16 %v11823
    %v12217 = vunpack.c.l.b16 %v11824
    %v12218 = vunpack.c.h.b16 %v11824
    %v12219 = vunpack.c.l.b16 %v11825
    %v12220 = vunpack.c.h.b16 %v11825
    %v12221 = vunpack.c.l.b16 %v11826
    %v12222 = vunpack.c.h.b16 %v11826
    %v12223 = vunpack.c.l.b16 %v11827
    %v12224 = vunpack.c.h.b16 %v11827
    %v12225 = vunpack.c.l.b16 %v11828
    %v12226 = vunpack.c.h.b16 %v11828
    %v12227 = vunpack.c.l.b16 %v11829
    %v12228 = vunpack.c.h.b16 %v11829
    %v12229 = vunpack.c.l.b16 %v11830
    %v12230 = vunpack.c.h.b16 %v11830
    %v12231 = vunpack.c.l.b16 %v11831
    %v12232 = vunpack.c.h.b16 %v11831
    %v12233 = vunpack.c.l.b16 %v11832
    %v12234 = vunpack.c.h.b16 %v11832
    %v12235 = vpack.c.b16 %v11987, %v11979
    %v12236 = vpack.c.b16 %v11988, %v11980
    %v12237 = vpack.c.b16 %v11989, %v11981
    %v12238 = vpack.c.b16 %v11990, %v11982
    %v12239 = vpack.c.b16 %v11991, %v11983
    %v12240 = vpack.c.b16 %v11992, %v11984
    %v12241 = vpack.c.b16 %v11993, %v11985
    %v12242 = vpack.c.b16 %v11994, %v11986
    %v12243 = vpack.c.b16 %v12003, %v11995
    %v12244 = vpack.c.b16 %v12004, %v11996
    %v12245 = vpack.c.b16 %v12005, %v11997
    %v12246 = vpack.c.b16 %v12006, %v11998
    %v12247 = vpack.c.b16 %v12007, %v11999
    %v12248 = vpack.c.b16 %v12008, %v12000
    %v12249 = vpack.c.b16 %v12009, %v12001
    %v12250 = vpack.c.b16 %v12010, %v12002
    %v12251 = vpack.c.b16 %v12019, %v12011
    %v12252 = vpack.c.b16 %v12020, %v12012
    %v12253 = vpack.c.b16 %v12021, %v12013
    %v12254 = vpack.c.b16 %v12022, %v12014
    %v12255 = vpack.c.b16 %v12023, %v12015
    %v12256 = vpack.c.b16 %v12024, %v12016
    %v12257 = vpack.c.b16 %v12025, %v12017
    %v12258 = vpack.c.b16 %v12026, %v12018
    %v12259 = vpack.c.b16 %v12035, %v12027
    %v12260 = vpack.c.b16 %v12036, %v12028
    %v12261 = vpack.c.b16 %v12037, %v12029
    %v12262 = vpack.c.b16 %v12038, %v12030
    %v12263 = vpack.c.b16 %v12039, %v12031
    %v12264 = vpack.c.b16 %v12040, %v12032
    %v12265 = vpack.c.b16 %v12041, %v12033
    %v12266 = vpack.c.b16 %v12042, %v12034
    %v12267 = vpack.c.b16 %v12051, %v12043
    %v12268 = vpack.c.b16 %v12052, %v12044
    %v12269 = vpack.c.b16 %v12053, %v12045
    %v12270 = vpack.c.b16 %v12054, %v12046
    %v12271 = vpack.c.b16 %v12055, %v12047
    %v12272 = vpack.c.b16 %v12056, %v12048
    %v12273 = vpack.c.b16 %v12057, %v12049
    %v12274 = vpack.c.b16 %v12058, %v12050
    %v12275 = vpack.c.b16 %v12067, %v12059
    %v12276 = vpack.c.b16 %v12068, %v12060
    %v12277 = vpack.c.b16 %v12069, %v12061
    %v12278 = vpack.c.b16 %v12070, %v12062
    %v12279 = vpack.c.b16 %v12071, %v12063
    %v12280 = vpack.c.b16 %v12072, %v12064
    %v12281 = vpack.c.b16 %v12073, %v12065
    %v12282 = vpack.c.b16 %v12074, %v12066
    %v12283 = vpack.c.b16 %v12083, %v12075
    %v12284 = vpack.c.b16 %v12084, %v12076
    %v12285 = vpack.c.b16 %v12085, %v12077
    %v12286 = vpack.c.b16 %v12086, %v12078
    %v12287 = vpack.c.b16 %v12087, %v12079
    %v12288 = vpack.c.b16 %v12088, %v12080
    %v12289 = vpack.c.b16 %v12089, %v12081
    %v12290 = vpack.c.b16 %v12090, %v12082
    %v12291 = vpack.c.b16 %v12099, %v12091
    %v12292 = vpack.c.b16 %v12100, %v12092
    %v12293 = vpack.c.b16 %v12101, %v12093
    %v12294 = vpack.c.b16 %v12102, %v12094
    %v12295 = vpack.c.b16 %v12103, %v12095
    %v12296 = vpack.c.b16 %v12104, %v12096
    %v12297 = vpack.c.b16 %v12105, %v12097
    %v12298 = vpack.c.b16 %v12106, %v12098
    %v12299 = vpack.c.b16 %v12115, %v12107
    %v12300 = vpack.c.b16 %v12116, %v12108
    %v12301 = vpack.c.b16 %v12117, %v12109
    %v12302 = vpack.c.b16 %v12118, %v12110
    %v12303 = vpack.c.b16 %v12119, %v12111
    %v12304 = vpack.c.b16 %v12120, %v12112
    %v12305 = vpack.c.b16 %v12121, %v12113
    %v12306 = vpack.c.b16 %v12122, %v12114
    %v12307 = vpack.c.b16 %v12131, %v12123
    %v12308 = vpack.c.b16 %v12132, %v12124
    %v12309 = vpack.c.b16 %v12133, %v12125
    %v12310 = vpack.c.b16 %v12134, %v12126
    %v12311 = vpack.c.b16 %v12135, %v12127
    %v12312 = vpack.c.b16 %v12136, %v12128
    %v12313 = vpack.c.b16 %v12137, %v12129
    %v12314 = vpack.c.b16 %v12138, %v12130
    %v12315 = vpack.c.b16 %v12147, %v12139
    %v12316 = vpack.c.b16 %v12148, %v12140
    %v12317 = vpack.c.b16 %v12149, %v12141
    %v12318 = vpack.c.b16 %v12150, %v12142
    %v12319 = vpack.c.b16 %v12151, %v12143
    %v12320 = vpack.c.b16 %v12152, %v12144
    %v12321 = vpack.c.b16 %v12153, %v12145
    %v12322 = vpack.c.b16 %v12154, %v12146
    %v12323 = vpack.c.b16 %v12163, %v12155
    %v12324 = vpack.c.b16 %v12164, %v12156
    %v12325 = vpack.c.b16 %v12165, %v12157
    %v12326 = vpack.c.b16 %v12166, %v12158
    %v12327 = vpack.c.b16 %v12167, %v12159
    %v12328 = vpack.c.b16 %v12168, %v12160
    %v12329 = vpack.c.b16 %v12169, %v12161
    %v12330 = vpack.c.b16 %v12170, %v12162
    %v12331 = vpack.c.b16 %v12179, %v12171
    %v12332 = vpack.c.b16 %v12180, %v12172
    %v12333 = vpack.c.b16 %v12181, %v12173
    %v12334 = vpack.c.b16 %v12182, %v12174
    %v12335 = vpack.c.b16 %v12183, %v12175
    %v12336 = vpack.c.b16 %v12184, %v12176
    %v12337 = vpack.c.b16 %v12185, %v12177
    %v12338 = vpack.c.b16 %v12186, %v12178
    %v12339 = vpack.c.b16 %v12195, %v12187
    %v12340 = vpack.c.b16 %v12196, %v12188
    %v12341 = vpack.c.b16 %v12197, %v12189
    %v12342 = vpack.c.b16 %v12198, %v12190
    %v12343 = vpack.c.b16 %v12199, %v12191
    %v12344 = vpack.c.b16 %v12200, %v12192
    %v12345 = vpack.c.b16 %v12201, %v12193
    %v12346 = vpack.c.b16 %v12202, %v12194
    %v12347 = vpack.c.b16 %v12211, %v12203
    %v12348 = vpack.c.b16 %v12212, %v12204
    %v12349 = vpack.c.b16 %v12213, %v12205
    %v12350 = vpack.c.b16 %v12214, %v12206
    %v12351 = vpack.c.b16 %v12215, %v12207
    %v12352 = vpack.c.b16 %v12216, %v12208
    %v12353 = vpack.c.b16 %v12217, %v12209
    %v12354 = vpack.c.b16 %v12218, %v12210
    %v12355 = vpack.c.b16 %v12227, %v12219
    %v12356 = vpack.c.b16 %v12228, %v12220
    %v12357 = vpack.c.b16 %v12229, %v12221
    %v12358 = vpack.c.b16 %v12230, %v12222
    %v12359 = vpack.c.b16 %v12231, %v12223
    %v12360 = vpack.c.b16 %v12232, %v12224
    %v12361 = vpack.c.b16 %v12233, %v12225
    %v12362 = vpack.c.b16 %v12234, %v12226
    %12491 = vmatpush.bf16.msra.mxu0 %v12291
    %12492 = vmatpush.bf16.msra.mxu0 %v12283
    %12493 = vmatpush.bf16.msra.mxu0 %v12275
    %12494 = vmatpush.bf16.msra.mxu0 %v12267
    %12495 = vmatpush.bf16.msra.mxu0 %v12259
    %12496 = vmatpush.bf16.msra.mxu0 %v12251
    %12497 = vmatpush.bf16.msra.mxu0 %v12243
    %12498 = vmatpush.bf16.msra.mxu0 %v12235
    %12499 = vmatmul.bf16.gmra.mxu0 %v11703
    %v12500 = vpop.f32.mrf.mxu0
    %v12501 = vadd.f32 %v11835, %v12500
    %v12502 = vpop.f32.mrf.mxu0
    %v12503 = vadd.f32 %v11835, %v12502
    %12504 = vdwg.mxu0
    %12505 = vmatpush.bf16.msra.mxu0 %v12355
    %12506 = vmatpush.bf16.msra.mxu0 %v12347
    %12507 = vmatpush.bf16.msra.mxu0 %v12339
    %12508 = vmatpush.bf16.msra.mxu0 %v12331
    %12509 = vmatpush.bf16.msra.mxu0 %v12323
    %12510 = vmatpush.bf16.msra.mxu0 %v12315
    %12511 = vmatpush.bf16.msra.mxu0 %v12307
    %12512 = vmatpush.bf16.msra.mxu0 %v12299
    %12513 = vmatmul.bf16.gmra.mxu0 %v11704
    %v12514 = vpop.f32.mrf.mxu0
    %v12515 = vadd.f32 %v12501, %v12514
    %v12516 = vpop.f32.mrf.mxu0
    %v12517 = vadd.f32 %v12503, %v12516
    %12518 = vdwg.mxu0
    %12519 = vmatpush.bf16.msra.mxu0 %v12292
    %12520 = vmatpush.bf16.msra.mxu0 %v12284
    %12521 = vmatpush.bf16.msra.mxu0 %v12276
    %12522 = vmatpush.bf16.msra.mxu0 %v12268
    %12523 = vmatpush.bf16.msra.mxu0 %v12260
    %12524 = vmatpush.bf16.msra.mxu0 %v12252
    %12525 = vmatpush.bf16.msra.mxu0 %v12244
    %12526 = vmatpush.bf16.msra.mxu0 %v12236
    %12527 = vmatmul.bf16.gmra.mxu0 %v11703
    %v12528 = vpop.f32.mrf.mxu0
    %v12529 = vadd.f32 %v11836, %v12528
    %v12530 = vpop.f32.mrf.mxu0
    %v12531 = vadd.f32 %v11836, %v12530
    %12532 = vdwg.mxu0
    %12533 = vmatpush.bf16.msra.mxu0 %v12356
    %12534 = vmatpush.bf16.msra.mxu0 %v12348
    %12535 = vmatpush.bf16.msra.mxu0 %v12340
    %12536 = vmatpush.bf16.msra.mxu0 %v12332
    %12537 = vmatpush.bf16.msra.mxu0 %v12324
    %12538 = vmatpush.bf16.msra.mxu0 %v12316
    %12539 = vmatpush.bf16.msra.mxu0 %v12308
    %12540 = vmatpush.bf16.msra.mxu0 %v12300
    %12541 = vmatmul.bf16.gmra.mxu0 %v11704
    %v12542 = vpop.f32.mrf.mxu0
    %v12543 = vadd.f32 %v12529, %v12542
    %v12544 = vpop.f32.mrf.mxu0
    %v12545 = vadd.f32 %v12531, %v12544
    %12546 = vdwg.mxu0
    %12547 = vmatpush.bf16.msra.mxu0 %v12293
    %12548 = vmatpush.bf16.msra.mxu0 %v12285
    %12549 = vmatpush.bf16.msra.mxu0 %v12277
    %12550 = vmatpush.bf16.msra.mxu0 %v12269
    %12551 = vmatpush.bf16.msra.mxu0 %v12261
    %12552 = vmatpush.bf16.msra.mxu0 %v12253
    %12553 = vmatpush.bf16.msra.mxu0 %v12245
    %12554 = vmatpush.bf16.msra.mxu0 %v12237
    %12555 = vmatmul.bf16.gmra.mxu0 %v11703
    %v12556 = vpop.f32.mrf.mxu0
    %v12557 = vadd.f32 %v11837, %v12556
    %v12558 = vpop.f32.mrf.mxu0
    %v12559 = vadd.f32 %v11837, %v12558
    %12560 = vdwg.mxu0
    %12561 = vmatpush.bf16.msra.mxu0 %v12357
    %12562 = vmatpush.bf16.msra.mxu0 %v12349
    %12563 = vmatpush.bf16.msra.mxu0 %v12341
    %12564 = vmatpush.bf16.msra.mxu0 %v12333
    %12565 = vmatpush.bf16.msra.mxu0 %v12325
    %12566 = vmatpush.bf16.msra.mxu0 %v12317
    %12567 = vmatpush.bf16.msra.mxu0 %v12309
    %12568 = vmatpush.bf16.msra.mxu0 %v12301
    %12569 = vmatmul.bf16.gmra.mxu0 %v11704
    %v12570 = vpop.f32.mrf.mxu0
    %v12571 = vadd.f32 %v12557, %v12570
    %v12572 = vpop.f32.mrf.mxu0
    %v12573 = vadd.f32 %v12559, %v12572
    %12574 = vdwg.mxu0
    %12575 = vmatpush.bf16.msra.mxu0 %v12294
    %12576 = vmatpush.bf16.msra.mxu0 %v12286
    %12577 = vmatpush.bf16.msra.mxu0 %v12278
    %12578 = vmatpush.bf16.msra.mxu0 %v12270
    %12579 = vmatpush.bf16.msra.mxu0 %v12262
    %12580 = vmatpush.bf16.msra.mxu0 %v12254
    %12581 = vmatpush.bf16.msra.mxu0 %v12246
    %12582 = vmatpush.bf16.msra.mxu0 %v12238
    %12583 = vmatmul.bf16.gmra.mxu0 %v11703
    %v12584 = vpop.f32.mrf.mxu0
    %v12585 = vadd.f32 %v11838, %v12584
    %v12586 = vpop.f32.mrf.mxu0
    %v12587 = vadd.f32 %v11838, %v12586
    %12588 = vdwg.mxu0
    %12589 = vmatpush.bf16.msra.mxu0 %v12358
    %12590 = vmatpush.bf16.msra.mxu0 %v12350
    %12591 = vmatpush.bf16.msra.mxu0 %v12342
    %12592 = vmatpush.bf16.msra.mxu0 %v12334
    %12593 = vmatpush.bf16.msra.mxu0 %v12326
    %12594 = vmatpush.bf16.msra.mxu0 %v12318
    %12595 = vmatpush.bf16.msra.mxu0 %v12310
    %12596 = vmatpush.bf16.msra.mxu0 %v12302
    %12597 = vmatmul.bf16.gmra.mxu0 %v11704
    %v12598 = vpop.f32.mrf.mxu0
    %v12599 = vadd.f32 %v12585, %v12598
    %v12600 = vpop.f32.mrf.mxu0
    %v12601 = vadd.f32 %v12587, %v12600
    %12602 = vdwg.mxu0
    %12603 = vmatpush.bf16.msra.mxu0 %v12295
    %12604 = vmatpush.bf16.msra.mxu0 %v12287
    %12605 = vmatpush.bf16.msra.mxu0 %v12279
    %12606 = vmatpush.bf16.msra.mxu0 %v12271
    %12607 = vmatpush.bf16.msra.mxu0 %v12263
    %12608 = vmatpush.bf16.msra.mxu0 %v12255
    %12609 = vmatpush.bf16.msra.mxu0 %v12247
    %12610 = vmatpush.bf16.msra.mxu0 %v12239
    %12611 = vmatmul.bf16.gmra.mxu0 %v11703
    %v12612 = vpop.f32.mrf.mxu0
    %v12613 = vadd.f32 %v11839, %v12612
    %v12614 = vpop.f32.mrf.mxu0
    %v12615 = vadd.f32 %v11839, %v12614
    %12616 = vdwg.mxu0
    %12617 = vmatpush.bf16.msra.mxu0 %v12359
    %12618 = vmatpush.bf16.msra.mxu0 %v12351
    %12619 = vmatpush.bf16.msra.mxu0 %v12343
    %12620 = vmatpush.bf16.msra.mxu0 %v12335
    %12621 = vmatpush.bf16.msra.mxu0 %v12327
    %12622 = vmatpush.bf16.msra.mxu0 %v12319
    %12623 = vmatpush.bf16.msra.mxu0 %v12311
    %12624 = vmatpush.bf16.msra.mxu0 %v12303
    %12625 = vmatmul.bf16.gmra.mxu0 %v11704
    %v12626 = vpop.f32.mrf.mxu0
    %v12627 = vadd.f32 %v12613, %v12626
    %v12628 = vpop.f32.mrf.mxu0
    %v12629 = vadd.f32 %v12615, %v12628
    %12630 = vdwg.mxu0
    %12631 = vmatpush.bf16.msra.mxu0 %v12296
    %12632 = vmatpush.bf16.msra.mxu0 %v12288
    %12633 = vmatpush.bf16.msra.mxu0 %v12280
    %12634 = vmatpush.bf16.msra.mxu0 %v12272
    %12635 = vmatpush.bf16.msra.mxu0 %v12264
    %12636 = vmatpush.bf16.msra.mxu0 %v12256
    %12637 = vmatpush.bf16.msra.mxu0 %v12248
    %12638 = vmatpush.bf16.msra.mxu0 %v12240
    %12639 = vmatmul.bf16.gmra.mxu0 %v11703
    %v12640 = vpop.f32.mrf.mxu0
    %v12641 = vadd.f32 %v11840, %v12640
    %v12642 = vpop.f32.mrf.mxu0
    %v12643 = vadd.f32 %v11840, %v12642
    %12644 = vdwg.mxu0
    %12645 = vmatpush.bf16.msra.mxu0 %v12360
    %12646 = vmatpush.bf16.msra.mxu0 %v12352
    %12647 = vmatpush.bf16.msra.mxu0 %v12344
    %12648 = vmatpush.bf16.msra.mxu0 %v12336
    %12649 = vmatpush.bf16.msra.mxu0 %v12328
    %12650 = vmatpush.bf16.msra.mxu0 %v12320
    %12651 = vmatpush.bf16.msra.mxu0 %v12312
    %12652 = vmatpush.bf16.msra.mxu0 %v12304
    %12653 = vmatmul.bf16.gmra.mxu0 %v11704
    %v12654 = vpop.f32.mrf.mxu0
    %v12655 = vadd.f32 %v12641, %v12654
    %v12656 = vpop.f32.mrf.mxu0
    %v12657 = vadd.f32 %v12643, %v12656
    %12658 = vdwg.mxu0
    %12659 = vmatpush.bf16.msra.mxu0 %v12297
    %12660 = vmatpush.bf16.msra.mxu0 %v12289
    %12661 = vmatpush.bf16.msra.mxu0 %v12281
    %12662 = vmatpush.bf16.msra.mxu0 %v12273
    %12663 = vmatpush.bf16.msra.mxu0 %v12265
    %12664 = vmatpush.bf16.msra.mxu0 %v12257
    %12665 = vmatpush.bf16.msra.mxu0 %v12249
    %12666 = vmatpush.bf16.msra.mxu0 %v12241
    %12667 = vmatmul.bf16.gmra.mxu0 %v11703
    %v12668 = vpop.f32.mrf.mxu0
    %v12669 = vadd.f32 %v11841, %v12668
    %v12670 = vpop.f32.mrf.mxu0
    %v12671 = vadd.f32 %v11841, %v12670
    %12672 = vdwg.mxu0
    %12673 = vmatpush.bf16.msra.mxu0 %v12361
    %12674 = vmatpush.bf16.msra.mxu0 %v12353
    %12675 = vmatpush.bf16.msra.mxu0 %v12345
    %12676 = vmatpush.bf16.msra.mxu0 %v12337
    %12677 = vmatpush.bf16.msra.mxu0 %v12329
    %12678 = vmatpush.bf16.msra.mxu0 %v12321
    %12679 = vmatpush.bf16.msra.mxu0 %v12313
    %12680 = vmatpush.bf16.msra.mxu0 %v12305
    %12681 = vmatmul.bf16.gmra.mxu0 %v11704
    %v12682 = vpop.f32.mrf.mxu0
    %v12683 = vadd.f32 %v12669, %v12682
    %v12684 = vpop.f32.mrf.mxu0
    %v12685 = vadd.f32 %v12671, %v12684
    %12686 = vdwg.mxu0
    %12687 = vmatpush.bf16.msra.mxu0 %v12298
    %12688 = vmatpush.bf16.msra.mxu0 %v12290
    %12689 = vmatpush.bf16.msra.mxu0 %v12282
    %12690 = vmatpush.bf16.msra.mxu0 %v12274
    %12691 = vmatpush.bf16.msra.mxu0 %v12266
    %12692 = vmatpush.bf16.msra.mxu0 %v12258
    %12693 = vmatpush.bf16.msra.mxu0 %v12250
    %12694 = vmatpush.bf16.msra.mxu0 %v12242
    %12695 = vmatmul.bf16.gmra.mxu0 %v11703
    %v12696 = vpop.f32.mrf.mxu0
    %v12697 = vadd.f32 %v11842, %v12696
    %v12698 = vpop.f32.mrf.mxu0
    %v12699 = vadd.f32 %v11842, %v12698
    %12700 = vdwg.mxu0
    %12701 = vmatpush.bf16.msra.mxu0 %v12362
    %12702 = vmatpush.bf16.msra.mxu0 %v12354
    %12703 = vmatpush.bf16.msra.mxu0 %v12346
    %12704 = vmatpush.bf16.msra.mxu0 %v12338
    %12705 = vmatpush.bf16.msra.mxu0 %v12330
    %12706 = vmatpush.bf16.msra.mxu0 %v12322
    %12707 = vmatpush.bf16.msra.mxu0 %v12314
    %12708 = vmatpush.bf16.msra.mxu0 %v12306
    %12709 = vmatmul.bf16.gmra.mxu0 %v11704
    %v12710 = vpop.f32.mrf.mxu0
    %v12711 = vadd.f32 %v12697, %v12710
    %v12712 = vpop.f32.mrf.mxu0
    %v12713 = vadd.f32 %v12699, %v12712
    %12714 = vdwg.mxu0
    %v12715 = vmax.f32 %v12515, 0.0
    %v12716 = vmax.f32 %v12543, 0.0
    %v12717 = vmax.f32 %v12571, 0.0
    %v12718 = vmax.f32 %v12599, 0.0
    %v12719 = vmax.f32 %v12627, 0.0
    %v12720 = vmax.f32 %v12655, 0.0
    %v12721 = vmax.f32 %v12683, 0.0
    %v12722 = vmax.f32 %v12711, 0.0
    %v12723 = vmax.f32 %v12517, 0.0
    %v12724 = vmax.f32 %v12545, 0.0
    %v12725 = vmax.f32 %v12573, 0.0
    %v12726 = vmax.f32 %v12601, 0.0
    %v12727 = vmax.f32 %v12629, 0.0
    %v12728 = vmax.f32 %v12657, 0.0
    %v12729 = vmax.f32 %v12685, 0.0
    %v12730 = vmax.f32 %v12713, 0.0
    %v12731 = vpack.c.bf16 %v12723, %v12715
    %v12732 = vpack.c.bf16 %v12724, %v12716
    %v12733 = vpack.c.bf16 %v12725, %v12717
    %v12734 = vpack.c.bf16 %v12726, %v12718
    %v12735 = vpack.c.bf16 %v12727, %v12719
    %v12736 = vpack.c.bf16 %v12728, %v12720
    %v12737 = vpack.c.bf16 %v12729, %v12721
    %v12738 = vpack.c.bf16 %v12730, %v12722
    %v12739 = vld [vmem:[#allocation15] sm:$0xf]
    %v12740 = vld [vmem:[#allocation15 + $0x4] sm:$0xf]
    %v12741 = vld [vmem:[#allocation15 + $0x8] sm:$0xf]
    %v12742 = vld [vmem:[#allocation15 + $0xc] sm:$0xf]
    %v12743 = vld [vmem:[#allocation15 + $0x10] sm:$0xf]
    %v12744 = vld [vmem:[#allocation15 + $0x14] sm:$0xf]
    %v12745 = vld [vmem:[#allocation15 + $0x18] sm:$0xf]
    %v12746 = vld [vmem:[#allocation15 + $0x1c] sm:$0xf]
    %v12747 = vld [vmem:[#allocation15 + $0x20] sm:$0xf]
    %v12748 = vld [vmem:[#allocation15 + $0x24] sm:$0xf]
    %v12749 = vld [vmem:[#allocation15 + $0x28] sm:$0xf]
    %v12750 = vld [vmem:[#allocation15 + $0x2c] sm:$0xf]
    %v12751 = vld [vmem:[#allocation15 + $0x30] sm:$0xf]
    %v12752 = vld [vmem:[#allocation15 + $0x34] sm:$0xf]
    %v12753 = vld [vmem:[#allocation15 + $0x38] sm:$0xf]
    %v12754 = vld [vmem:[#allocation15 + $0x3c] sm:$0xf]
    %v12755 = vld [vmem:[#allocation15 + $0x40] sm:$0xf]
    %v12756 = vld [vmem:[#allocation15 + $0x44] sm:$0xf]
    %v12757 = vld [vmem:[#allocation15 + $0x48] sm:$0xf]
    %v12758 = vld [vmem:[#allocation15 + $0x4c] sm:$0xf]
    %v12759 = vld [vmem:[#allocation15 + $0x50] sm:$0xf]
    %v12760 = vld [vmem:[#allocation15 + $0x54] sm:$0xf]
    %v12761 = vld [vmem:[#allocation15 + $0x58] sm:$0xf]
    %v12762 = vld [vmem:[#allocation15 + $0x5c] sm:$0xf]
    %v12763 = vld [vmem:[#allocation15 + $0x60] sm:$0xf]
    %v12764 = vld [vmem:[#allocation15 + $0x64] sm:$0xf]
    %v12765 = vld [vmem:[#allocation15 + $0x68] sm:$0xf]
    %v12766 = vld [vmem:[#allocation15 + $0x6c] sm:$0xf]
    %v12767 = vld [vmem:[#allocation15 + $0x70] sm:$0xf]
    %v12768 = vld [vmem:[#allocation15 + $0x74] sm:$0xf]
    %v12769 = vld [vmem:[#allocation15 + $0x78] sm:$0xf]
    %v12770 = vld [vmem:[#allocation15 + $0x7c] sm:$0xf]
    %v12771 = vld [vmem:[#allocation15 + $0x80] sm:$0xf]
    %v12772 = vld [vmem:[#allocation15 + $0x84] sm:$0xf]
    %v12773 = vld [vmem:[#allocation15 + $0x88] sm:$0xf]
    %v12774 = vld [vmem:[#allocation15 + $0x8c] sm:$0xf]
    %v12775 = vld [vmem:[#allocation15 + $0x90] sm:$0xf]
    %v12776 = vld [vmem:[#allocation15 + $0x94] sm:$0xf]
    %v12777 = vld [vmem:[#allocation15 + $0x98] sm:$0xf]
    %v12778 = vld [vmem:[#allocation15 + $0x9c] sm:$0xf]
    %v12779 = vld [vmem:[#allocation15 + $0xa0] sm:$0xf]
    %v12780 = vld [vmem:[#allocation15 + $0xa4] sm:$0xf]
    %v12781 = vld [vmem:[#allocation15 + $0xa8] sm:$0xf]
    %v12782 = vld [vmem:[#allocation15 + $0xac] sm:$0xf]
    %v12783 = vld [vmem:[#allocation15 + $0xb0] sm:$0xf]
    %v12784 = vld [vmem:[#allocation15 + $0xb4] sm:$0xf]
    %v12785 = vld [vmem:[#allocation15 + $0xb8] sm:$0xf]
    %v12786 = vld [vmem:[#allocation15 + $0xbc] sm:$0xf]
    %v12787 = vld [vmem:[#allocation15 + $0xc0] sm:$0xf]
    %v12788 = vld [vmem:[#allocation15 + $0xc4] sm:$0xf]
    %v12789 = vld [vmem:[#allocation15 + $0xc8] sm:$0xf]
    %v12790 = vld [vmem:[#allocation15 + $0xcc] sm:$0xf]
    %v12791 = vld [vmem:[#allocation15 + $0xd0] sm:$0xf]
    %v12792 = vld [vmem:[#allocation15 + $0xd4] sm:$0xf]
    %v12793 = vld [vmem:[#allocation15 + $0xd8] sm:$0xf]
    %v12794 = vld [vmem:[#allocation15 + $0xdc] sm:$0xf]
    %v12795 = vld [vmem:[#allocation15 + $0xe0] sm:$0xf]
    %v12796 = vld [vmem:[#allocation15 + $0xe4] sm:$0xf]
    %v12797 = vld [vmem:[#allocation15 + $0xe8] sm:$0xf]
    %v12798 = vld [vmem:[#allocation15 + $0xec] sm:$0xf]
    %v12799 = vld [vmem:[#allocation15 + $0xf0] sm:$0xf]
    %v12800 = vld [vmem:[#allocation15 + $0xf4] sm:$0xf]
    %v12801 = vld [vmem:[#allocation15 + $0xf8] sm:$0xf]
    %v12802 = vld [vmem:[#allocation15 + $0xfc] sm:$0xf]
    %v12803 = vld [vmem:[#allocation15 + $0x100] sm:$0xf]
    %v12804 = vld [vmem:[#allocation15 + $0x104] sm:$0xf]
    %v12805 = vld [vmem:[#allocation15 + $0x108] sm:$0xf]
    %v12806 = vld [vmem:[#allocation15 + $0x10c] sm:$0xf]
    %v12807 = vld [vmem:[#allocation15 + $0x110] sm:$0xf]
    %v12808 = vld [vmem:[#allocation15 + $0x114] sm:$0xf]
    %v12809 = vld [vmem:[#allocation15 + $0x118] sm:$0xf]
    %v12810 = vld [vmem:[#allocation15 + $0x11c] sm:$0xf]
    %v12811 = vld [vmem:[#allocation15 + $0x120] sm:$0xf]
    %v12812 = vld [vmem:[#allocation15 + $0x124] sm:$0xf]
    %v12813 = vld [vmem:[#allocation15 + $0x128] sm:$0xf]
    %v12814 = vld [vmem:[#allocation15 + $0x12c] sm:$0xf]
    %v12815 = vld [vmem:[#allocation15 + $0x130] sm:$0xf]
    %v12816 = vld [vmem:[#allocation15 + $0x134] sm:$0xf]
    %v12817 = vld [vmem:[#allocation15 + $0x138] sm:$0xf]
    %v12818 = vld [vmem:[#allocation15 + $0x13c] sm:$0xf]
    %v12819 = vld [vmem:[#allocation15 + $0x140] sm:$0xf]
    %v12820 = vld [vmem:[#allocation15 + $0x144] sm:$0xf]
    %v12821 = vld [vmem:[#allocation15 + $0x148] sm:$0xf]
    %v12822 = vld [vmem:[#allocation15 + $0x14c] sm:$0xf]
    %v12823 = vld [vmem:[#allocation15 + $0x150] sm:$0xf]
    %v12824 = vld [vmem:[#allocation15 + $0x154] sm:$0xf]
    %v12825 = vld [vmem:[#allocation15 + $0x158] sm:$0xf]
    %v12826 = vld [vmem:[#allocation15 + $0x15c] sm:$0xf]
    %v12827 = vld [vmem:[#allocation15 + $0x160] sm:$0xf]
    %v12828 = vld [vmem:[#allocation15 + $0x164] sm:$0xf]
    %v12829 = vld [vmem:[#allocation15 + $0x168] sm:$0xf]
    %v12830 = vld [vmem:[#allocation15 + $0x16c] sm:$0xf]
    %v12831 = vld [vmem:[#allocation15 + $0x170] sm:$0xf]
    %v12832 = vld [vmem:[#allocation15 + $0x174] sm:$0xf]
    %v12833 = vld [vmem:[#allocation15 + $0x178] sm:$0xf]
    %v12834 = vld [vmem:[#allocation15 + $0x17c] sm:$0xf]
    %v12835 = vld [vmem:[#allocation15 + $0x180] sm:$0xf]
    %v12836 = vld [vmem:[#allocation15 + $0x184] sm:$0xf]
    %v12837 = vld [vmem:[#allocation15 + $0x188] sm:$0xf]
    %v12838 = vld [vmem:[#allocation15 + $0x18c] sm:$0xf]
    %v12839 = vld [vmem:[#allocation15 + $0x190] sm:$0xf]
    %v12840 = vld [vmem:[#allocation15 + $0x194] sm:$0xf]
    %v12841 = vld [vmem:[#allocation15 + $0x198] sm:$0xf]
    %v12842 = vld [vmem:[#allocation15 + $0x19c] sm:$0xf]
    %v12843 = vld [vmem:[#allocation15 + $0x1a0] sm:$0xf]
    %v12844 = vld [vmem:[#allocation15 + $0x1a4] sm:$0xf]
    %v12845 = vld [vmem:[#allocation15 + $0x1a8] sm:$0xf]
    %v12846 = vld [vmem:[#allocation15 + $0x1ac] sm:$0xf]
    %v12847 = vld [vmem:[#allocation15 + $0x1b0] sm:$0xf]
    %v12848 = vld [vmem:[#allocation15 + $0x1b4] sm:$0xf]
    %v12849 = vld [vmem:[#allocation15 + $0x1b8] sm:$0xf]
    %v12850 = vld [vmem:[#allocation15 + $0x1bc] sm:$0xf]
    %v12851 = vld [vmem:[#allocation15 + $0x1c0] sm:$0xf]
    %v12852 = vld [vmem:[#allocation15 + $0x1c4] sm:$0xf]
    %v12853 = vld [vmem:[#allocation15 + $0x1c8] sm:$0xf]
    %v12854 = vld [vmem:[#allocation15 + $0x1cc] sm:$0xf]
    %v12855 = vld [vmem:[#allocation15 + $0x1d0] sm:$0xf]
    %v12856 = vld [vmem:[#allocation15 + $0x1d4] sm:$0xf]
    %v12857 = vld [vmem:[#allocation15 + $0x1d8] sm:$0xf]
    %v12858 = vld [vmem:[#allocation15 + $0x1dc] sm:$0xf]
    %v12859 = vld [vmem:[#allocation15 + $0x1e0] sm:$0xf]
    %v12860 = vld [vmem:[#allocation15 + $0x1e4] sm:$0xf]
    %v12861 = vld [vmem:[#allocation15 + $0x1e8] sm:$0xf]
    %v12862 = vld [vmem:[#allocation15 + $0x1ec] sm:$0xf]
    %v12863 = vld [vmem:[#allocation15 + $0x1f0] sm:$0xf]
    %v12864 = vld [vmem:[#allocation15 + $0x1f4] sm:$0xf]
    %v12865 = vld [vmem:[#allocation15 + $0x1f8] sm:$0xf]
    %v12866 = vld [vmem:[#allocation15 + $0x1fc] sm:$0xf]
    %v12867 = vld [vmem:[#allocation16] sm:$0xf]
    %v12868 = vld [vmem:[#allocation16 + $0x4] sm:$0xf]
    %v12869 = vld [vmem:[#allocation16 + $0x8] sm:$0xf]
    %v12870 = vld [vmem:[#allocation16 + $0xc] sm:$0xf]
    %v12871 = vld [vmem:[#allocation16 + $0x10] sm:$0xf]
    %v12872 = vld [vmem:[#allocation16 + $0x14] sm:$0xf]
    %v12873 = vld [vmem:[#allocation16 + $0x18] sm:$0xf]
    %v12874 = vld [vmem:[#allocation16 + $0x1c] sm:$0xf]
    %v12875 = vld [vmem:[#allocation16 + $0x20] sm:$0xf]
    %v12876 = vld [vmem:[#allocation16 + $0x24] sm:$0xf]
    %v12877 = vld [vmem:[#allocation16 + $0x28] sm:$0xf]
    %v12878 = vld [vmem:[#allocation16 + $0x2c] sm:$0xf]
    %v12879 = vld [vmem:[#allocation16 + $0x30] sm:$0xf]
    %v12880 = vld [vmem:[#allocation16 + $0x34] sm:$0xf]
    %v12881 = vld [vmem:[#allocation16 + $0x38] sm:$0xf]
    %v12882 = vld [vmem:[#allocation16 + $0x3c] sm:$0xf]
    %v12883 = vld [vmem:[#allocation16 + $0x40] sm:$0xf]
    %v12884 = vld [vmem:[#allocation16 + $0x44] sm:$0xf]
    %v12885 = vld [vmem:[#allocation16 + $0x48] sm:$0xf]
    %v12886 = vld [vmem:[#allocation16 + $0x4c] sm:$0xf]
    %v12887 = vld [vmem:[#allocation16 + $0x50] sm:$0xf]
    %v12888 = vld [vmem:[#allocation16 + $0x54] sm:$0xf]
    %v12889 = vld [vmem:[#allocation16 + $0x58] sm:$0xf]
    %v12890 = vld [vmem:[#allocation16 + $0x5c] sm:$0xf]
    %v12891 = vld [vmem:[#allocation16 + $0x60] sm:$0xf]
    %v12892 = vld [vmem:[#allocation16 + $0x64] sm:$0xf]
    %v12893 = vld [vmem:[#allocation16 + $0x68] sm:$0xf]
    %v12894 = vld [vmem:[#allocation16 + $0x6c] sm:$0xf]
    %v12895 = vld [vmem:[#allocation16 + $0x70] sm:$0xf]
    %v12896 = vld [vmem:[#allocation16 + $0x74] sm:$0xf]
    %v12897 = vld [vmem:[#allocation16 + $0x78] sm:$0xf]
    %v12898 = vld [vmem:[#allocation16 + $0x7c] sm:$0xf]
    %v12899 = vld [vmem:[#allocation16 + $0x80] sm:$0xf]
    %v12900 = vld [vmem:[#allocation16 + $0x84] sm:$0xf]
    %v12901 = vld [vmem:[#allocation16 + $0x88] sm:$0xf]
    %v12902 = vld [vmem:[#allocation16 + $0x8c] sm:$0xf]
    %v12903 = vld [vmem:[#allocation16 + $0x90] sm:$0xf]
    %v12904 = vld [vmem:[#allocation16 + $0x94] sm:$0xf]
    %v12905 = vld [vmem:[#allocation16 + $0x98] sm:$0xf]
    %v12906 = vld [vmem:[#allocation16 + $0x9c] sm:$0xf]
    %v12907 = vld [vmem:[#allocation16 + $0xa0] sm:$0xf]
    %v12908 = vld [vmem:[#allocation16 + $0xa4] sm:$0xf]
    %v12909 = vld [vmem:[#allocation16 + $0xa8] sm:$0xf]
    %v12910 = vld [vmem:[#allocation16 + $0xac] sm:$0xf]
    %v12911 = vld [vmem:[#allocation16 + $0xb0] sm:$0xf]
    %v12912 = vld [vmem:[#allocation16 + $0xb4] sm:$0xf]
    %v12913 = vld [vmem:[#allocation16 + $0xb8] sm:$0xf]
    %v12914 = vld [vmem:[#allocation16 + $0xbc] sm:$0xf]
    %v12915 = vld [vmem:[#allocation16 + $0xc0] sm:$0xf]
    %v12916 = vld [vmem:[#allocation16 + $0xc4] sm:$0xf]
    %v12917 = vld [vmem:[#allocation16 + $0xc8] sm:$0xf]
    %v12918 = vld [vmem:[#allocation16 + $0xcc] sm:$0xf]
    %v12919 = vld [vmem:[#allocation16 + $0xd0] sm:$0xf]
    %v12920 = vld [vmem:[#allocation16 + $0xd4] sm:$0xf]
    %v12921 = vld [vmem:[#allocation16 + $0xd8] sm:$0xf]
    %v12922 = vld [vmem:[#allocation16 + $0xdc] sm:$0xf]
    %v12923 = vld [vmem:[#allocation16 + $0xe0] sm:$0xf]
    %v12924 = vld [vmem:[#allocation16 + $0xe4] sm:$0xf]
    %v12925 = vld [vmem:[#allocation16 + $0xe8] sm:$0xf]
    %v12926 = vld [vmem:[#allocation16 + $0xec] sm:$0xf]
    %v12927 = vld [vmem:[#allocation16 + $0xf0] sm:$0xf]
    %v12928 = vld [vmem:[#allocation16 + $0xf4] sm:$0xf]
    %v12929 = vld [vmem:[#allocation16 + $0xf8] sm:$0xf]
    %v12930 = vld [vmem:[#allocation16 + $0xfc] sm:$0xf]
    %v12931 = vld [vmem:[#allocation16 + $0x100] sm:$0xf]
    %v12932 = vld [vmem:[#allocation16 + $0x104] sm:$0xf]
    %v12933 = vld [vmem:[#allocation16 + $0x108] sm:$0xf]
    %v12934 = vld [vmem:[#allocation16 + $0x10c] sm:$0xf]
    %v12935 = vld [vmem:[#allocation16 + $0x110] sm:$0xf]
    %v12936 = vld [vmem:[#allocation16 + $0x114] sm:$0xf]
    %v12937 = vld [vmem:[#allocation16 + $0x118] sm:$0xf]
    %v12938 = vld [vmem:[#allocation16 + $0x11c] sm:$0xf]
    %v12939 = vld [vmem:[#allocation16 + $0x120] sm:$0xf]
    %v12940 = vld [vmem:[#allocation16 + $0x124] sm:$0xf]
    %v12941 = vld [vmem:[#allocation16 + $0x128] sm:$0xf]
    %v12942 = vld [vmem:[#allocation16 + $0x12c] sm:$0xf]
    %v12943 = vld [vmem:[#allocation16 + $0x130] sm:$0xf]
    %v12944 = vld [vmem:[#allocation16 + $0x134] sm:$0xf]
    %v12945 = vld [vmem:[#allocation16 + $0x138] sm:$0xf]
    %v12946 = vld [vmem:[#allocation16 + $0x13c] sm:$0xf]
    %v12947 = vld [vmem:[#allocation16 + $0x140] sm:$0xf]
    %v12948 = vld [vmem:[#allocation16 + $0x144] sm:$0xf]
    %v12949 = vld [vmem:[#allocation16 + $0x148] sm:$0xf]
    %v12950 = vld [vmem:[#allocation16 + $0x14c] sm:$0xf]
    %v12951 = vld [vmem:[#allocation16 + $0x150] sm:$0xf]
    %v12952 = vld [vmem:[#allocation16 + $0x154] sm:$0xf]
    %v12953 = vld [vmem:[#allocation16 + $0x158] sm:$0xf]
    %v12954 = vld [vmem:[#allocation16 + $0x15c] sm:$0xf]
    %v12955 = vld [vmem:[#allocation16 + $0x160] sm:$0xf]
    %v12956 = vld [vmem:[#allocation16 + $0x164] sm:$0xf]
    %v12957 = vld [vmem:[#allocation16 + $0x168] sm:$0xf]
    %v12958 = vld [vmem:[#allocation16 + $0x16c] sm:$0xf]
    %v12959 = vld [vmem:[#allocation16 + $0x170] sm:$0xf]
    %v12960 = vld [vmem:[#allocation16 + $0x174] sm:$0xf]
    %v12961 = vld [vmem:[#allocation16 + $0x178] sm:$0xf]
    %v12962 = vld [vmem:[#allocation16 + $0x17c] sm:$0xf]
    %v12963 = vld [vmem:[#allocation16 + $0x180] sm:$0xf]
    %v12964 = vld [vmem:[#allocation16 + $0x184] sm:$0xf]
    %v12965 = vld [vmem:[#allocation16 + $0x188] sm:$0xf]
    %v12966 = vld [vmem:[#allocation16 + $0x18c] sm:$0xf]
    %v12967 = vld [vmem:[#allocation16 + $0x190] sm:$0xf]
    %v12968 = vld [vmem:[#allocation16 + $0x194] sm:$0xf]
    %v12969 = vld [vmem:[#allocation16 + $0x198] sm:$0xf]
    %v12970 = vld [vmem:[#allocation16 + $0x19c] sm:$0xf]
    %v12971 = vld [vmem:[#allocation16 + $0x1a0] sm:$0xf]
    %v12972 = vld [vmem:[#allocation16 + $0x1a4] sm:$0xf]
    %v12973 = vld [vmem:[#allocation16 + $0x1a8] sm:$0xf]
    %v12974 = vld [vmem:[#allocation16 + $0x1ac] sm:$0xf]
    %v12975 = vld [vmem:[#allocation16 + $0x1b0] sm:$0xf]
    %v12976 = vld [vmem:[#allocation16 + $0x1b4] sm:$0xf]
    %v12977 = vld [vmem:[#allocation16 + $0x1b8] sm:$0xf]
    %v12978 = vld [vmem:[#allocation16 + $0x1bc] sm:$0xf]
    %v12979 = vld [vmem:[#allocation16 + $0x1c0] sm:$0xf]
    %v12980 = vld [vmem:[#allocation16 + $0x1c4] sm:$0xf]
    %v12981 = vld [vmem:[#allocation16 + $0x1c8] sm:$0xf]
    %v12982 = vld [vmem:[#allocation16 + $0x1cc] sm:$0xf]
    %v12983 = vld [vmem:[#allocation16 + $0x1d0] sm:$0xf]
    %v12984 = vld [vmem:[#allocation16 + $0x1d4] sm:$0xf]
    %v12985 = vld [vmem:[#allocation16 + $0x1d8] sm:$0xf]
    %v12986 = vld [vmem:[#allocation16 + $0x1dc] sm:$0xf]
    %v12987 = vld [vmem:[#allocation16 + $0x1e0] sm:$0xf]
    %v12988 = vld [vmem:[#allocation16 + $0x1e4] sm:$0xf]
    %v12989 = vld [vmem:[#allocation16 + $0x1e8] sm:$0xf]
    %v12990 = vld [vmem:[#allocation16 + $0x1ec] sm:$0xf]
    %v12991 = vld [vmem:[#allocation16 + $0x1f0] sm:$0xf]
    %v12992 = vld [vmem:[#allocation16 + $0x1f4] sm:$0xf]
    %v12993 = vld [vmem:[#allocation16 + $0x1f8] sm:$0xf]
    %v12994 = vld [vmem:[#allocation16 + $0x1fc] sm:$0xf]
    %v13123 = vunpack.c.l.b16 %v12867
    %v13124 = vunpack.c.l.b16 %v12868
    %v13125 = vunpack.c.l.b16 %v12869
    %v13126 = vunpack.c.l.b16 %v12870
    %v13127 = vunpack.c.l.b16 %v12871
    %v13128 = vunpack.c.l.b16 %v12872
    %v13129 = vunpack.c.l.b16 %v12873
    %v13130 = vunpack.c.l.b16 %v12874
    %v13131 = vunpack.c.l.b16 %v12875
    %v13132 = vunpack.c.l.b16 %v12876
    %v13133 = vunpack.c.l.b16 %v12877
    %v13134 = vunpack.c.l.b16 %v12878
    %v13135 = vunpack.c.l.b16 %v12879
    %v13136 = vunpack.c.l.b16 %v12880
    %v13137 = vunpack.c.l.b16 %v12881
    %v13138 = vunpack.c.l.b16 %v12882
    %v13139 = vunpack.c.l.b16 %v12883
    %v13140 = vunpack.c.l.b16 %v12884
    %v13141 = vunpack.c.l.b16 %v12885
    %v13142 = vunpack.c.l.b16 %v12886
    %v13143 = vunpack.c.l.b16 %v12887
    %v13144 = vunpack.c.l.b16 %v12888
    %v13145 = vunpack.c.l.b16 %v12889
    %v13146 = vunpack.c.l.b16 %v12890
    %v13147 = vunpack.c.l.b16 %v12891
    %v13148 = vunpack.c.l.b16 %v12892
    %v13149 = vunpack.c.l.b16 %v12893
    %v13150 = vunpack.c.l.b16 %v12894
    %v13151 = vunpack.c.l.b16 %v12895
    %v13152 = vunpack.c.l.b16 %v12896
    %v13153 = vunpack.c.l.b16 %v12897
    %v13154 = vunpack.c.l.b16 %v12898
    %v13155 = vunpack.c.l.b16 %v12899
    %v13156 = vunpack.c.l.b16 %v12900
    %v13157 = vunpack.c.l.b16 %v12901
    %v13158 = vunpack.c.l.b16 %v12902
    %v13159 = vunpack.c.l.b16 %v12903
    %v13160 = vunpack.c.l.b16 %v12904
    %v13161 = vunpack.c.l.b16 %v12905
    %v13162 = vunpack.c.l.b16 %v12906
    %v13163 = vunpack.c.l.b16 %v12907
    %v13164 = vunpack.c.l.b16 %v12908
    %v13165 = vunpack.c.l.b16 %v12909
    %v13166 = vunpack.c.l.b16 %v12910
    %v13167 = vunpack.c.l.b16 %v12911
    %v13168 = vunpack.c.l.b16 %v12912
    %v13169 = vunpack.c.l.b16 %v12913
    %v13170 = vunpack.c.l.b16 %v12914
    %v13171 = vunpack.c.l.b16 %v12915
    %v13172 = vunpack.c.l.b16 %v12916
    %v13173 = vunpack.c.l.b16 %v12917
    %v13174 = vunpack.c.l.b16 %v12918
    %v13175 = vunpack.c.l.b16 %v12919
    %v13176 = vunpack.c.l.b16 %v12920
    %v13177 = vunpack.c.l.b16 %v12921
    %v13178 = vunpack.c.l.b16 %v12922
    %v13179 = vunpack.c.l.b16 %v12923
    %v13180 = vunpack.c.l.b16 %v12924
    %v13181 = vunpack.c.l.b16 %v12925
    %v13182 = vunpack.c.l.b16 %v12926
    %v13183 = vunpack.c.l.b16 %v12927
    %v13184 = vunpack.c.l.b16 %v12928
    %v13185 = vunpack.c.l.b16 %v12929
    %v13186 = vunpack.c.l.b16 %v12930
    %v13187 = vunpack.c.l.b16 %v12931
    %v13188 = vunpack.c.l.b16 %v12932
    %v13189 = vunpack.c.l.b16 %v12933
    %v13190 = vunpack.c.l.b16 %v12934
    %v13191 = vunpack.c.l.b16 %v12935
    %v13192 = vunpack.c.l.b16 %v12936
    %v13193 = vunpack.c.l.b16 %v12937
    %v13194 = vunpack.c.l.b16 %v12938
    %v13195 = vunpack.c.l.b16 %v12939
    %v13196 = vunpack.c.l.b16 %v12940
    %v13197 = vunpack.c.l.b16 %v12941
    %v13198 = vunpack.c.l.b16 %v12942
    %v13199 = vunpack.c.l.b16 %v12943
    %v13200 = vunpack.c.l.b16 %v12944
    %v13201 = vunpack.c.l.b16 %v12945
    %v13202 = vunpack.c.l.b16 %v12946
    %v13203 = vunpack.c.l.b16 %v12947
    %v13204 = vunpack.c.l.b16 %v12948
    %v13205 = vunpack.c.l.b16 %v12949
    %v13206 = vunpack.c.l.b16 %v12950
    %v13207 = vunpack.c.l.b16 %v12951
    %v13208 = vunpack.c.l.b16 %v12952
    %v13209 = vunpack.c.l.b16 %v12953
    %v13210 = vunpack.c.l.b16 %v12954
    %v13211 = vunpack.c.l.b16 %v12955
    %v13212 = vunpack.c.l.b16 %v12956
    %v13213 = vunpack.c.l.b16 %v12957
    %v13214 = vunpack.c.l.b16 %v12958
    %v13215 = vunpack.c.l.b16 %v12959
    %v13216 = vunpack.c.l.b16 %v12960
    %v13217 = vunpack.c.l.b16 %v12961
    %v13218 = vunpack.c.l.b16 %v12962
    %v13219 = vunpack.c.l.b16 %v12963
    %v13220 = vunpack.c.l.b16 %v12964
    %v13221 = vunpack.c.l.b16 %v12965
    %v13222 = vunpack.c.l.b16 %v12966
    %v13223 = vunpack.c.l.b16 %v12967
    %v13224 = vunpack.c.l.b16 %v12968
    %v13225 = vunpack.c.l.b16 %v12969
    %v13226 = vunpack.c.l.b16 %v12970
    %v13227 = vunpack.c.l.b16 %v12971
    %v13228 = vunpack.c.l.b16 %v12972
    %v13229 = vunpack.c.l.b16 %v12973
    %v13230 = vunpack.c.l.b16 %v12974
    %v13231 = vunpack.c.l.b16 %v12975
    %v13232 = vunpack.c.l.b16 %v12976
    %v13233 = vunpack.c.l.b16 %v12977
    %v13234 = vunpack.c.l.b16 %v12978
    %v13235 = vunpack.c.l.b16 %v12979
    %v13236 = vunpack.c.l.b16 %v12980
    %v13237 = vunpack.c.l.b16 %v12981
    %v13238 = vunpack.c.l.b16 %v12982
    %v13239 = vunpack.c.l.b16 %v12983
    %v13240 = vunpack.c.l.b16 %v12984
    %v13241 = vunpack.c.l.b16 %v12985
    %v13242 = vunpack.c.l.b16 %v12986
    %v13243 = vunpack.c.l.b16 %v12987
    %v13244 = vunpack.c.l.b16 %v12988
    %v13245 = vunpack.c.l.b16 %v12989
    %v13246 = vunpack.c.l.b16 %v12990
    %v13247 = vunpack.c.l.b16 %v12991
    %v13248 = vunpack.c.l.b16 %v12992
    %v13249 = vunpack.c.l.b16 %v12993
    %v13250 = vunpack.c.l.b16 %v12994
    %v13251 = vpack.c.b16 %v13124, %v13123
    %v13252 = vpack.c.b16 %v13126, %v13125
    %v13253 = vpack.c.b16 %v13128, %v13127
    %v13254 = vpack.c.b16 %v13130, %v13129
    %v13255 = vpack.c.b16 %v13132, %v13131
    %v13256 = vpack.c.b16 %v13134, %v13133
    %v13257 = vpack.c.b16 %v13136, %v13135
    %v13258 = vpack.c.b16 %v13138, %v13137
    %v13259 = vpack.c.b16 %v13140, %v13139
    %v13260 = vpack.c.b16 %v13142, %v13141
    %v13261 = vpack.c.b16 %v13144, %v13143
    %v13262 = vpack.c.b16 %v13146, %v13145
    %v13263 = vpack.c.b16 %v13148, %v13147
    %v13264 = vpack.c.b16 %v13150, %v13149
    %v13265 = vpack.c.b16 %v13152, %v13151
    %v13266 = vpack.c.b16 %v13154, %v13153
    %v13267 = vpack.c.b16 %v13156, %v13155
    %v13268 = vpack.c.b16 %v13158, %v13157
    %v13269 = vpack.c.b16 %v13160, %v13159
    %v13270 = vpack.c.b16 %v13162, %v13161
    %v13271 = vpack.c.b16 %v13164, %v13163
    %v13272 = vpack.c.b16 %v13166, %v13165
    %v13273 = vpack.c.b16 %v13168, %v13167
    %v13274 = vpack.c.b16 %v13170, %v13169
    %v13275 = vpack.c.b16 %v13172, %v13171
    %v13276 = vpack.c.b16 %v13174, %v13173
    %v13277 = vpack.c.b16 %v13176, %v13175
    %v13278 = vpack.c.b16 %v13178, %v13177
    %v13279 = vpack.c.b16 %v13180, %v13179
    %v13280 = vpack.c.b16 %v13182, %v13181
    %v13281 = vpack.c.b16 %v13184, %v13183
    %v13282 = vpack.c.b16 %v13186, %v13185
    %v13283 = vpack.c.b16 %v13188, %v13187
    %v13284 = vpack.c.b16 %v13190, %v13189
    %v13285 = vpack.c.b16 %v13192, %v13191
    %v13286 = vpack.c.b16 %v13194, %v13193
    %v13287 = vpack.c.b16 %v13196, %v13195
    %v13288 = vpack.c.b16 %v13198, %v13197
    %v13289 = vpack.c.b16 %v13200, %v13199
    %v13290 = vpack.c.b16 %v13202, %v13201
    %v13291 = vpack.c.b16 %v13204, %v13203
    %v13292 = vpack.c.b16 %v13206, %v13205
    %v13293 = vpack.c.b16 %v13208, %v13207
    %v13294 = vpack.c.b16 %v13210, %v13209
    %v13295 = vpack.c.b16 %v13212, %v13211
    %v13296 = vpack.c.b16 %v13214, %v13213
    %v13297 = vpack.c.b16 %v13216, %v13215
    %v13298 = vpack.c.b16 %v13218, %v13217
    %v13299 = vpack.c.b16 %v13220, %v13219
    %v13300 = vpack.c.b16 %v13222, %v13221
    %v13301 = vpack.c.b16 %v13224, %v13223
    %v13302 = vpack.c.b16 %v13226, %v13225
    %v13303 = vpack.c.b16 %v13228, %v13227
    %v13304 = vpack.c.b16 %v13230, %v13229
    %v13305 = vpack.c.b16 %v13232, %v13231
    %v13306 = vpack.c.b16 %v13234, %v13233
    %v13307 = vpack.c.b16 %v13236, %v13235
    %v13308 = vpack.c.b16 %v13238, %v13237
    %v13309 = vpack.c.b16 %v13240, %v13239
    %v13310 = vpack.c.b16 %v13242, %v13241
    %v13311 = vpack.c.b16 %v13244, %v13243
    %v13312 = vpack.c.b16 %v13246, %v13245
    %v13313 = vpack.c.b16 %v13248, %v13247
    %v13314 = vpack.c.b16 %v13250, %v13249
    %13379 = vmatpush.bf16.msra.mxu0 %v13258
    %13380 = vmatpush.bf16.msra.mxu0 %v13257
    %13381 = vmatpush.bf16.msra.mxu0 %v13256
    %13382 = vmatpush.bf16.msra.mxu0 %v13255
    %13383 = vmatpush.bf16.msra.mxu0 %v13254
    %13384 = vmatpush.bf16.msra.mxu0 %v13253
    %13385 = vmatpush.bf16.msra.mxu0 %v13252
    %13386 = vmatpush.bf16.msra.mxu0 %v13251
    %13387 = vmatmul.bf16.gmra.mxu0 %v11695
    %v13388 = vpop.f32.mrf.mxu0
    %v13389 = vadd.f32 0.0, %v13388
    %v13390 = vpop.f32.mrf.mxu0
    %v13391 = vadd.f32 0.0, %v13390
    %13392 = vdwg.mxu0
    %13393 = vmatpush.bf16.msra.mxu0 %v13266
    %13394 = vmatpush.bf16.msra.mxu0 %v13265
    %13395 = vmatpush.bf16.msra.mxu0 %v13264
    %13396 = vmatpush.bf16.msra.mxu0 %v13263
    %13397 = vmatpush.bf16.msra.mxu0 %v13262
    %13398 = vmatpush.bf16.msra.mxu0 %v13261
    %13399 = vmatpush.bf16.msra.mxu0 %v13260
    %13400 = vmatpush.bf16.msra.mxu0 %v13259
    %13401 = vmatmul.bf16.gmra.mxu0 %v11696
    %v13402 = vpop.f32.mrf.mxu0
    %v13403 = vadd.f32 %v13389, %v13402
    %v13404 = vpop.f32.mrf.mxu0
    %v13405 = vadd.f32 %v13391, %v13404
    %13406 = vdwg.mxu0
    %13407 = vmatpush.bf16.msra.mxu0 %v13274
    %13408 = vmatpush.bf16.msra.mxu0 %v13273
    %13409 = vmatpush.bf16.msra.mxu0 %v13272
    %13410 = vmatpush.bf16.msra.mxu0 %v13271
    %13411 = vmatpush.bf16.msra.mxu0 %v13270
    %13412 = vmatpush.bf16.msra.mxu0 %v13269
    %13413 = vmatpush.bf16.msra.mxu0 %v13268
    %13414 = vmatpush.bf16.msra.mxu0 %v13267
    %13415 = vmatmul.bf16.gmra.mxu0 %v11697
    %v13416 = vpop.f32.mrf.mxu0
    %v13417 = vadd.f32 %v13403, %v13416
    %v13418 = vpop.f32.mrf.mxu0
    %v13419 = vadd.f32 %v13405, %v13418
    %13420 = vdwg.mxu0
    %13421 = vmatpush.bf16.msra.mxu0 %v13282
    %13422 = vmatpush.bf16.msra.mxu0 %v13281
    %13423 = vmatpush.bf16.msra.mxu0 %v13280
    %13424 = vmatpush.bf16.msra.mxu0 %v13279
    %13425 = vmatpush.bf16.msra.mxu0 %v13278
    %13426 = vmatpush.bf16.msra.mxu0 %v13277
    %13427 = vmatpush.bf16.msra.mxu0 %v13276
    %13428 = vmatpush.bf16.msra.mxu0 %v13275
    %13429 = vmatmul.bf16.gmra.mxu0 %v11698
    %v13430 = vpop.f32.mrf.mxu0
    %v13431 = vadd.f32 %v13417, %v13430
    %v13432 = vpop.f32.mrf.mxu0
    %v13433 = vadd.f32 %v13419, %v13432
    %13434 = vdwg.mxu0
    %13435 = vmatpush.bf16.msra.mxu0 %v13290
    %13436 = vmatpush.bf16.msra.mxu0 %v13289
    %13437 = vmatpush.bf16.msra.mxu0 %v13288
    %13438 = vmatpush.bf16.msra.mxu0 %v13287
    %13439 = vmatpush.bf16.msra.mxu0 %v13286
    %13440 = vmatpush.bf16.msra.mxu0 %v13285
    %13441 = vmatpush.bf16.msra.mxu0 %v13284
    %13442 = vmatpush.bf16.msra.mxu0 %v13283
    %13443 = vmatmul.bf16.gmra.mxu0 %v11699
    %v13444 = vpop.f32.mrf.mxu0
    %v13445 = vadd.f32 %v13431, %v13444
    %v13446 = vpop.f32.mrf.mxu0
    %v13447 = vadd.f32 %v13433, %v13446
    %13448 = vdwg.mxu0
    %13449 = vmatpush.bf16.msra.mxu0 %v13298
    %13450 = vmatpush.bf16.msra.mxu0 %v13297
    %13451 = vmatpush.bf16.msra.mxu0 %v13296
    %13452 = vmatpush.bf16.msra.mxu0 %v13295
    %13453 = vmatpush.bf16.msra.mxu0 %v13294
    %13454 = vmatpush.bf16.msra.mxu0 %v13293
    %13455 = vmatpush.bf16.msra.mxu0 %v13292
    %13456 = vmatpush.bf16.msra.mxu0 %v13291
    %13457 = vmatmul.bf16.gmra.mxu0 %v11700
    %v13458 = vpop.f32.mrf.mxu0
    %v13459 = vadd.f32 %v13445, %v13458
    %v13460 = vpop.f32.mrf.mxu0
    %v13461 = vadd.f32 %v13447, %v13460
    %13462 = vdwg.mxu0
    %13463 = vmatpush.bf16.msra.mxu0 %v13306
    %13464 = vmatpush.bf16.msra.mxu0 %v13305
    %13465 = vmatpush.bf16.msra.mxu0 %v13304
    %13466 = vmatpush.bf16.msra.mxu0 %v13303
    %13467 = vmatpush.bf16.msra.mxu0 %v13302
    %13468 = vmatpush.bf16.msra.mxu0 %v13301
    %13469 = vmatpush.bf16.msra.mxu0 %v13300
    %13470 = vmatpush.bf16.msra.mxu0 %v13299
    %13471 = vmatmul.bf16.gmra.mxu0 %v11701
    %v13472 = vpop.f32.mrf.mxu0
    %v13473 = vadd.f32 %v13459, %v13472
    %v13474 = vpop.f32.mrf.mxu0
    %v13475 = vadd.f32 %v13461, %v13474
    %13476 = vdwg.mxu0
    %13477 = vmatpush.bf16.msra.mxu0 %v13314
    %13478 = vmatpush.bf16.msra.mxu0 %v13313
    %13479 = vmatpush.bf16.msra.mxu0 %v13312
    %13480 = vmatpush.bf16.msra.mxu0 %v13311
    %13481 = vmatpush.bf16.msra.mxu0 %v13310
    %13482 = vmatpush.bf16.msra.mxu0 %v13309
    %13483 = vmatpush.bf16.msra.mxu0 %v13308
    %13484 = vmatpush.bf16.msra.mxu0 %v13307
    %13485 = vmatmul.bf16.gmra.mxu0 %v11702
    %v13486 = vpop.f32.mrf.mxu0
    %v13487 = vadd.f32 %v13473, %v13486
    %v13488 = vpop.f32.mrf.mxu0
    %v13489 = vadd.f32 %v13475, %v13488
    %13490 = vdwg.mxu0
    %v13619 = vunpack.c.l.b16 %v12739
    %v13620 = vunpack.c.l.b16 %v12740
    %v13621 = vunpack.c.l.b16 %v12741
    %v13622 = vunpack.c.l.b16 %v12742
    %v13623 = vunpack.c.l.b16 %v12743
    %v13624 = vunpack.c.l.b16 %v12744
    %v13625 = vunpack.c.l.b16 %v12745
    %v13626 = vunpack.c.l.b16 %v12746
    %v13627 = vunpack.c.l.b16 %v12747
    %v13628 = vunpack.c.l.b16 %v12748
    %v13629 = vunpack.c.l.b16 %v12749
    %v13630 = vunpack.c.l.b16 %v12750
    %v13631 = vunpack.c.l.b16 %v12751
    %v13632 = vunpack.c.l.b16 %v12752
    %v13633 = vunpack.c.l.b16 %v12753
    %v13634 = vunpack.c.l.b16 %v12754
    %v13635 = vunpack.c.l.b16 %v12755
    %v13636 = vunpack.c.l.b16 %v12756
    %v13637 = vunpack.c.l.b16 %v12757
    %v13638 = vunpack.c.l.b16 %v12758
    %v13639 = vunpack.c.l.b16 %v12759
    %v13640 = vunpack.c.l.b16 %v12760
    %v13641 = vunpack.c.l.b16 %v12761
    %v13642 = vunpack.c.l.b16 %v12762
    %v13643 = vunpack.c.l.b16 %v12763
    %v13644 = vunpack.c.l.b16 %v12764
    %v13645 = vunpack.c.l.b16 %v12765
    %v13646 = vunpack.c.l.b16 %v12766
    %v13647 = vunpack.c.l.b16 %v12767
    %v13648 = vunpack.c.l.b16 %v12768
    %v13649 = vunpack.c.l.b16 %v12769
    %v13650 = vunpack.c.l.b16 %v12770
    %v13651 = vunpack.c.l.b16 %v12771
    %v13652 = vunpack.c.l.b16 %v12772
    %v13653 = vunpack.c.l.b16 %v12773
    %v13654 = vunpack.c.l.b16 %v12774
    %v13655 = vunpack.c.l.b16 %v12775
    %v13656 = vunpack.c.l.b16 %v12776
    %v13657 = vunpack.c.l.b16 %v12777
    %v13658 = vunpack.c.l.b16 %v12778
    %v13659 = vunpack.c.l.b16 %v12779
    %v13660 = vunpack.c.l.b16 %v12780
    %v13661 = vunpack.c.l.b16 %v12781
    %v13662 = vunpack.c.l.b16 %v12782
    %v13663 = vunpack.c.l.b16 %v12783
    %v13664 = vunpack.c.l.b16 %v12784
    %v13665 = vunpack.c.l.b16 %v12785
    %v13666 = vunpack.c.l.b16 %v12786
    %v13667 = vunpack.c.l.b16 %v12787
    %v13668 = vunpack.c.l.b16 %v12788
    %v13669 = vunpack.c.l.b16 %v12789
    %v13670 = vunpack.c.l.b16 %v12790
    %v13671 = vunpack.c.l.b16 %v12791
    %v13672 = vunpack.c.l.b16 %v12792
    %v13673 = vunpack.c.l.b16 %v12793
    %v13674 = vunpack.c.l.b16 %v12794
    %v13675 = vunpack.c.l.b16 %v12795
    %v13676 = vunpack.c.l.b16 %v12796
    %v13677 = vunpack.c.l.b16 %v12797
    %v13678 = vunpack.c.l.b16 %v12798
    %v13679 = vunpack.c.l.b16 %v12799
    %v13680 = vunpack.c.l.b16 %v12800
    %v13681 = vunpack.c.l.b16 %v12801
    %v13682 = vunpack.c.l.b16 %v12802
    %v13683 = vunpack.c.l.b16 %v12803
    %v13684 = vunpack.c.l.b16 %v12804
    %v13685 = vunpack.c.l.b16 %v12805
    %v13686 = vunpack.c.l.b16 %v12806
    %v13687 = vunpack.c.l.b16 %v12807
    %v13688 = vunpack.c.l.b16 %v12808
    %v13689 = vunpack.c.l.b16 %v12809
    %v13690 = vunpack.c.l.b16 %v12810
    %v13691 = vunpack.c.l.b16 %v12811
    %v13692 = vunpack.c.l.b16 %v12812
    %v13693 = vunpack.c.l.b16 %v12813
    %v13694 = vunpack.c.l.b16 %v12814
    %v13695 = vunpack.c.l.b16 %v12815
    %v13696 = vunpack.c.l.b16 %v12816
    %v13697 = vunpack.c.l.b16 %v12817
    %v13698 = vunpack.c.l.b16 %v12818
    %v13699 = vunpack.c.l.b16 %v12819
    %v13700 = vunpack.c.l.b16 %v12820
    %v13701 = vunpack.c.l.b16 %v12821
    %v13702 = vunpack.c.l.b16 %v12822
    %v13703 = vunpack.c.l.b16 %v12823
    %v13704 = vunpack.c.l.b16 %v12824
    %v13705 = vunpack.c.l.b16 %v12825
    %v13706 = vunpack.c.l.b16 %v12826
    %v13707 = vunpack.c.l.b16 %v12827
    %v13708 = vunpack.c.l.b16 %v12828
    %v13709 = vunpack.c.l.b16 %v12829
    %v13710 = vunpack.c.l.b16 %v12830
    %v13711 = vunpack.c.l.b16 %v12831
    %v13712 = vunpack.c.l.b16 %v12832
    %v13713 = vunpack.c.l.b16 %v12833
    %v13714 = vunpack.c.l.b16 %v12834
    %v13715 = vunpack.c.l.b16 %v12835
    %v13716 = vunpack.c.l.b16 %v12836
    %v13717 = vunpack.c.l.b16 %v12837
    %v13718 = vunpack.c.l.b16 %v12838
    %v13719 = vunpack.c.l.b16 %v12839
    %v13720 = vunpack.c.l.b16 %v12840
    %v13721 = vunpack.c.l.b16 %v12841
    %v13722 = vunpack.c.l.b16 %v12842
    %v13723 = vunpack.c.l.b16 %v12843
    %v13724 = vunpack.c.l.b16 %v12844
    %v13725 = vunpack.c.l.b16 %v12845
    %v13726 = vunpack.c.l.b16 %v12846
    %v13727 = vunpack.c.l.b16 %v12847
    %v13728 = vunpack.c.l.b16 %v12848
    %v13729 = vunpack.c.l.b16 %v12849
    %v13730 = vunpack.c.l.b16 %v12850
    %v13731 = vunpack.c.l.b16 %v12851
    %v13732 = vunpack.c.l.b16 %v12852
    %v13733 = vunpack.c.l.b16 %v12853
    %v13734 = vunpack.c.l.b16 %v12854
    %v13735 = vunpack.c.l.b16 %v12855
    %v13736 = vunpack.c.l.b16 %v12856
    %v13737 = vunpack.c.l.b16 %v12857
    %v13738 = vunpack.c.l.b16 %v12858
    %v13739 = vunpack.c.l.b16 %v12859
    %v13740 = vunpack.c.l.b16 %v12860
    %v13741 = vunpack.c.l.b16 %v12861
    %v13742 = vunpack.c.l.b16 %v12862
    %v13743 = vunpack.c.l.b16 %v12863
    %v13744 = vunpack.c.l.b16 %v12864
    %v13745 = vunpack.c.l.b16 %v12865
    %v13746 = vunpack.c.l.b16 %v12866
    %v13747 = vpack.c.b16 %v13620, %v13619
    %v13748 = vpack.c.b16 %v13622, %v13621
    %v13749 = vpack.c.b16 %v13624, %v13623
    %v13750 = vpack.c.b16 %v13626, %v13625
    %v13751 = vpack.c.b16 %v13628, %v13627
    %v13752 = vpack.c.b16 %v13630, %v13629
    %v13753 = vpack.c.b16 %v13632, %v13631
    %v13754 = vpack.c.b16 %v13634, %v13633
    %v13755 = vpack.c.b16 %v13636, %v13635
    %v13756 = vpack.c.b16 %v13638, %v13637
    %v13757 = vpack.c.b16 %v13640, %v13639
    %v13758 = vpack.c.b16 %v13642, %v13641
    %v13759 = vpack.c.b16 %v13644, %v13643
    %v13760 = vpack.c.b16 %v13646, %v13645
    %v13761 = vpack.c.b16 %v13648, %v13647
    %v13762 = vpack.c.b16 %v13650, %v13649
    %v13763 = vpack.c.b16 %v13652, %v13651
    %v13764 = vpack.c.b16 %v13654, %v13653
    %v13765 = vpack.c.b16 %v13656, %v13655
    %v13766 = vpack.c.b16 %v13658, %v13657
    %v13767 = vpack.c.b16 %v13660, %v13659
    %v13768 = vpack.c.b16 %v13662, %v13661
    %v13769 = vpack.c.b16 %v13664, %v13663
    %v13770 = vpack.c.b16 %v13666, %v13665
    %v13771 = vpack.c.b16 %v13668, %v13667
    %v13772 = vpack.c.b16 %v13670, %v13669
    %v13773 = vpack.c.b16 %v13672, %v13671
    %v13774 = vpack.c.b16 %v13674, %v13673
    %v13775 = vpack.c.b16 %v13676, %v13675
    %v13776 = vpack.c.b16 %v13678, %v13677
    %v13777 = vpack.c.b16 %v13680, %v13679
    %v13778 = vpack.c.b16 %v13682, %v13681
    %v13779 = vpack.c.b16 %v13684, %v13683
    %v13780 = vpack.c.b16 %v13686, %v13685
    %v13781 = vpack.c.b16 %v13688, %v13687
    %v13782 = vpack.c.b16 %v13690, %v13689
    %v13783 = vpack.c.b16 %v13692, %v13691
    %v13784 = vpack.c.b16 %v13694, %v13693
    %v13785 = vpack.c.b16 %v13696, %v13695
    %v13786 = vpack.c.b16 %v13698, %v13697
    %v13787 = vpack.c.b16 %v13700, %v13699
    %v13788 = vpack.c.b16 %v13702, %v13701
    %v13789 = vpack.c.b16 %v13704, %v13703
    %v13790 = vpack.c.b16 %v13706, %v13705
    %v13791 = vpack.c.b16 %v13708, %v13707
    %v13792 = vpack.c.b16 %v13710, %v13709
    %v13793 = vpack.c.b16 %v13712, %v13711
    %v13794 = vpack.c.b16 %v13714, %v13713
    %v13795 = vpack.c.b16 %v13716, %v13715
    %v13796 = vpack.c.b16 %v13718, %v13717
    %v13797 = vpack.c.b16 %v13720, %v13719
    %v13798 = vpack.c.b16 %v13722, %v13721
    %v13799 = vpack.c.b16 %v13724, %v13723
    %v13800 = vpack.c.b16 %v13726, %v13725
    %v13801 = vpack.c.b16 %v13728, %v13727
    %v13802 = vpack.c.b16 %v13730, %v13729
    %v13803 = vpack.c.b16 %v13732, %v13731
    %v13804 = vpack.c.b16 %v13734, %v13733
    %v13805 = vpack.c.b16 %v13736, %v13735
    %v13806 = vpack.c.b16 %v13738, %v13737
    %v13807 = vpack.c.b16 %v13740, %v13739
    %v13808 = vpack.c.b16 %v13742, %v13741
    %v13809 = vpack.c.b16 %v13744, %v13743
    %v13810 = vpack.c.b16 %v13746, %v13745
    %13875 = vmatpush.bf16.msra.mxu0 %v13754
    %13876 = vmatpush.bf16.msra.mxu0 %v13753
    %13877 = vmatpush.bf16.msra.mxu0 %v13752
    %13878 = vmatpush.bf16.msra.mxu0 %v13751
    %13879 = vmatpush.bf16.msra.mxu0 %v13750
    %13880 = vmatpush.bf16.msra.mxu0 %v13749
    %13881 = vmatpush.bf16.msra.mxu0 %v13748
    %13882 = vmatpush.bf16.msra.mxu0 %v13747
    %13883 = vmatmul.bf16.gmra.mxu0 %v12731
    %v13884 = vpop.f32.mrf.mxu0
    %v13885 = vadd.f32 %v13487, %v13884
    %v13886 = vpop.f32.mrf.mxu0
    %v13887 = vadd.f32 %v13489, %v13886
    %13888 = vdwg.mxu0
    %13889 = vmatpush.bf16.msra.mxu0 %v13762
    %13890 = vmatpush.bf16.msra.mxu0 %v13761
    %13891 = vmatpush.bf16.msra.mxu0 %v13760
    %13892 = vmatpush.bf16.msra.mxu0 %v13759
    %13893 = vmatpush.bf16.msra.mxu0 %v13758
    %13894 = vmatpush.bf16.msra.mxu0 %v13757
    %13895 = vmatpush.bf16.msra.mxu0 %v13756
    %13896 = vmatpush.bf16.msra.mxu0 %v13755
    %13897 = vmatmul.bf16.gmra.mxu0 %v12732
    %v13898 = vpop.f32.mrf.mxu0
    %v13899 = vadd.f32 %v13885, %v13898
    %v13900 = vpop.f32.mrf.mxu0
    %v13901 = vadd.f32 %v13887, %v13900
    %13902 = vdwg.mxu0
    %13903 = vmatpush.bf16.msra.mxu0 %v13770
    %13904 = vmatpush.bf16.msra.mxu0 %v13769
    %13905 = vmatpush.bf16.msra.mxu0 %v13768
    %13906 = vmatpush.bf16.msra.mxu0 %v13767
    %13907 = vmatpush.bf16.msra.mxu0 %v13766
    %13908 = vmatpush.bf16.msra.mxu0 %v13765
    %13909 = vmatpush.bf16.msra.mxu0 %v13764
    %13910 = vmatpush.bf16.msra.mxu0 %v13763
    %13911 = vmatmul.bf16.gmra.mxu0 %v12733
    %v13912 = vpop.f32.mrf.mxu0
    %v13913 = vadd.f32 %v13899, %v13912
    %v13914 = vpop.f32.mrf.mxu0
    %v13915 = vadd.f32 %v13901, %v13914
    %13916 = vdwg.mxu0
    %13917 = vmatpush.bf16.msra.mxu0 %v13778
    %13918 = vmatpush.bf16.msra.mxu0 %v13777
    %13919 = vmatpush.bf16.msra.mxu0 %v13776
    %13920 = vmatpush.bf16.msra.mxu0 %v13775
    %13921 = vmatpush.bf16.msra.mxu0 %v13774
    %13922 = vmatpush.bf16.msra.mxu0 %v13773
    %13923 = vmatpush.bf16.msra.mxu0 %v13772
    %13924 = vmatpush.bf16.msra.mxu0 %v13771
    %13925 = vmatmul.bf16.gmra.mxu0 %v12734
    %v13926 = vpop.f32.mrf.mxu0
    %v13927 = vadd.f32 %v13913, %v13926
    %v13928 = vpop.f32.mrf.mxu0
    %v13929 = vadd.f32 %v13915, %v13928
    %13930 = vdwg.mxu0
    %13931 = vmatpush.bf16.msra.mxu0 %v13786
    %13932 = vmatpush.bf16.msra.mxu0 %v13785
    %13933 = vmatpush.bf16.msra.mxu0 %v13784
    %13934 = vmatpush.bf16.msra.mxu0 %v13783
    %13935 = vmatpush.bf16.msra.mxu0 %v13782
    %13936 = vmatpush.bf16.msra.mxu0 %v13781
    %13937 = vmatpush.bf16.msra.mxu0 %v13780
    %13938 = vmatpush.bf16.msra.mxu0 %v13779
    %13939 = vmatmul.bf16.gmra.mxu0 %v12735
    %v13940 = vpop.f32.mrf.mxu0
    %v13941 = vadd.f32 %v13927, %v13940
    %v13942 = vpop.f32.mrf.mxu0
    %v13943 = vadd.f32 %v13929, %v13942
    %13944 = vdwg.mxu0
    %13945 = vmatpush.bf16.msra.mxu0 %v13794
    %13946 = vmatpush.bf16.msra.mxu0 %v13793
    %13947 = vmatpush.bf16.msra.mxu0 %v13792
    %13948 = vmatpush.bf16.msra.mxu0 %v13791
    %13949 = vmatpush.bf16.msra.mxu0 %v13790
    %13950 = vmatpush.bf16.msra.mxu0 %v13789
    %13951 = vmatpush.bf16.msra.mxu0 %v13788
    %13952 = vmatpush.bf16.msra.mxu0 %v13787
    %13953 = vmatmul.bf16.gmra.mxu0 %v12736
    %v13954 = vpop.f32.mrf.mxu0
    %v13955 = vadd.f32 %v13941, %v13954
    %v13956 = vpop.f32.mrf.mxu0
    %v13957 = vadd.f32 %v13943, %v13956
    %13958 = vdwg.mxu0
    %13959 = vmatpush.bf16.msra.mxu0 %v13802
    %13960 = vmatpush.bf16.msra.mxu0 %v13801
    %13961 = vmatpush.bf16.msra.mxu0 %v13800
    %13962 = vmatpush.bf16.msra.mxu0 %v13799
    %13963 = vmatpush.bf16.msra.mxu0 %v13798
    %13964 = vmatpush.bf16.msra.mxu0 %v13797
    %13965 = vmatpush.bf16.msra.mxu0 %v13796
    %13966 = vmatpush.bf16.msra.mxu0 %v13795
    %13967 = vmatmul.bf16.gmra.mxu0 %v12737
    %v13968 = vpop.f32.mrf.mxu0
    %v13969 = vadd.f32 %v13955, %v13968
    %v13970 = vpop.f32.mrf.mxu0
    %v13971 = vadd.f32 %v13957, %v13970
    %13972 = vdwg.mxu0
    %13973 = vmatpush.bf16.msra.mxu0 %v13810
    %13974 = vmatpush.bf16.msra.mxu0 %v13809
    %13975 = vmatpush.bf16.msra.mxu0 %v13808
    %13976 = vmatpush.bf16.msra.mxu0 %v13807
    %13977 = vmatpush.bf16.msra.mxu0 %v13806
    %13978 = vmatpush.bf16.msra.mxu0 %v13805
    %13979 = vmatpush.bf16.msra.mxu0 %v13804
    %13980 = vmatpush.bf16.msra.mxu0 %v13803
    %13981 = vmatmul.bf16.gmra.mxu0 %v12738
    %v13982 = vpop.f32.mrf.mxu0
    %v13983 = vadd.f32 %v13969, %v13982
    %v13984 = vpop.f32.mrf.mxu0
    %v13985 = vadd.f32 %v13971, %v13984
    %13986 = vdwg.mxu0
    %v13987 = vld [vmem:[#allocation18] sm:$0x1]
    %v13989 = vperm.slane %v13987, 0
    %v13991 = vadd.f32 %v13983, %v13989
    %v13992 = vadd.f32 %v13985, %v13989
    %13993 = vst [vmem:[%s12] sm:$0xff] %v13991
    %13994 = vst [vmem:[%s12 + $0x8] sm:$0xff] %v13992
    // Predicated region
    $region94: #{forward.1} parent=1 // pred_check
      _
    $region95: #{forward.1} parent=1 // pred_check_branch
      %13996 = sbr.rel (0) target = $region97
    $region96: #{forward.1} parent=1 // pred_region
      _
    $region97: #{forward.1} parent=1 // pred_fallthru
      _
    // Predicated region
    $region98: #{forward.1} parent=1 // pred_check
      _
    $region99: #{forward.1} parent=1 // pred_check_branch
      %13998 = sbr.rel (0) target = $region101
    $region100: #{forward.1} parent=1 // pred_region
      _
    $region101: #{forward.1} parent=1 // pred_fallthru
      _
    %13999 = vsyncpa [#allocation3], 1
    %14000 = vsyncpa [#allocation5], 1
    %14001 = vsyncpa [#allocation8], 1
    %14002 = vsyncpa [#allocation11], 1
    %14003 = vsyncpa [#allocation14], 1
    %14004 = vsyncpa [#allocation17], 1

</llo_original>
